<compile_context>
chip_gen: v7x
topology: tpu7x:2x2x1
jax: 0.10.0
libtpu: 0.0.40
codegen_flags: <defaults>
</compile_context>

<pallas_src>
import functools

import jax
import jax.numpy as jnp
from jax import lax
from jax.experimental import pallas as pl
from jax.experimental.pallas import tpu as pltpu

EPS = 1e-5
LANES = 128


# ------------------------------ small helpers ------------------------------ #

def _round_up(x, m):
    return ((x + m - 1) // m) * m


def _pad_last(a, c):
    d = c - a.shape[-1]
    if d == 0:
        return a
    return jnp.pad(a, [(0, 0)] * (a.ndim - 1) + [(0, d)])


def _pad_last2(a, r, c):
    dr, dc = r - a.shape[-2], c - a.shape[-1]
    if dr == 0 and dc == 0:
        return a
    return jnp.pad(a, [(0, 0)] * (a.ndim - 2) + [(0, dr), (0, dc)])


def _pad_rows(a, r):
    d = r - a.shape[0]
    if d == 0:
        return a
    return jnp.pad(a, [(0, d)] + [(0, 0)] * (a.ndim - 1))


def _row_tile(p):
    """(row tile, padded row count) for the flat-pixel matmul stages.

    Prefer a large power-of-two tile that divides p exactly; otherwise pad the
    rows up to a fixed 512-row tile (zero rows do not perturb BN sums; stage 3
    additionally masks them).  Tiles are always multiples of 8 (sublane rule).
    """
    if p <= 1024:
        t = _round_up(p, 8)
        return t, t
    for t in (1024, 512, 256):
        if p % t == 0:
            return t, p
    return 512, _round_up(p, 512)


def _default_vmem_limit():
    """Per-generation scoped VMEM budget (96 MiB on 128-MiB chips, 48 on v7x)."""
    try:
        cap = int(pltpu.get_tpu_info().vmem_capacity_bytes)
    except Exception:  # pragma: no cover - conservative fallback
        cap = 0
    if cap >= 100 * 1024 * 1024:       # v5e / v6e: 128 MiB physical VMEM
        return 96 * 1024 * 1024
    return 48 * 1024 * 1024            # v7x (64 MiB physical) and safe fallback


_VMEM_LIMIT = _default_vmem_limit()


def _cparams(semantics):
    return pltpu.CompilerParams(dimension_semantics=semantics,
                                vmem_limit_bytes=_VMEM_LIMIT)


def _tile_stats(y):
    """Per-tile (sum, sum-of-squares) over rows; reduced pairwise in the wrapper."""
    return jnp.concatenate([jnp.sum(y, axis=0, keepdims=True),
                            jnp.sum(y * y, axis=0, keepdims=True)], axis=0)


def _bn_scale_shift(stats_tiles, count, gamma_p, beta_p):
    """Fold training-mode BN into per-channel scale/shift from per-tile stats."""
    stats = jnp.sum(stats_tiles, axis=0)            # pairwise tree-sum in XLA
    mean = stats[0] / count
    var = jnp.maximum(stats[1] / count - mean * mean, 0.0)
    scale = gamma_p * lax.rsqrt(var + EPS)
    shift = beta_p - mean * scale
    return (scale.reshape(1, -1).astype(jnp.float32),
            shift.reshape(1, -1).astype(jnp.float32))


def _mask_pad_rows(a, rows_valid, tm):
    """Zero flat-pixel padding rows (>= rows_valid) so BN stats stay exact."""
    if rows_valid % tm == 0:
        return a
    row = pl.program_id(0) * tm + lax.broadcasted_iota(jnp.int32, a.shape, 0)
    return jnp.where(row < rows_valid, a, 0.0)


# ------------------------------ kernel bodies ------------------------------ #

def _stage1_kernel(x_ref, w_ref, y_ref, st_ref):
    """y1 = x @ w1 (bf16 operands, f32 acc); per-tile BN1 partial stats."""
    y = jnp.dot(x_ref[...], w_ref[...], preferred_element_type=jnp.float32)
    y_ref[...] = y.astype(y_ref.dtype)
    st_ref[...] = _tile_stats(y).reshape(st_ref.shape)


def _stage2_kernel(y1_ref, s1_ref, t1_ref, w2_ref, y2_ref, st2_ref,
                   pad_ref, col_ref, *, stride, H, W, Ho, Wo, Wpad):
    """a1 = relu(BN1(y1)); y2 = conv3x3(a1) via one im2col matmul; BN2 stats."""
    C = pad_ref.shape[-1]
    zdt = pad_ref.dtype

    # Zero only the halo (top/bottom rows, left/right cols) of the bf16 padded
    # scratch.  Done every step so the batch axis is parallel/megacore-safe;
    # the interior is fully overwritten below.
    pad_ref[0:1, :, :] = jnp.zeros((1, Wpad, C), zdt)
    pad_ref[H + 1:H + 2, :, :] = jnp.zeros((1, Wpad, C), zdt)
    pad_ref[1:H + 1, 0:1, :] = jnp.zeros((H, 1, C), zdt)
    pad_ref[1:H + 1, W + 1:Wpad, :] = jnp.zeros((H, Wpad - W - 1, C), zdt)

    # Fused BN1 normalize + ReLU + f32->bf16 cast of the stage-1 pre-activation,
    # written into the interior of the zero-padded scratch (halo = conv padding).
    a = y1_ref[0].astype(jnp.float32) * s1_ref[...] + t1_ref[...]
    pad_ref[1:H + 1, 1:W + 1, :] = jnp.maximum(a, 0.0).astype(zdt)

    # im2col: build one bf16 (Ho*Wo, 9*C) slab (kh row-band hoisted out of the
    # kw loop so stride-2 only does 3 strided reads), then one full-K MXU matmul.
    for kh in range(3):
        if stride == 1:
            band = pad_ref[kh:kh + Ho, :, :]
        else:
            band = pad_ref[pl.ds(kh, Ho, stride), :, :]
        for kw in range(3):
            if stride == 1:
                win = band[:, kw:kw + Wo, :]
            else:
                win = lax.slice_in_dim(band, kw, kw + (Wo - 1) * stride + 1,
                                       stride=stride, axis=1)
            tap = kh * 3 + kw
            col_ref[:, tap * C:(tap + 1) * C] = win.reshape(Ho * Wo, C)

    y = jnp.dot(col_ref[...], w2_ref[...], preferred_element_type=jnp.float32)
    y2_ref[...] = y.reshape(y2_ref.shape).astype(y2_ref.dtype)
    st2_ref[...] = _tile_stats(y).reshape(st2_ref.shape)


def _stage3_proj_kernel(y2_ref, s2_ref, t2_ref, w3_ref, x_ref, wsc_ref,
                        y3_ref, sc_ref, st3_ref, stsc_ref, *, rows_valid, tm):
    """a2 = relu(BN2(y2)); y3 = a2 @ w3; sc = x @ wsc; per-tile BN3/BNsc stats."""
    a2 = jnp.maximum(y2_ref[...].astype(jnp.float32) * s2_ref[...] + t2_ref[...], 0.0)
    a2 = _mask_pad_rows(a2, rows_valid, tm)
    y3 = jnp.dot(a2.astype(jnp.bfloat16), w3_ref[...],
                 preferred_element_type=jnp.float32)
    sc = jnp.dot(x_ref[...], wsc_ref[...], preferred_element_type=jnp.float32)
    y3_ref[...] = y3.astype(y3_ref.dtype)
    sc_ref[...] = sc.astype(sc_ref.dtype)
    st3_ref[...] = _tile_stats(y3).reshape(st3_ref.shape)
    stsc_ref[...] = _tile_stats(sc).reshape(stsc_ref.shape)


def _stage3_id_kernel(y2_ref, s2_ref, t2_ref, w3_ref, y3_ref, st3_ref,
                      *, rows_valid, tm):
    a2 = jnp.maximum(y2_ref[...].astype(jnp.float32) * s2_ref[...] + t2_ref[...], 0.0)
    a2 = _mask_pad_rows(a2, rows_valid, tm)
    y3 = jnp.dot(a2.astype(jnp.bfloat16), w3_ref[...],
                 preferred_element_type=jnp.float32)
    y3_ref[...] = y3.astype(y3_ref.dtype)
    st3_ref[...] = _tile_stats(y3).reshape(st3_ref.shape)


def _finalize_proj_kernel(y3_ref, sc_ref, s3_ref, t3_ref, ssc_ref, tsc_ref, o_ref):
    y = y3_ref[...].astype(jnp.float32) * s3_ref[...] + t3_ref[...]
    s = sc_ref[...].astype(jnp.float32) * ssc_ref[...] + tsc_ref[...]
    o_ref[...] = jnp.maximum(y + s, 0.0)


def _finalize_id_kernel(y3_ref, xsc_ref, s3_ref, t3_ref, o_ref):
    y = y3_ref[...].astype(jnp.float32) * s3_ref[...] + t3_ref[...]
    o_ref[...] = jnp.maximum(y + xsc_ref[...].astype(jnp.float32), 0.0)


# ------------------------------- forward pass ------------------------------- #

@functools.partial(jax.jit, static_argnames=("stride",))
def bottleneck_forward(x_nchw, p, stride=1):
    f32, bf16 = jnp.float32, jnp.bfloat16
    # NCHW -> NHWC and f32 -> bf16 at the PyTorch interface boundary (layout
    # plumbing; bf16 x halves HBM reads for stage 1 and the shortcut).
    x = jnp.transpose(x_nchw, (0, 2, 3, 1)).astype(bf16)
    N, H, W, Cin = x.shape
    Cmid = p["w1"].shape[1]
    C4 = p["w3"].shape[1]
    Cin_p = _round_up(Cin, LANES)
    Cm_p = _round_up(Cmid, LANES)
    C4_p = _round_up(C4, LANES)

    Ho = (H + 2 - 3) // stride + 1
    Wo = (W + 2 - 3) // stride + 1
    P, Po = N * H * W, N * Ho * Wo
    TM1, P_pad = _row_tile(P)
    TM3, Po_pad = _row_tile(Po)
    G1, G3 = P_pad // TM1, Po_pad // TM3

    # Lane-dense (channel-padded) bf16 operands; padded gamma/beta are zero so
    # padded output channels are exactly zero and get sliced off at the end.
    x_p = _pad_last(x, Cin_p)
    x2d = _pad_rows(x_p.reshape(P, Cin_p), P_pad)
    w1 = _pad_last2(p["w1"], Cin_p, Cm_p).astype(bf16)
    w2 = _pad_last2(p["w2"], Cm_p, Cm_p).astype(bf16).reshape(9 * Cm_p, Cm_p)
    w3 = _pad_last2(p["w3"], Cm_p, C4_p).astype(bf16)
    g1, b1 = _pad_last(p["g1"], Cm_p), _pad_last(p["be1"], Cm_p)
    g2, b2 = _pad_last(p["g2"], Cm_p), _pad_last(p["be2"], Cm_p)
    g3, b3 = _pad_last(p["g3"], C4_p), _pad_last(p["be3"], C4_p)

    # ------------- stage 1: 1x1 conv + per-tile BN1 stats (row-tiled) -------- #
    # TODO(synk): single-buffer the resident weight blocks (constant index_map)
    # with pipeline_mode=pl.Buffered(1) once verified on the target jax version.
    y1, st1 = pl.pallas_call(
        _stage1_kernel,
        grid=(G1,),
        in_specs=[pl.BlockSpec((TM1, Cin_p), lambda i: (i, 0)),
                  pl.BlockSpec((Cin_p, Cm_p), lambda i: (0, 0))],
        out_specs=(pl.BlockSpec((TM1, Cm_p), lambda i: (i, 0)),
                   pl.BlockSpec((1, 2, Cm_p), lambda i: (i, 0, 0))),
        out_shape=(jax.ShapeDtypeStruct((P_pad, Cm_p), bf16),
                   jax.ShapeDtypeStruct((G1, 2, Cm_p), f32)),
        compiler_params=_cparams(("parallel",)),
    )(x2d, w1)
    s1, t1 = _bn_scale_shift(st1, float(P), g1, b1)

    # ---- stage 2: relu(BN1) fused + 3x3 conv (im2col matmul) + BN2 stats ---- #
    # TODO(synk): strip-tile the spatial dims (grid=(N, H//strip) with a halo)
    # to bound VMEM for very large H*W*Cmid on v7x.
    y1_4d = (y1 if P_pad == P else y1[:P]).reshape(N, H, W, Cm_p)
    Wpad = _round_up(W + 2, 8)
    y2_4d, st2 = pl.pallas_call(
        functools.partial(_stage2_kernel, stride=stride,
                          H=H, W=W, Ho=Ho, Wo=Wo, Wpad=Wpad),
        grid=(N,),
        in_specs=[pl.BlockSpec((1, H, W, Cm_p), lambda n: (n, 0, 0, 0)),
                  pl.BlockSpec((1, Cm_p), lambda n: (0, 0)),
                  pl.BlockSpec((1, Cm_p), lambda n: (0, 0)),
                  pl.BlockSpec((9 * Cm_p, Cm_p), lambda n: (0, 0))],
        out_specs=(pl.BlockSpec((1, Ho, Wo, Cm_p), lambda n: (n, 0, 0, 0)),
                   pl.BlockSpec((1, 2, Cm_p), lambda n: (n, 0, 0))),
        out_shape=(jax.ShapeDtypeStruct((N, Ho, Wo, Cm_p), bf16),
                   jax.ShapeDtypeStruct((N, 2, Cm_p), f32)),
        scratch_shapes=[pltpu.VMEM((H + 2, Wpad, Cm_p), bf16),
                        pltpu.VMEM((Ho * Wo, 9 * Cm_p), bf16)],
        compiler_params=_cparams(("parallel",)),
    )(y1_4d, s1, t1, w2)
    s2, t2 = _bn_scale_shift(st2, float(Po), g2, b2)

    # ---- stage 3: relu(BN2) fused + 1x1 conv (+shortcut conv) + stats ------- #
    y2_2d = _pad_rows(y2_4d.reshape(Po, Cm_p), Po_pad)
    if stride == 1:
        x_sc = x2d                      # identical rows, no extra HBM traffic
    else:
        # TODO(synk): fold the stride-2 shortcut subsampling into the stage-3
        # index_map / an in-kernel strided DMA instead of this XLA strided slice.
        x_sc = _pad_rows(x_p[:, ::stride, ::stride, :].reshape(Po, Cin_p), Po_pad)
    use_proj = (stride != 1) or (Cin != C4)

    if use_proj:
        wsc = _pad_last2(p["wsc"], Cin_p, C4_p).astype(bf16)
        gsc, bsc = _pad_last(p["gsc"], C4_p), _pad_last(p["besc"], C4_p)
        y3, sc, st3, stsc = pl.pallas_call(
            functools.partial(_stage3_proj_kernel, rows_valid=Po, tm=TM3),
            grid=(G3,),
            in_specs=[pl.BlockSpec((TM3, Cm_p), lambda i: (i, 0)),
                      pl.BlockSpec((1, Cm_p), lambda i: (0, 0)),
                      pl.BlockSpec((1, Cm_p), lambda i: (0, 0)),
                      pl.BlockSpec((Cm_p, C4_p), lambda i: (0, 0)),
                      pl.BlockSpec((TM3, Cin_p), lambda i: (i, 0)),
                      pl.BlockSpec((Cin_p, C4_p), lambda i: (0, 0))],
            out_specs=(pl.BlockSpec((TM3, C4_p), lambda i: (i, 0)),
                       pl.BlockSpec((TM3, C4_p), lambda i: (i, 0)),
                       pl.BlockSpec((1, 2, C4_p), lambda i: (i, 0, 0)),
                       pl.BlockSpec((1, 2, C4_p), lambda i: (i, 0, 0))),
            out_shape=(jax.ShapeDtypeStruct((Po_pad, C4_p), bf16),
                       jax.ShapeDtypeStruct((Po_pad, C4_p), bf16),
                       jax.ShapeDtypeStruct((G3, 2, C4_p), f32),
                       jax.ShapeDtypeStruct((G3, 2, C4_p), f32)),
            compiler_params=_cparams(("parallel",)),
        )(y2_2d, s2, t2, w3, x_sc, wsc)
        s3, t3 = _bn_scale_shift(st3, float(Po), g3, b3)
        ssc, tsc = _bn_scale_shift(stsc, float(Po), gsc, bsc)
        out2d = pl.pallas_call(
            _finalize_proj_kernel,
            grid=(G3,),
            in_specs=[pl.BlockSpec((TM3, C4_p), lambda i: (i, 0)),
                      pl.BlockSpec((TM3, C4_p), lambda i: (i, 0)),
                      pl.BlockSpec((1, C4_p), lambda i: (0, 0)),
                      pl.BlockSpec((1, C4_p), lambda i: (0, 0)),
                      pl.BlockSpec((1, C4_p), lambda i: (0, 0)),
                      pl.BlockSpec((1, C4_p), lambda i: (0, 0))],
            out_specs=pl.BlockSpec((TM3, C4_p), lambda i: (i, 0)),
            out_shape=jax.ShapeDtypeStruct((Po_pad, C4_p), f32),
            compiler_params=_cparams(("parallel",)),
        )(y3, sc, s3, t3, ssc, tsc)
    else:
        y3, st3 = pl.pallas_call(
            functools.partial(_stage3_id_kernel, rows_valid=Po, tm=TM3),
            grid=(G3,),
            in_specs=[pl.BlockSpec((TM3, Cm_p), lambda i: (i, 0)),
                      pl.BlockSpec((1, Cm_p), lambda i: (0, 0)),
                      pl.BlockSpec((1, Cm_p), lambda i: (0, 0)),
                      pl.BlockSpec((Cm_p, C4_p), lambda i: (0, 0))],
            out_specs=(pl.BlockSpec((TM3, C4_p), lambda i: (i, 0)),
                       pl.BlockSpec((1, 2, C4_p), lambda i: (i, 0, 0))),
            out_shape=(jax.ShapeDtypeStruct((Po_pad, C4_p), bf16),
                       jax.ShapeDtypeStruct((G3, 2, C4_p), f32)),
            compiler_params=_cparams(("parallel",)),
        )(y2_2d, s2, t2, w3)
        s3, t3 = _bn_scale_shift(st3, float(Po), g3, b3)
        out2d = pl.pallas_call(
            _finalize_id_kernel,
            grid=(G3,),
            in_specs=[pl.BlockSpec((TM3, C4_p), lambda i: (i, 0)),
                      pl.BlockSpec((TM3, C4_p), lambda i: (i, 0)),
                      pl.BlockSpec((1, C4_p), lambda i: (0, 0)),
                      pl.BlockSpec((1, C4_p), lambda i: (0, 0))],
            out_specs=pl.BlockSpec((TM3, C4_p), lambda i: (i, 0)),
            out_shape=jax.ShapeDtypeStruct((Po_pad, C4_p), f32),
            compiler_params=_cparams(("parallel",)),
        )(y3, x_sc, s3, t3)

    out = out2d[:Po, :C4].reshape(N, Ho, Wo, C4)
    return jnp.transpose(out, (0, 3, 1, 2))   # back to NCHW at the block boundary


# -------------------------------- reference --------------------------------- #

def reference_forward(x_nchw, p, stride=1):
    x = jnp.transpose(x_nchw, (0, 2, 3, 1)).astype(jnp.float32)
    dn = ("NHWC", "HWIO", "NHWC")
    hp = lax.Precision.HIGHEST

    def conv(v, w, b, s, pad):
        y = lax.conv_general_dilated(v, w, (s, s), pad, dimension_numbers=dn,
                                     precision=hp)
        return y + b.reshape(1, 1, 1, -1)

    def bn(y, g, be):
        m = jnp.mean(y, axis=(0, 1, 2), keepdims=True)
        v = jnp.mean(jnp.square(y - m), axis=(0, 1, 2), keepdims=True)
        return (y - m) * lax.rsqrt(v + EPS) * g.reshape(1, 1, 1, -1) + be.reshape(1, 1, 1, -1)

    Cin, C4 = p["w1"].shape[0], p["w3"].shape[1]
    o = jax.nn.relu(bn(conv(x, p["w1"][None, None], p["b1"], 1, ((0, 0), (0, 0))),
                       p["g1"], p["be1"]))
    o = jax.nn.relu(bn(conv(o, p["w2"], p["b2"], stride, ((1, 1), (1, 1))),
                       p["g2"], p["be2"]))
    o = bn(conv(o, p["w3"][None, None], p["b3"], 1, ((0, 0), (0, 0))),
           p["g3"], p["be3"])
    if stride != 1 or Cin != C4:
        sc = bn(conv(x, p["wsc"][None, None], p["bsc"], stride, ((0, 0), (0, 0))),
                p["gsc"], p["besc"])
    else:
        sc = x
    return jnp.transpose(jax.nn.relu(o + sc), (0, 3, 1, 2))


# ----------------------------------- main ------------------------------------ #

def make_params(key, in_channels, out_channels, expansion=4):
    Cin, Cm, C4 = in_channels, out_channels, out_channels * expansion
    ks = jax.random.split(key, 8)
    f32 = jnp.float32

    def w(k, shape, fan_in):
        return jax.random.normal(k, shape, f32) / jnp.sqrt(float(fan_in))

    return {
        # conv weights: 1x1 convs stored as (Cin, Cout); 3x3 as (kh, kw, Cin, Cout)
        "w1": w(ks[0], (Cin, Cm), Cin),        "b1": w(ks[1], (Cm,), Cin),
        "w2": w(ks[2], (3, 3, Cm, Cm), 9 * Cm), "b2": w(ks[3], (Cm,), 9 * Cm),
        "w3": w(ks[4], (Cm, C4), Cm),          "b3": w(ks[5], (C4,), Cm),
        "wsc": w(ks[6], (Cin, C4), Cin),       "bsc": w(ks[7], (C4,), Cin),
        # BatchNorm affine params: PyTorch default init (gamma=1, beta=0)
        "g1": jnp.ones((Cm,), f32),  "be1": jnp.zeros((Cm,), f32),
        "g2": jnp.ones((Cm,), f32),  "be2": jnp.zeros((Cm,), f32),
        "g3": jnp.ones((C4,), f32),  "be3": jnp.zeros((C4,), f32),
        "gsc": jnp.ones((C4,), f32), "besc": jnp.zeros((C4,), f32),
    }


if __name__ == "__main__":
    key = jax.random.PRNGKey(0)
    k_x, k_p = jax.random.split(key)

    N, Cin, H, W = 2, 4, 16, 16
    out_channels, stride = 4, 1          # projection shortcut: Cin != out_channels*4

    x = jax.random.normal(k_x, (N, Cin, H, W), jnp.float32)
    params = make_params(k_p, Cin, out_channels)

    out = jax.block_until_ready(bottleneck_forward(x, params, stride=stride))
    ref = jax.block_until_ready(reference_forward(x, params, stride=stride))

    assert out.shape == (N, out_channels * 4, H, W), out.shape
    # bf16 MXU operands vs f32 reference -> allow a few tenths of a percent drift
    assert jnp.allclose(out, ref, atol=3e-2, rtol=3e-2), float(jnp.max(jnp.abs(out - ref)))

    print("KERNEL_OK")
</pallas_src>

<mosaic_0001>
module attributes {stable_mosaic.version = 11 : i64} {
  func.func @_stage1_kernel(%arg0: i32, %arg1: memref<512x128xbf16, #tpu.memory_space<vmem>>, %arg2: memref<128x128xbf16, #tpu.memory_space<vmem>>, %arg3: memref<512x128xbf16, #tpu.memory_space<vmem>>, %arg4: memref<1x2x128xf32, #tpu.memory_space<vmem>>) attributes {dimension_semantics = [#tpu.dimension_semantics<parallel>], iteration_bounds = array<i64: 1>, scalar_prefetch = 0 : i64, scratch_operands = 0 : i64, tpu.core_type = #tpu.core_type<tc>, window_params = [{transform_indices = @transform_0, window_bounds = array<i64: 512, 128>}, {pipeline_mode = #tpu.pipeline_mode<synchronous>, transform_indices = @transform_1, window_bounds = array<i64: 128, 128>}, {transform_indices = @transform_2, window_bounds = array<i64: 512, 128>}, {transform_indices = @transform_3, window_bounds = array<i64: 1, 2, 128>}]} {
    %c0 = arith.constant 0 : index
    %c0_0 = arith.constant 0 : index
    %0 = vector.load %arg1[%c0, %c0_0] : memref<512x128xbf16, #tpu.memory_space<vmem>>, vector<512x128xbf16>
    %c0_1 = arith.constant 0 : index
    %c0_2 = arith.constant 0 : index
    %1 = vector.load %arg2[%c0_1, %c0_2] : memref<128x128xbf16, #tpu.memory_space<vmem>>, vector<128x128xbf16>
    %cst = arith.constant dense<0.000000e+00> : vector<512x128xf32>
    %2 = tpu.matmul %0, %1, %cst {dimension_numbers = #tpu.dot_dimension_numbers<[1], [0], [0], [1], [0, 0, 1, 1], [], []>} : vector<512x128xbf16>, vector<128x128xbf16>, vector<512x128xf32> -> vector<512x128xf32>
    %3 = arith.truncf %2 : vector<512x128xf32> to vector<512x128xbf16>
    %c0_3 = arith.constant 0 : index
    %c0_4 = arith.constant 0 : index
    %4 = vector.load %arg3[%c0_3, %c0_4] : memref<512x128xbf16, #tpu.memory_space<vmem>>, vector<512x128xbf16>
    tpu.vector_store %arg3[%c0_3, %c0_4], %3 {strides = array<i32>} : memref<512x128xbf16, #tpu.memory_space<vmem>>, vector<512x128xbf16>,
    %cst_5 = arith.constant dense<0.000000e+00> : vector<128xf32>
    %5 = vector.multi_reduction <add>, %2, %cst_5 [0] : vector<512x128xf32> to vector<128xf32>
    %6 = vector.shape_cast %5 : vector<128xf32> to vector<1x128xf32>
    %7 = arith.mulf %2, %2 : vector<512x128xf32>
    %cst_6 = arith.constant dense<0.000000e+00> : vector<128xf32>
    %8 = vector.multi_reduction <add>, %7, %cst_6 [0] : vector<512x128xf32> to vector<128xf32>
    %9 = vector.shape_cast %8 : vector<128xf32> to vector<1x128xf32>
    %10 = tpu.concatenate %6, %9 in 0 : vector<1x128xf32>, vector<1x128xf32> -> vector<2x128xf32>
    %11 = vector.shape_cast %10 : vector<2x128xf32> to vector<1x2x128xf32>
    %c0_7 = arith.constant 0 : index
    %c0_8 = arith.constant 0 : index
    %c0_9 = arith.constant 0 : index
    %12 = vector.load %arg4[%c0_7, %c0_8, %c0_9] : memref<1x2x128xf32, #tpu.memory_space<vmem>>, vector<1x2x128xf32>
    tpu.vector_store %arg4[%c0_7, %c0_8, %c0_9], %11 {strides = array<i32>} : memref<1x2x128xf32, #tpu.memory_space<vmem>>, vector<1x2x128xf32>,
    return
  }
  func.func @transform_0(%arg0: i32) -> (i32, i32) {
    %c0_i32 = arith.constant 0 : i32
    %c0_i32_0 = arith.constant 0 : i32
    return %arg0, %c0_i32 : i32, i32
  }
  func.func @transform_1(%arg0: i32) -> (i32, i32) {
    %c0_i32 = arith.constant 0 : i32
    %c0_i32_0 = arith.constant 0 : i32
    %c0_i32_1 = arith.constant 0 : i32
    return %c0_i32, %c0_i32_0 : i32, i32
  }
  func.func @transform_2(%arg0: i32) -> (i32, i32) {
    %c0_i32 = arith.constant 0 : i32
    %c0_i32_0 = arith.constant 0 : i32
    return %arg0, %c0_i32 : i32, i32
  }
  func.func @transform_3(%arg0: i32) -> (i32, i32, i32) {
    %c0_i32 = arith.constant 0 : i32
    %c0_i32_0 = arith.constant 0 : i32
    %c0_i32_1 = arith.constant 0 : i32
    return %arg0, %c0_i32, %c0_i32_0 : i32, i32, i32
  }
}

module attributes {stable_mosaic.version = 11 : i64} {
  func.func @_stage2_kernel(%arg0: i32, %arg1: memref<1x16x16x128xbf16, #tpu.memory_space<vmem>>, %arg2: memref<1x128xf32, #tpu.memory_space<vmem>>, %arg3: memref<1x128xf32, #tpu.memory_space<vmem>>, %arg4: memref<1152x128xbf16, #tpu.memory_space<vmem>>, %arg5: memref<1x16x16x128xbf16, #tpu.memory_space<vmem>>, %arg6: memref<1x2x128xf32, #tpu.memory_space<vmem>>, %arg7: memref<18x24x128xbf16, #tpu.memory_space<vmem>>, %arg8: memref<256x1152xbf16, #tpu.memory_space<vmem>>) attributes {dimension_semantics = [#tpu.dimension_semantics<parallel>], iteration_bounds = array<i64: 2>, scalar_prefetch = 0 : i64, scratch_operands = 2 : i64, tpu.core_type = #tpu.core_type<tc>, window_params = [{transform_indices = @transform_0, window_bounds = array<i64: 1, 16, 16, 128>}, {pipeline_mode = #tpu.pipeline_mode<synchronous>, transform_indices = @transform_1, window_bounds = array<i64: 1, 128>}, {pipeline_mode = #tpu.pipeline_mode<synchronous>, transform_indices = @transform_2, window_bounds = array<i64: 1, 128>}, {pipeline_mode = #tpu.pipeline_mode<synchronous>, transform_indices = @transform_3, window_bounds = array<i64: 1152, 128>}, {transform_indices = @transform_4, window_bounds = array<i64: 1, 16, 16, 128>}, {transform_indices = @transform_5, window_bounds = array<i64: 1, 2, 128>}]} {
    %cst = arith.constant 0.000000e+00 : bf16
    %0 = vector.broadcast %cst : bf16 to vector<1x24x128xbf16>
    %c0 = arith.constant 0 : index
    %c0_0 = arith.constant 0 : index
    %c0_1 = arith.constant 0 : index
    %1 = vector.load %arg7[%c0, %c0_0, %c0_1] : memref<18x24x128xbf16, #tpu.memory_space<vmem>>, vector<1x24x128xbf16>
    tpu.vector_store %arg7[%c0, %c0_0, %c0_1], %0 {strides = array<i32>} : memref<18x24x128xbf16, #tpu.memory_space<vmem>>, vector<1x24x128xbf16>,
    %cst_2 = arith.constant 0.000000e+00 : bf16
    %2 = vector.broadcast %cst_2 : bf16 to vector<1x24x128xbf16>
    %c17 = arith.constant 17 : index
    %c0_3 = arith.constant 0 : index
    %c0_4 = arith.constant 0 : index
    %3 = vector.load %arg7[%c17, %c0_3, %c0_4] : memref<18x24x128xbf16, #tpu.memory_space<vmem>>, vector<1x24x128xbf16>
    tpu.vector_store %arg7[%c17, %c0_3, %c0_4], %2 {strides = array<i32>} : memref<18x24x128xbf16, #tpu.memory_space<vmem>>, vector<1x24x128xbf16>,
    %cst_5 = arith.constant 0.000000e+00 : bf16
    %4 = vector.broadcast %cst_5 : bf16 to vector<16x1x128xbf16>
    %c1 = arith.constant 1 : index
    %c0_6 = arith.constant 0 : index
    %c0_7 = arith.constant 0 : index
    %5 = vector.load %arg7[%c1, %c0_6, %c0_7] : memref<18x24x128xbf16, #tpu.memory_space<vmem>>, vector<16x1x128xbf16>
    tpu.vector_store %arg7[%c1, %c0_6, %c0_7], %4 {strides = array<i32>} : memref<18x24x128xbf16, #tpu.memory_space<vmem>>, vector<16x1x128xbf16>,
    %cst_8 = arith.constant 0.000000e+00 : bf16
    %6 = vector.broadcast %cst_8 : bf16 to vector<16x7x128xbf16>
    %c1_9 = arith.constant 1 : index
    %c17_10 = arith.constant 17 : index
    %c0_11 = arith.constant 0 : index
    %7 = vector.load %arg7[%c1_9, %c17_10, %c0_11] : memref<18x24x128xbf16, #tpu.memory_space<vmem>>, vector<16x7x128xbf16>
    tpu.vector_store %arg7[%c1_9, %c17_10, %c0_11], %6 {strides = array<i32>} : memref<18x24x128xbf16, #tpu.memory_space<vmem>>, vector<16x7x128xbf16>,
    %c0_12 = arith.constant 0 : index
    %c0_13 = arith.constant 0 : index
    %c0_14 = arith.constant 0 : index
    %c0_15 = arith.constant 0 : index
    %8 = vector.load %arg1[%c0_12, %c0_13, %c0_14, %c0_15] : memref<1x16x16x128xbf16, #tpu.memory_space<vmem>>, vector<1x16x16x128xbf16>
    %9 = vector.shape_cast %8 : vector<1x16x16x128xbf16> to vector<16x16x128xbf16>
    %10 = arith.extf %9 : vector<16x16x128xbf16> to vector<16x16x128xf32>
    %c0_16 = arith.constant 0 : index
    %c0_17 = arith.constant 0 : index
    %11 = vector.load %arg2[%c0_16, %c0_17] : memref<1x128xf32, #tpu.memory_space<vmem>>, vector<1x128xf32>
    %12 = vector.shape_cast %11 : vector<1x128xf32> to vector<1x1x128xf32>
    %13 = vector.broadcast %12 : vector<1x1x128xf32> to vector<16x16x128xf32>
    %14 = arith.mulf %10, %13 : vector<16x16x128xf32>
    %c0_18 = arith.constant 0 : index
    %c0_19 = arith.constant 0 : index
    %15 = vector.load %arg3[%c0_18, %c0_19] : memref<1x128xf32, #tpu.memory_space<vmem>>, vector<1x128xf32>
    %16 = vector.shape_cast %15 : vector<1x128xf32> to vector<1x1x128xf32>
    %17 = vector.broadcast %16 : vector<1x1x128xf32> to vector<16x16x128xf32>
    %18 = arith.addf %14, %17 : vector<16x16x128xf32>
    %cst_20 = arith.constant 0.000000e+00 : f32
    %19 = vector.broadcast %cst_20 : f32 to vector<16x16x128xf32>
    %20 = arith.maximumf %18, %19 : vector<16x16x128xf32>
    %21 = arith.truncf %20 : vector<16x16x128xf32> to vector<16x16x128xbf16>
    %c1_21 = arith.constant 1 : index
    %c1_22 = arith.constant 1 : index
    %c0_23 = arith.constant 0 : index
    %22 = vector.load %arg7[%c1_21, %c1_22, %c0_23] : memref<18x24x128xbf16, #tpu.memory_space<vmem>>, vector<16x16x128xbf16>
    tpu.vector_store %arg7[%c1_21, %c1_22, %c0_23], %21 {strides = array<i32>} : memref<18x24x128xbf16, #tpu.memory_space<vmem>>, vector<16x16x128xbf16>,
    %c0_24 = arith.constant 0 : index
    %c0_25 = arith.constant 0 : index
    %c0_26 = arith.constant 0 : index
    %23 = vector.load %arg7[%c0_24, %c0_25, %c0_26] : memref<18x24x128xbf16, #tpu.memory_space<vmem>>, vector<16x24x128xbf16>
    %24 = vector.extract_strided_slice %23 {offsets = [0, 0, 0], sizes = [16, 16, 128], strides = [1, 1, 1]} : vector<16x24x128xbf16> to vector<16x16x128xbf16>
    %25 = vector.shape_cast %24 : vector<16x16x128xbf16> to vector<256x128xbf16>
    %c0_27 = arith.constant 0 : index
    %c0_28 = arith.constant 0 : index
    %26 = vector.load %arg8[%c0_27, %c0_28] : memref<256x1152xbf16, #tpu.memory_space<vmem>>, vector<256x128xbf16>
    tpu.vector_store %arg8[%c0_27, %c0_28], %25 {strides = array<i32>} : memref<256x1152xbf16, #tpu.memory_space<vmem>>, vector<256x128xbf16>,
    %27 = vector.extract_strided_slice %23 {offsets = [0, 1, 0], sizes = [16, 16, 128], strides = [1, 1, 1]} : vector<16x24x128xbf16> to vector<16x16x128xbf16>
    %28 = vector.shape_cast %27 : vector<16x16x128xbf16> to vector<256x128xbf16>
    %c0_29 = arith.constant 0 : index
    %c128 = arith.constant 128 : index
    %29 = vector.load %arg8[%c0_29, %c128] : memref<256x1152xbf16, #tpu.memory_space<vmem>>, vector<256x128xbf16>
    tpu.vector_store %arg8[%c0_29, %c128], %28 {strides = array<i32>} : memref<256x1152xbf16, #tpu.memory_space<vmem>>, vector<256x128xbf16>,
    %30 = vector.extract_strided_slice %23 {offsets = [0, 2, 0], sizes = [16, 16, 128], strides = [1, 1, 1]} : vector<16x24x128xbf16> to vector<16x16x128xbf16>
    %31 = vector.shape_cast %30 : vector<16x16x128xbf16> to vector<256x128xbf16>
    %c0_30 = arith.constant 0 : index
    %c256 = arith.constant 256 : index
    %32 = vector.load %arg8[%c0_30, %c256] : memref<256x1152xbf16, #tpu.memory_space<vmem>>, vector<256x128xbf16>
    tpu.vector_store %arg8[%c0_30, %c256], %31 {strides = array<i32>} : memref<256x1152xbf16, #tpu.memory_space<vmem>>, vector<256x128xbf16>,
    %c1_31 = arith.constant 1 : index
    %c0_32 = arith.constant 0 : index
    %c0_33 = arith.constant 0 : index
    %33 = vector.load %arg7[%c1_31, %c0_32, %c0_33] : memref<18x24x128xbf16, #tpu.memory_space<vmem>>, vector<16x24x128xbf16>
    %34 = vector.extract_strided_slice %33 {offsets = [0, 0, 0], sizes = [16, 16, 128], strides = [1, 1, 1]} : vector<16x24x128xbf16> to vector<16x16x128xbf16>
    %35 = vector.shape_cast %34 : vector<16x16x128xbf16> to vector<256x128xbf16>
    %c0_34 = arith.constant 0 : index
    %c384 = arith.constant 384 : index
    %36 = vector.load %arg8[%c0_34, %c384] : memref<256x1152xbf16, #tpu.memory_space<vmem>>, vector<256x128xbf16>
    tpu.vector_store %arg8[%c0_34, %c384], %35 {strides = array<i32>} : memref<256x1152xbf16, #tpu.memory_space<vmem>>, vector<256x128xbf16>,
    %37 = vector.extract_strided_slice %33 {offsets = [0, 1, 0], sizes = [16, 16, 128], strides = [1, 1, 1]} : vector<16x24x128xbf16> to vector<16x16x128xbf16>
    %38 = vector.shape_cast %37 : vector<16x16x128xbf16> to vector<256x128xbf16>
    %c0_35 = arith.constant 0 : index
    %c512 = arith.constant 512 : index
    %39 = vector.load %arg8[%c0_35, %c512] : memref<256x1152xbf16, #tpu.memory_space<vmem>>, vector<256x128xbf16>
    tpu.vector_store %arg8[%c0_35, %c512], %38 {strides = array<i32>} : memref<256x1152xbf16, #tpu.memory_space<vmem>>, vector<256x128xbf16>,
    %40 = vector.extract_strided_slice %33 {offsets = [0, 2, 0], sizes = [16, 16, 128], strides = [1, 1, 1]} : vector<16x24x128xbf16> to vector<16x16x128xbf16>
    %41 = vector.shape_cast %40 : vector<16x16x128xbf16> to vector<256x128xbf16>
    %c0_36 = arith.constant 0 : index
    %c640 = arith.constant 640 : index
    %42 = vector.load %arg8[%c0_36, %c640] : memref<256x1152xbf16, #tpu.memory_space<vmem>>, vector<256x128xbf16>
    tpu.vector_store %arg8[%c0_36, %c640], %41 {strides = array<i32>} : memref<256x1152xbf16, #tpu.memory_space<vmem>>, vector<256x128xbf16>,
    %c2 = arith.constant 2 : index
    %c0_37 = arith.constant 0 : index
    %c0_38 = arith.constant 0 : index
    %43 = vector.load %arg7[%c2, %c0_37, %c0_38] : memref<18x24x128xbf16, #tpu.memory_space<vmem>>, vector<16x24x128xbf16>
    %44 = vector.extract_strided_slice %43 {offsets = [0, 0, 0], sizes = [16, 16, 128], strides = [1, 1, 1]} : vector<16x24x128xbf16> to vector<16x16x128xbf16>
    %45 = vector.shape_cast %44 : vector<16x16x128xbf16> to vector<256x128xbf16>
    %c0_39 = arith.constant 0 : index
    %c768 = arith.constant 768 : index
    %46 = vector.load %arg8[%c0_39, %c768] : memref<256x1152xbf16, #tpu.memory_space<vmem>>, vector<256x128xbf16>
    tpu.vector_store %arg8[%c0_39, %c768], %45 {strides = array<i32>} : memref<256x1152xbf16, #tpu.memory_space<vmem>>, vector<256x128xbf16>,
    %47 = vector.extract_strided_slice %43 {offsets = [0, 1, 0], sizes = [16, 16, 128], strides = [1, 1, 1]} : vector<16x24x128xbf16> to vector<16x16x128xbf16>
    %48 = vector.shape_cast %47 : vector<16x16x128xbf16> to vector<256x128xbf16>
    %c0_40 = arith.constant 0 : index
    %c896 = arith.constant 896 : index
    %49 = vector.load %arg8[%c0_40, %c896] : memref<256x1152xbf16, #tpu.memory_space<vmem>>, vector<256x128xbf16>
    tpu.vector_store %arg8[%c0_40, %c896], %48 {strides = array<i32>} : memref<256x1152xbf16, #tpu.memory_space<vmem>>, vector<256x128xbf16>,
    %50 = vector.extract_strided_slice %43 {offsets = [0, 2, 0], sizes = [16, 16, 128], strides = [1, 1, 1]} : vector<16x24x128xbf16> to vector<16x16x128xbf16>
    %51 = vector.shape_cast %50 : vector<16x16x128xbf16> to vector<256x128xbf16>
    %c0_41 = arith.constant 0 : index
    %c1024 = arith.constant 1024 : index
    %52 = vector.load %arg8[%c0_41, %c1024] : memref<256x1152xbf16, #tpu.memory_space<vmem>>, vector<256x128xbf16>
    tpu.vector_store %arg8[%c0_41, %c1024], %51 {strides = array<i32>} : memref<256x1152xbf16, #tpu.memory_space<vmem>>, vector<256x128xbf16>,
    %c0_42 = arith.constant 0 : index
    %c0_43 = arith.constant 0 : index
    %53 = vector.load %arg8[%c0_42, %c0_43] : memref<256x1152xbf16, #tpu.memory_space<vmem>>, vector<256x1152xbf16>
    %c0_44 = arith.constant 0 : index
    %c0_45 = arith.constant 0 : index
    %54 = vector.load %arg4[%c0_44, %c0_45] : memref<1152x128xbf16, #tpu.memory_space<vmem>>, vector<1152x128xbf16>
    %cst_46 = arith.constant dense<0.000000e+00> : vector<256x128xf32>
    %55 = tpu.matmul %53, %54, %cst_46 {dimension_numbers = #tpu.dot_dimension_numbers<[1], [0], [0], [1], [0, 0, 1, 1], [], []>} : vector<256x1152xbf16>, vector<1152x128xbf16>, vector<256x128xf32> -> vector<256x128xf32>
    %56 = vector.shape_cast %55 : vector<256x128xf32> to vector<1x16x16x128xf32>
    %57 = arith.truncf %56 : vector<1x16x16x128xf32> to vector<1x16x16x128xbf16>
    %c0_47 = arith.constant 0 : index
    %c0_48 = arith.constant 0 : index
    %c0_49 = arith.constant 0 : index
    %c0_50 = arith.constant 0 : index
    %58 = vector.load %arg5[%c0_47, %c0_48, %c0_49, %c0_50] : memref<1x16x16x128xbf16, #tpu.memory_space<vmem>>, vector<1x16x16x128xbf16>
    tpu.vector_store %arg5[%c0_47, %c0_48, %c0_49, %c0_50], %57 {strides = array<i32>} : memref<1x16x16x128xbf16, #tpu.memory_space<vmem>>, vector<1x16x16x128xbf16>,
    %cst_51 = arith.constant dense<0.000000e+00> : vector<128xf32>
    %59 = vector.multi_reduction <add>, %55, %cst_51 [0] : vector<256x128xf32> to vector<128xf32>
    %60 = vector.shape_cast %59 : vector<128xf32> to vector<1x128xf32>
    %61 = arith.mulf %55, %55 : vector<256x128xf32>
    %cst_52 = arith.constant dense<0.000000e+00> : vector<128xf32>
    %62 = vector.multi_reduction <add>, %61, %cst_52 [0] : vector<256x128xf32> to vector<128xf32>
    %63 = vector.shape_cast %62 : vector<128xf32> to vector<1x128xf32>
    %64 = tpu.concatenate %60, %63 in 0 : vector<1x128xf32>, vector<1x128xf32> -> vector<2x128xf32>
    %65 = vector.shape_cast %64 : vector<2x128xf32> to vector<1x2x128xf32>
    %c0_53 = arith.constant 0 : index
    %c0_54 = arith.constant 0 : index
    %c0_55 = arith.constant 0 : index
    %66 = vector.load %arg6[%c0_53, %c0_54, %c0_55] : memref<1x2x128xf32, #tpu.memory_space<vmem>>, vector<1x2x128xf32>
    tpu.vector_store %arg6[%c0_53, %c0_54, %c0_55], %65 {strides = array<i32>} : memref<1x2x128xf32, #tpu.memory_space<vmem>>, vector<1x2x128xf32>,
    return
  }
  func.func @transform_0(%arg0: i32) -> (i32, i32, i32, i32) {
    %c0_i32 = arith.constant 0 : i32
    %c0_i32_0 = arith.constant 0 : i32
    %c0_i32_1 = arith.constant 0 : i32
    %c0_i32_2 = arith.constant 0 : i32
    return %arg0, %c0_i32, %c0_i32_0, %c0_i32_1 : i32, i32, i32, i32
  }
  func.func @transform_1(%arg0: i32) -> (i32, i32) {
    %c0_i32 = arith.constant 0 : i32
    %c0_i32_0 = arith.constant 0 : i32
    %c0_i32_1 = arith.constant 0 : i32
    return %c0_i32, %c0_i32_0 : i32, i32
  }
  func.func @transform_2(%arg0: i32) -> (i32, i32) {
    %c0_i32 = arith.constant 0 : i32
    %c0_i32_0 = arith.constant 0 : i32
    %c0_i32_1 = arith.constant 0 : i32
    return %c0_i32, %c0_i32_0 : i32, i32
  }
  func.func @transform_3(%arg0: i32) -> (i32, i32) {
    %c0_i32 = arith.constant 0 : i32
    %c0_i32_0 = arith.constant 0 : i32
    %c0_i32_1 = arith.constant 0 : i32
    return %c0_i32, %c0_i32_0 : i32, i32
  }
  func.func @transform_4(%arg0: i32) -> (i32, i32, i32, i32) {
    %c0_i32 = arith.constant 0 : i32
    %c0_i32_0 = arith.constant 0 : i32
    %c0_i32_1 = arith.constant 0 : i32
    %c0_i32_2 = arith.constant 0 : i32
    return %arg0, %c0_i32, %c0_i32_0, %c0_i32_1 : i32, i32, i32, i32
  }
  func.func @transform_5(%arg0: i32) -> (i32, i32, i32) {
    %c0_i32 = arith.constant 0 : i32
    %c0_i32_0 = arith.constant 0 : i32
    %c0_i32_1 = arith.constant 0 : i32
    return %arg0, %c0_i32, %c0_i32_0 : i32, i32, i32
  }
}

module attributes {stable_mosaic.version = 11 : i64} {
  func.func @_stage3_proj_kernel(%arg0: i32, %arg1: memref<512x128xbf16, #tpu.memory_space<vmem>>, %arg2: memref<1x128xf32, #tpu.memory_space<vmem>>, %arg3: memref<1x128xf32, #tpu.memory_space<vmem>>, %arg4: memref<128x128xbf16, #tpu.memory_space<vmem>>, %arg5: memref<512x128xbf16, #tpu.memory_space<vmem>>, %arg6: memref<128x128xbf16, #tpu.memory_space<vmem>>, %arg7: memref<512x128xbf16, #tpu.memory_space<vmem>>, %arg8: memref<512x128xbf16, #tpu.memory_space<vmem>>, %arg9: memref<1x2x128xf32, #tpu.memory_space<vmem>>, %arg10: memref<1x2x128xf32, #tpu.memory_space<vmem>>) attributes {dimension_semantics = [#tpu.dimension_semantics<parallel>], iteration_bounds = array<i64: 1>, scalar_prefetch = 0 : i64, scratch_operands = 0 : i64, tpu.core_type = #tpu.core_type<tc>, window_params = [{transform_indices = @transform_0, window_bounds = array<i64: 512, 128>}, {pipeline_mode = #tpu.pipeline_mode<synchronous>, transform_indices = @transform_1, window_bounds = array<i64: 1, 128>}, {pipeline_mode = #tpu.pipeline_mode<synchronous>, transform_indices = @transform_2, window_bounds = array<i64: 1, 128>}, {pipeline_mode = #tpu.pipeline_mode<synchronous>, transform_indices = @transform_3, window_bounds = array<i64: 128, 128>}, {transform_indices = @transform_4, window_bounds = array<i64: 512, 128>}, {pipeline_mode = #tpu.pipeline_mode<synchronous>, transform_indices = @transform_5, window_bounds = array<i64: 128, 128>}, {transform_indices = @transform_6, window_bounds = array<i64: 512, 128>}, {transform_indices = @transform_7, window_bounds = array<i64: 512, 128>}, {transform_indices = @transform_8, window_bounds = array<i64: 1, 2, 128>}, {transform_indices = @transform_9, window_bounds = array<i64: 1, 2, 128>}]} {
    %c0 = arith.constant 0 : index
    %c0_0 = arith.constant 0 : index
    %0 = vector.load %arg1[%c0, %c0_0] : memref<512x128xbf16, #tpu.memory_space<vmem>>, vector<512x128xbf16>
    %1 = arith.extf %0 : vector<512x128xbf16> to vector<512x128xf32>
    %c0_1 = arith.constant 0 : index
    %c0_2 = arith.constant 0 : index
    %2 = vector.load %arg2[%c0_1, %c0_2] : memref<1x128xf32, #tpu.memory_space<vmem>>, vector<1x128xf32>
    %3 = vector.broadcast %2 : vector<1x128xf32> to vector<512x128xf32>
    %4 = arith.mulf %1, %3 : vector<512x128xf32>
    %c0_3 = arith.constant 0 : index
    %c0_4 = arith.constant 0 : index
    %5 = vector.load %arg3[%c0_3, %c0_4] : memref<1x128xf32, #tpu.memory_space<vmem>>, vector<1x128xf32>
    %6 = vector.broadcast %5 : vector<1x128xf32> to vector<512x128xf32>
    %7 = arith.addf %4, %6 : vector<512x128xf32>
    %cst = arith.constant 0.000000e+00 : f32
    %8 = vector.broadcast %cst : f32 to vector<512x128xf32>
    %9 = arith.maximumf %7, %8 : vector<512x128xf32>
    %10 = arith.truncf %9 : vector<512x128xf32> to vector<512x128xbf16>
    %c0_5 = arith.constant 0 : index
    %c0_6 = arith.constant 0 : index
    %11 = vector.load %arg4[%c0_5, %c0_6] : memref<128x128xbf16, #tpu.memory_space<vmem>>, vector<128x128xbf16>
    %cst_7 = arith.constant dense<0.000000e+00> : vector<512x128xf32>
    %12 = tpu.matmul %10, %11, %cst_7 {dimension_numbers = #tpu.dot_dimension_numbers<[1], [0], [0], [1], [0, 0, 1, 1], [], []>} : vector<512x128xbf16>, vector<128x128xbf16>, vector<512x128xf32> -> vector<512x128xf32>
    %c0_8 = arith.constant 0 : index
    %c0_9 = arith.constant 0 : index
    %13 = vector.load %arg5[%c0_8, %c0_9] : memref<512x128xbf16, #tpu.memory_space<vmem>>, vector<512x128xbf16>
    %c0_10 = arith.constant 0 : index
    %c0_11 = arith.constant 0 : index
    %14 = vector.load %arg6[%c0_10, %c0_11] : memref<128x128xbf16, #tpu.memory_space<vmem>>, vector<128x128xbf16>
    %cst_12 = arith.constant dense<0.000000e+00> : vector<512x128xf32>
    %15 = tpu.matmul %13, %14, %cst_12 {dimension_numbers = #tpu.dot_dimension_numbers<[1], [0], [0], [1], [0, 0, 1, 1], [], []>} : vector<512x128xbf16>, vector<128x128xbf16>, vector<512x128xf32> -> vector<512x128xf32>
    %16 = arith.truncf %12 : vector<512x128xf32> to vector<512x128xbf16>
    %c0_13 = arith.constant 0 : index
    %c0_14 = arith.constant 0 : index
    %17 = vector.load %arg7[%c0_13, %c0_14] : memref<512x128xbf16, #tpu.memory_space<vmem>>, vector<512x128xbf16>
    tpu.vector_store %arg7[%c0_13, %c0_14], %16 {strides = array<i32>} : memref<512x128xbf16, #tpu.memory_space<vmem>>, vector<512x128xbf16>,
    %18 = arith.truncf %15 : vector<512x128xf32> to vector<512x128xbf16>
    %c0_15 = arith.constant 0 : index
    %c0_16 = arith.constant 0 : index
    %19 = vector.load %arg8[%c0_15, %c0_16] : memref<512x128xbf16, #tpu.memory_space<vmem>>, vector<512x128xbf16>
    tpu.vector_store %arg8[%c0_15, %c0_16], %18 {strides = array<i32>} : memref<512x128xbf16, #tpu.memory_space<vmem>>, vector<512x128xbf16>,
    %cst_17 = arith.constant dense<0.000000e+00> : vector<128xf32>
    %20 = vector.multi_reduction <add>, %12, %cst_17 [0] : vector<512x128xf32> to vector<128xf32>
    %21 = vector.shape_cast %20 : vector<128xf32> to vector<1x128xf32>
    %22 = arith.mulf %12, %12 : vector<512x128xf32>
    %cst_18 = arith.constant dense<0.000000e+00> : vector<128xf32>
    %23 = vector.multi_reduction <add>, %22, %cst_18 [0] : vector<512x128xf32> to vector<128xf32>
    %24 = vector.shape_cast %23 : vector<128xf32> to vector<1x128xf32>
    %25 = tpu.concatenate %21, %24 in 0 : vector<1x128xf32>, vector<1x128xf32> -> vector<2x128xf32>
    %26 = vector.shape_cast %25 : vector<2x128xf32> to vector<1x2x128xf32>
    %c0_19 = arith.constant 0 : index
    %c0_20 = arith.constant 0 : index
    %c0_21 = arith.constant 0 : index
    %27 = vector.load %arg9[%c0_19, %c0_20, %c0_21] : memref<1x2x128xf32, #tpu.memory_space<vmem>>, vector<1x2x128xf32>
    tpu.vector_store %arg9[%c0_19, %c0_20, %c0_21], %26 {strides = array<i32>} : memref<1x2x128xf32, #tpu.memory_space<vmem>>, vector<1x2x128xf32>,
    %cst_22 = arith.constant dense<0.000000e+00> : vector<128xf32>
    %28 = vector.multi_reduction <add>, %15, %cst_22 [0] : vector<512x128xf32> to vector<128xf32>
    %29 = vector.shape_cast %28 : vector<128xf32> to vector<1x128xf32>
    %30 = arith.mulf %15, %15 : vector<512x128xf32>
    %cst_23 = arith.constant dense<0.000000e+00> : vector<128xf32>
    %31 = vector.multi_reduction <add>, %30, %cst_23 [0] : vector<512x128xf32> to vector<128xf32>
    %32 = vector.shape_cast %31 : vector<128xf32> to vector<1x128xf32>
    %33 = tpu.concatenate %29, %32 in 0 : vector<1x128xf32>, vector<1x128xf32> -> vector<2x128xf32>
    %34 = vector.shape_cast %33 : vector<2x128xf32> to vector<1x2x128xf32>
    %c0_24 = arith.constant 0 : index
    %c0_25 = arith.constant 0 : index
    %c0_26 = arith.constant 0 : index
    %35 = vector.load %arg10[%c0_24, %c0_25, %c0_26] : memref<1x2x128xf32, #tpu.memory_space<vmem>>, vector<1x2x128xf32>
    tpu.vector_store %arg10[%c0_24, %c0_25, %c0_26], %34 {strides = array<i32>} : memref<1x2x128xf32, #tpu.memory_space<vmem>>, vector<1x2x128xf32>,
    return
  }
  func.func @transform_0(%arg0: i32) -> (i32, i32) {
    %c0_i32 = arith.constant 0 : i32
    %c0_i32_0 = arith.constant 0 : i32
    return %arg0, %c0_i32 : i32, i32
  }
  func.func @transform_1(%arg0: i32) -> (i32, i32) {
    %c0_i32 = arith.constant 0 : i32
    %c0_i32_0 = arith.constant 0 : i32
    %c0_i32_1 = arith.constant 0 : i32
    return %c0_i32, %c0_i32_0 : i32, i32
  }
  func.func @transform_2(%arg0: i32) -> (i32, i32) {
    %c0_i32 = arith.constant 0 : i32
    %c0_i32_0 = arith.constant 0 : i32
    %c0_i32_1 = arith.constant 0 : i32
    return %c0_i32, %c0_i32_0 : i32, i32
  }
  func.func @transform_3(%arg0: i32) -> (i32, i32) {
    %c0_i32 = arith.constant 0 : i32
    %c0_i32_0 = arith.constant 0 : i32
    %c0_i32_1 = arith.constant 0 : i32
    return %c0_i32, %c0_i32_0 : i32, i32
  }
  func.func @transform_4(%arg0: i32) -> (i32, i32) {
    %c0_i32 = arith.constant 0 : i32
    %c0_i32_0 = arith.constant 0 : i32
    return %arg0, %c0_i32 : i32, i32
  }
  func.func @transform_5(%arg0: i32) -> (i32, i32) {
    %c0_i32 = arith.constant 0 : i32
    %c0_i32_0 = arith.constant 0 : i32
    %c0_i32_1 = arith.constant 0 : i32
    return %c0_i32, %c0_i32_0 : i32, i32
  }
  func.func @transform_6(%arg0: i32) -> (i32, i32) {
    %c0_i32 = arith.constant 0 : i32
    %c0_i32_0 = arith.constant 0 : i32
    return %arg0, %c0_i32 : i32, i32
  }
  func.func @transform_7(%arg0: i32) -> (i32, i32) {
    %c0_i32 = arith.constant 0 : i32
    %c0_i32_0 = arith.constant 0 : i32
    return %arg0, %c0_i32 : i32, i32
  }
  func.func @transform_8(%arg0: i32) -> (i32, i32, i32) {
    %c0_i32 = arith.constant 0 : i32
    %c0_i32_0 = arith.constant 0 : i32
    %c0_i32_1 = arith.constant 0 : i32
    return %arg0, %c0_i32, %c0_i32_0 : i32, i32, i32
  }
  func.func @transform_9(%arg0: i32) -> (i32, i32, i32) {
    %c0_i32 = arith.constant 0 : i32
    %c0_i32_0 = arith.constant 0 : i32
    %c0_i32_1 = arith.constant 0 : i32
    return %arg0, %c0_i32, %c0_i32_0 : i32, i32, i32
  }
}

module attributes {stable_mosaic.version = 11 : i64} {
  func.func @_finalize_proj_kernel(%arg0: i32, %arg1: memref<512x128xbf16, #tpu.memory_space<vmem>>, %arg2: memref<512x128xbf16, #tpu.memory_space<vmem>>, %arg3: memref<1x128xf32, #tpu.memory_space<vmem>>, %arg4: memref<1x128xf32, #tpu.memory_space<vmem>>, %arg5: memref<1x128xf32, #tpu.memory_space<vmem>>, %arg6: memref<1x128xf32, #tpu.memory_space<vmem>>, %arg7: memref<512x128xf32, #tpu.memory_space<vmem>>) attributes {dimension_semantics = [#tpu.dimension_semantics<parallel>], iteration_bounds = array<i64: 1>, scalar_prefetch = 0 : i64, scratch_operands = 0 : i64, tpu.core_type = #tpu.core_type<tc>, window_params = [{transform_indices = @transform_0, window_bounds = array<i64: 512, 128>}, {transform_indices = @transform_1, window_bounds = array<i64: 512, 128>}, {pipeline_mode = #tpu.pipeline_mode<synchronous>, transform_indices = @transform_2, window_bounds = array<i64: 1, 128>}, {pipeline_mode = #tpu.pipeline_mode<synchronous>, transform_indices = @transform_3, window_bounds = array<i64: 1, 128>}, {pipeline_mode = #tpu.pipeline_mode<synchronous>, transform_indices = @transform_4, window_bounds = array<i64: 1, 128>}, {pipeline_mode = #tpu.pipeline_mode<synchronous>, transform_indices = @transform_5, window_bounds = array<i64: 1, 128>}, {transform_indices = @transform_6, window_bounds = array<i64: 512, 128>}]} {
    %c0 = arith.constant 0 : index
    %c0_0 = arith.constant 0 : index
    %0 = vector.load %arg1[%c0, %c0_0] : memref<512x128xbf16, #tpu.memory_space<vmem>>, vector<512x128xbf16>
    %1 = arith.extf %0 : vector<512x128xbf16> to vector<512x128xf32>
    %c0_1 = arith.constant 0 : index
    %c0_2 = arith.constant 0 : index
    %2 = vector.load %arg3[%c0_1, %c0_2] : memref<1x128xf32, #tpu.memory_space<vmem>>, vector<1x128xf32>
    %3 = vector.broadcast %2 : vector<1x128xf32> to vector<512x128xf32>
    %4 = arith.mulf %1, %3 : vector<512x128xf32>
    %c0_3 = arith.constant 0 : index
    %c0_4 = arith.constant 0 : index
    %5 = vector.load %arg4[%c0_3, %c0_4] : memref<1x128xf32, #tpu.memory_space<vmem>>, vector<1x128xf32>
    %6 = vector.broadcast %5 : vector<1x128xf32> to vector<512x128xf32>
    %7 = arith.addf %4, %6 : vector<512x128xf32>
    %c0_5 = arith.constant 0 : index
    %c0_6 = arith.constant 0 : index
    %8 = vector.load %arg2[%c0_5, %c0_6] : memref<512x128xbf16, #tpu.memory_space<vmem>>, vector<512x128xbf16>
    %9 = arith.extf %8 : vector<512x128xbf16> to vector<512x128xf32>
    %c0_7 = arith.constant 0 : index
    %c0_8 = arith.constant 0 : index
    %10 = vector.load %arg5[%c0_7, %c0_8] : memref<1x128xf32, #tpu.memory_space<vmem>>, vector<1x128xf32>
    %11 = vector.broadcast %10 : vector<1x128xf32> to vector<512x128xf32>
    %12 = arith.mulf %9, %11 : vector<512x128xf32>
    %c0_9 = arith.constant 0 : index
    %c0_10 = arith.constant 0 : index
    %13 = vector.load %arg6[%c0_9, %c0_10] : memref<1x128xf32, #tpu.memory_space<vmem>>, vector<1x128xf32>
    %14 = vector.broadcast %13 : vector<1x128xf32> to vector<512x128xf32>
    %15 = arith.addf %12, %14 : vector<512x128xf32>
    %16 = arith.addf %7, %15 : vector<512x128xf32>
    %cst = arith.constant 0.000000e+00 : f32
    %17 = vector.broadcast %cst : f32 to vector<512x128xf32>
    %18 = arith.maximumf %16, %17 : vector<512x128xf32>
    %c0_11 = arith.constant 0 : index
    %c0_12 = arith.constant 0 : index
    %19 = vector.load %arg7[%c0_11, %c0_12] : memref<512x128xf32, #tpu.memory_space<vmem>>, vector<512x128xf32>
    tpu.vector_store %arg7[%c0_11, %c0_12], %18 {strides = array<i32>} : memref<512x128xf32, #tpu.memory_space<vmem>>, vector<512x128xf32>,
    return
  }
  func.func @transform_0(%arg0: i32) -> (i32, i32) {
    %c0_i32 = arith.constant 0 : i32
    %c0_i32_0 = arith.constant 0 : i32
    return %arg0, %c0_i32 : i32, i32
  }
  func.func @transform_1(%arg0: i32) -> (i32, i32) {
    %c0_i32 = arith.constant 0 : i32
    %c0_i32_0 = arith.constant 0 : i32
    return %arg0, %c0_i32 : i32, i32
  }
  func.func @transform_2(%arg0: i32) -> (i32, i32) {
    %c0_i32 = arith.constant 0 : i32
    %c0_i32_0 = arith.constant 0 : i32
    %c0_i32_1 = arith.constant 0 : i32
    return %c0_i32, %c0_i32_0 : i32, i32
  }
  func.func @transform_3(%arg0: i32) -> (i32, i32) {
    %c0_i32 = arith.constant 0 : i32
    %c0_i32_0 = arith.constant 0 : i32
    %c0_i32_1 = arith.constant 0 : i32
    return %c0_i32, %c0_i32_0 : i32, i32
  }
  func.func @transform_4(%arg0: i32) -> (i32, i32) {
    %c0_i32 = arith.constant 0 : i32
    %c0_i32_0 = arith.constant 0 : i32
    %c0_i32_1 = arith.constant 0 : i32
    return %c0_i32, %c0_i32_0 : i32, i32
  }
  func.func @transform_5(%arg0: i32) -> (i32, i32) {
    %c0_i32 = arith.constant 0 : i32
    %c0_i32_0 = arith.constant 0 : i32
    %c0_i32_1 = arith.constant 0 : i32
    return %c0_i32, %c0_i32_0 : i32, i32
  }
  func.func @transform_6(%arg0: i32) -> (i32, i32) {
    %c0_i32 = arith.constant 0 : i32
    %c0_i32_0 = arith.constant 0 : i32
    return %arg0, %c0_i32 : i32, i32
  }
}

</mosaic_0001>

<llo_original>
// kernel: bottleneck_forward.4
$region0: #{bottleneck_forward.4}
  #allocation0 [shape = 'u32[]', space=smem, size = 0x4, offset = 0x4, fixed_abs, tag = 'smem constant byte address 0x4 - core index']
  #allocation1 [shape = 'u32[144,128]{1,0:T(1,128)}', space=vmem, size = 0x12000, scoped, tag = 'internal scratch']
  %s0 = inlined_call_operand.vmem [shape: bf16[512,128], index: 0, kind: input, shape index: {}]
  %s1 = inlined_call_operand.vmem [shape: bf16[128,128], index: 1, kind: input, shape index: {}]
  %s2 = inlined_call_operand.vmem [shape: bf16[512,128], index: 2, kind: output, shape index: {0}]
  %s3 = inlined_call_operand.vmem [shape: f32[1,2,128], index: 3, kind: output, shape index: {1}]
  %4 = xla_tuple %s2, %s3
  %s5 = sld [smem:[#allocation0]]
  $region26: #{bottleneck_forward.4} parent=0
    _
  %s7 = ssub.s32 1, %s5
  %s8 = scalar_select 0, %s7, %s5
  // Predicated region
  $region2: #{bottleneck_forward.4} parent=0 // pred_check
    _
  $region3: #{bottleneck_forward.4} parent=0 // pred_check_branch
    %10 = sbr.rel (0) target = $region5
  $region4: #{bottleneck_forward.4} parent=0 // pred_region
    _
  $region5: #{bottleneck_forward.4} parent=0 // pred_fallthru
    _
  // Predicated region
  $region6: #{bottleneck_forward.4} parent=0 // pred_check
    _
  $region7: #{bottleneck_forward.4} parent=0 // pred_check_branch
    %12 = sbr.rel (0) target = $region9
  $region8: #{bottleneck_forward.4} parent=0 // pred_region
    _
  $region9: #{bottleneck_forward.4} parent=0 // pred_fallthru
    _
  %v14 = vld [vmem:[%s0] sm:$0xf]
  %v15 = vld [vmem:[%s0 + $0x4] sm:$0xf]
  %v16 = vld [vmem:[%s0 + $0x8] sm:$0xf]
  %v17 = vld [vmem:[%s0 + $0xc] sm:$0xf]
  %v18 = vld [vmem:[%s0 + $0x10] sm:$0xf]
  %v19 = vld [vmem:[%s0 + $0x14] sm:$0xf]
  %v20 = vld [vmem:[%s0 + $0x18] sm:$0xf]
  %v21 = vld [vmem:[%s0 + $0x1c] sm:$0xf]
  %v22 = vld [vmem:[%s0 + $0x20] sm:$0xf]
  %v23 = vld [vmem:[%s0 + $0x24] sm:$0xf]
  %v24 = vld [vmem:[%s0 + $0x28] sm:$0xf]
  %v25 = vld [vmem:[%s0 + $0x2c] sm:$0xf]
  %v26 = vld [vmem:[%s0 + $0x30] sm:$0xf]
  %v27 = vld [vmem:[%s0 + $0x34] sm:$0xf]
  %v28 = vld [vmem:[%s0 + $0x38] sm:$0xf]
  %v29 = vld [vmem:[%s0 + $0x3c] sm:$0xf]
  %v30 = vld [vmem:[%s0 + $0x40] sm:$0xf]
  %v31 = vld [vmem:[%s0 + $0x44] sm:$0xf]
  %v32 = vld [vmem:[%s0 + $0x48] sm:$0xf]
  %v33 = vld [vmem:[%s0 + $0x4c] sm:$0xf]
  %v34 = vld [vmem:[%s0 + $0x50] sm:$0xf]
  %v35 = vld [vmem:[%s0 + $0x54] sm:$0xf]
  %v36 = vld [vmem:[%s0 + $0x58] sm:$0xf]
  %v37 = vld [vmem:[%s0 + $0x5c] sm:$0xf]
  %v38 = vld [vmem:[%s0 + $0x60] sm:$0xf]
  %v39 = vld [vmem:[%s0 + $0x64] sm:$0xf]
  %v40 = vld [vmem:[%s0 + $0x68] sm:$0xf]
  %v41 = vld [vmem:[%s0 + $0x6c] sm:$0xf]
  %v42 = vld [vmem:[%s0 + $0x70] sm:$0xf]
  %v43 = vld [vmem:[%s0 + $0x74] sm:$0xf]
  %v44 = vld [vmem:[%s0 + $0x78] sm:$0xf]
  %v45 = vld [vmem:[%s0 + $0x7c] sm:$0xf]
  %v46 = vld [vmem:[%s0 + $0x80] sm:$0xf]
  %v47 = vld [vmem:[%s0 + $0x84] sm:$0xf]
  %v48 = vld [vmem:[%s0 + $0x88] sm:$0xf]
  %v49 = vld [vmem:[%s0 + $0x8c] sm:$0xf]
  %v50 = vld [vmem:[%s0 + $0x90] sm:$0xf]
  %v51 = vld [vmem:[%s0 + $0x94] sm:$0xf]
  %v52 = vld [vmem:[%s0 + $0x98] sm:$0xf]
  %v53 = vld [vmem:[%s0 + $0x9c] sm:$0xf]
  %v54 = vld [vmem:[%s0 + $0xa0] sm:$0xf]
  %v55 = vld [vmem:[%s0 + $0xa4] sm:$0xf]
  %v56 = vld [vmem:[%s0 + $0xa8] sm:$0xf]
  %v57 = vld [vmem:[%s0 + $0xac] sm:$0xf]
  %v58 = vld [vmem:[%s0 + $0xb0] sm:$0xf]
  %v59 = vld [vmem:[%s0 + $0xb4] sm:$0xf]
  %v60 = vld [vmem:[%s0 + $0xb8] sm:$0xf]
  %v61 = vld [vmem:[%s0 + $0xbc] sm:$0xf]
  %v62 = vld [vmem:[%s0 + $0xc0] sm:$0xf]
  %v63 = vld [vmem:[%s0 + $0xc4] sm:$0xf]
  %v64 = vld [vmem:[%s0 + $0xc8] sm:$0xf]
  %v65 = vld [vmem:[%s0 + $0xcc] sm:$0xf]
  %v66 = vld [vmem:[%s0 + $0xd0] sm:$0xf]
  %v67 = vld [vmem:[%s0 + $0xd4] sm:$0xf]
  %v68 = vld [vmem:[%s0 + $0xd8] sm:$0xf]
  %v69 = vld [vmem:[%s0 + $0xdc] sm:$0xf]
  %v70 = vld [vmem:[%s0 + $0xe0] sm:$0xf]
  %v71 = vld [vmem:[%s0 + $0xe4] sm:$0xf]
  %v72 = vld [vmem:[%s0 + $0xe8] sm:$0xf]
  %v73 = vld [vmem:[%s0 + $0xec] sm:$0xf]
  %v74 = vld [vmem:[%s0 + $0xf0] sm:$0xf]
  %v75 = vld [vmem:[%s0 + $0xf4] sm:$0xf]
  %v76 = vld [vmem:[%s0 + $0xf8] sm:$0xf]
  %v77 = vld [vmem:[%s0 + $0xfc] sm:$0xf]
  %v78 = vld [vmem:[%s1] sm:$0xf]
  %v79 = vld [vmem:[%s1 + $0x4] sm:$0xf]
  %v80 = vld [vmem:[%s1 + $0x8] sm:$0xf]
  %v81 = vld [vmem:[%s1 + $0xc] sm:$0xf]
  %v82 = vld [vmem:[%s1 + $0x10] sm:$0xf]
  %v83 = vld [vmem:[%s1 + $0x14] sm:$0xf]
  %v84 = vld [vmem:[%s1 + $0x18] sm:$0xf]
  %v85 = vld [vmem:[%s1 + $0x1c] sm:$0xf]
  %v86 = vld [vmem:[%s1 + $0x20] sm:$0xf]
  %v87 = vld [vmem:[%s1 + $0x24] sm:$0xf]
  %v88 = vld [vmem:[%s1 + $0x28] sm:$0xf]
  %v89 = vld [vmem:[%s1 + $0x2c] sm:$0xf]
  %v90 = vld [vmem:[%s1 + $0x30] sm:$0xf]
  %v91 = vld [vmem:[%s1 + $0x34] sm:$0xf]
  %v92 = vld [vmem:[%s1 + $0x38] sm:$0xf]
  %v93 = vld [vmem:[%s1 + $0x3c] sm:$0xf]
  %v158 = vunpack.c.l.b16 %v14
  %v159 = vunpack.c.l.b16 %v15
  %v160 = vunpack.c.l.b16 %v16
  %v161 = vunpack.c.l.b16 %v17
  %v162 = vunpack.c.l.b16 %v18
  %v163 = vunpack.c.l.b16 %v19
  %v164 = vunpack.c.l.b16 %v20
  %v165 = vunpack.c.l.b16 %v21
  %v166 = vunpack.c.l.b16 %v22
  %v167 = vunpack.c.l.b16 %v23
  %v168 = vunpack.c.l.b16 %v24
  %v169 = vunpack.c.l.b16 %v25
  %v170 = vunpack.c.l.b16 %v26
  %v171 = vunpack.c.l.b16 %v27
  %v172 = vunpack.c.l.b16 %v28
  %v173 = vunpack.c.l.b16 %v29
  %v174 = vunpack.c.l.b16 %v30
  %v175 = vunpack.c.l.b16 %v31
  %v176 = vunpack.c.l.b16 %v32
  %v177 = vunpack.c.l.b16 %v33
  %v178 = vunpack.c.l.b16 %v34
  %v179 = vunpack.c.l.b16 %v35
  %v180 = vunpack.c.l.b16 %v36
  %v181 = vunpack.c.l.b16 %v37
  %v182 = vunpack.c.l.b16 %v38
  %v183 = vunpack.c.l.b16 %v39
  %v184 = vunpack.c.l.b16 %v40
  %v185 = vunpack.c.l.b16 %v41
  %v186 = vunpack.c.l.b16 %v42
  %v187 = vunpack.c.l.b16 %v43
  %v188 = vunpack.c.l.b16 %v44
  %v189 = vunpack.c.l.b16 %v45
  %v190 = vunpack.c.l.b16 %v46
  %v191 = vunpack.c.l.b16 %v47
  %v192 = vunpack.c.l.b16 %v48
  %v193 = vunpack.c.l.b16 %v49
  %v194 = vunpack.c.l.b16 %v50
  %v195 = vunpack.c.l.b16 %v51
  %v196 = vunpack.c.l.b16 %v52
  %v197 = vunpack.c.l.b16 %v53
  %v198 = vunpack.c.l.b16 %v54
  %v199 = vunpack.c.l.b16 %v55
  %v200 = vunpack.c.l.b16 %v56
  %v201 = vunpack.c.l.b16 %v57
  %v202 = vunpack.c.l.b16 %v58
  %v203 = vunpack.c.l.b16 %v59
  %v204 = vunpack.c.l.b16 %v60
  %v205 = vunpack.c.l.b16 %v61
  %v206 = vunpack.c.l.b16 %v62
  %v207 = vunpack.c.l.b16 %v63
  %v208 = vunpack.c.l.b16 %v64
  %v209 = vunpack.c.l.b16 %v65
  %v210 = vunpack.c.l.b16 %v66
  %v211 = vunpack.c.l.b16 %v67
  %v212 = vunpack.c.l.b16 %v68
  %v213 = vunpack.c.l.b16 %v69
  %v214 = vunpack.c.l.b16 %v70
  %v215 = vunpack.c.l.b16 %v71
  %v216 = vunpack.c.l.b16 %v72
  %v217 = vunpack.c.l.b16 %v73
  %v218 = vunpack.c.l.b16 %v74
  %v219 = vunpack.c.l.b16 %v75
  %v220 = vunpack.c.l.b16 %v76
  %v221 = vunpack.c.l.b16 %v77
  %v222 = vpack.c.b16 %v159, %v158
  %v223 = vpack.c.b16 %v161, %v160
  %v224 = vpack.c.b16 %v163, %v162
  %v225 = vpack.c.b16 %v165, %v164
  %v226 = vpack.c.b16 %v167, %v166
  %v227 = vpack.c.b16 %v169, %v168
  %v228 = vpack.c.b16 %v171, %v170
  %v229 = vpack.c.b16 %v173, %v172
  %v230 = vpack.c.b16 %v175, %v174
  %v231 = vpack.c.b16 %v177, %v176
  %v232 = vpack.c.b16 %v179, %v178
  %v233 = vpack.c.b16 %v181, %v180
  %v234 = vpack.c.b16 %v183, %v182
  %v235 = vpack.c.b16 %v185, %v184
  %v236 = vpack.c.b16 %v187, %v186
  %v237 = vpack.c.b16 %v189, %v188
  %v238 = vpack.c.b16 %v191, %v190
  %v239 = vpack.c.b16 %v193, %v192
  %v240 = vpack.c.b16 %v195, %v194
  %v241 = vpack.c.b16 %v197, %v196
  %v242 = vpack.c.b16 %v199, %v198
  %v243 = vpack.c.b16 %v201, %v200
  %v244 = vpack.c.b16 %v203, %v202
  %v245 = vpack.c.b16 %v205, %v204
  %v246 = vpack.c.b16 %v207, %v206
  %v247 = vpack.c.b16 %v209, %v208
  %v248 = vpack.c.b16 %v211, %v210
  %v249 = vpack.c.b16 %v213, %v212
  %v250 = vpack.c.b16 %v215, %v214
  %v251 = vpack.c.b16 %v217, %v216
  %v252 = vpack.c.b16 %v219, %v218
  %v253 = vpack.c.b16 %v221, %v220
  %v302 = vunpack.c.l.b16 %v78
  %v303 = vunpack.c.l.b16 %v79
  %v304 = vunpack.c.l.b16 %v80
  %v305 = vunpack.c.l.b16 %v81
  %v306 = vunpack.c.l.b16 %v82
  %v307 = vunpack.c.l.b16 %v83
  %v308 = vunpack.c.l.b16 %v84
  %v309 = vunpack.c.l.b16 %v85
  %v310 = vunpack.c.l.b16 %v86
  %v311 = vunpack.c.l.b16 %v87
  %v312 = vunpack.c.l.b16 %v88
  %v313 = vunpack.c.l.b16 %v89
  %v314 = vunpack.c.l.b16 %v90
  %v315 = vunpack.c.l.b16 %v91
  %v316 = vunpack.c.l.b16 %v92
  %v317 = vunpack.c.l.b16 %v93
  %v318 = vpack.c.b16 %v303, %v302
  %v319 = vpack.c.b16 %v305, %v304
  %v320 = vpack.c.b16 %v307, %v306
  %v321 = vpack.c.b16 %v309, %v308
  %v322 = vpack.c.b16 %v311, %v310
  %v323 = vpack.c.b16 %v313, %v312
  %v324 = vpack.c.b16 %v315, %v314
  %v325 = vpack.c.b16 %v317, %v316
  %334 = vmatprep.subr.bf16.mxu0 0
  %335 = vmatpush1.bf16.msra.mxu0 %v318
  %336 = vmatprep.subr.bf16.mxu0 0
  %337 = vmatpush1.bf16.msra.mxu0 %v319
  %338 = vmatprep.subr.bf16.mxu0 0
  %339 = vmatpush1.bf16.msra.mxu0 %v320
  %340 = vmatprep.subr.bf16.mxu0 0
  %341 = vmatpush1.bf16.msra.mxu0 %v321
  %342 = vmatprep.subr.bf16.mxu0 0
  %343 = vmatpush1.bf16.msra.mxu0 %v322
  %344 = vmatprep.subr.bf16.mxu0 0
  %345 = vmatpush1.bf16.msra.mxu0 %v323
  %346 = vmatprep.subr.bf16.mxu0 0
  %347 = vmatpush1.bf16.msra.mxu0 %v324
  %348 = vmatprep.subr.bf16.mxu0 0
  %349 = vmatpush1.bf16.msra.mxu0 %v325
  %350 = vmatprep.subr.bf16.mxu0 0
  %351 = vmatpush1.bf16.msra.mxu0 0
  %352 = vmatprep.subr.bf16.mxu0 0
  %353 = vmatpush1.bf16.msra.mxu0 0
  %354 = vmatprep.subr.bf16.mxu0 0
  %355 = vmatpush1.bf16.msra.mxu0 0
  %356 = vmatprep.subr.bf16.mxu0 0
  %357 = vmatpush1.bf16.msra.mxu0 0
  %358 = vmatprep.subr.bf16.mxu0 0
  %359 = vmatpush1.bf16.msra.mxu0 0
  %360 = vmatprep.subr.bf16.mxu0 0
  %361 = vmatpush1.bf16.msra.mxu0 0
  %362 = vmatprep.subr.bf16.mxu0 0
  %363 = vmatpush1.bf16.msra.mxu0 0
  %364 = vmatprep.subr.bf16.mxu0 0
  %365 = vmatpush1.bf16.msra.mxu0 0
  %366 = vmatprep.mubr.bf16.mxu0 0
  %367 = vmatmul.mubr.bf16.gmra.mrb[0].mxu0 %v222
  %v368 = vpop.f32.mrb[0].mxu0
  %v369 = vadd.f32 0.0, %v368
  %v370 = vpop.f32.mrb[0].mxu0
  %v371 = vpop.f32.mrb[0].mxu0
  %v372 = vadd.f32 0.0, %v371
  %v373 = vpop.f32.mrb[0].mxu0
  %374 = vmatprep.mubr.bf16.mxu0 0
  %375 = vmatmul.mubr.bf16.gmra.mrb[0].mxu0 %v223
  %v376 = vpop.f32.mrb[0].mxu0
  %v377 = vadd.f32 0.0, %v376
  %v378 = vpop.f32.mrb[0].mxu0
  %v379 = vpop.f32.mrb[0].mxu0
  %v380 = vadd.f32 0.0, %v379
  %v381 = vpop.f32.mrb[0].mxu0
  %382 = vmatprep.mubr.bf16.mxu0 0
  %383 = vmatmul.mubr.bf16.gmra.mrb[0].mxu0 %v224
  %v384 = vpop.f32.mrb[0].mxu0
  %v385 = vadd.f32 0.0, %v384
  %v386 = vpop.f32.mrb[0].mxu0
  %v387 = vpop.f32.mrb[0].mxu0
  %v388 = vadd.f32 0.0, %v387
  %v389 = vpop.f32.mrb[0].mxu0
  %390 = vmatprep.mubr.bf16.mxu0 0
  %391 = vmatmul.mubr.bf16.gmra.mrb[0].mxu0 %v225
  %v392 = vpop.f32.mrb[0].mxu0
  %v393 = vadd.f32 0.0, %v392
  %v394 = vpop.f32.mrb[0].mxu0
  %v395 = vpop.f32.mrb[0].mxu0
  %v396 = vadd.f32 0.0, %v395
  %v397 = vpop.f32.mrb[0].mxu0
  %398 = vmatprep.mubr.bf16.mxu0 0
  %399 = vmatmul.mubr.bf16.gmra.mrb[0].mxu0 %v226
  %v400 = vpop.f32.mrb[0].mxu0
  %v401 = vadd.f32 0.0, %v400
  %v402 = vpop.f32.mrb[0].mxu0
  %v403 = vpop.f32.mrb[0].mxu0
  %v404 = vadd.f32 0.0, %v403
  %v405 = vpop.f32.mrb[0].mxu0
  %406 = vmatprep.mubr.bf16.mxu0 0
  %407 = vmatmul.mubr.bf16.gmra.mrb[0].mxu0 %v227
  %v408 = vpop.f32.mrb[0].mxu0
  %v409 = vadd.f32 0.0, %v408
  %v410 = vpop.f32.mrb[0].mxu0
  %v411 = vpop.f32.mrb[0].mxu0
  %v412 = vadd.f32 0.0, %v411
  %v413 = vpop.f32.mrb[0].mxu0
  %414 = vmatprep.mubr.bf16.mxu0 0
  %415 = vmatmul.mubr.bf16.gmra.mrb[0].mxu0 %v228
  %v416 = vpop.f32.mrb[0].mxu0
  %v417 = vadd.f32 0.0, %v416
  %v418 = vpop.f32.mrb[0].mxu0
  %v419 = vpop.f32.mrb[0].mxu0
  %v420 = vadd.f32 0.0, %v419
  %v421 = vpop.f32.mrb[0].mxu0
  %422 = vmatprep.mubr.bf16.mxu0 0
  %423 = vmatmul.mubr.bf16.gmra.mrb[0].mxu0 %v229
  %v424 = vpop.f32.mrb[0].mxu0
  %v425 = vadd.f32 0.0, %v424
  %v426 = vpop.f32.mrb[0].mxu0
  %v427 = vpop.f32.mrb[0].mxu0
  %v428 = vadd.f32 0.0, %v427
  %v429 = vpop.f32.mrb[0].mxu0
  %430 = vmatprep.mubr.bf16.mxu0 0
  %431 = vmatmul.mubr.bf16.gmra.mrb[0].mxu0 %v230
  %v432 = vpop.f32.mrb[0].mxu0
  %v433 = vadd.f32 0.0, %v432
  %v434 = vpop.f32.mrb[0].mxu0
  %v435 = vpop.f32.mrb[0].mxu0
  %v436 = vadd.f32 0.0, %v435
  %v437 = vpop.f32.mrb[0].mxu0
  %438 = vmatprep.mubr.bf16.mxu0 0
  %439 = vmatmul.mubr.bf16.gmra.mrb[0].mxu0 %v231
  %v440 = vpop.f32.mrb[0].mxu0
  %v441 = vadd.f32 0.0, %v440
  %v442 = vpop.f32.mrb[0].mxu0
  %v443 = vpop.f32.mrb[0].mxu0
  %v444 = vadd.f32 0.0, %v443
  %v445 = vpop.f32.mrb[0].mxu0
  %446 = vmatprep.mubr.bf16.mxu0 0
  %447 = vmatmul.mubr.bf16.gmra.mrb[0].mxu0 %v232
  %v448 = vpop.f32.mrb[0].mxu0
  %v449 = vadd.f32 0.0, %v448
  %v450 = vpop.f32.mrb[0].mxu0
  %v451 = vpop.f32.mrb[0].mxu0
  %v452 = vadd.f32 0.0, %v451
  %v453 = vpop.f32.mrb[0].mxu0
  %454 = vmatprep.mubr.bf16.mxu0 0
  %455 = vmatmul.mubr.bf16.gmra.mrb[0].mxu0 %v233
  %v456 = vpop.f32.mrb[0].mxu0
  %v457 = vadd.f32 0.0, %v456
  %v458 = vpop.f32.mrb[0].mxu0
  %v459 = vpop.f32.mrb[0].mxu0
  %v460 = vadd.f32 0.0, %v459
  %v461 = vpop.f32.mrb[0].mxu0
  %462 = vmatprep.mubr.bf16.mxu0 0
  %463 = vmatmul.mubr.bf16.gmra.mrb[0].mxu0 %v234
  %v464 = vpop.f32.mrb[0].mxu0
  %v465 = vadd.f32 0.0, %v464
  %v466 = vpop.f32.mrb[0].mxu0
  %v467 = vpop.f32.mrb[0].mxu0
  %v468 = vadd.f32 0.0, %v467
  %v469 = vpop.f32.mrb[0].mxu0
  %470 = vmatprep.mubr.bf16.mxu0 0
  %471 = vmatmul.mubr.bf16.gmra.mrb[0].mxu0 %v235
  %v472 = vpop.f32.mrb[0].mxu0
  %v473 = vadd.f32 0.0, %v472
  %v474 = vpop.f32.mrb[0].mxu0
  %v475 = vpop.f32.mrb[0].mxu0
  %v476 = vadd.f32 0.0, %v475
  %v477 = vpop.f32.mrb[0].mxu0
  %478 = vmatprep.mubr.bf16.mxu0 0
  %479 = vmatmul.mubr.bf16.gmra.mrb[0].mxu0 %v236
  %v480 = vpop.f32.mrb[0].mxu0
  %v481 = vadd.f32 0.0, %v480
  %v482 = vpop.f32.mrb[0].mxu0
  %v483 = vpop.f32.mrb[0].mxu0
  %v484 = vadd.f32 0.0, %v483
  %v485 = vpop.f32.mrb[0].mxu0
  %486 = vmatprep.mubr.bf16.mxu0 0
  %487 = vmatmul.mubr.bf16.gmra.mrb[0].mxu0 %v237
  %v488 = vpop.f32.mrb[0].mxu0
  %v489 = vadd.f32 0.0, %v488
  %v490 = vpop.f32.mrb[0].mxu0
  %v491 = vpop.f32.mrb[0].mxu0
  %v492 = vadd.f32 0.0, %v491
  %v493 = vpop.f32.mrb[0].mxu0
  %494 = vmatprep.mubr.bf16.mxu0 0
  %495 = vmatmul.mubr.bf16.gmra.mrb[0].mxu0 %v238
  %v496 = vpop.f32.mrb[0].mxu0
  %v497 = vadd.f32 0.0, %v496
  %v498 = vpop.f32.mrb[0].mxu0
  %v499 = vpop.f32.mrb[0].mxu0
  %v500 = vadd.f32 0.0, %v499
  %v501 = vpop.f32.mrb[0].mxu0
  %502 = vmatprep.mubr.bf16.mxu0 0
  %503 = vmatmul.mubr.bf16.gmra.mrb[0].mxu0 %v239
  %v504 = vpop.f32.mrb[0].mxu0
  %v505 = vadd.f32 0.0, %v504
  %v506 = vpop.f32.mrb[0].mxu0
  %v507 = vpop.f32.mrb[0].mxu0
  %v508 = vadd.f32 0.0, %v507
  %v509 = vpop.f32.mrb[0].mxu0
  %510 = vmatprep.mubr.bf16.mxu0 0
  %511 = vmatmul.mubr.bf16.gmra.mrb[0].mxu0 %v240
  %v512 = vpop.f32.mrb[0].mxu0
  %v513 = vadd.f32 0.0, %v512
  %v514 = vpop.f32.mrb[0].mxu0
  %v515 = vpop.f32.mrb[0].mxu0
  %v516 = vadd.f32 0.0, %v515
  %v517 = vpop.f32.mrb[0].mxu0
  %518 = vmatprep.mubr.bf16.mxu0 0
  %519 = vmatmul.mubr.bf16.gmra.mrb[0].mxu0 %v241
  %v520 = vpop.f32.mrb[0].mxu0
  %v521 = vadd.f32 0.0, %v520
  %v522 = vpop.f32.mrb[0].mxu0
  %v523 = vpop.f32.mrb[0].mxu0
  %v524 = vadd.f32 0.0, %v523
  %v525 = vpop.f32.mrb[0].mxu0
  %526 = vmatprep.mubr.bf16.mxu0 0
  %527 = vmatmul.mubr.bf16.gmra.mrb[0].mxu0 %v242
  %v528 = vpop.f32.mrb[0].mxu0
  %v529 = vadd.f32 0.0, %v528
  %v530 = vpop.f32.mrb[0].mxu0
  %v531 = vpop.f32.mrb[0].mxu0
  %v532 = vadd.f32 0.0, %v531
  %v533 = vpop.f32.mrb[0].mxu0
  %534 = vmatprep.mubr.bf16.mxu0 0
  %535 = vmatmul.mubr.bf16.gmra.mrb[0].mxu0 %v243
  %v536 = vpop.f32.mrb[0].mxu0
  %v537 = vadd.f32 0.0, %v536
  %v538 = vpop.f32.mrb[0].mxu0
  %v539 = vpop.f32.mrb[0].mxu0
  %v540 = vadd.f32 0.0, %v539
  %v541 = vpop.f32.mrb[0].mxu0
  %542 = vmatprep.mubr.bf16.mxu0 0
  %543 = vmatmul.mubr.bf16.gmra.mrb[0].mxu0 %v244
  %v544 = vpop.f32.mrb[0].mxu0
  %v545 = vadd.f32 0.0, %v544
  %v546 = vpop.f32.mrb[0].mxu0
  %v547 = vpop.f32.mrb[0].mxu0
  %v548 = vadd.f32 0.0, %v547
  %v549 = vpop.f32.mrb[0].mxu0
  %550 = vmatprep.mubr.bf16.mxu0 0
  %551 = vmatmul.mubr.bf16.gmra.mrb[0].mxu0 %v245
  %v552 = vpop.f32.mrb[0].mxu0
  %v553 = vadd.f32 0.0, %v552
  %v554 = vpop.f32.mrb[0].mxu0
  %v555 = vpop.f32.mrb[0].mxu0
  %v556 = vadd.f32 0.0, %v555
  %v557 = vpop.f32.mrb[0].mxu0
  %558 = vmatprep.mubr.bf16.mxu0 0
  %559 = vmatmul.mubr.bf16.gmra.mrb[0].mxu0 %v246
  %v560 = vpop.f32.mrb[0].mxu0
  %v561 = vadd.f32 0.0, %v560
  %v562 = vpop.f32.mrb[0].mxu0
  %v563 = vpop.f32.mrb[0].mxu0
  %v564 = vadd.f32 0.0, %v563
  %v565 = vpop.f32.mrb[0].mxu0
  %566 = vmatprep.mubr.bf16.mxu0 0
  %567 = vmatmul.mubr.bf16.gmra.mrb[0].mxu0 %v247
  %v568 = vpop.f32.mrb[0].mxu0
  %v569 = vadd.f32 0.0, %v568
  %v570 = vpop.f32.mrb[0].mxu0
  %v571 = vpop.f32.mrb[0].mxu0
  %v572 = vadd.f32 0.0, %v571
  %v573 = vpop.f32.mrb[0].mxu0
  %574 = vmatprep.mubr.bf16.mxu0 0
  %575 = vmatmul.mubr.bf16.gmra.mrb[0].mxu0 %v248
  %v576 = vpop.f32.mrb[0].mxu0
  %v577 = vadd.f32 0.0, %v576
  %v578 = vpop.f32.mrb[0].mxu0
  %v579 = vpop.f32.mrb[0].mxu0
  %v580 = vadd.f32 0.0, %v579
  %v581 = vpop.f32.mrb[0].mxu0
  %582 = vmatprep.mubr.bf16.mxu0 0
  %583 = vmatmul.mubr.bf16.gmra.mrb[0].mxu0 %v249
  %v584 = vpop.f32.mrb[0].mxu0
  %v585 = vadd.f32 0.0, %v584
  %v586 = vpop.f32.mrb[0].mxu0
  %v587 = vpop.f32.mrb[0].mxu0
  %v588 = vadd.f32 0.0, %v587
  %v589 = vpop.f32.mrb[0].mxu0
  %590 = vmatprep.mubr.bf16.mxu0 0
  %591 = vmatmul.mubr.bf16.gmra.mrb[0].mxu0 %v250
  %v592 = vpop.f32.mrb[0].mxu0
  %v593 = vadd.f32 0.0, %v592
  %v594 = vpop.f32.mrb[0].mxu0
  %v595 = vpop.f32.mrb[0].mxu0
  %v596 = vadd.f32 0.0, %v595
  %v597 = vpop.f32.mrb[0].mxu0
  %598 = vmatprep.mubr.bf16.mxu0 0
  %599 = vmatmul.mubr.bf16.gmra.mrb[0].mxu0 %v251
  %v600 = vpop.f32.mrb[0].mxu0
  %v601 = vadd.f32 0.0, %v600
  %v602 = vpop.f32.mrb[0].mxu0
  %v603 = vpop.f32.mrb[0].mxu0
  %v604 = vadd.f32 0.0, %v603
  %v605 = vpop.f32.mrb[0].mxu0
  %606 = vmatprep.mubr.bf16.mxu0 0
  %607 = vmatmul.mubr.bf16.gmra.mrb[0].mxu0 %v252
  %v608 = vpop.f32.mrb[0].mxu0
  %v609 = vadd.f32 0.0, %v608
  %v610 = vpop.f32.mrb[0].mxu0
  %v611 = vpop.f32.mrb[0].mxu0
  %v612 = vadd.f32 0.0, %v611
  %v613 = vpop.f32.mrb[0].mxu0
  %614 = vmatprep.mubr.bf16.mxu0 0
  %615 = vmatmul.mubr.bf16.gmra.mrb[0].mxu0 %v253
  %v616 = vpop.f32.mrb[0].mxu0
  %v617 = vadd.f32 0.0, %v616
  %v618 = vpop.f32.mrb[0].mxu0
  %v619 = vpop.f32.mrb[0].mxu0
  %v620 = vadd.f32 0.0, %v619
  %v621 = vpop.f32.mrb[0].mxu0
  %622 = vdwg.mxu0
  %v623 = vpack.c.bf16 %v372, %v369
  %v624 = vpack.c.bf16 %v380, %v377
  %v625 = vpack.c.bf16 %v388, %v385
  %v626 = vpack.c.bf16 %v396, %v393
  %v627 = vpack.c.bf16 %v404, %v401
  %v628 = vpack.c.bf16 %v412, %v409
  %v629 = vpack.c.bf16 %v420, %v417
  %v630 = vpack.c.bf16 %v428, %v425
  %v631 = vpack.c.bf16 %v436, %v433
  %v632 = vpack.c.bf16 %v444, %v441
  %v633 = vpack.c.bf16 %v452, %v449
  %v634 = vpack.c.bf16 %v460, %v457
  %v635 = vpack.c.bf16 %v468, %v465
  %v636 = vpack.c.bf16 %v476, %v473
  %v637 = vpack.c.bf16 %v484, %v481
  %v638 = vpack.c.bf16 %v492, %v489
  %v639 = vpack.c.bf16 %v500, %v497
  %v640 = vpack.c.bf16 %v508, %v505
  %v641 = vpack.c.bf16 %v516, %v513
  %v642 = vpack.c.bf16 %v524, %v521
  %v643 = vpack.c.bf16 %v532, %v529
  %v644 = vpack.c.bf16 %v540, %v537
  %v645 = vpack.c.bf16 %v548, %v545
  %v646 = vpack.c.bf16 %v556, %v553
  %v647 = vpack.c.bf16 %v564, %v561
  %v648 = vpack.c.bf16 %v572, %v569
  %v649 = vpack.c.bf16 %v580, %v577
  %v650 = vpack.c.bf16 %v588, %v585
  %v651 = vpack.c.bf16 %v596, %v593
  %v652 = vpack.c.bf16 %v604, %v601
  %v653 = vpack.c.bf16 %v612, %v609
  %v654 = vpack.c.bf16 %v620, %v617
  %v687 = vunpack.c.l.b16 %v623
  %v688 = vunpack.c.h.b16 %v623
  %v689 = vunpack.c.l.b16 %v624
  %v690 = vunpack.c.h.b16 %v624
  %v691 = vunpack.c.l.b16 %v625
  %v692 = vunpack.c.h.b16 %v625
  %v693 = vunpack.c.l.b16 %v626
  %v694 = vunpack.c.h.b16 %v626
  %v695 = vunpack.c.l.b16 %v627
  %v696 = vunpack.c.h.b16 %v627
  %v697 = vunpack.c.l.b16 %v628
  %v698 = vunpack.c.h.b16 %v628
  %v699 = vunpack.c.l.b16 %v629
  %v700 = vunpack.c.h.b16 %v629
  %v701 = vunpack.c.l.b16 %v630
  %v702 = vunpack.c.h.b16 %v630
  %v703 = vunpack.c.l.b16 %v631
  %v704 = vunpack.c.h.b16 %v631
  %v705 = vunpack.c.l.b16 %v632
  %v706 = vunpack.c.h.b16 %v632
  %v707 = vunpack.c.l.b16 %v633
  %v708 = vunpack.c.h.b16 %v633
  %v709 = vunpack.c.l.b16 %v634
  %v710 = vunpack.c.h.b16 %v634
  %v711 = vunpack.c.l.b16 %v635
  %v712 = vunpack.c.h.b16 %v635
  %v713 = vunpack.c.l.b16 %v636
  %v714 = vunpack.c.h.b16 %v636
  %v715 = vunpack.c.l.b16 %v637
  %v716 = vunpack.c.h.b16 %v637
  %v717 = vunpack.c.l.b16 %v638
  %v718 = vunpack.c.h.b16 %v638
  %v719 = vunpack.c.l.b16 %v639
  %v720 = vunpack.c.h.b16 %v639
  %v721 = vunpack.c.l.b16 %v640
  %v722 = vunpack.c.h.b16 %v640
  %v723 = vunpack.c.l.b16 %v641
  %v724 = vunpack.c.h.b16 %v641
  %v725 = vunpack.c.l.b16 %v642
  %v726 = vunpack.c.h.b16 %v642
  %v727 = vunpack.c.l.b16 %v643
  %v728 = vunpack.c.h.b16 %v643
  %v729 = vunpack.c.l.b16 %v644
  %v730 = vunpack.c.h.b16 %v644
  %v731 = vunpack.c.l.b16 %v645
  %v732 = vunpack.c.h.b16 %v645
  %v733 = vunpack.c.l.b16 %v646
  %v734 = vunpack.c.h.b16 %v646
  %v735 = vunpack.c.l.b16 %v647
  %v736 = vunpack.c.h.b16 %v647
  %v737 = vunpack.c.l.b16 %v648
  %v738 = vunpack.c.h.b16 %v648
  %v739 = vunpack.c.l.b16 %v649
  %v740 = vunpack.c.h.b16 %v649
  %v741 = vunpack.c.l.b16 %v650
  %v742 = vunpack.c.h.b16 %v650
  %v743 = vunpack.c.l.b16 %v651
  %v744 = vunpack.c.h.b16 %v651
  %v745 = vunpack.c.l.b16 %v652
  %v746 = vunpack.c.h.b16 %v652
  %v747 = vunpack.c.l.b16 %v653
  %v748 = vunpack.c.h.b16 %v653
  %v749 = vunpack.c.l.b16 %v654
  %v750 = vunpack.c.h.b16 %v654
  %v751 = vpack.c.b16 %v687, %v687
  %v752 = vpack.c.b16 %v688, %v688
  %v753 = vpack.c.b16 %v689, %v689
  %v754 = vpack.c.b16 %v690, %v690
  %v755 = vpack.c.b16 %v691, %v691
  %v756 = vpack.c.b16 %v692, %v692
  %v757 = vpack.c.b16 %v693, %v693
  %v758 = vpack.c.b16 %v694, %v694
  %v759 = vpack.c.b16 %v695, %v695
  %v760 = vpack.c.b16 %v696, %v696
  %v761 = vpack.c.b16 %v697, %v697
  %v762 = vpack.c.b16 %v698, %v698
  %v763 = vpack.c.b16 %v699, %v699
  %v764 = vpack.c.b16 %v700, %v700
  %v765 = vpack.c.b16 %v701, %v701
  %v766 = vpack.c.b16 %v702, %v702
  %v767 = vpack.c.b16 %v703, %v703
  %v768 = vpack.c.b16 %v704, %v704
  %v769 = vpack.c.b16 %v705, %v705
  %v770 = vpack.c.b16 %v706, %v706
  %v771 = vpack.c.b16 %v707, %v707
  %v772 = vpack.c.b16 %v708, %v708
  %v773 = vpack.c.b16 %v709, %v709
  %v774 = vpack.c.b16 %v710, %v710
  %v775 = vpack.c.b16 %v711, %v711
  %v776 = vpack.c.b16 %v712, %v712
  %v777 = vpack.c.b16 %v713, %v713
  %v778 = vpack.c.b16 %v714, %v714
  %v779 = vpack.c.b16 %v715, %v715
  %v780 = vpack.c.b16 %v716, %v716
  %v781 = vpack.c.b16 %v717, %v717
  %v782 = vpack.c.b16 %v718, %v718
  %v783 = vpack.c.b16 %v719, %v719
  %v784 = vpack.c.b16 %v720, %v720
  %v785 = vpack.c.b16 %v721, %v721
  %v786 = vpack.c.b16 %v722, %v722
  %v787 = vpack.c.b16 %v723, %v723
  %v788 = vpack.c.b16 %v724, %v724
  %v789 = vpack.c.b16 %v725, %v725
  %v790 = vpack.c.b16 %v726, %v726
  %v791 = vpack.c.b16 %v727, %v727
  %v792 = vpack.c.b16 %v728, %v728
  %v793 = vpack.c.b16 %v729, %v729
  %v794 = vpack.c.b16 %v730, %v730
  %v795 = vpack.c.b16 %v731, %v731
  %v796 = vpack.c.b16 %v732, %v732
  %v797 = vpack.c.b16 %v733, %v733
  %v798 = vpack.c.b16 %v734, %v734
  %v799 = vpack.c.b16 %v735, %v735
  %v800 = vpack.c.b16 %v736, %v736
  %v801 = vpack.c.b16 %v737, %v737
  %v802 = vpack.c.b16 %v738, %v738
  %v803 = vpack.c.b16 %v739, %v739
  %v804 = vpack.c.b16 %v740, %v740
  %v805 = vpack.c.b16 %v741, %v741
  %v806 = vpack.c.b16 %v742, %v742
  %v807 = vpack.c.b16 %v743, %v743
  %v808 = vpack.c.b16 %v744, %v744
  %v809 = vpack.c.b16 %v745, %v745
  %v810 = vpack.c.b16 %v746, %v746
  %v811 = vpack.c.b16 %v747, %v747
  %v812 = vpack.c.b16 %v748, %v748
  %v813 = vpack.c.b16 %v749, %v749
  %v814 = vpack.c.b16 %v750, %v750
  %879 = vst [vmem:[%s2] sm:$0xf] %v751
  %880 = vst [vmem:[%s2 + $0x4] sm:$0xf] %v752
  %881 = vst [vmem:[%s2 + $0x8] sm:$0xf] %v753
  %882 = vst [vmem:[%s2 + $0xc] sm:$0xf] %v754
  %883 = vst [vmem:[%s2 + $0x10] sm:$0xf] %v755
  %884 = vst [vmem:[%s2 + $0x14] sm:$0xf] %v756
  %885 = vst [vmem:[%s2 + $0x18] sm:$0xf] %v757
  %886 = vst [vmem:[%s2 + $0x1c] sm:$0xf] %v758
  %887 = vst [vmem:[%s2 + $0x20] sm:$0xf] %v759
  %888 = vst [vmem:[%s2 + $0x24] sm:$0xf] %v760
  %889 = vst [vmem:[%s2 + $0x28] sm:$0xf] %v761
  %890 = vst [vmem:[%s2 + $0x2c] sm:$0xf] %v762
  %891 = vst [vmem:[%s2 + $0x30] sm:$0xf] %v763
  %892 = vst [vmem:[%s2 + $0x34] sm:$0xf] %v764
  %893 = vst [vmem:[%s2 + $0x38] sm:$0xf] %v765
  %894 = vst [vmem:[%s2 + $0x3c] sm:$0xf] %v766
  %895 = vst [vmem:[%s2 + $0x40] sm:$0xf] %v767
  %896 = vst [vmem:[%s2 + $0x44] sm:$0xf] %v768
  %897 = vst [vmem:[%s2 + $0x48] sm:$0xf] %v769
  %898 = vst [vmem:[%s2 + $0x4c] sm:$0xf] %v770
  %899 = vst [vmem:[%s2 + $0x50] sm:$0xf] %v771
  %900 = vst [vmem:[%s2 + $0x54] sm:$0xf] %v772
  %901 = vst [vmem:[%s2 + $0x58] sm:$0xf] %v773
  %902 = vst [vmem:[%s2 + $0x5c] sm:$0xf] %v774
  %903 = vst [vmem:[%s2 + $0x60] sm:$0xf] %v775
  %904 = vst [vmem:[%s2 + $0x64] sm:$0xf] %v776
  %905 = vst [vmem:[%s2 + $0x68] sm:$0xf] %v777
  %906 = vst [vmem:[%s2 + $0x6c] sm:$0xf] %v778
  %907 = vst [vmem:[%s2 + $0x70] sm:$0xf] %v779
  %908 = vst [vmem:[%s2 + $0x74] sm:$0xf] %v780
  %909 = vst [vmem:[%s2 + $0x78] sm:$0xf] %v781
  %910 = vst [vmem:[%s2 + $0x7c] sm:$0xf] %v782
  %911 = vst [vmem:[%s2 + $0x80] sm:$0xf] %v783
  %912 = vst [vmem:[%s2 + $0x84] sm:$0xf] %v784
  %913 = vst [vmem:[%s2 + $0x88] sm:$0xf] %v785
  %914 = vst [vmem:[%s2 + $0x8c] sm:$0xf] %v786
  %915 = vst [vmem:[%s2 + $0x90] sm:$0xf] %v787
  %916 = vst [vmem:[%s2 + $0x94] sm:$0xf] %v788
  %917 = vst [vmem:[%s2 + $0x98] sm:$0xf] %v789
  %918 = vst [vmem:[%s2 + $0x9c] sm:$0xf] %v790
  %919 = vst [vmem:[%s2 + $0xa0] sm:$0xf] %v791
  %920 = vst [vmem:[%s2 + $0xa4] sm:$0xf] %v792
  %921 = vst [vmem:[%s2 + $0xa8] sm:$0xf] %v793
  %922 = vst [vmem:[%s2 + $0xac] sm:$0xf] %v794
  %923 = vst [vmem:[%s2 + $0xb0] sm:$0xf] %v795
  %924 = vst [vmem:[%s2 + $0xb4] sm:$0xf] %v796
  %925 = vst [vmem:[%s2 + $0xb8] sm:$0xf] %v797
  %926 = vst [vmem:[%s2 + $0xbc] sm:$0xf] %v798
  %927 = vst [vmem:[%s2 + $0xc0] sm:$0xf] %v799
  %928 = vst [vmem:[%s2 + $0xc4] sm:$0xf] %v800
  %929 = vst [vmem:[%s2 + $0xc8] sm:$0xf] %v801
  %930 = vst [vmem:[%s2 + $0xcc] sm:$0xf] %v802
  %931 = vst [vmem:[%s2 + $0xd0] sm:$0xf] %v803
  %932 = vst [vmem:[%s2 + $0xd4] sm:$0xf] %v804
  %933 = vst [vmem:[%s2 + $0xd8] sm:$0xf] %v805
  %934 = vst [vmem:[%s2 + $0xdc] sm:$0xf] %v806
  %935 = vst [vmem:[%s2 + $0xe0] sm:$0xf] %v807
  %936 = vst [vmem:[%s2 + $0xe4] sm:$0xf] %v808
  %937 = vst [vmem:[%s2 + $0xe8] sm:$0xf] %v809
  %938 = vst [vmem:[%s2 + $0xec] sm:$0xf] %v810
  %939 = vst [vmem:[%s2 + $0xf0] sm:$0xf] %v811
  %940 = vst [vmem:[%s2 + $0xf4] sm:$0xf] %v812
  %941 = vst [vmem:[%s2 + $0xf8] sm:$0xf] %v813
  %942 = vst [vmem:[%s2 + $0xfc] sm:$0xf] %v814
  %v943 = vadd.f32 %v369, %v372
  %v944 = vadd.f32 %v943, %v377
  %v945 = vadd.f32 %v944, %v380
  %v946 = vadd.f32 %v945, %v385
  %v947 = vadd.f32 %v946, %v388
  %v948 = vadd.f32 %v947, %v393
  %v949 = vadd.f32 %v948, %v396
  %v950 = vadd.f32 %v949, %v401
  %v951 = vadd.f32 %v950, %v404
  %v952 = vadd.f32 %v951, %v409
  %v953 = vadd.f32 %v952, %v412
  %v954 = vadd.f32 %v953, %v417
  %v955 = vadd.f32 %v954, %v420
  %v956 = vadd.f32 %v955, %v425
  %v957 = vadd.f32 %v956, %v428
  %v958 = vadd.f32 %v957, %v433
  %v959 = vadd.f32 %v958, %v436
  %v960 = vadd.f32 %v959, %v441
  %v961 = vadd.f32 %v960, %v444
  %v962 = vadd.f32 %v961, %v449
  %v963 = vadd.f32 %v962, %v452
  %v964 = vadd.f32 %v963, %v457
  %v965 = vadd.f32 %v964, %v460
  %v966 = vadd.f32 %v965, %v465
  %v967 = vadd.f32 %v966, %v468
  %v968 = vadd.f32 %v967, %v473
  %v969 = vadd.f32 %v968, %v476
  %v970 = vadd.f32 %v969, %v481
  %v971 = vadd.f32 %v970, %v484
  %v972 = vadd.f32 %v971, %v489
  %v973 = vadd.f32 %v972, %v492
  %v974 = vadd.f32 %v973, %v497
  %v975 = vadd.f32 %v974, %v500
  %v976 = vadd.f32 %v975, %v505
  %v977 = vadd.f32 %v976, %v508
  %v978 = vadd.f32 %v977, %v513
  %v979 = vadd.f32 %v978, %v516
  %v980 = vadd.f32 %v979, %v521
  %v981 = vadd.f32 %v980, %v524
  %v982 = vadd.f32 %v981, %v529
  %v983 = vadd.f32 %v982, %v532
  %v984 = vadd.f32 %v983, %v537
  %v985 = vadd.f32 %v984, %v540
  %v986 = vadd.f32 %v985, %v545
  %v987 = vadd.f32 %v986, %v548
  %v988 = vadd.f32 %v987, %v553
  %v989 = vadd.f32 %v988, %v556
  %v990 = vadd.f32 %v989, %v561
  %v991 = vadd.f32 %v990, %v564
  %v992 = vadd.f32 %v991, %v569
  %v993 = vadd.f32 %v992, %v572
  %v994 = vadd.f32 %v993, %v577
  %v995 = vadd.f32 %v994, %v580
  %v996 = vadd.f32 %v995, %v585
  %v997 = vadd.f32 %v996, %v588
  %v998 = vadd.f32 %v997, %v593
  %v999 = vadd.f32 %v998, %v596
  %v1000 = vadd.f32 %v999, %v601
  %v1001 = vadd.f32 %v1000, %v604
  %v1002 = vadd.f32 %v1001, %v609
  %v1003 = vadd.f32 %v1002, %v612
  %v1004 = vadd.f32 %v1003, %v617
  %v1005 = vadd.f32 %v1004, %v620
  %v1006 = vrot.slane %v1005, 4
  %v1007 = vadd.f32 %v1005, %v1006
  %v1008 = vrot.slane %v1007, 2
  %v1009 = vadd.f32 %v1007, %v1008
  %v1010 = vrot.slane %v1009, 1
  %v1011 = vadd.f32 %v1009, %v1010
  %v1012 = vmul.f32 %v369, %v369
  %v1013 = vmul.f32 %v372, %v372
  %v1014 = vmul.f32 %v377, %v377
  %v1015 = vmul.f32 %v380, %v380
  %v1016 = vmul.f32 %v385, %v385
  %v1017 = vmul.f32 %v388, %v388
  %v1018 = vmul.f32 %v393, %v393
  %v1019 = vmul.f32 %v396, %v396
  %v1020 = vmul.f32 %v401, %v401
  %v1021 = vmul.f32 %v404, %v404
  %v1022 = vmul.f32 %v409, %v409
  %v1023 = vmul.f32 %v412, %v412
  %v1024 = vmul.f32 %v417, %v417
  %v1025 = vmul.f32 %v420, %v420
  %v1026 = vmul.f32 %v425, %v425
  %v1027 = vmul.f32 %v428, %v428
  %v1028 = vmul.f32 %v433, %v433
  %v1029 = vmul.f32 %v436, %v436
  %v1030 = vmul.f32 %v441, %v441
  %v1031 = vmul.f32 %v444, %v444
  %v1032 = vmul.f32 %v449, %v449
  %v1033 = vmul.f32 %v452, %v452
  %v1034 = vmul.f32 %v457, %v457
  %v1035 = vmul.f32 %v460, %v460
  %v1036 = vmul.f32 %v465, %v465
  %v1037 = vmul.f32 %v468, %v468
  %v1038 = vmul.f32 %v473, %v473
  %v1039 = vmul.f32 %v476, %v476
  %v1040 = vmul.f32 %v481, %v481
  %v1041 = vmul.f32 %v484, %v484
  %v1042 = vmul.f32 %v489, %v489
  %v1043 = vmul.f32 %v492, %v492
  %v1044 = vmul.f32 %v497, %v497
  %v1045 = vmul.f32 %v500, %v500
  %v1046 = vmul.f32 %v505, %v505
  %v1047 = vmul.f32 %v508, %v508
  %v1048 = vmul.f32 %v513, %v513
  %v1049 = vmul.f32 %v516, %v516
  %v1050 = vmul.f32 %v521, %v521
  %v1051 = vmul.f32 %v524, %v524
  %v1052 = vmul.f32 %v529, %v529
  %v1053 = vmul.f32 %v532, %v532
  %v1054 = vmul.f32 %v537, %v537
  %v1055 = vmul.f32 %v540, %v540
  %v1056 = vmul.f32 %v545, %v545
  %v1057 = vmul.f32 %v548, %v548
  %v1058 = vmul.f32 %v553, %v553
  %v1059 = vmul.f32 %v556, %v556
  %v1060 = vmul.f32 %v561, %v561
  %v1061 = vmul.f32 %v564, %v564
  %v1062 = vmul.f32 %v569, %v569
  %v1063 = vmul.f32 %v572, %v572
  %v1064 = vmul.f32 %v577, %v577
  %v1065 = vmul.f32 %v580, %v580
  %v1066 = vmul.f32 %v585, %v585
  %v1067 = vmul.f32 %v588, %v588
  %v1068 = vmul.f32 %v593, %v593
  %v1069 = vmul.f32 %v596, %v596
  %v1070 = vmul.f32 %v601, %v601
  %v1071 = vmul.f32 %v604, %v604
  %v1072 = vmul.f32 %v609, %v609
  %v1073 = vmul.f32 %v612, %v612
  %v1074 = vmul.f32 %v617, %v617
  %v1075 = vmul.f32 %v620, %v620
  %v1076 = vadd.f32 %v1012, %v1013
  %v1077 = vadd.f32 %v1076, %v1014
  %v1078 = vadd.f32 %v1077, %v1015
  %v1079 = vadd.f32 %v1078, %v1016
  %v1080 = vadd.f32 %v1079, %v1017
  %v1081 = vadd.f32 %v1080, %v1018
  %v1082 = vadd.f32 %v1081, %v1019
  %v1083 = vadd.f32 %v1082, %v1020
  %v1084 = vadd.f32 %v1083, %v1021
  %v1085 = vadd.f32 %v1084, %v1022
  %v1086 = vadd.f32 %v1085, %v1023
  %v1087 = vadd.f32 %v1086, %v1024
  %v1088 = vadd.f32 %v1087, %v1025
  %v1089 = vadd.f32 %v1088, %v1026
  %v1090 = vadd.f32 %v1089, %v1027
  %v1091 = vadd.f32 %v1090, %v1028
  %v1092 = vadd.f32 %v1091, %v1029
  %v1093 = vadd.f32 %v1092, %v1030
  %v1094 = vadd.f32 %v1093, %v1031
  %v1095 = vadd.f32 %v1094, %v1032
  %v1096 = vadd.f32 %v1095, %v1033
  %v1097 = vadd.f32 %v1096, %v1034
  %v1098 = vadd.f32 %v1097, %v1035
  %v1099 = vadd.f32 %v1098, %v1036
  %v1100 = vadd.f32 %v1099, %v1037
  %v1101 = vadd.f32 %v1100, %v1038
  %v1102 = vadd.f32 %v1101, %v1039
  %v1103 = vadd.f32 %v1102, %v1040
  %v1104 = vadd.f32 %v1103, %v1041
  %v1105 = vadd.f32 %v1104, %v1042
  %v1106 = vadd.f32 %v1105, %v1043
  %v1107 = vadd.f32 %v1106, %v1044
  %v1108 = vadd.f32 %v1107, %v1045
  %v1109 = vadd.f32 %v1108, %v1046
  %v1110 = vadd.f32 %v1109, %v1047
  %v1111 = vadd.f32 %v1110, %v1048
  %v1112 = vadd.f32 %v1111, %v1049
  %v1113 = vadd.f32 %v1112, %v1050
  %v1114 = vadd.f32 %v1113, %v1051
  %v1115 = vadd.f32 %v1114, %v1052
  %v1116 = vadd.f32 %v1115, %v1053
  %v1117 = vadd.f32 %v1116, %v1054
  %v1118 = vadd.f32 %v1117, %v1055
  %v1119 = vadd.f32 %v1118, %v1056
  %v1120 = vadd.f32 %v1119, %v1057
  %v1121 = vadd.f32 %v1120, %v1058
  %v1122 = vadd.f32 %v1121, %v1059
  %v1123 = vadd.f32 %v1122, %v1060
  %v1124 = vadd.f32 %v1123, %v1061
  %v1125 = vadd.f32 %v1124, %v1062
  %v1126 = vadd.f32 %v1125, %v1063
  %v1127 = vadd.f32 %v1126, %v1064
  %v1128 = vadd.f32 %v1127, %v1065
  %v1129 = vadd.f32 %v1128, %v1066
  %v1130 = vadd.f32 %v1129, %v1067
  %v1131 = vadd.f32 %v1130, %v1068
  %v1132 = vadd.f32 %v1131, %v1069
  %v1133 = vadd.f32 %v1132, %v1070
  %v1134 = vadd.f32 %v1133, %v1071
  %v1135 = vadd.f32 %v1134, %v1072
  %v1136 = vadd.f32 %v1135, %v1073
  %v1137 = vadd.f32 %v1136, %v1074
  %v1138 = vadd.f32 %v1137, %v1075
  %v1139 = vrot.slane %v1138, 4
  %v1140 = vadd.f32 %v1138, %v1139
  %v1141 = vrot.slane %v1140, 2
  %v1142 = vadd.f32 %v1140, %v1141
  %v1143 = vrot.slane %v1142, 1
  %v1144 = vadd.f32 %v1142, %v1143
  %vm1145 = vcmask 1040384
  %v1146 = vsel %vm1145, %v1011, %v1144
  %1147 = vst [vmem:[%s3] sm:$0x3] %v1146
  // Predicated region
  $region10: #{bottleneck_forward.4} parent=0 // pred_check
    _
  $region11: #{bottleneck_forward.4} parent=0 // pred_check_branch
    %1149 = sbr.rel (0) target = $region13
  $region12: #{bottleneck_forward.4} parent=0 // pred_region
    _
  $region13: #{bottleneck_forward.4} parent=0 // pred_fallthru
    _
  // Predicated region
  $region14: #{bottleneck_forward.4} parent=0 // pred_check
    _
  $region15: #{bottleneck_forward.4} parent=0 // pred_check_branch
    %1151 = sbr.rel (0) target = $region17
  $region16: #{bottleneck_forward.4} parent=0 // pred_region
    _
  $region17: #{bottleneck_forward.4} parent=0 // pred_fallthru
    _
  // Predicated region
  $region18: #{bottleneck_forward.4} parent=0 // pred_check
    _
  $region19: #{bottleneck_forward.4} parent=0 // pred_check_branch
    %1153 = sbr.rel (0) target = $region21
  $region20: #{bottleneck_forward.4} parent=0 // pred_region
    _
  $region21: #{bottleneck_forward.4} parent=0 // pred_fallthru
    _
  // Predicated region
  $region22: #{bottleneck_forward.4} parent=0 // pred_check
    _
  $region23: #{bottleneck_forward.4} parent=0 // pred_check_branch
    %1155 = sbr.rel (0) target = $region25
  $region24: #{bottleneck_forward.4} parent=0 // pred_region
    _
  $region25: #{bottleneck_forward.4} parent=0 // pred_fallthru
    _

// kernel: bottleneck_forward.7
$region0: #{bottleneck_forward.7}
  #allocation0 [shape = 'u32[]', space=smem, size = 0x4, offset = 0x4, fixed_abs, tag = 'smem constant byte address 0x4 - core index']
  #allocation1 [shape = 'u32[144,128]{1,0:T(1,128)}', space=vmem, size = 0x12000, scoped, tag = 'internal scratch']
  %s0 = inlined_call_operand.vmem [shape: bf16[512,128], index: 0, kind: input, shape index: {}]
  %s1 = inlined_call_operand.vmem [shape: bf16[512,128], index: 1, kind: input, shape index: {}]
  %s2 = inlined_call_operand.vmem [shape: f32[1,128], index: 2, kind: input, shape index: {}]
  %s3 = inlined_call_operand.vmem [shape: f32[1,128], index: 3, kind: input, shape index: {}]
  %s4 = inlined_call_operand.vmem [shape: f32[1,128], index: 4, kind: input, shape index: {}]
  %s5 = inlined_call_operand.vmem [shape: f32[1,128], index: 5, kind: input, shape index: {}]
  %s6 = inlined_call_operand.vmem [shape: f32[512,128], index: 6, kind: output, shape index: {}]
  %s7 = sld [smem:[#allocation0]]
  $region34: #{bottleneck_forward.7} parent=0
    _
  %s9 = ssub.s32 1, %s7
  %s10 = scalar_select 0, %s9, %s7
  // Predicated region
  $region2: #{bottleneck_forward.7} parent=0 // pred_check
    _
  $region3: #{bottleneck_forward.7} parent=0 // pred_check_branch
    %12 = sbr.rel (0) target = $region5
  $region4: #{bottleneck_forward.7} parent=0 // pred_region
    _
  $region5: #{bottleneck_forward.7} parent=0 // pred_fallthru
    _
  // Predicated region
  $region6: #{bottleneck_forward.7} parent=0 // pred_check
    _
  $region7: #{bottleneck_forward.7} parent=0 // pred_check_branch
    %14 = sbr.rel (0) target = $region9
  $region8: #{bottleneck_forward.7} parent=0 // pred_region
    _
  $region9: #{bottleneck_forward.7} parent=0 // pred_fallthru
    _
  // Predicated region
  $region10: #{bottleneck_forward.7} parent=0 // pred_check
    _
  $region11: #{bottleneck_forward.7} parent=0 // pred_check_branch
    %16 = sbr.rel (0) target = $region13
  $region12: #{bottleneck_forward.7} parent=0 // pred_region
    _
  $region13: #{bottleneck_forward.7} parent=0 // pred_fallthru
    _
  // Predicated region
  $region14: #{bottleneck_forward.7} parent=0 // pred_check
    _
  $region15: #{bottleneck_forward.7} parent=0 // pred_check_branch
    %18 = sbr.rel (0) target = $region17
  $region16: #{bottleneck_forward.7} parent=0 // pred_region
    _
  $region17: #{bottleneck_forward.7} parent=0 // pred_fallthru
    _
  // Predicated region
  $region18: #{bottleneck_forward.7} parent=0 // pred_check
    _
  $region19: #{bottleneck_forward.7} parent=0 // pred_check_branch
    %20 = sbr.rel (0) target = $region21
  $region20: #{bottleneck_forward.7} parent=0 // pred_region
    _
  $region21: #{bottleneck_forward.7} parent=0 // pred_fallthru
    _
  // Predicated region
  $region22: #{bottleneck_forward.7} parent=0 // pred_check
    _
  $region23: #{bottleneck_forward.7} parent=0 // pred_check_branch
    %22 = sbr.rel (0) target = $region25
  $region24: #{bottleneck_forward.7} parent=0 // pred_region
    _
  $region25: #{bottleneck_forward.7} parent=0 // pred_fallthru
    _
  %v23 = vld [vmem:[%s0] sm:$0xf]
  %v24 = vld [vmem:[%s0 + $0x4] sm:$0xf]
  %v25 = vld [vmem:[%s0 + $0x8] sm:$0xf]
  %v26 = vld [vmem:[%s0 + $0xc] sm:$0xf]
  %v27 = vld [vmem:[%s0 + $0x10] sm:$0xf]
  %v28 = vld [vmem:[%s0 + $0x14] sm:$0xf]
  %v29 = vld [vmem:[%s0 + $0x18] sm:$0xf]
  %v30 = vld [vmem:[%s0 + $0x1c] sm:$0xf]
  %v31 = vld [vmem:[%s0 + $0x20] sm:$0xf]
  %v32 = vld [vmem:[%s0 + $0x24] sm:$0xf]
  %v33 = vld [vmem:[%s0 + $0x28] sm:$0xf]
  %v34 = vld [vmem:[%s0 + $0x2c] sm:$0xf]
  %v35 = vld [vmem:[%s0 + $0x30] sm:$0xf]
  %v36 = vld [vmem:[%s0 + $0x34] sm:$0xf]
  %v37 = vld [vmem:[%s0 + $0x38] sm:$0xf]
  %v38 = vld [vmem:[%s0 + $0x3c] sm:$0xf]
  %v39 = vld [vmem:[%s0 + $0x40] sm:$0xf]
  %v40 = vld [vmem:[%s0 + $0x44] sm:$0xf]
  %v41 = vld [vmem:[%s0 + $0x48] sm:$0xf]
  %v42 = vld [vmem:[%s0 + $0x4c] sm:$0xf]
  %v43 = vld [vmem:[%s0 + $0x50] sm:$0xf]
  %v44 = vld [vmem:[%s0 + $0x54] sm:$0xf]
  %v45 = vld [vmem:[%s0 + $0x58] sm:$0xf]
  %v46 = vld [vmem:[%s0 + $0x5c] sm:$0xf]
  %v47 = vld [vmem:[%s0 + $0x60] sm:$0xf]
  %v48 = vld [vmem:[%s0 + $0x64] sm:$0xf]
  %v49 = vld [vmem:[%s0 + $0x68] sm:$0xf]
  %v50 = vld [vmem:[%s0 + $0x6c] sm:$0xf]
  %v51 = vld [vmem:[%s0 + $0x70] sm:$0xf]
  %v52 = vld [vmem:[%s0 + $0x74] sm:$0xf]
  %v53 = vld [vmem:[%s0 + $0x78] sm:$0xf]
  %v54 = vld [vmem:[%s0 + $0x7c] sm:$0xf]
  %v55 = vld [vmem:[%s0 + $0x80] sm:$0xf]
  %v56 = vld [vmem:[%s0 + $0x84] sm:$0xf]
  %v57 = vld [vmem:[%s0 + $0x88] sm:$0xf]
  %v58 = vld [vmem:[%s0 + $0x8c] sm:$0xf]
  %v59 = vld [vmem:[%s0 + $0x90] sm:$0xf]
  %v60 = vld [vmem:[%s0 + $0x94] sm:$0xf]
  %v61 = vld [vmem:[%s0 + $0x98] sm:$0xf]
  %v62 = vld [vmem:[%s0 + $0x9c] sm:$0xf]
  %v63 = vld [vmem:[%s0 + $0xa0] sm:$0xf]
  %v64 = vld [vmem:[%s0 + $0xa4] sm:$0xf]
  %v65 = vld [vmem:[%s0 + $0xa8] sm:$0xf]
  %v66 = vld [vmem:[%s0 + $0xac] sm:$0xf]
  %v67 = vld [vmem:[%s0 + $0xb0] sm:$0xf]
  %v68 = vld [vmem:[%s0 + $0xb4] sm:$0xf]
  %v69 = vld [vmem:[%s0 + $0xb8] sm:$0xf]
  %v70 = vld [vmem:[%s0 + $0xbc] sm:$0xf]
  %v71 = vld [vmem:[%s0 + $0xc0] sm:$0xf]
  %v72 = vld [vmem:[%s0 + $0xc4] sm:$0xf]
  %v73 = vld [vmem:[%s0 + $0xc8] sm:$0xf]
  %v74 = vld [vmem:[%s0 + $0xcc] sm:$0xf]
  %v75 = vld [vmem:[%s0 + $0xd0] sm:$0xf]
  %v76 = vld [vmem:[%s0 + $0xd4] sm:$0xf]
  %v77 = vld [vmem:[%s0 + $0xd8] sm:$0xf]
  %v78 = vld [vmem:[%s0 + $0xdc] sm:$0xf]
  %v79 = vld [vmem:[%s0 + $0xe0] sm:$0xf]
  %v80 = vld [vmem:[%s0 + $0xe4] sm:$0xf]
  %v81 = vld [vmem:[%s0 + $0xe8] sm:$0xf]
  %v82 = vld [vmem:[%s0 + $0xec] sm:$0xf]
  %v83 = vld [vmem:[%s0 + $0xf0] sm:$0xf]
  %v84 = vld [vmem:[%s0 + $0xf4] sm:$0xf]
  %v85 = vld [vmem:[%s0 + $0xf8] sm:$0xf]
  %v86 = vld [vmem:[%s0 + $0xfc] sm:$0xf]
  %v87 = vunpack.c.l.bf16 %v23
  %v88 = vunpack.c.l.bf16 %v24
  %v89 = vunpack.c.l.bf16 %v25
  %v90 = vunpack.c.l.bf16 %v26
  %v91 = vunpack.c.l.bf16 %v27
  %v92 = vunpack.c.l.bf16 %v28
  %v93 = vunpack.c.l.bf16 %v29
  %v94 = vunpack.c.l.bf16 %v30
  %v95 = vunpack.c.l.bf16 %v31
  %v96 = vunpack.c.l.bf16 %v32
  %v97 = vunpack.c.l.bf16 %v33
  %v98 = vunpack.c.l.bf16 %v34
  %v99 = vunpack.c.l.bf16 %v35
  %v100 = vunpack.c.l.bf16 %v36
  %v101 = vunpack.c.l.bf16 %v37
  %v102 = vunpack.c.l.bf16 %v38
  %v103 = vunpack.c.l.bf16 %v39
  %v104 = vunpack.c.l.bf16 %v40
  %v105 = vunpack.c.l.bf16 %v41
  %v106 = vunpack.c.l.bf16 %v42
  %v107 = vunpack.c.l.bf16 %v43
  %v108 = vunpack.c.l.bf16 %v44
  %v109 = vunpack.c.l.bf16 %v45
  %v110 = vunpack.c.l.bf16 %v46
  %v111 = vunpack.c.l.bf16 %v47
  %v112 = vunpack.c.l.bf16 %v48
  %v113 = vunpack.c.l.bf16 %v49
  %v114 = vunpack.c.l.bf16 %v50
  %v115 = vunpack.c.l.bf16 %v51
  %v116 = vunpack.c.l.bf16 %v52
  %v117 = vunpack.c.l.bf16 %v53
  %v118 = vunpack.c.l.bf16 %v54
  %v119 = vunpack.c.l.bf16 %v55
  %v120 = vunpack.c.l.bf16 %v56
  %v121 = vunpack.c.l.bf16 %v57
  %v122 = vunpack.c.l.bf16 %v58
  %v123 = vunpack.c.l.bf16 %v59
  %v124 = vunpack.c.l.bf16 %v60
  %v125 = vunpack.c.l.bf16 %v61
  %v126 = vunpack.c.l.bf16 %v62
  %v127 = vunpack.c.l.bf16 %v63
  %v128 = vunpack.c.l.bf16 %v64
  %v129 = vunpack.c.l.bf16 %v65
  %v130 = vunpack.c.l.bf16 %v66
  %v131 = vunpack.c.l.bf16 %v67
  %v132 = vunpack.c.l.bf16 %v68
  %v133 = vunpack.c.l.bf16 %v69
  %v134 = vunpack.c.l.bf16 %v70
  %v135 = vunpack.c.l.bf16 %v71
  %v136 = vunpack.c.l.bf16 %v72
  %v137 = vunpack.c.l.bf16 %v73
  %v138 = vunpack.c.l.bf16 %v74
  %v139 = vunpack.c.l.bf16 %v75
  %v140 = vunpack.c.l.bf16 %v76
  %v141 = vunpack.c.l.bf16 %v77
  %v142 = vunpack.c.l.bf16 %v78
  %v143 = vunpack.c.l.bf16 %v79
  %v144 = vunpack.c.l.bf16 %v80
  %v145 = vunpack.c.l.bf16 %v81
  %v146 = vunpack.c.l.bf16 %v82
  %v147 = vunpack.c.l.bf16 %v83
  %v148 = vunpack.c.l.bf16 %v84
  %v149 = vunpack.c.l.bf16 %v85
  %v150 = vunpack.c.l.bf16 %v86
  %v151 = vld [vmem:[%s2] sm:$0x1]
  %v153 = vlaneseq
  %v154 = vshrl.u32 %v153, 7
  %v155 = vsub.s32 0, %v154
  %v156 = vrot.slane %v151, %v155
  %v158 = vmul.f32 %v87, %v156
  %v159 = vmul.f32 %v88, %v156
  %v160 = vmul.f32 %v89, %v156
  %v161 = vmul.f32 %v90, %v156
  %v162 = vmul.f32 %v91, %v156
  %v163 = vmul.f32 %v92, %v156
  %v164 = vmul.f32 %v93, %v156
  %v165 = vmul.f32 %v94, %v156
  %v166 = vmul.f32 %v95, %v156
  %v167 = vmul.f32 %v96, %v156
  %v168 = vmul.f32 %v97, %v156
  %v169 = vmul.f32 %v98, %v156
  %v170 = vmul.f32 %v99, %v156
  %v171 = vmul.f32 %v100, %v156
  %v172 = vmul.f32 %v101, %v156
  %v173 = vmul.f32 %v102, %v156
  %v174 = vmul.f32 %v103, %v156
  %v175 = vmul.f32 %v104, %v156
  %v176 = vmul.f32 %v105, %v156
  %v177 = vmul.f32 %v106, %v156
  %v178 = vmul.f32 %v107, %v156
  %v179 = vmul.f32 %v108, %v156
  %v180 = vmul.f32 %v109, %v156
  %v181 = vmul.f32 %v110, %v156
  %v182 = vmul.f32 %v111, %v156
  %v183 = vmul.f32 %v112, %v156
  %v184 = vmul.f32 %v113, %v156
  %v185 = vmul.f32 %v114, %v156
  %v186 = vmul.f32 %v115, %v156
  %v187 = vmul.f32 %v116, %v156
  %v188 = vmul.f32 %v117, %v156
  %v189 = vmul.f32 %v118, %v156
  %v190 = vmul.f32 %v119, %v156
  %v191 = vmul.f32 %v120, %v156
  %v192 = vmul.f32 %v121, %v156
  %v193 = vmul.f32 %v122, %v156
  %v194 = vmul.f32 %v123, %v156
  %v195 = vmul.f32 %v124, %v156
  %v196 = vmul.f32 %v125, %v156
  %v197 = vmul.f32 %v126, %v156
  %v198 = vmul.f32 %v127, %v156
  %v199 = vmul.f32 %v128, %v156
  %v200 = vmul.f32 %v129, %v156
  %v201 = vmul.f32 %v130, %v156
  %v202 = vmul.f32 %v131, %v156
  %v203 = vmul.f32 %v132, %v156
  %v204 = vmul.f32 %v133, %v156
  %v205 = vmul.f32 %v134, %v156
  %v206 = vmul.f32 %v135, %v156
  %v207 = vmul.f32 %v136, %v156
  %v208 = vmul.f32 %v137, %v156
  %v209 = vmul.f32 %v138, %v156
  %v210 = vmul.f32 %v139, %v156
  %v211 = vmul.f32 %v140, %v156
  %v212 = vmul.f32 %v141, %v156
  %v213 = vmul.f32 %v142, %v156
  %v214 = vmul.f32 %v143, %v156
  %v215 = vmul.f32 %v144, %v156
  %v216 = vmul.f32 %v145, %v156
  %v217 = vmul.f32 %v146, %v156
  %v218 = vmul.f32 %v147, %v156
  %v219 = vmul.f32 %v148, %v156
  %v220 = vmul.f32 %v149, %v156
  %v221 = vmul.f32 %v150, %v156
  %v222 = vld [vmem:[%s3] sm:$0x1]
  %v224 = vlaneseq
  %v225 = vshrl.u32 %v224, 7
  %v226 = vsub.s32 0, %v225
  %v227 = vrot.slane %v222, %v226
  %v229 = vadd.f32 %v158, %v227
  %v230 = vadd.f32 %v159, %v227
  %v231 = vadd.f32 %v160, %v227
  %v232 = vadd.f32 %v161, %v227
  %v233 = vadd.f32 %v162, %v227
  %v234 = vadd.f32 %v163, %v227
  %v235 = vadd.f32 %v164, %v227
  %v236 = vadd.f32 %v165, %v227
  %v237 = vadd.f32 %v166, %v227
  %v238 = vadd.f32 %v167, %v227
  %v239 = vadd.f32 %v168, %v227
  %v240 = vadd.f32 %v169, %v227
  %v241 = vadd.f32 %v170, %v227
  %v242 = vadd.f32 %v171, %v227
  %v243 = vadd.f32 %v172, %v227
  %v244 = vadd.f32 %v173, %v227
  %v245 = vadd.f32 %v174, %v227
  %v246 = vadd.f32 %v175, %v227
  %v247 = vadd.f32 %v176, %v227
  %v248 = vadd.f32 %v177, %v227
  %v249 = vadd.f32 %v178, %v227
  %v250 = vadd.f32 %v179, %v227
  %v251 = vadd.f32 %v180, %v227
  %v252 = vadd.f32 %v181, %v227
  %v253 = vadd.f32 %v182, %v227
  %v254 = vadd.f32 %v183, %v227
  %v255 = vadd.f32 %v184, %v227
  %v256 = vadd.f32 %v185, %v227
  %v257 = vadd.f32 %v186, %v227
  %v258 = vadd.f32 %v187, %v227
  %v259 = vadd.f32 %v188, %v227
  %v260 = vadd.f32 %v189, %v227
  %v261 = vadd.f32 %v190, %v227
  %v262 = vadd.f32 %v191, %v227
  %v263 = vadd.f32 %v192, %v227
  %v264 = vadd.f32 %v193, %v227
  %v265 = vadd.f32 %v194, %v227
  %v266 = vadd.f32 %v195, %v227
  %v267 = vadd.f32 %v196, %v227
  %v268 = vadd.f32 %v197, %v227
  %v269 = vadd.f32 %v198, %v227
  %v270 = vadd.f32 %v199, %v227
  %v271 = vadd.f32 %v200, %v227
  %v272 = vadd.f32 %v201, %v227
  %v273 = vadd.f32 %v202, %v227
  %v274 = vadd.f32 %v203, %v227
  %v275 = vadd.f32 %v204, %v227
  %v276 = vadd.f32 %v205, %v227
  %v277 = vadd.f32 %v206, %v227
  %v278 = vadd.f32 %v207, %v227
  %v279 = vadd.f32 %v208, %v227
  %v280 = vadd.f32 %v209, %v227
  %v281 = vadd.f32 %v210, %v227
  %v282 = vadd.f32 %v211, %v227
  %v283 = vadd.f32 %v212, %v227
  %v284 = vadd.f32 %v213, %v227
  %v285 = vadd.f32 %v214, %v227
  %v286 = vadd.f32 %v215, %v227
  %v287 = vadd.f32 %v216, %v227
  %v288 = vadd.f32 %v217, %v227
  %v289 = vadd.f32 %v218, %v227
  %v290 = vadd.f32 %v219, %v227
  %v291 = vadd.f32 %v220, %v227
  %v292 = vadd.f32 %v221, %v227
  %v293 = vld [vmem:[%s1] sm:$0xf]
  %v294 = vld [vmem:[%s1 + $0x4] sm:$0xf]
  %v295 = vld [vmem:[%s1 + $0x8] sm:$0xf]
  %v296 = vld [vmem:[%s1 + $0xc] sm:$0xf]
  %v297 = vld [vmem:[%s1 + $0x10] sm:$0xf]
  %v298 = vld [vmem:[%s1 + $0x14] sm:$0xf]
  %v299 = vld [vmem:[%s1 + $0x18] sm:$0xf]
  %v300 = vld [vmem:[%s1 + $0x1c] sm:$0xf]
  %v301 = vld [vmem:[%s1 + $0x20] sm:$0xf]
  %v302 = vld [vmem:[%s1 + $0x24] sm:$0xf]
  %v303 = vld [vmem:[%s1 + $0x28] sm:$0xf]
  %v304 = vld [vmem:[%s1 + $0x2c] sm:$0xf]
  %v305 = vld [vmem:[%s1 + $0x30] sm:$0xf]
  %v306 = vld [vmem:[%s1 + $0x34] sm:$0xf]
  %v307 = vld [vmem:[%s1 + $0x38] sm:$0xf]
  %v308 = vld [vmem:[%s1 + $0x3c] sm:$0xf]
  %v309 = vld [vmem:[%s1 + $0x40] sm:$0xf]
  %v310 = vld [vmem:[%s1 + $0x44] sm:$0xf]
  %v311 = vld [vmem:[%s1 + $0x48] sm:$0xf]
  %v312 = vld [vmem:[%s1 + $0x4c] sm:$0xf]
  %v313 = vld [vmem:[%s1 + $0x50] sm:$0xf]
  %v314 = vld [vmem:[%s1 + $0x54] sm:$0xf]
  %v315 = vld [vmem:[%s1 + $0x58] sm:$0xf]
  %v316 = vld [vmem:[%s1 + $0x5c] sm:$0xf]
  %v317 = vld [vmem:[%s1 + $0x60] sm:$0xf]
  %v318 = vld [vmem:[%s1 + $0x64] sm:$0xf]
  %v319 = vld [vmem:[%s1 + $0x68] sm:$0xf]
  %v320 = vld [vmem:[%s1 + $0x6c] sm:$0xf]
  %v321 = vld [vmem:[%s1 + $0x70] sm:$0xf]
  %v322 = vld [vmem:[%s1 + $0x74] sm:$0xf]
  %v323 = vld [vmem:[%s1 + $0x78] sm:$0xf]
  %v324 = vld [vmem:[%s1 + $0x7c] sm:$0xf]
  %v325 = vld [vmem:[%s1 + $0x80] sm:$0xf]
  %v326 = vld [vmem:[%s1 + $0x84] sm:$0xf]
  %v327 = vld [vmem:[%s1 + $0x88] sm:$0xf]
  %v328 = vld [vmem:[%s1 + $0x8c] sm:$0xf]
  %v329 = vld [vmem:[%s1 + $0x90] sm:$0xf]
  %v330 = vld [vmem:[%s1 + $0x94] sm:$0xf]
  %v331 = vld [vmem:[%s1 + $0x98] sm:$0xf]
  %v332 = vld [vmem:[%s1 + $0x9c] sm:$0xf]
  %v333 = vld [vmem:[%s1 + $0xa0] sm:$0xf]
  %v334 = vld [vmem:[%s1 + $0xa4] sm:$0xf]
  %v335 = vld [vmem:[%s1 + $0xa8] sm:$0xf]
  %v336 = vld [vmem:[%s1 + $0xac] sm:$0xf]
  %v337 = vld [vmem:[%s1 + $0xb0] sm:$0xf]
  %v338 = vld [vmem:[%s1 + $0xb4] sm:$0xf]
  %v339 = vld [vmem:[%s1 + $0xb8] sm:$0xf]
  %v340 = vld [vmem:[%s1 + $0xbc] sm:$0xf]
  %v341 = vld [vmem:[%s1 + $0xc0] sm:$0xf]
  %v342 = vld [vmem:[%s1 + $0xc4] sm:$0xf]
  %v343 = vld [vmem:[%s1 + $0xc8] sm:$0xf]
  %v344 = vld [vmem:[%s1 + $0xcc] sm:$0xf]
  %v345 = vld [vmem:[%s1 + $0xd0] sm:$0xf]
  %v346 = vld [vmem:[%s1 + $0xd4] sm:$0xf]
  %v347 = vld [vmem:[%s1 + $0xd8] sm:$0xf]
  %v348 = vld [vmem:[%s1 + $0xdc] sm:$0xf]
  %v349 = vld [vmem:[%s1 + $0xe0] sm:$0xf]
  %v350 = vld [vmem:[%s1 + $0xe4] sm:$0xf]
  %v351 = vld [vmem:[%s1 + $0xe8] sm:$0xf]
  %v352 = vld [vmem:[%s1 + $0xec] sm:$0xf]
  %v353 = vld [vmem:[%s1 + $0xf0] sm:$0xf]
  %v354 = vld [vmem:[%s1 + $0xf4] sm:$0xf]
  %v355 = vld [vmem:[%s1 + $0xf8] sm:$0xf]
  %v356 = vld [vmem:[%s1 + $0xfc] sm:$0xf]
  %v357 = vunpack.c.l.bf16 %v293
  %v358 = vunpack.c.l.bf16 %v294
  %v359 = vunpack.c.l.bf16 %v295
  %v360 = vunpack.c.l.bf16 %v296
  %v361 = vunpack.c.l.bf16 %v297
  %v362 = vunpack.c.l.bf16 %v298
  %v363 = vunpack.c.l.bf16 %v299
  %v364 = vunpack.c.l.bf16 %v300
  %v365 = vunpack.c.l.bf16 %v301
  %v366 = vunpack.c.l.bf16 %v302
  %v367 = vunpack.c.l.bf16 %v303
  %v368 = vunpack.c.l.bf16 %v304
  %v369 = vunpack.c.l.bf16 %v305
  %v370 = vunpack.c.l.bf16 %v306
  %v371 = vunpack.c.l.bf16 %v307
  %v372 = vunpack.c.l.bf16 %v308
  %v373 = vunpack.c.l.bf16 %v309
  %v374 = vunpack.c.l.bf16 %v310
  %v375 = vunpack.c.l.bf16 %v311
  %v376 = vunpack.c.l.bf16 %v312
  %v377 = vunpack.c.l.bf16 %v313
  %v378 = vunpack.c.l.bf16 %v314
  %v379 = vunpack.c.l.bf16 %v315
  %v380 = vunpack.c.l.bf16 %v316
  %v381 = vunpack.c.l.bf16 %v317
  %v382 = vunpack.c.l.bf16 %v318
  %v383 = vunpack.c.l.bf16 %v319
  %v384 = vunpack.c.l.bf16 %v320
  %v385 = vunpack.c.l.bf16 %v321
  %v386 = vunpack.c.l.bf16 %v322
  %v387 = vunpack.c.l.bf16 %v323
  %v388 = vunpack.c.l.bf16 %v324
  %v389 = vunpack.c.l.bf16 %v325
  %v390 = vunpack.c.l.bf16 %v326
  %v391 = vunpack.c.l.bf16 %v327
  %v392 = vunpack.c.l.bf16 %v328
  %v393 = vunpack.c.l.bf16 %v329
  %v394 = vunpack.c.l.bf16 %v330
  %v395 = vunpack.c.l.bf16 %v331
  %v396 = vunpack.c.l.bf16 %v332
  %v397 = vunpack.c.l.bf16 %v333
  %v398 = vunpack.c.l.bf16 %v334
  %v399 = vunpack.c.l.bf16 %v335
  %v400 = vunpack.c.l.bf16 %v336
  %v401 = vunpack.c.l.bf16 %v337
  %v402 = vunpack.c.l.bf16 %v338
  %v403 = vunpack.c.l.bf16 %v339
  %v404 = vunpack.c.l.bf16 %v340
  %v405 = vunpack.c.l.bf16 %v341
  %v406 = vunpack.c.l.bf16 %v342
  %v407 = vunpack.c.l.bf16 %v343
  %v408 = vunpack.c.l.bf16 %v344
  %v409 = vunpack.c.l.bf16 %v345
  %v410 = vunpack.c.l.bf16 %v346
  %v411 = vunpack.c.l.bf16 %v347
  %v412 = vunpack.c.l.bf16 %v348
  %v413 = vunpack.c.l.bf16 %v349
  %v414 = vunpack.c.l.bf16 %v350
  %v415 = vunpack.c.l.bf16 %v351
  %v416 = vunpack.c.l.bf16 %v352
  %v417 = vunpack.c.l.bf16 %v353
  %v418 = vunpack.c.l.bf16 %v354
  %v419 = vunpack.c.l.bf16 %v355
  %v420 = vunpack.c.l.bf16 %v356
  %v421 = vld [vmem:[%s4] sm:$0x1]
  %v423 = vlaneseq
  %v424 = vshrl.u32 %v423, 7
  %v425 = vsub.s32 0, %v424
  %v426 = vrot.slane %v421, %v425
  %v428 = vmul.f32 %v357, %v426
  %v429 = vmul.f32 %v358, %v426
  %v430 = vmul.f32 %v359, %v426
  %v431 = vmul.f32 %v360, %v426
  %v432 = vmul.f32 %v361, %v426
  %v433 = vmul.f32 %v362, %v426
  %v434 = vmul.f32 %v363, %v426
  %v435 = vmul.f32 %v364, %v426
  %v436 = vmul.f32 %v365, %v426
  %v437 = vmul.f32 %v366, %v426
  %v438 = vmul.f32 %v367, %v426
  %v439 = vmul.f32 %v368, %v426
  %v440 = vmul.f32 %v369, %v426
  %v441 = vmul.f32 %v370, %v426
  %v442 = vmul.f32 %v371, %v426
  %v443 = vmul.f32 %v372, %v426
  %v444 = vmul.f32 %v373, %v426
  %v445 = vmul.f32 %v374, %v426
  %v446 = vmul.f32 %v375, %v426
  %v447 = vmul.f32 %v376, %v426
  %v448 = vmul.f32 %v377, %v426
  %v449 = vmul.f32 %v378, %v426
  %v450 = vmul.f32 %v379, %v426
  %v451 = vmul.f32 %v380, %v426
  %v452 = vmul.f32 %v381, %v426
  %v453 = vmul.f32 %v382, %v426
  %v454 = vmul.f32 %v383, %v426
  %v455 = vmul.f32 %v384, %v426
  %v456 = vmul.f32 %v385, %v426
  %v457 = vmul.f32 %v386, %v426
  %v458 = vmul.f32 %v387, %v426
  %v459 = vmul.f32 %v388, %v426
  %v460 = vmul.f32 %v389, %v426
  %v461 = vmul.f32 %v390, %v426
  %v462 = vmul.f32 %v391, %v426
  %v463 = vmul.f32 %v392, %v426
  %v464 = vmul.f32 %v393, %v426
  %v465 = vmul.f32 %v394, %v426
  %v466 = vmul.f32 %v395, %v426
  %v467 = vmul.f32 %v396, %v426
  %v468 = vmul.f32 %v397, %v426
  %v469 = vmul.f32 %v398, %v426
  %v470 = vmul.f32 %v399, %v426
  %v471 = vmul.f32 %v400, %v426
  %v472 = vmul.f32 %v401, %v426
  %v473 = vmul.f32 %v402, %v426
  %v474 = vmul.f32 %v403, %v426
  %v475 = vmul.f32 %v404, %v426
  %v476 = vmul.f32 %v405, %v426
  %v477 = vmul.f32 %v406, %v426
  %v478 = vmul.f32 %v407, %v426
  %v479 = vmul.f32 %v408, %v426
  %v480 = vmul.f32 %v409, %v426
  %v481 = vmul.f32 %v410, %v426
  %v482 = vmul.f32 %v411, %v426
  %v483 = vmul.f32 %v412, %v426
  %v484 = vmul.f32 %v413, %v426
  %v485 = vmul.f32 %v414, %v426
  %v486 = vmul.f32 %v415, %v426
  %v487 = vmul.f32 %v416, %v426
  %v488 = vmul.f32 %v417, %v426
  %v489 = vmul.f32 %v418, %v426
  %v490 = vmul.f32 %v419, %v426
  %v491 = vmul.f32 %v420, %v426
  %v492 = vld [vmem:[%s5] sm:$0x1]
  %v494 = vlaneseq
  %v495 = vshrl.u32 %v494, 7
  %v496 = vsub.s32 0, %v495
  %v497 = vrot.slane %v492, %v496
  %v499 = vadd.f32 %v428, %v497
  %v500 = vadd.f32 %v429, %v497
  %v501 = vadd.f32 %v430, %v497
  %v502 = vadd.f32 %v431, %v497
  %v503 = vadd.f32 %v432, %v497
  %v504 = vadd.f32 %v433, %v497
  %v505 = vadd.f32 %v434, %v497
  %v506 = vadd.f32 %v435, %v497
  %v507 = vadd.f32 %v436, %v497
  %v508 = vadd.f32 %v437, %v497
  %v509 = vadd.f32 %v438, %v497
  %v510 = vadd.f32 %v439, %v497
  %v511 = vadd.f32 %v440, %v497
  %v512 = vadd.f32 %v441, %v497
  %v513 = vadd.f32 %v442, %v497
  %v514 = vadd.f32 %v443, %v497
  %v515 = vadd.f32 %v444, %v497
  %v516 = vadd.f32 %v445, %v497
  %v517 = vadd.f32 %v446, %v497
  %v518 = vadd.f32 %v447, %v497
  %v519 = vadd.f32 %v448, %v497
  %v520 = vadd.f32 %v449, %v497
  %v521 = vadd.f32 %v450, %v497
  %v522 = vadd.f32 %v451, %v497
  %v523 = vadd.f32 %v452, %v497
  %v524 = vadd.f32 %v453, %v497
  %v525 = vadd.f32 %v454, %v497
  %v526 = vadd.f32 %v455, %v497
  %v527 = vadd.f32 %v456, %v497
  %v528 = vadd.f32 %v457, %v497
  %v529 = vadd.f32 %v458, %v497
  %v530 = vadd.f32 %v459, %v497
  %v531 = vadd.f32 %v460, %v497
  %v532 = vadd.f32 %v461, %v497
  %v533 = vadd.f32 %v462, %v497
  %v534 = vadd.f32 %v463, %v497
  %v535 = vadd.f32 %v464, %v497
  %v536 = vadd.f32 %v465, %v497
  %v537 = vadd.f32 %v466, %v497
  %v538 = vadd.f32 %v467, %v497
  %v539 = vadd.f32 %v468, %v497
  %v540 = vadd.f32 %v469, %v497
  %v541 = vadd.f32 %v470, %v497
  %v542 = vadd.f32 %v471, %v497
  %v543 = vadd.f32 %v472, %v497
  %v544 = vadd.f32 %v473, %v497
  %v545 = vadd.f32 %v474, %v497
  %v546 = vadd.f32 %v475, %v497
  %v547 = vadd.f32 %v476, %v497
  %v548 = vadd.f32 %v477, %v497
  %v549 = vadd.f32 %v478, %v497
  %v550 = vadd.f32 %v479, %v497
  %v551 = vadd.f32 %v480, %v497
  %v552 = vadd.f32 %v481, %v497
  %v553 = vadd.f32 %v482, %v497
  %v554 = vadd.f32 %v483, %v497
  %v555 = vadd.f32 %v484, %v497
  %v556 = vadd.f32 %v485, %v497
  %v557 = vadd.f32 %v486, %v497
  %v558 = vadd.f32 %v487, %v497
  %v559 = vadd.f32 %v488, %v497
  %v560 = vadd.f32 %v489, %v497
  %v561 = vadd.f32 %v490, %v497
  %v562 = vadd.f32 %v491, %v497
  %v563 = vadd.f32 %v229, %v499
  %v564 = vadd.f32 %v230, %v500
  %v565 = vadd.f32 %v231, %v501
  %v566 = vadd.f32 %v232, %v502
  %v567 = vadd.f32 %v233, %v503
  %v568 = vadd.f32 %v234, %v504
  %v569 = vadd.f32 %v235, %v505
  %v570 = vadd.f32 %v236, %v506
  %v571 = vadd.f32 %v237, %v507
  %v572 = vadd.f32 %v238, %v508
  %v573 = vadd.f32 %v239, %v509
  %v574 = vadd.f32 %v240, %v510
  %v575 = vadd.f32 %v241, %v511
  %v576 = vadd.f32 %v242, %v512
  %v577 = vadd.f32 %v243, %v513
  %v578 = vadd.f32 %v244, %v514
  %v579 = vadd.f32 %v245, %v515
  %v580 = vadd.f32 %v246, %v516
  %v581 = vadd.f32 %v247, %v517
  %v582 = vadd.f32 %v248, %v518
  %v583 = vadd.f32 %v249, %v519
  %v584 = vadd.f32 %v250, %v520
  %v585 = vadd.f32 %v251, %v521
  %v586 = vadd.f32 %v252, %v522
  %v587 = vadd.f32 %v253, %v523
  %v588 = vadd.f32 %v254, %v524
  %v589 = vadd.f32 %v255, %v525
  %v590 = vadd.f32 %v256, %v526
  %v591 = vadd.f32 %v257, %v527
  %v592 = vadd.f32 %v258, %v528
  %v593 = vadd.f32 %v259, %v529
  %v594 = vadd.f32 %v260, %v530
  %v595 = vadd.f32 %v261, %v531
  %v596 = vadd.f32 %v262, %v532
  %v597 = vadd.f32 %v263, %v533
  %v598 = vadd.f32 %v264, %v534
  %v599 = vadd.f32 %v265, %v535
  %v600 = vadd.f32 %v266, %v536
  %v601 = vadd.f32 %v267, %v537
  %v602 = vadd.f32 %v268, %v538
  %v603 = vadd.f32 %v269, %v539
  %v604 = vadd.f32 %v270, %v540
  %v605 = vadd.f32 %v271, %v541
  %v606 = vadd.f32 %v272, %v542
  %v607 = vadd.f32 %v273, %v543
  %v608 = vadd.f32 %v274, %v544
  %v609 = vadd.f32 %v275, %v545
  %v610 = vadd.f32 %v276, %v546
  %v611 = vadd.f32 %v277, %v547
  %v612 = vadd.f32 %v278, %v548
  %v613 = vadd.f32 %v279, %v549
  %v614 = vadd.f32 %v280, %v550
  %v615 = vadd.f32 %v281, %v551
  %v616 = vadd.f32 %v282, %v552
  %v617 = vadd.f32 %v283, %v553
  %v618 = vadd.f32 %v284, %v554
  %v619 = vadd.f32 %v285, %v555
  %v620 = vadd.f32 %v286, %v556
  %v621 = vadd.f32 %v287, %v557
  %v622 = vadd.f32 %v288, %v558
  %v623 = vadd.f32 %v289, %v559
  %v624 = vadd.f32 %v290, %v560
  %v625 = vadd.f32 %v291, %v561
  %v626 = vadd.f32 %v292, %v562
  %v627 = vmax.f32 %v563, 0.0
  %v628 = vmax.f32 %v564, 0.0
  %v629 = vmax.f32 %v565, 0.0
  %v630 = vmax.f32 %v566, 0.0
  %v631 = vmax.f32 %v567, 0.0
  %v632 = vmax.f32 %v568, 0.0
  %v633 = vmax.f32 %v569, 0.0
  %v634 = vmax.f32 %v570, 0.0
  %v635 = vmax.f32 %v571, 0.0
  %v636 = vmax.f32 %v572, 0.0
  %v637 = vmax.f32 %v573, 0.0
  %v638 = vmax.f32 %v574, 0.0
  %v639 = vmax.f32 %v575, 0.0
  %v640 = vmax.f32 %v576, 0.0
  %v641 = vmax.f32 %v577, 0.0
  %v642 = vmax.f32 %v578, 0.0
  %v643 = vmax.f32 %v579, 0.0
  %v644 = vmax.f32 %v580, 0.0
  %v645 = vmax.f32 %v581, 0.0
  %v646 = vmax.f32 %v582, 0.0
  %v647 = vmax.f32 %v583, 0.0
  %v648 = vmax.f32 %v584, 0.0
  %v649 = vmax.f32 %v585, 0.0
  %v650 = vmax.f32 %v586, 0.0
  %v651 = vmax.f32 %v587, 0.0
  %v652 = vmax.f32 %v588, 0.0
  %v653 = vmax.f32 %v589, 0.0
  %v654 = vmax.f32 %v590, 0.0
  %v655 = vmax.f32 %v591, 0.0
  %v656 = vmax.f32 %v592, 0.0
  %v657 = vmax.f32 %v593, 0.0
  %v658 = vmax.f32 %v594, 0.0
  %v659 = vmax.f32 %v595, 0.0
  %v660 = vmax.f32 %v596, 0.0
  %v661 = vmax.f32 %v597, 0.0
  %v662 = vmax.f32 %v598, 0.0
  %v663 = vmax.f32 %v599, 0.0
  %v664 = vmax.f32 %v600, 0.0
  %v665 = vmax.f32 %v601, 0.0
  %v666 = vmax.f32 %v602, 0.0
  %v667 = vmax.f32 %v603, 0.0
  %v668 = vmax.f32 %v604, 0.0
  %v669 = vmax.f32 %v605, 0.0
  %v670 = vmax.f32 %v606, 0.0
  %v671 = vmax.f32 %v607, 0.0
  %v672 = vmax.f32 %v608, 0.0
  %v673 = vmax.f32 %v609, 0.0
  %v674 = vmax.f32 %v610, 0.0
  %v675 = vmax.f32 %v611, 0.0
  %v676 = vmax.f32 %v612, 0.0
  %v677 = vmax.f32 %v613, 0.0
  %v678 = vmax.f32 %v614, 0.0
  %v679 = vmax.f32 %v615, 0.0
  %v680 = vmax.f32 %v616, 0.0
  %v681 = vmax.f32 %v617, 0.0
  %v682 = vmax.f32 %v618, 0.0
  %v683 = vmax.f32 %v619, 0.0
  %v684 = vmax.f32 %v620, 0.0
  %v685 = vmax.f32 %v621, 0.0
  %v686 = vmax.f32 %v622, 0.0
  %v687 = vmax.f32 %v623, 0.0
  %v688 = vmax.f32 %v624, 0.0
  %v689 = vmax.f32 %v625, 0.0
  %v690 = vmax.f32 %v626, 0.0
  %691 = vst [vmem:[%s6] sm:$0xff] %v627
  %692 = vst [vmem:[%s6 + $0x8] sm:$0xff] %v628
  %693 = vst [vmem:[%s6 + $0x10] sm:$0xff] %v629
  %694 = vst [vmem:[%s6 + $0x18] sm:$0xff] %v630
  %695 = vst [vmem:[%s6 + $0x20] sm:$0xff] %v631
  %696 = vst [vmem:[%s6 + $0x28] sm:$0xff] %v632
  %697 = vst [vmem:[%s6 + $0x30] sm:$0xff] %v633
  %698 = vst [vmem:[%s6 + $0x38] sm:$0xff] %v634
  %699 = vst [vmem:[%s6 + $0x40] sm:$0xff] %v635
  %700 = vst [vmem:[%s6 + $0x48] sm:$0xff] %v636
  %701 = vst [vmem:[%s6 + $0x50] sm:$0xff] %v637
  %702 = vst [vmem:[%s6 + $0x58] sm:$0xff] %v638
  %703 = vst [vmem:[%s6 + $0x60] sm:$0xff] %v639
  %704 = vst [vmem:[%s6 + $0x68] sm:$0xff] %v640
  %705 = vst [vmem:[%s6 + $0x70] sm:$0xff] %v641
  %706 = vst [vmem:[%s6 + $0x78] sm:$0xff] %v642
  %707 = vst [vmem:[%s6 + $0x80] sm:$0xff] %v643
  %708 = vst [vmem:[%s6 + $0x88] sm:$0xff] %v644
  %709 = vst [vmem:[%s6 + $0x90] sm:$0xff] %v645
  %710 = vst [vmem:[%s6 + $0x98] sm:$0xff] %v646
  %711 = vst [vmem:[%s6 + $0xa0] sm:$0xff] %v647
  %712 = vst [vmem:[%s6 + $0xa8] sm:$0xff] %v648
  %713 = vst [vmem:[%s6 + $0xb0] sm:$0xff] %v649
  %714 = vst [vmem:[%s6 + $0xb8] sm:$0xff] %v650
  %715 = vst [vmem:[%s6 + $0xc0] sm:$0xff] %v651
  %716 = vst [vmem:[%s6 + $0xc8] sm:$0xff] %v652
  %717 = vst [vmem:[%s6 + $0xd0] sm:$0xff] %v653
  %718 = vst [vmem:[%s6 + $0xd8] sm:$0xff] %v654
  %719 = vst [vmem:[%s6 + $0xe0] sm:$0xff] %v655
  %720 = vst [vmem:[%s6 + $0xe8] sm:$0xff] %v656
  %721 = vst [vmem:[%s6 + $0xf0] sm:$0xff] %v657
  %722 = vst [vmem:[%s6 + $0xf8] sm:$0xff] %v658
  %723 = vst [vmem:[%s6 + $0x100] sm:$0xff] %v659
  %724 = vst [vmem:[%s6 + $0x108] sm:$0xff] %v660
  %725 = vst [vmem:[%s6 + $0x110] sm:$0xff] %v661
  %726 = vst [vmem:[%s6 + $0x118] sm:$0xff] %v662
  %727 = vst [vmem:[%s6 + $0x120] sm:$0xff] %v663
  %728 = vst [vmem:[%s6 + $0x128] sm:$0xff] %v664
  %729 = vst [vmem:[%s6 + $0x130] sm:$0xff] %v665
  %730 = vst [vmem:[%s6 + $0x138] sm:$0xff] %v666
  %731 = vst [vmem:[%s6 + $0x140] sm:$0xff] %v667
  %732 = vst [vmem:[%s6 + $0x148] sm:$0xff] %v668
  %733 = vst [vmem:[%s6 + $0x150] sm:$0xff] %v669
  %734 = vst [vmem:[%s6 + $0x158] sm:$0xff] %v670
  %735 = vst [vmem:[%s6 + $0x160] sm:$0xff] %v671
  %736 = vst [vmem:[%s6 + $0x168] sm:$0xff] %v672
  %737 = vst [vmem:[%s6 + $0x170] sm:$0xff] %v673
  %738 = vst [vmem:[%s6 + $0x178] sm:$0xff] %v674
  %739 = vst [vmem:[%s6 + $0x180] sm:$0xff] %v675
  %740 = vst [vmem:[%s6 + $0x188] sm:$0xff] %v676
  %741 = vst [vmem:[%s6 + $0x190] sm:$0xff] %v677
  %742 = vst [vmem:[%s6 + $0x198] sm:$0xff] %v678
  %743 = vst [vmem:[%s6 + $0x1a0] sm:$0xff] %v679
  %744 = vst [vmem:[%s6 + $0x1a8] sm:$0xff] %v680
  %745 = vst [vmem:[%s6 + $0x1b0] sm:$0xff] %v681
  %746 = vst [vmem:[%s6 + $0x1b8] sm:$0xff] %v682
  %747 = vst [vmem:[%s6 + $0x1c0] sm:$0xff] %v683
  %748 = vst [vmem:[%s6 + $0x1c8] sm:$0xff] %v684
  %749 = vst [vmem:[%s6 + $0x1d0] sm:$0xff] %v685
  %750 = vst [vmem:[%s6 + $0x1d8] sm:$0xff] %v686
  %751 = vst [vmem:[%s6 + $0x1e0] sm:$0xff] %v687
  %752 = vst [vmem:[%s6 + $0x1e8] sm:$0xff] %v688
  %753 = vst [vmem:[%s6 + $0x1f0] sm:$0xff] %v689
  %754 = vst [vmem:[%s6 + $0x1f8] sm:$0xff] %v690
  // Predicated region
  $region26: #{bottleneck_forward.7} parent=0 // pred_check
    _
  $region27: #{bottleneck_forward.7} parent=0 // pred_check_branch
    %756 = sbr.rel (0) target = $region29
  $region28: #{bottleneck_forward.7} parent=0 // pred_region
    _
  $region29: #{bottleneck_forward.7} parent=0 // pred_fallthru
    _
  // Predicated region
  $region30: #{bottleneck_forward.7} parent=0 // pred_check
    _
  $region31: #{bottleneck_forward.7} parent=0 // pred_check_branch
    %758 = sbr.rel (0) target = $region33
  $region32: #{bottleneck_forward.7} parent=0 // pred_region
    _
  $region33: #{bottleneck_forward.7} parent=0 // pred_fallthru
    _

// kernel: bottleneck_forward.6
$region0: #{bottleneck_forward.6}
  #allocation0 [shape = 'u32[]', space=smem, size = 0x4, offset = 0x4, fixed_abs, tag = 'smem constant byte address 0x4 - core index']
  #allocation1 [shape = 'u32[144,128]{1,0:T(1,128)}', space=vmem, size = 0x12000, scoped, tag = 'internal scratch']
  %s0 = inlined_call_operand.vmem [shape: bf16[512,128], index: 0, kind: input, shape index: {}]
  %s1 = inlined_call_operand.vmem [shape: f32[1,128], index: 1, kind: input, shape index: {}]
  %s2 = inlined_call_operand.vmem [shape: f32[1,128], index: 2, kind: input, shape index: {}]
  %s3 = inlined_call_operand.vmem [shape: bf16[128,128], index: 3, kind: input, shape index: {}]
  %s4 = inlined_call_operand.vmem [shape: bf16[512,128], index: 4, kind: input, shape index: {}]
  %s5 = inlined_call_operand.vmem [shape: bf16[128,128], index: 5, kind: input, shape index: {}]
  %s6 = inlined_call_operand.vmem [shape: bf16[512,128], index: 6, kind: output, shape index: {0}]
  %s7 = inlined_call_operand.vmem [shape: bf16[512,128], index: 7, kind: output, shape index: {1}]
  %s8 = inlined_call_operand.vmem [shape: f32[1,2,128], index: 8, kind: output, shape index: {2}]
  %s9 = inlined_call_operand.vmem [shape: f32[1,2,128], index: 9, kind: output, shape index: {3}]
  %10 = xla_tuple %s6, %s7, %s8, %s9
  %s11 = sld [smem:[#allocation0]]
  $region58: #{bottleneck_forward.6} parent=0
    _
  %s13 = ssub.s32 1, %s11
  %s14 = scalar_select 0, %s13, %s11
  // Predicated region
  $region2: #{bottleneck_forward.6} parent=0 // pred_check
    _
  $region3: #{bottleneck_forward.6} parent=0 // pred_check_branch
    %16 = sbr.rel (0) target = $region5
  $region4: #{bottleneck_forward.6} parent=0 // pred_region
    _
  $region5: #{bottleneck_forward.6} parent=0 // pred_fallthru
    _
  // Predicated region
  $region6: #{bottleneck_forward.6} parent=0 // pred_check
    _
  $region7: #{bottleneck_forward.6} parent=0 // pred_check_branch
    %18 = sbr.rel (0) target = $region9
  $region8: #{bottleneck_forward.6} parent=0 // pred_region
    _
  $region9: #{bottleneck_forward.6} parent=0 // pred_fallthru
    _
  // Predicated region
  $region10: #{bottleneck_forward.6} parent=0 // pred_check
    _
  $region11: #{bottleneck_forward.6} parent=0 // pred_check_branch
    %20 = sbr.rel (0) target = $region13
  $region12: #{bottleneck_forward.6} parent=0 // pred_region
    _
  $region13: #{bottleneck_forward.6} parent=0 // pred_fallthru
    _
  // Predicated region
  $region14: #{bottleneck_forward.6} parent=0 // pred_check
    _
  $region15: #{bottleneck_forward.6} parent=0 // pred_check_branch
    %22 = sbr.rel (0) target = $region17
  $region16: #{bottleneck_forward.6} parent=0 // pred_region
    _
  $region17: #{bottleneck_forward.6} parent=0 // pred_fallthru
    _
  // Predicated region
  $region18: #{bottleneck_forward.6} parent=0 // pred_check
    _
  $region19: #{bottleneck_forward.6} parent=0 // pred_check_branch
    %24 = sbr.rel (0) target = $region21
  $region20: #{bottleneck_forward.6} parent=0 // pred_region
    _
  $region21: #{bottleneck_forward.6} parent=0 // pred_fallthru
    _
  // Predicated region
  $region22: #{bottleneck_forward.6} parent=0 // pred_check
    _
  $region23: #{bottleneck_forward.6} parent=0 // pred_check_branch
    %26 = sbr.rel (0) target = $region25
  $region24: #{bottleneck_forward.6} parent=0 // pred_region
    _
  $region25: #{bottleneck_forward.6} parent=0 // pred_fallthru
    _
  %v28 = vld [vmem:[%s0] sm:$0xf]
  %v29 = vld [vmem:[%s0 + $0x4] sm:$0xf]
  %v30 = vld [vmem:[%s0 + $0x8] sm:$0xf]
  %v31 = vld [vmem:[%s0 + $0xc] sm:$0xf]
  %v32 = vld [vmem:[%s0 + $0x10] sm:$0xf]
  %v33 = vld [vmem:[%s0 + $0x14] sm:$0xf]
  %v34 = vld [vmem:[%s0 + $0x18] sm:$0xf]
  %v35 = vld [vmem:[%s0 + $0x1c] sm:$0xf]
  %v36 = vld [vmem:[%s0 + $0x20] sm:$0xf]
  %v37 = vld [vmem:[%s0 + $0x24] sm:$0xf]
  %v38 = vld [vmem:[%s0 + $0x28] sm:$0xf]
  %v39 = vld [vmem:[%s0 + $0x2c] sm:$0xf]
  %v40 = vld [vmem:[%s0 + $0x30] sm:$0xf]
  %v41 = vld [vmem:[%s0 + $0x34] sm:$0xf]
  %v42 = vld [vmem:[%s0 + $0x38] sm:$0xf]
  %v43 = vld [vmem:[%s0 + $0x3c] sm:$0xf]
  %v44 = vld [vmem:[%s0 + $0x40] sm:$0xf]
  %v45 = vld [vmem:[%s0 + $0x44] sm:$0xf]
  %v46 = vld [vmem:[%s0 + $0x48] sm:$0xf]
  %v47 = vld [vmem:[%s0 + $0x4c] sm:$0xf]
  %v48 = vld [vmem:[%s0 + $0x50] sm:$0xf]
  %v49 = vld [vmem:[%s0 + $0x54] sm:$0xf]
  %v50 = vld [vmem:[%s0 + $0x58] sm:$0xf]
  %v51 = vld [vmem:[%s0 + $0x5c] sm:$0xf]
  %v52 = vld [vmem:[%s0 + $0x60] sm:$0xf]
  %v53 = vld [vmem:[%s0 + $0x64] sm:$0xf]
  %v54 = vld [vmem:[%s0 + $0x68] sm:$0xf]
  %v55 = vld [vmem:[%s0 + $0x6c] sm:$0xf]
  %v56 = vld [vmem:[%s0 + $0x70] sm:$0xf]
  %v57 = vld [vmem:[%s0 + $0x74] sm:$0xf]
  %v58 = vld [vmem:[%s0 + $0x78] sm:$0xf]
  %v59 = vld [vmem:[%s0 + $0x7c] sm:$0xf]
  %v60 = vld [vmem:[%s0 + $0x80] sm:$0xf]
  %v61 = vld [vmem:[%s0 + $0x84] sm:$0xf]
  %v62 = vld [vmem:[%s0 + $0x88] sm:$0xf]
  %v63 = vld [vmem:[%s0 + $0x8c] sm:$0xf]
  %v64 = vld [vmem:[%s0 + $0x90] sm:$0xf]
  %v65 = vld [vmem:[%s0 + $0x94] sm:$0xf]
  %v66 = vld [vmem:[%s0 + $0x98] sm:$0xf]
  %v67 = vld [vmem:[%s0 + $0x9c] sm:$0xf]
  %v68 = vld [vmem:[%s0 + $0xa0] sm:$0xf]
  %v69 = vld [vmem:[%s0 + $0xa4] sm:$0xf]
  %v70 = vld [vmem:[%s0 + $0xa8] sm:$0xf]
  %v71 = vld [vmem:[%s0 + $0xac] sm:$0xf]
  %v72 = vld [vmem:[%s0 + $0xb0] sm:$0xf]
  %v73 = vld [vmem:[%s0 + $0xb4] sm:$0xf]
  %v74 = vld [vmem:[%s0 + $0xb8] sm:$0xf]
  %v75 = vld [vmem:[%s0 + $0xbc] sm:$0xf]
  %v76 = vld [vmem:[%s0 + $0xc0] sm:$0xf]
  %v77 = vld [vmem:[%s0 + $0xc4] sm:$0xf]
  %v78 = vld [vmem:[%s0 + $0xc8] sm:$0xf]
  %v79 = vld [vmem:[%s0 + $0xcc] sm:$0xf]
  %v80 = vld [vmem:[%s0 + $0xd0] sm:$0xf]
  %v81 = vld [vmem:[%s0 + $0xd4] sm:$0xf]
  %v82 = vld [vmem:[%s0 + $0xd8] sm:$0xf]
  %v83 = vld [vmem:[%s0 + $0xdc] sm:$0xf]
  %v84 = vld [vmem:[%s0 + $0xe0] sm:$0xf]
  %v85 = vld [vmem:[%s0 + $0xe4] sm:$0xf]
  %v86 = vld [vmem:[%s0 + $0xe8] sm:$0xf]
  %v87 = vld [vmem:[%s0 + $0xec] sm:$0xf]
  %v88 = vld [vmem:[%s0 + $0xf0] sm:$0xf]
  %v89 = vld [vmem:[%s0 + $0xf4] sm:$0xf]
  %v90 = vld [vmem:[%s0 + $0xf8] sm:$0xf]
  %v91 = vld [vmem:[%s0 + $0xfc] sm:$0xf]
  %v92 = vunpack.c.l.bf16 %v28
  %v93 = vunpack.c.l.bf16 %v29
  %v94 = vunpack.c.l.bf16 %v30
  %v95 = vunpack.c.l.bf16 %v31
  %v96 = vunpack.c.l.bf16 %v32
  %v97 = vunpack.c.l.bf16 %v33
  %v98 = vunpack.c.l.bf16 %v34
  %v99 = vunpack.c.l.bf16 %v35
  %v100 = vunpack.c.l.bf16 %v36
  %v101 = vunpack.c.l.bf16 %v37
  %v102 = vunpack.c.l.bf16 %v38
  %v103 = vunpack.c.l.bf16 %v39
  %v104 = vunpack.c.l.bf16 %v40
  %v105 = vunpack.c.l.bf16 %v41
  %v106 = vunpack.c.l.bf16 %v42
  %v107 = vunpack.c.l.bf16 %v43
  %v108 = vunpack.c.l.bf16 %v44
  %v109 = vunpack.c.l.bf16 %v45
  %v110 = vunpack.c.l.bf16 %v46
  %v111 = vunpack.c.l.bf16 %v47
  %v112 = vunpack.c.l.bf16 %v48
  %v113 = vunpack.c.l.bf16 %v49
  %v114 = vunpack.c.l.bf16 %v50
  %v115 = vunpack.c.l.bf16 %v51
  %v116 = vunpack.c.l.bf16 %v52
  %v117 = vunpack.c.l.bf16 %v53
  %v118 = vunpack.c.l.bf16 %v54
  %v119 = vunpack.c.l.bf16 %v55
  %v120 = vunpack.c.l.bf16 %v56
  %v121 = vunpack.c.l.bf16 %v57
  %v122 = vunpack.c.l.bf16 %v58
  %v123 = vunpack.c.l.bf16 %v59
  %v124 = vunpack.c.l.bf16 %v60
  %v125 = vunpack.c.l.bf16 %v61
  %v126 = vunpack.c.l.bf16 %v62
  %v127 = vunpack.c.l.bf16 %v63
  %v128 = vunpack.c.l.bf16 %v64
  %v129 = vunpack.c.l.bf16 %v65
  %v130 = vunpack.c.l.bf16 %v66
  %v131 = vunpack.c.l.bf16 %v67
  %v132 = vunpack.c.l.bf16 %v68
  %v133 = vunpack.c.l.bf16 %v69
  %v134 = vunpack.c.l.bf16 %v70
  %v135 = vunpack.c.l.bf16 %v71
  %v136 = vunpack.c.l.bf16 %v72
  %v137 = vunpack.c.l.bf16 %v73
  %v138 = vunpack.c.l.bf16 %v74
  %v139 = vunpack.c.l.bf16 %v75
  %v140 = vunpack.c.l.bf16 %v76
  %v141 = vunpack.c.l.bf16 %v77
  %v142 = vunpack.c.l.bf16 %v78
  %v143 = vunpack.c.l.bf16 %v79
  %v144 = vunpack.c.l.bf16 %v80
  %v145 = vunpack.c.l.bf16 %v81
  %v146 = vunpack.c.l.bf16 %v82
  %v147 = vunpack.c.l.bf16 %v83
  %v148 = vunpack.c.l.bf16 %v84
  %v149 = vunpack.c.l.bf16 %v85
  %v150 = vunpack.c.l.bf16 %v86
  %v151 = vunpack.c.l.bf16 %v87
  %v152 = vunpack.c.l.bf16 %v88
  %v153 = vunpack.c.l.bf16 %v89
  %v154 = vunpack.c.l.bf16 %v90
  %v155 = vunpack.c.l.bf16 %v91
  %v156 = vld [vmem:[%s1] sm:$0x1]
  %v158 = vlaneseq
  %v159 = vshrl.u32 %v158, 7
  %v160 = vsub.s32 0, %v159
  %v161 = vrot.slane %v156, %v160
  %v163 = vmul.f32 %v92, %v161
  %v164 = vmul.f32 %v93, %v161
  %v165 = vmul.f32 %v94, %v161
  %v166 = vmul.f32 %v95, %v161
  %v167 = vmul.f32 %v96, %v161
  %v168 = vmul.f32 %v97, %v161
  %v169 = vmul.f32 %v98, %v161
  %v170 = vmul.f32 %v99, %v161
  %v171 = vmul.f32 %v100, %v161
  %v172 = vmul.f32 %v101, %v161
  %v173 = vmul.f32 %v102, %v161
  %v174 = vmul.f32 %v103, %v161
  %v175 = vmul.f32 %v104, %v161
  %v176 = vmul.f32 %v105, %v161
  %v177 = vmul.f32 %v106, %v161
  %v178 = vmul.f32 %v107, %v161
  %v179 = vmul.f32 %v108, %v161
  %v180 = vmul.f32 %v109, %v161
  %v181 = vmul.f32 %v110, %v161
  %v182 = vmul.f32 %v111, %v161
  %v183 = vmul.f32 %v112, %v161
  %v184 = vmul.f32 %v113, %v161
  %v185 = vmul.f32 %v114, %v161
  %v186 = vmul.f32 %v115, %v161
  %v187 = vmul.f32 %v116, %v161
  %v188 = vmul.f32 %v117, %v161
  %v189 = vmul.f32 %v118, %v161
  %v190 = vmul.f32 %v119, %v161
  %v191 = vmul.f32 %v120, %v161
  %v192 = vmul.f32 %v121, %v161
  %v193 = vmul.f32 %v122, %v161
  %v194 = vmul.f32 %v123, %v161
  %v195 = vmul.f32 %v124, %v161
  %v196 = vmul.f32 %v125, %v161
  %v197 = vmul.f32 %v126, %v161
  %v198 = vmul.f32 %v127, %v161
  %v199 = vmul.f32 %v128, %v161
  %v200 = vmul.f32 %v129, %v161
  %v201 = vmul.f32 %v130, %v161
  %v202 = vmul.f32 %v131, %v161
  %v203 = vmul.f32 %v132, %v161
  %v204 = vmul.f32 %v133, %v161
  %v205 = vmul.f32 %v134, %v161
  %v206 = vmul.f32 %v135, %v161
  %v207 = vmul.f32 %v136, %v161
  %v208 = vmul.f32 %v137, %v161
  %v209 = vmul.f32 %v138, %v161
  %v210 = vmul.f32 %v139, %v161
  %v211 = vmul.f32 %v140, %v161
  %v212 = vmul.f32 %v141, %v161
  %v213 = vmul.f32 %v142, %v161
  %v214 = vmul.f32 %v143, %v161
  %v215 = vmul.f32 %v144, %v161
  %v216 = vmul.f32 %v145, %v161
  %v217 = vmul.f32 %v146, %v161
  %v218 = vmul.f32 %v147, %v161
  %v219 = vmul.f32 %v148, %v161
  %v220 = vmul.f32 %v149, %v161
  %v221 = vmul.f32 %v150, %v161
  %v222 = vmul.f32 %v151, %v161
  %v223 = vmul.f32 %v152, %v161
  %v224 = vmul.f32 %v153, %v161
  %v225 = vmul.f32 %v154, %v161
  %v226 = vmul.f32 %v155, %v161
  %v227 = vld [vmem:[%s2] sm:$0x1]
  %v229 = vlaneseq
  %v230 = vshrl.u32 %v229, 7
  %v231 = vsub.s32 0, %v230
  %v232 = vrot.slane %v227, %v231
  %v234 = vadd.f32 %v163, %v232
  %v235 = vadd.f32 %v164, %v232
  %v236 = vadd.f32 %v165, %v232
  %v237 = vadd.f32 %v166, %v232
  %v238 = vadd.f32 %v167, %v232
  %v239 = vadd.f32 %v168, %v232
  %v240 = vadd.f32 %v169, %v232
  %v241 = vadd.f32 %v170, %v232
  %v242 = vadd.f32 %v171, %v232
  %v243 = vadd.f32 %v172, %v232
  %v244 = vadd.f32 %v173, %v232
  %v245 = vadd.f32 %v174, %v232
  %v246 = vadd.f32 %v175, %v232
  %v247 = vadd.f32 %v176, %v232
  %v248 = vadd.f32 %v177, %v232
  %v249 = vadd.f32 %v178, %v232
  %v250 = vadd.f32 %v179, %v232
  %v251 = vadd.f32 %v180, %v232
  %v252 = vadd.f32 %v181, %v232
  %v253 = vadd.f32 %v182, %v232
  %v254 = vadd.f32 %v183, %v232
  %v255 = vadd.f32 %v184, %v232
  %v256 = vadd.f32 %v185, %v232
  %v257 = vadd.f32 %v186, %v232
  %v258 = vadd.f32 %v187, %v232
  %v259 = vadd.f32 %v188, %v232
  %v260 = vadd.f32 %v189, %v232
  %v261 = vadd.f32 %v190, %v232
  %v262 = vadd.f32 %v191, %v232
  %v263 = vadd.f32 %v192, %v232
  %v264 = vadd.f32 %v193, %v232
  %v265 = vadd.f32 %v194, %v232
  %v266 = vadd.f32 %v195, %v232
  %v267 = vadd.f32 %v196, %v232
  %v268 = vadd.f32 %v197, %v232
  %v269 = vadd.f32 %v198, %v232
  %v270 = vadd.f32 %v199, %v232
  %v271 = vadd.f32 %v200, %v232
  %v272 = vadd.f32 %v201, %v232
  %v273 = vadd.f32 %v202, %v232
  %v274 = vadd.f32 %v203, %v232
  %v275 = vadd.f32 %v204, %v232
  %v276 = vadd.f32 %v205, %v232
  %v277 = vadd.f32 %v206, %v232
  %v278 = vadd.f32 %v207, %v232
  %v279 = vadd.f32 %v208, %v232
  %v280 = vadd.f32 %v209, %v232
  %v281 = vadd.f32 %v210, %v232
  %v282 = vadd.f32 %v211, %v232
  %v283 = vadd.f32 %v212, %v232
  %v284 = vadd.f32 %v213, %v232
  %v285 = vadd.f32 %v214, %v232
  %v286 = vadd.f32 %v215, %v232
  %v287 = vadd.f32 %v216, %v232
  %v288 = vadd.f32 %v217, %v232
  %v289 = vadd.f32 %v218, %v232
  %v290 = vadd.f32 %v219, %v232
  %v291 = vadd.f32 %v220, %v232
  %v292 = vadd.f32 %v221, %v232
  %v293 = vadd.f32 %v222, %v232
  %v294 = vadd.f32 %v223, %v232
  %v295 = vadd.f32 %v224, %v232
  %v296 = vadd.f32 %v225, %v232
  %v297 = vadd.f32 %v226, %v232
  %v298 = vmax.f32 %v234, 0.0
  %v299 = vmax.f32 %v235, 0.0
  %v300 = vmax.f32 %v236, 0.0
  %v301 = vmax.f32 %v237, 0.0
  %v302 = vmax.f32 %v238, 0.0
  %v303 = vmax.f32 %v239, 0.0
  %v304 = vmax.f32 %v240, 0.0
  %v305 = vmax.f32 %v241, 0.0
  %v306 = vmax.f32 %v242, 0.0
  %v307 = vmax.f32 %v243, 0.0
  %v308 = vmax.f32 %v244, 0.0
  %v309 = vmax.f32 %v245, 0.0
  %v310 = vmax.f32 %v246, 0.0
  %v311 = vmax.f32 %v247, 0.0
  %v312 = vmax.f32 %v248, 0.0
  %v313 = vmax.f32 %v249, 0.0
  %v314 = vmax.f32 %v250, 0.0
  %v315 = vmax.f32 %v251, 0.0
  %v316 = vmax.f32 %v252, 0.0
  %v317 = vmax.f32 %v253, 0.0
  %v318 = vmax.f32 %v254, 0.0
  %v319 = vmax.f32 %v255, 0.0
  %v320 = vmax.f32 %v256, 0.0
  %v321 = vmax.f32 %v257, 0.0
  %v322 = vmax.f32 %v258, 0.0
  %v323 = vmax.f32 %v259, 0.0
  %v324 = vmax.f32 %v260, 0.0
  %v325 = vmax.f32 %v261, 0.0
  %v326 = vmax.f32 %v262, 0.0
  %v327 = vmax.f32 %v263, 0.0
  %v328 = vmax.f32 %v264, 0.0
  %v329 = vmax.f32 %v265, 0.0
  %v330 = vmax.f32 %v266, 0.0
  %v331 = vmax.f32 %v267, 0.0
  %v332 = vmax.f32 %v268, 0.0
  %v333 = vmax.f32 %v269, 0.0
  %v334 = vmax.f32 %v270, 0.0
  %v335 = vmax.f32 %v271, 0.0
  %v336 = vmax.f32 %v272, 0.0
  %v337 = vmax.f32 %v273, 0.0
  %v338 = vmax.f32 %v274, 0.0
  %v339 = vmax.f32 %v275, 0.0
  %v340 = vmax.f32 %v276, 0.0
  %v341 = vmax.f32 %v277, 0.0
  %v342 = vmax.f32 %v278, 0.0
  %v343 = vmax.f32 %v279, 0.0
  %v344 = vmax.f32 %v280, 0.0
  %v345 = vmax.f32 %v281, 0.0
  %v346 = vmax.f32 %v282, 0.0
  %v347 = vmax.f32 %v283, 0.0
  %v348 = vmax.f32 %v284, 0.0
  %v349 = vmax.f32 %v285, 0.0
  %v350 = vmax.f32 %v286, 0.0
  %v351 = vmax.f32 %v287, 0.0
  %v352 = vmax.f32 %v288, 0.0
  %v353 = vmax.f32 %v289, 0.0
  %v354 = vmax.f32 %v290, 0.0
  %v355 = vmax.f32 %v291, 0.0
  %v356 = vmax.f32 %v292, 0.0
  %v357 = vmax.f32 %v293, 0.0
  %v358 = vmax.f32 %v294, 0.0
  %v359 = vmax.f32 %v295, 0.0
  %v360 = vmax.f32 %v296, 0.0
  %v361 = vmax.f32 %v297, 0.0
  %v362 = vpack.c.bf16 %v299, %v298
  %v363 = vpack.c.bf16 %v301, %v300
  %v364 = vpack.c.bf16 %v303, %v302
  %v365 = vpack.c.bf16 %v305, %v304
  %v366 = vpack.c.bf16 %v307, %v306
  %v367 = vpack.c.bf16 %v309, %v308
  %v368 = vpack.c.bf16 %v311, %v310
  %v369 = vpack.c.bf16 %v313, %v312
  %v370 = vpack.c.bf16 %v315, %v314
  %v371 = vpack.c.bf16 %v317, %v316
  %v372 = vpack.c.bf16 %v319, %v318
  %v373 = vpack.c.bf16 %v321, %v320
  %v374 = vpack.c.bf16 %v323, %v322
  %v375 = vpack.c.bf16 %v325, %v324
  %v376 = vpack.c.bf16 %v327, %v326
  %v377 = vpack.c.bf16 %v329, %v328
  %v378 = vpack.c.bf16 %v331, %v330
  %v379 = vpack.c.bf16 %v333, %v332
  %v380 = vpack.c.bf16 %v335, %v334
  %v381 = vpack.c.bf16 %v337, %v336
  %v382 = vpack.c.bf16 %v339, %v338
  %v383 = vpack.c.bf16 %v341, %v340
  %v384 = vpack.c.bf16 %v343, %v342
  %v385 = vpack.c.bf16 %v345, %v344
  %v386 = vpack.c.bf16 %v347, %v346
  %v387 = vpack.c.bf16 %v349, %v348
  %v388 = vpack.c.bf16 %v351, %v350
  %v389 = vpack.c.bf16 %v353, %v352
  %v390 = vpack.c.bf16 %v355, %v354
  %v391 = vpack.c.bf16 %v357, %v356
  %v392 = vpack.c.bf16 %v359, %v358
  %v393 = vpack.c.bf16 %v361, %v360
  %v394 = vld [vmem:[%s3] sm:$0xf]
  %v395 = vld [vmem:[%s3 + $0x4] sm:$0xf]
  %v396 = vld [vmem:[%s3 + $0x8] sm:$0xf]
  %v397 = vld [vmem:[%s3 + $0xc] sm:$0xf]
  %v398 = vld [vmem:[%s3 + $0x10] sm:$0xf]
  %v399 = vld [vmem:[%s3 + $0x14] sm:$0xf]
  %v400 = vld [vmem:[%s3 + $0x18] sm:$0xf]
  %v401 = vld [vmem:[%s3 + $0x1c] sm:$0xf]
  %v402 = vld [vmem:[%s3 + $0x20] sm:$0xf]
  %v403 = vld [vmem:[%s3 + $0x24] sm:$0xf]
  %v404 = vld [vmem:[%s3 + $0x28] sm:$0xf]
  %v405 = vld [vmem:[%s3 + $0x2c] sm:$0xf]
  %v406 = vld [vmem:[%s3 + $0x30] sm:$0xf]
  %v407 = vld [vmem:[%s3 + $0x34] sm:$0xf]
  %v408 = vld [vmem:[%s3 + $0x38] sm:$0xf]
  %v409 = vld [vmem:[%s3 + $0x3c] sm:$0xf]
  %v426 = vunpack.c.l.b16 %v394
  %v427 = vunpack.c.l.b16 %v395
  %v428 = vunpack.c.l.b16 %v396
  %v429 = vunpack.c.l.b16 %v397
  %v430 = vunpack.c.l.b16 %v398
  %v431 = vunpack.c.l.b16 %v399
  %v432 = vunpack.c.l.b16 %v400
  %v433 = vunpack.c.l.b16 %v401
  %v434 = vunpack.c.l.b16 %v402
  %v435 = vunpack.c.l.b16 %v403
  %v436 = vunpack.c.l.b16 %v404
  %v437 = vunpack.c.l.b16 %v405
  %v438 = vunpack.c.l.b16 %v406
  %v439 = vunpack.c.l.b16 %v407
  %v440 = vunpack.c.l.b16 %v408
  %v441 = vunpack.c.l.b16 %v409
  %v442 = vpack.c.b16 %v427, %v426
  %v443 = vpack.c.b16 %v429, %v428
  %v444 = vpack.c.b16 %v431, %v430
  %v445 = vpack.c.b16 %v433, %v432
  %v446 = vpack.c.b16 %v435, %v434
  %v447 = vpack.c.b16 %v437, %v436
  %v448 = vpack.c.b16 %v439, %v438
  %v449 = vpack.c.b16 %v441, %v440
  %458 = vmatprep.subr.bf16.mxu0 0
  %459 = vmatpush1.bf16.msra.mxu0 %v442
  %460 = vmatprep.subr.bf16.mxu0 0
  %461 = vmatpush1.bf16.msra.mxu0 %v443
  %462 = vmatprep.subr.bf16.mxu0 0
  %463 = vmatpush1.bf16.msra.mxu0 %v444
  %464 = vmatprep.subr.bf16.mxu0 0
  %465 = vmatpush1.bf16.msra.mxu0 %v445
  %466 = vmatprep.subr.bf16.mxu0 0
  %467 = vmatpush1.bf16.msra.mxu0 %v446
  %468 = vmatprep.subr.bf16.mxu0 0
  %469 = vmatpush1.bf16.msra.mxu0 %v447
  %470 = vmatprep.subr.bf16.mxu0 0
  %471 = vmatpush1.bf16.msra.mxu0 %v448
  %472 = vmatprep.subr.bf16.mxu0 0
  %473 = vmatpush1.bf16.msra.mxu0 %v449
  %474 = vmatprep.subr.bf16.mxu0 0
  %475 = vmatpush1.bf16.msra.mxu0 0
  %476 = vmatprep.subr.bf16.mxu0 0
  %477 = vmatpush1.bf16.msra.mxu0 0
  %478 = vmatprep.subr.bf16.mxu0 0
  %479 = vmatpush1.bf16.msra.mxu0 0
  %480 = vmatprep.subr.bf16.mxu0 0
  %481 = vmatpush1.bf16.msra.mxu0 0
  %482 = vmatprep.subr.bf16.mxu0 0
  %483 = vmatpush1.bf16.msra.mxu0 0
  %484 = vmatprep.subr.bf16.mxu0 0
  %485 = vmatpush1.bf16.msra.mxu0 0
  %486 = vmatprep.subr.bf16.mxu0 0
  %487 = vmatpush1.bf16.msra.mxu0 0
  %488 = vmatprep.subr.bf16.mxu0 0
  %489 = vmatpush1.bf16.msra.mxu0 0
  %490 = vmatprep.mubr.bf16.mxu0 0
  %491 = vmatmul.mubr.bf16.gmra.mrb[0].mxu0 %v362
  %v492 = vpop.f32.mrb[0].mxu0
  %v493 = vadd.f32 0.0, %v492
  %v494 = vpop.f32.mrb[0].mxu0
  %v495 = vpop.f32.mrb[0].mxu0
  %v496 = vadd.f32 0.0, %v495
  %v497 = vpop.f32.mrb[0].mxu0
  %498 = vmatprep.mubr.bf16.mxu0 0
  %499 = vmatmul.mubr.bf16.gmra.mrb[0].mxu0 %v363
  %v500 = vpop.f32.mrb[0].mxu0
  %v501 = vadd.f32 0.0, %v500
  %v502 = vpop.f32.mrb[0].mxu0
  %v503 = vpop.f32.mrb[0].mxu0
  %v504 = vadd.f32 0.0, %v503
  %v505 = vpop.f32.mrb[0].mxu0
  %506 = vmatprep.mubr.bf16.mxu0 0
  %507 = vmatmul.mubr.bf16.gmra.mrb[0].mxu0 %v364
  %v508 = vpop.f32.mrb[0].mxu0
  %v509 = vadd.f32 0.0, %v508
  %v510 = vpop.f32.mrb[0].mxu0
  %v511 = vpop.f32.mrb[0].mxu0
  %v512 = vadd.f32 0.0, %v511
  %v513 = vpop.f32.mrb[0].mxu0
  %514 = vmatprep.mubr.bf16.mxu0 0
  %515 = vmatmul.mubr.bf16.gmra.mrb[0].mxu0 %v365
  %v516 = vpop.f32.mrb[0].mxu0
  %v517 = vadd.f32 0.0, %v516
  %v518 = vpop.f32.mrb[0].mxu0
  %v519 = vpop.f32.mrb[0].mxu0
  %v520 = vadd.f32 0.0, %v519
  %v521 = vpop.f32.mrb[0].mxu0
  %522 = vmatprep.mubr.bf16.mxu0 0
  %523 = vmatmul.mubr.bf16.gmra.mrb[0].mxu0 %v366
  %v524 = vpop.f32.mrb[0].mxu0
  %v525 = vadd.f32 0.0, %v524
  %v526 = vpop.f32.mrb[0].mxu0
  %v527 = vpop.f32.mrb[0].mxu0
  %v528 = vadd.f32 0.0, %v527
  %v529 = vpop.f32.mrb[0].mxu0
  %530 = vmatprep.mubr.bf16.mxu0 0
  %531 = vmatmul.mubr.bf16.gmra.mrb[0].mxu0 %v367
  %v532 = vpop.f32.mrb[0].mxu0
  %v533 = vadd.f32 0.0, %v532
  %v534 = vpop.f32.mrb[0].mxu0
  %v535 = vpop.f32.mrb[0].mxu0
  %v536 = vadd.f32 0.0, %v535
  %v537 = vpop.f32.mrb[0].mxu0
  %538 = vmatprep.mubr.bf16.mxu0 0
  %539 = vmatmul.mubr.bf16.gmra.mrb[0].mxu0 %v368
  %v540 = vpop.f32.mrb[0].mxu0
  %v541 = vadd.f32 0.0, %v540
  %v542 = vpop.f32.mrb[0].mxu0
  %v543 = vpop.f32.mrb[0].mxu0
  %v544 = vadd.f32 0.0, %v543
  %v545 = vpop.f32.mrb[0].mxu0
  %546 = vmatprep.mubr.bf16.mxu0 0
  %547 = vmatmul.mubr.bf16.gmra.mrb[0].mxu0 %v369
  %v548 = vpop.f32.mrb[0].mxu0
  %v549 = vadd.f32 0.0, %v548
  %v550 = vpop.f32.mrb[0].mxu0
  %v551 = vpop.f32.mrb[0].mxu0
  %v552 = vadd.f32 0.0, %v551
  %v553 = vpop.f32.mrb[0].mxu0
  %554 = vmatprep.mubr.bf16.mxu0 0
  %555 = vmatmul.mubr.bf16.gmra.mrb[0].mxu0 %v370
  %v556 = vpop.f32.mrb[0].mxu0
  %v557 = vadd.f32 0.0, %v556
  %v558 = vpop.f32.mrb[0].mxu0
  %v559 = vpop.f32.mrb[0].mxu0
  %v560 = vadd.f32 0.0, %v559
  %v561 = vpop.f32.mrb[0].mxu0
  %562 = vmatprep.mubr.bf16.mxu0 0
  %563 = vmatmul.mubr.bf16.gmra.mrb[0].mxu0 %v371
  %v564 = vpop.f32.mrb[0].mxu0
  %v565 = vadd.f32 0.0, %v564
  %v566 = vpop.f32.mrb[0].mxu0
  %v567 = vpop.f32.mrb[0].mxu0
  %v568 = vadd.f32 0.0, %v567
  %v569 = vpop.f32.mrb[0].mxu0
  %570 = vmatprep.mubr.bf16.mxu0 0
  %571 = vmatmul.mubr.bf16.gmra.mrb[0].mxu0 %v372
  %v572 = vpop.f32.mrb[0].mxu0
  %v573 = vadd.f32 0.0, %v572
  %v574 = vpop.f32.mrb[0].mxu0
  %v575 = vpop.f32.mrb[0].mxu0
  %v576 = vadd.f32 0.0, %v575
  %v577 = vpop.f32.mrb[0].mxu0
  %578 = vmatprep.mubr.bf16.mxu0 0
  %579 = vmatmul.mubr.bf16.gmra.mrb[0].mxu0 %v373
  %v580 = vpop.f32.mrb[0].mxu0
  %v581 = vadd.f32 0.0, %v580
  %v582 = vpop.f32.mrb[0].mxu0
  %v583 = vpop.f32.mrb[0].mxu0
  %v584 = vadd.f32 0.0, %v583
  %v585 = vpop.f32.mrb[0].mxu0
  %586 = vmatprep.mubr.bf16.mxu0 0
  %587 = vmatmul.mubr.bf16.gmra.mrb[0].mxu0 %v374
  %v588 = vpop.f32.mrb[0].mxu0
  %v589 = vadd.f32 0.0, %v588
  %v590 = vpop.f32.mrb[0].mxu0
  %v591 = vpop.f32.mrb[0].mxu0
  %v592 = vadd.f32 0.0, %v591
  %v593 = vpop.f32.mrb[0].mxu0
  %594 = vmatprep.mubr.bf16.mxu0 0
  %595 = vmatmul.mubr.bf16.gmra.mrb[0].mxu0 %v375
  %v596 = vpop.f32.mrb[0].mxu0
  %v597 = vadd.f32 0.0, %v596
  %v598 = vpop.f32.mrb[0].mxu0
  %v599 = vpop.f32.mrb[0].mxu0
  %v600 = vadd.f32 0.0, %v599
  %v601 = vpop.f32.mrb[0].mxu0
  %602 = vmatprep.mubr.bf16.mxu0 0
  %603 = vmatmul.mubr.bf16.gmra.mrb[0].mxu0 %v376
  %v604 = vpop.f32.mrb[0].mxu0
  %v605 = vadd.f32 0.0, %v604
  %v606 = vpop.f32.mrb[0].mxu0
  %v607 = vpop.f32.mrb[0].mxu0
  %v608 = vadd.f32 0.0, %v607
  %v609 = vpop.f32.mrb[0].mxu0
  %610 = vmatprep.mubr.bf16.mxu0 0
  %611 = vmatmul.mubr.bf16.gmra.mrb[0].mxu0 %v377
  %v612 = vpop.f32.mrb[0].mxu0
  %v613 = vadd.f32 0.0, %v612
  %v614 = vpop.f32.mrb[0].mxu0
  %v615 = vpop.f32.mrb[0].mxu0
  %v616 = vadd.f32 0.0, %v615
  %v617 = vpop.f32.mrb[0].mxu0
  %618 = vmatprep.mubr.bf16.mxu0 0
  %619 = vmatmul.mubr.bf16.gmra.mrb[0].mxu0 %v378
  %v620 = vpop.f32.mrb[0].mxu0
  %v621 = vadd.f32 0.0, %v620
  %v622 = vpop.f32.mrb[0].mxu0
  %v623 = vpop.f32.mrb[0].mxu0
  %v624 = vadd.f32 0.0, %v623
  %v625 = vpop.f32.mrb[0].mxu0
  %626 = vmatprep.mubr.bf16.mxu0 0
  %627 = vmatmul.mubr.bf16.gmra.mrb[0].mxu0 %v379
  %v628 = vpop.f32.mrb[0].mxu0
  %v629 = vadd.f32 0.0, %v628
  %v630 = vpop.f32.mrb[0].mxu0
  %v631 = vpop.f32.mrb[0].mxu0
  %v632 = vadd.f32 0.0, %v631
  %v633 = vpop.f32.mrb[0].mxu0
  %634 = vmatprep.mubr.bf16.mxu0 0
  %635 = vmatmul.mubr.bf16.gmra.mrb[0].mxu0 %v380
  %v636 = vpop.f32.mrb[0].mxu0
  %v637 = vadd.f32 0.0, %v636
  %v638 = vpop.f32.mrb[0].mxu0
  %v639 = vpop.f32.mrb[0].mxu0
  %v640 = vadd.f32 0.0, %v639
  %v641 = vpop.f32.mrb[0].mxu0
  %642 = vmatprep.mubr.bf16.mxu0 0
  %643 = vmatmul.mubr.bf16.gmra.mrb[0].mxu0 %v381
  %v644 = vpop.f32.mrb[0].mxu0
  %v645 = vadd.f32 0.0, %v644
  %v646 = vpop.f32.mrb[0].mxu0
  %v647 = vpop.f32.mrb[0].mxu0
  %v648 = vadd.f32 0.0, %v647
  %v649 = vpop.f32.mrb[0].mxu0
  %650 = vmatprep.mubr.bf16.mxu0 0
  %651 = vmatmul.mubr.bf16.gmra.mrb[0].mxu0 %v382
  %v652 = vpop.f32.mrb[0].mxu0
  %v653 = vadd.f32 0.0, %v652
  %v654 = vpop.f32.mrb[0].mxu0
  %v655 = vpop.f32.mrb[0].mxu0
  %v656 = vadd.f32 0.0, %v655
  %v657 = vpop.f32.mrb[0].mxu0
  %658 = vmatprep.mubr.bf16.mxu0 0
  %659 = vmatmul.mubr.bf16.gmra.mrb[0].mxu0 %v383
  %v660 = vpop.f32.mrb[0].mxu0
  %v661 = vadd.f32 0.0, %v660
  %v662 = vpop.f32.mrb[0].mxu0
  %v663 = vpop.f32.mrb[0].mxu0
  %v664 = vadd.f32 0.0, %v663
  %v665 = vpop.f32.mrb[0].mxu0
  %666 = vmatprep.mubr.bf16.mxu0 0
  %667 = vmatmul.mubr.bf16.gmra.mrb[0].mxu0 %v384
  %v668 = vpop.f32.mrb[0].mxu0
  %v669 = vadd.f32 0.0, %v668
  %v670 = vpop.f32.mrb[0].mxu0
  %v671 = vpop.f32.mrb[0].mxu0
  %v672 = vadd.f32 0.0, %v671
  %v673 = vpop.f32.mrb[0].mxu0
  %674 = vmatprep.mubr.bf16.mxu0 0
  %675 = vmatmul.mubr.bf16.gmra.mrb[0].mxu0 %v385
  %v676 = vpop.f32.mrb[0].mxu0
  %v677 = vadd.f32 0.0, %v676
  %v678 = vpop.f32.mrb[0].mxu0
  %v679 = vpop.f32.mrb[0].mxu0
  %v680 = vadd.f32 0.0, %v679
  %v681 = vpop.f32.mrb[0].mxu0
  %682 = vmatprep.mubr.bf16.mxu0 0
  %683 = vmatmul.mubr.bf16.gmra.mrb[0].mxu0 %v386
  %v684 = vpop.f32.mrb[0].mxu0
  %v685 = vadd.f32 0.0, %v684
  %v686 = vpop.f32.mrb[0].mxu0
  %v687 = vpop.f32.mrb[0].mxu0
  %v688 = vadd.f32 0.0, %v687
  %v689 = vpop.f32.mrb[0].mxu0
  %690 = vmatprep.mubr.bf16.mxu0 0
  %691 = vmatmul.mubr.bf16.gmra.mrb[0].mxu0 %v387
  %v692 = vpop.f32.mrb[0].mxu0
  %v693 = vadd.f32 0.0, %v692
  %v694 = vpop.f32.mrb[0].mxu0
  %v695 = vpop.f32.mrb[0].mxu0
  %v696 = vadd.f32 0.0, %v695
  %v697 = vpop.f32.mrb[0].mxu0
  %698 = vmatprep.mubr.bf16.mxu0 0
  %699 = vmatmul.mubr.bf16.gmra.mrb[0].mxu0 %v388
  %v700 = vpop.f32.mrb[0].mxu0
  %v701 = vadd.f32 0.0, %v700
  %v702 = vpop.f32.mrb[0].mxu0
  %v703 = vpop.f32.mrb[0].mxu0
  %v704 = vadd.f32 0.0, %v703
  %v705 = vpop.f32.mrb[0].mxu0
  %706 = vmatprep.mubr.bf16.mxu0 0
  %707 = vmatmul.mubr.bf16.gmra.mrb[0].mxu0 %v389
  %v708 = vpop.f32.mrb[0].mxu0
  %v709 = vadd.f32 0.0, %v708
  %v710 = vpop.f32.mrb[0].mxu0
  %v711 = vpop.f32.mrb[0].mxu0
  %v712 = vadd.f32 0.0, %v711
  %v713 = vpop.f32.mrb[0].mxu0
  %714 = vmatprep.mubr.bf16.mxu0 0
  %715 = vmatmul.mubr.bf16.gmra.mrb[0].mxu0 %v390
  %v716 = vpop.f32.mrb[0].mxu0
  %v717 = vadd.f32 0.0, %v716
  %v718 = vpop.f32.mrb[0].mxu0
  %v719 = vpop.f32.mrb[0].mxu0
  %v720 = vadd.f32 0.0, %v719
  %v721 = vpop.f32.mrb[0].mxu0
  %722 = vmatprep.mubr.bf16.mxu0 0
  %723 = vmatmul.mubr.bf16.gmra.mrb[0].mxu0 %v391
  %v724 = vpop.f32.mrb[0].mxu0
  %v725 = vadd.f32 0.0, %v724
  %v726 = vpop.f32.mrb[0].mxu0
  %v727 = vpop.f32.mrb[0].mxu0
  %v728 = vadd.f32 0.0, %v727
  %v729 = vpop.f32.mrb[0].mxu0
  %730 = vmatprep.mubr.bf16.mxu0 0
  %731 = vmatmul.mubr.bf16.gmra.mrb[0].mxu0 %v392
  %v732 = vpop.f32.mrb[0].mxu0
  %v733 = vadd.f32 0.0, %v732
  %v734 = vpop.f32.mrb[0].mxu0
  %v735 = vpop.f32.mrb[0].mxu0
  %v736 = vadd.f32 0.0, %v735
  %v737 = vpop.f32.mrb[0].mxu0
  %738 = vmatprep.mubr.bf16.mxu0 0
  %739 = vmatmul.mubr.bf16.gmra.mrb[0].mxu0 %v393
  %v740 = vpop.f32.mrb[0].mxu0
  %v741 = vadd.f32 0.0, %v740
  %v742 = vpop.f32.mrb[0].mxu0
  %v743 = vpop.f32.mrb[0].mxu0
  %v744 = vadd.f32 0.0, %v743
  %v745 = vpop.f32.mrb[0].mxu0
  %746 = vdwg.mxu0
  %v747 = vld [vmem:[%s4] sm:$0xf]
  %v748 = vld [vmem:[%s4 + $0x4] sm:$0xf]
  %v749 = vld [vmem:[%s4 + $0x8] sm:$0xf]
  %v750 = vld [vmem:[%s4 + $0xc] sm:$0xf]
  %v751 = vld [vmem:[%s4 + $0x10] sm:$0xf]
  %v752 = vld [vmem:[%s4 + $0x14] sm:$0xf]
  %v753 = vld [vmem:[%s4 + $0x18] sm:$0xf]
  %v754 = vld [vmem:[%s4 + $0x1c] sm:$0xf]
  %v755 = vld [vmem:[%s4 + $0x20] sm:$0xf]
  %v756 = vld [vmem:[%s4 + $0x24] sm:$0xf]
  %v757 = vld [vmem:[%s4 + $0x28] sm:$0xf]
  %v758 = vld [vmem:[%s4 + $0x2c] sm:$0xf]
  %v759 = vld [vmem:[%s4 + $0x30] sm:$0xf]
  %v760 = vld [vmem:[%s4 + $0x34] sm:$0xf]
  %v761 = vld [vmem:[%s4 + $0x38] sm:$0xf]
  %v762 = vld [vmem:[%s4 + $0x3c] sm:$0xf]
  %v763 = vld [vmem:[%s4 + $0x40] sm:$0xf]
  %v764 = vld [vmem:[%s4 + $0x44] sm:$0xf]
  %v765 = vld [vmem:[%s4 + $0x48] sm:$0xf]
  %v766 = vld [vmem:[%s4 + $0x4c] sm:$0xf]
  %v767 = vld [vmem:[%s4 + $0x50] sm:$0xf]
  %v768 = vld [vmem:[%s4 + $0x54] sm:$0xf]
  %v769 = vld [vmem:[%s4 + $0x58] sm:$0xf]
  %v770 = vld [vmem:[%s4 + $0x5c] sm:$0xf]
  %v771 = vld [vmem:[%s4 + $0x60] sm:$0xf]
  %v772 = vld [vmem:[%s4 + $0x64] sm:$0xf]
  %v773 = vld [vmem:[%s4 + $0x68] sm:$0xf]
  %v774 = vld [vmem:[%s4 + $0x6c] sm:$0xf]
  %v775 = vld [vmem:[%s4 + $0x70] sm:$0xf]
  %v776 = vld [vmem:[%s4 + $0x74] sm:$0xf]
  %v777 = vld [vmem:[%s4 + $0x78] sm:$0xf]
  %v778 = vld [vmem:[%s4 + $0x7c] sm:$0xf]
  %v779 = vld [vmem:[%s4 + $0x80] sm:$0xf]
  %v780 = vld [vmem:[%s4 + $0x84] sm:$0xf]
  %v781 = vld [vmem:[%s4 + $0x88] sm:$0xf]
  %v782 = vld [vmem:[%s4 + $0x8c] sm:$0xf]
  %v783 = vld [vmem:[%s4 + $0x90] sm:$0xf]
  %v784 = vld [vmem:[%s4 + $0x94] sm:$0xf]
  %v785 = vld [vmem:[%s4 + $0x98] sm:$0xf]
  %v786 = vld [vmem:[%s4 + $0x9c] sm:$0xf]
  %v787 = vld [vmem:[%s4 + $0xa0] sm:$0xf]
  %v788 = vld [vmem:[%s4 + $0xa4] sm:$0xf]
  %v789 = vld [vmem:[%s4 + $0xa8] sm:$0xf]
  %v790 = vld [vmem:[%s4 + $0xac] sm:$0xf]
  %v791 = vld [vmem:[%s4 + $0xb0] sm:$0xf]
  %v792 = vld [vmem:[%s4 + $0xb4] sm:$0xf]
  %v793 = vld [vmem:[%s4 + $0xb8] sm:$0xf]
  %v794 = vld [vmem:[%s4 + $0xbc] sm:$0xf]
  %v795 = vld [vmem:[%s4 + $0xc0] sm:$0xf]
  %v796 = vld [vmem:[%s4 + $0xc4] sm:$0xf]
  %v797 = vld [vmem:[%s4 + $0xc8] sm:$0xf]
  %v798 = vld [vmem:[%s4 + $0xcc] sm:$0xf]
  %v799 = vld [vmem:[%s4 + $0xd0] sm:$0xf]
  %v800 = vld [vmem:[%s4 + $0xd4] sm:$0xf]
  %v801 = vld [vmem:[%s4 + $0xd8] sm:$0xf]
  %v802 = vld [vmem:[%s4 + $0xdc] sm:$0xf]
  %v803 = vld [vmem:[%s4 + $0xe0] sm:$0xf]
  %v804 = vld [vmem:[%s4 + $0xe4] sm:$0xf]
  %v805 = vld [vmem:[%s4 + $0xe8] sm:$0xf]
  %v806 = vld [vmem:[%s4 + $0xec] sm:$0xf]
  %v807 = vld [vmem:[%s4 + $0xf0] sm:$0xf]
  %v808 = vld [vmem:[%s4 + $0xf4] sm:$0xf]
  %v809 = vld [vmem:[%s4 + $0xf8] sm:$0xf]
  %v810 = vld [vmem:[%s4 + $0xfc] sm:$0xf]
  %v811 = vld [vmem:[%s5] sm:$0xf]
  %v812 = vld [vmem:[%s5 + $0x4] sm:$0xf]
  %v813 = vld [vmem:[%s5 + $0x8] sm:$0xf]
  %v814 = vld [vmem:[%s5 + $0xc] sm:$0xf]
  %v815 = vld [vmem:[%s5 + $0x10] sm:$0xf]
  %v816 = vld [vmem:[%s5 + $0x14] sm:$0xf]
  %v817 = vld [vmem:[%s5 + $0x18] sm:$0xf]
  %v818 = vld [vmem:[%s5 + $0x1c] sm:$0xf]
  %v819 = vld [vmem:[%s5 + $0x20] sm:$0xf]
  %v820 = vld [vmem:[%s5 + $0x24] sm:$0xf]
  %v821 = vld [vmem:[%s5 + $0x28] sm:$0xf]
  %v822 = vld [vmem:[%s5 + $0x2c] sm:$0xf]
  %v823 = vld [vmem:[%s5 + $0x30] sm:$0xf]
  %v824 = vld [vmem:[%s5 + $0x34] sm:$0xf]
  %v825 = vld [vmem:[%s5 + $0x38] sm:$0xf]
  %v826 = vld [vmem:[%s5 + $0x3c] sm:$0xf]
  %v891 = vunpack.c.l.b16 %v747
  %v892 = vunpack.c.l.b16 %v748
  %v893 = vunpack.c.l.b16 %v749
  %v894 = vunpack.c.l.b16 %v750
  %v895 = vunpack.c.l.b16 %v751
  %v896 = vunpack.c.l.b16 %v752
  %v897 = vunpack.c.l.b16 %v753
  %v898 = vunpack.c.l.b16 %v754
  %v899 = vunpack.c.l.b16 %v755
  %v900 = vunpack.c.l.b16 %v756
  %v901 = vunpack.c.l.b16 %v757
  %v902 = vunpack.c.l.b16 %v758
  %v903 = vunpack.c.l.b16 %v759
  %v904 = vunpack.c.l.b16 %v760
  %v905 = vunpack.c.l.b16 %v761
  %v906 = vunpack.c.l.b16 %v762
  %v907 = vunpack.c.l.b16 %v763
  %v908 = vunpack.c.l.b16 %v764
  %v909 = vunpack.c.l.b16 %v765
  %v910 = vunpack.c.l.b16 %v766
  %v911 = vunpack.c.l.b16 %v767
  %v912 = vunpack.c.l.b16 %v768
  %v913 = vunpack.c.l.b16 %v769
  %v914 = vunpack.c.l.b16 %v770
  %v915 = vunpack.c.l.b16 %v771
  %v916 = vunpack.c.l.b16 %v772
  %v917 = vunpack.c.l.b16 %v773
  %v918 = vunpack.c.l.b16 %v774
  %v919 = vunpack.c.l.b16 %v775
  %v920 = vunpack.c.l.b16 %v776
  %v921 = vunpack.c.l.b16 %v777
  %v922 = vunpack.c.l.b16 %v778
  %v923 = vunpack.c.l.b16 %v779
  %v924 = vunpack.c.l.b16 %v780
  %v925 = vunpack.c.l.b16 %v781
  %v926 = vunpack.c.l.b16 %v782
  %v927 = vunpack.c.l.b16 %v783
  %v928 = vunpack.c.l.b16 %v784
  %v929 = vunpack.c.l.b16 %v785
  %v930 = vunpack.c.l.b16 %v786
  %v931 = vunpack.c.l.b16 %v787
  %v932 = vunpack.c.l.b16 %v788
  %v933 = vunpack.c.l.b16 %v789
  %v934 = vunpack.c.l.b16 %v790
  %v935 = vunpack.c.l.b16 %v791
  %v936 = vunpack.c.l.b16 %v792
  %v937 = vunpack.c.l.b16 %v793
  %v938 = vunpack.c.l.b16 %v794
  %v939 = vunpack.c.l.b16 %v795
  %v940 = vunpack.c.l.b16 %v796
  %v941 = vunpack.c.l.b16 %v797
  %v942 = vunpack.c.l.b16 %v798
  %v943 = vunpack.c.l.b16 %v799
  %v944 = vunpack.c.l.b16 %v800
  %v945 = vunpack.c.l.b16 %v801
  %v946 = vunpack.c.l.b16 %v802
  %v947 = vunpack.c.l.b16 %v803
  %v948 = vunpack.c.l.b16 %v804
  %v949 = vunpack.c.l.b16 %v805
  %v950 = vunpack.c.l.b16 %v806
  %v951 = vunpack.c.l.b16 %v807
  %v952 = vunpack.c.l.b16 %v808
  %v953 = vunpack.c.l.b16 %v809
  %v954 = vunpack.c.l.b16 %v810
  %v955 = vpack.c.b16 %v892, %v891
  %v956 = vpack.c.b16 %v894, %v893
  %v957 = vpack.c.b16 %v896, %v895
  %v958 = vpack.c.b16 %v898, %v897
  %v959 = vpack.c.b16 %v900, %v899
  %v960 = vpack.c.b16 %v902, %v901
  %v961 = vpack.c.b16 %v904, %v903
  %v962 = vpack.c.b16 %v906, %v905
  %v963 = vpack.c.b16 %v908, %v907
  %v964 = vpack.c.b16 %v910, %v909
  %v965 = vpack.c.b16 %v912, %v911
  %v966 = vpack.c.b16 %v914, %v913
  %v967 = vpack.c.b16 %v916, %v915
  %v968 = vpack.c.b16 %v918, %v917
  %v969 = vpack.c.b16 %v920, %v919
  %v970 = vpack.c.b16 %v922, %v921
  %v971 = vpack.c.b16 %v924, %v923
  %v972 = vpack.c.b16 %v926, %v925
  %v973 = vpack.c.b16 %v928, %v927
  %v974 = vpack.c.b16 %v930, %v929
  %v975 = vpack.c.b16 %v932, %v931
  %v976 = vpack.c.b16 %v934, %v933
  %v977 = vpack.c.b16 %v936, %v935
  %v978 = vpack.c.b16 %v938, %v937
  %v979 = vpack.c.b16 %v940, %v939
  %v980 = vpack.c.b16 %v942, %v941
  %v981 = vpack.c.b16 %v944, %v943
  %v982 = vpack.c.b16 %v946, %v945
  %v983 = vpack.c.b16 %v948, %v947
  %v984 = vpack.c.b16 %v950, %v949
  %v985 = vpack.c.b16 %v952, %v951
  %v986 = vpack.c.b16 %v954, %v953
  %v1035 = vunpack.c.l.b16 %v811
  %v1036 = vunpack.c.l.b16 %v812
  %v1037 = vunpack.c.l.b16 %v813
  %v1038 = vunpack.c.l.b16 %v814
  %v1039 = vunpack.c.l.b16 %v815
  %v1040 = vunpack.c.l.b16 %v816
  %v1041 = vunpack.c.l.b16 %v817
  %v1042 = vunpack.c.l.b16 %v818
  %v1043 = vunpack.c.l.b16 %v819
  %v1044 = vunpack.c.l.b16 %v820
  %v1045 = vunpack.c.l.b16 %v821
  %v1046 = vunpack.c.l.b16 %v822
  %v1047 = vunpack.c.l.b16 %v823
  %v1048 = vunpack.c.l.b16 %v824
  %v1049 = vunpack.c.l.b16 %v825
  %v1050 = vunpack.c.l.b16 %v826
  %v1051 = vpack.c.b16 %v1036, %v1035
  %v1052 = vpack.c.b16 %v1038, %v1037
  %v1053 = vpack.c.b16 %v1040, %v1039
  %v1054 = vpack.c.b16 %v1042, %v1041
  %v1055 = vpack.c.b16 %v1044, %v1043
  %v1056 = vpack.c.b16 %v1046, %v1045
  %v1057 = vpack.c.b16 %v1048, %v1047
  %v1058 = vpack.c.b16 %v1050, %v1049
  %1067 = vmatprep.subr.bf16.mxu0 0
  %1068 = vmatpush1.bf16.msra.mxu0 %v1051
  %1069 = vmatprep.subr.bf16.mxu0 0
  %1070 = vmatpush1.bf16.msra.mxu0 %v1052
  %1071 = vmatprep.subr.bf16.mxu0 0
  %1072 = vmatpush1.bf16.msra.mxu0 %v1053
  %1073 = vmatprep.subr.bf16.mxu0 0
  %1074 = vmatpush1.bf16.msra.mxu0 %v1054
  %1075 = vmatprep.subr.bf16.mxu0 0
  %1076 = vmatpush1.bf16.msra.mxu0 %v1055
  %1077 = vmatprep.subr.bf16.mxu0 0
  %1078 = vmatpush1.bf16.msra.mxu0 %v1056
  %1079 = vmatprep.subr.bf16.mxu0 0
  %1080 = vmatpush1.bf16.msra.mxu0 %v1057
  %1081 = vmatprep.subr.bf16.mxu0 0
  %1082 = vmatpush1.bf16.msra.mxu0 %v1058
  %1083 = vmatprep.subr.bf16.mxu0 0
  %1084 = vmatpush1.bf16.msra.mxu0 0
  %1085 = vmatprep.subr.bf16.mxu0 0
  %1086 = vmatpush1.bf16.msra.mxu0 0
  %1087 = vmatprep.subr.bf16.mxu0 0
  %1088 = vmatpush1.bf16.msra.mxu0 0
  %1089 = vmatprep.subr.bf16.mxu0 0
  %1090 = vmatpush1.bf16.msra.mxu0 0
  %1091 = vmatprep.subr.bf16.mxu0 0
  %1092 = vmatpush1.bf16.msra.mxu0 0
  %1093 = vmatprep.subr.bf16.mxu0 0
  %1094 = vmatpush1.bf16.msra.mxu0 0
  %1095 = vmatprep.subr.bf16.mxu0 0
  %1096 = vmatpush1.bf16.msra.mxu0 0
  %1097 = vmatprep.subr.bf16.mxu0 0
  %1098 = vmatpush1.bf16.msra.mxu0 0
  %1099 = vmatprep.mubr.bf16.mxu0 0
  %1100 = vmatmul.mubr.bf16.gmra.mrb[0].mxu0 %v955
  %v1101 = vpop.f32.mrb[0].mxu0
  %v1102 = vadd.f32 0.0, %v1101
  %v1103 = vpop.f32.mrb[0].mxu0
  %v1104 = vpop.f32.mrb[0].mxu0
  %v1105 = vadd.f32 0.0, %v1104
  %v1106 = vpop.f32.mrb[0].mxu0
  %1107 = vmatprep.mubr.bf16.mxu0 0
  %1108 = vmatmul.mubr.bf16.gmra.mrb[0].mxu0 %v956
  %v1109 = vpop.f32.mrb[0].mxu0
  %v1110 = vadd.f32 0.0, %v1109
  %v1111 = vpop.f32.mrb[0].mxu0
  %v1112 = vpop.f32.mrb[0].mxu0
  %v1113 = vadd.f32 0.0, %v1112
  %v1114 = vpop.f32.mrb[0].mxu0
  %1115 = vmatprep.mubr.bf16.mxu0 0
  %1116 = vmatmul.mubr.bf16.gmra.mrb[0].mxu0 %v957
  %v1117 = vpop.f32.mrb[0].mxu0
  %v1118 = vadd.f32 0.0, %v1117
  %v1119 = vpop.f32.mrb[0].mxu0
  %v1120 = vpop.f32.mrb[0].mxu0
  %v1121 = vadd.f32 0.0, %v1120
  %v1122 = vpop.f32.mrb[0].mxu0
  %1123 = vmatprep.mubr.bf16.mxu0 0
  %1124 = vmatmul.mubr.bf16.gmra.mrb[0].mxu0 %v958
  %v1125 = vpop.f32.mrb[0].mxu0
  %v1126 = vadd.f32 0.0, %v1125
  %v1127 = vpop.f32.mrb[0].mxu0
  %v1128 = vpop.f32.mrb[0].mxu0
  %v1129 = vadd.f32 0.0, %v1128
  %v1130 = vpop.f32.mrb[0].mxu0
  %1131 = vmatprep.mubr.bf16.mxu0 0
  %1132 = vmatmul.mubr.bf16.gmra.mrb[0].mxu0 %v959
  %v1133 = vpop.f32.mrb[0].mxu0
  %v1134 = vadd.f32 0.0, %v1133
  %v1135 = vpop.f32.mrb[0].mxu0
  %v1136 = vpop.f32.mrb[0].mxu0
  %v1137 = vadd.f32 0.0, %v1136
  %v1138 = vpop.f32.mrb[0].mxu0
  %1139 = vmatprep.mubr.bf16.mxu0 0
  %1140 = vmatmul.mubr.bf16.gmra.mrb[0].mxu0 %v960
  %v1141 = vpop.f32.mrb[0].mxu0
  %v1142 = vadd.f32 0.0, %v1141
  %v1143 = vpop.f32.mrb[0].mxu0
  %v1144 = vpop.f32.mrb[0].mxu0
  %v1145 = vadd.f32 0.0, %v1144
  %v1146 = vpop.f32.mrb[0].mxu0
  %1147 = vmatprep.mubr.bf16.mxu0 0
  %1148 = vmatmul.mubr.bf16.gmra.mrb[0].mxu0 %v961
  %v1149 = vpop.f32.mrb[0].mxu0
  %v1150 = vadd.f32 0.0, %v1149
  %v1151 = vpop.f32.mrb[0].mxu0
  %v1152 = vpop.f32.mrb[0].mxu0
  %v1153 = vadd.f32 0.0, %v1152
  %v1154 = vpop.f32.mrb[0].mxu0
  %1155 = vmatprep.mubr.bf16.mxu0 0
  %1156 = vmatmul.mubr.bf16.gmra.mrb[0].mxu0 %v962
  %v1157 = vpop.f32.mrb[0].mxu0
  %v1158 = vadd.f32 0.0, %v1157
  %v1159 = vpop.f32.mrb[0].mxu0
  %v1160 = vpop.f32.mrb[0].mxu0
  %v1161 = vadd.f32 0.0, %v1160
  %v1162 = vpop.f32.mrb[0].mxu0
  %1163 = vmatprep.mubr.bf16.mxu0 0
  %1164 = vmatmul.mubr.bf16.gmra.mrb[0].mxu0 %v963
  %v1165 = vpop.f32.mrb[0].mxu0
  %v1166 = vadd.f32 0.0, %v1165
  %v1167 = vpop.f32.mrb[0].mxu0
  %v1168 = vpop.f32.mrb[0].mxu0
  %v1169 = vadd.f32 0.0, %v1168
  %v1170 = vpop.f32.mrb[0].mxu0
  %1171 = vmatprep.mubr.bf16.mxu0 0
  %1172 = vmatmul.mubr.bf16.gmra.mrb[0].mxu0 %v964
  %v1173 = vpop.f32.mrb[0].mxu0
  %v1174 = vadd.f32 0.0, %v1173
  %v1175 = vpop.f32.mrb[0].mxu0
  %v1176 = vpop.f32.mrb[0].mxu0
  %v1177 = vadd.f32 0.0, %v1176
  %v1178 = vpop.f32.mrb[0].mxu0
  %1179 = vmatprep.mubr.bf16.mxu0 0
  %1180 = vmatmul.mubr.bf16.gmra.mrb[0].mxu0 %v965
  %v1181 = vpop.f32.mrb[0].mxu0
  %v1182 = vadd.f32 0.0, %v1181
  %v1183 = vpop.f32.mrb[0].mxu0
  %v1184 = vpop.f32.mrb[0].mxu0
  %v1185 = vadd.f32 0.0, %v1184
  %v1186 = vpop.f32.mrb[0].mxu0
  %1187 = vmatprep.mubr.bf16.mxu0 0
  %1188 = vmatmul.mubr.bf16.gmra.mrb[0].mxu0 %v966
  %v1189 = vpop.f32.mrb[0].mxu0
  %v1190 = vadd.f32 0.0, %v1189
  %v1191 = vpop.f32.mrb[0].mxu0
  %v1192 = vpop.f32.mrb[0].mxu0
  %v1193 = vadd.f32 0.0, %v1192
  %v1194 = vpop.f32.mrb[0].mxu0
  %1195 = vmatprep.mubr.bf16.mxu0 0
  %1196 = vmatmul.mubr.bf16.gmra.mrb[0].mxu0 %v967
  %v1197 = vpop.f32.mrb[0].mxu0
  %v1198 = vadd.f32 0.0, %v1197
  %v1199 = vpop.f32.mrb[0].mxu0
  %v1200 = vpop.f32.mrb[0].mxu0
  %v1201 = vadd.f32 0.0, %v1200
  %v1202 = vpop.f32.mrb[0].mxu0
  %1203 = vmatprep.mubr.bf16.mxu0 0
  %1204 = vmatmul.mubr.bf16.gmra.mrb[0].mxu0 %v968
  %v1205 = vpop.f32.mrb[0].mxu0
  %v1206 = vadd.f32 0.0, %v1205
  %v1207 = vpop.f32.mrb[0].mxu0
  %v1208 = vpop.f32.mrb[0].mxu0
  %v1209 = vadd.f32 0.0, %v1208
  %v1210 = vpop.f32.mrb[0].mxu0
  %1211 = vmatprep.mubr.bf16.mxu0 0
  %1212 = vmatmul.mubr.bf16.gmra.mrb[0].mxu0 %v969
  %v1213 = vpop.f32.mrb[0].mxu0
  %v1214 = vadd.f32 0.0, %v1213
  %v1215 = vpop.f32.mrb[0].mxu0
  %v1216 = vpop.f32.mrb[0].mxu0
  %v1217 = vadd.f32 0.0, %v1216
  %v1218 = vpop.f32.mrb[0].mxu0
  %1219 = vmatprep.mubr.bf16.mxu0 0
  %1220 = vmatmul.mubr.bf16.gmra.mrb[0].mxu0 %v970
  %v1221 = vpop.f32.mrb[0].mxu0
  %v1222 = vadd.f32 0.0, %v1221
  %v1223 = vpop.f32.mrb[0].mxu0
  %v1224 = vpop.f32.mrb[0].mxu0
  %v1225 = vadd.f32 0.0, %v1224
  %v1226 = vpop.f32.mrb[0].mxu0
  %1227 = vmatprep.mubr.bf16.mxu0 0
  %1228 = vmatmul.mubr.bf16.gmra.mrb[0].mxu0 %v971
  %v1229 = vpop.f32.mrb[0].mxu0
  %v1230 = vadd.f32 0.0, %v1229
  %v1231 = vpop.f32.mrb[0].mxu0
  %v1232 = vpop.f32.mrb[0].mxu0
  %v1233 = vadd.f32 0.0, %v1232
  %v1234 = vpop.f32.mrb[0].mxu0
  %1235 = vmatprep.mubr.bf16.mxu0 0
  %1236 = vmatmul.mubr.bf16.gmra.mrb[0].mxu0 %v972
  %v1237 = vpop.f32.mrb[0].mxu0
  %v1238 = vadd.f32 0.0, %v1237
  %v1239 = vpop.f32.mrb[0].mxu0
  %v1240 = vpop.f32.mrb[0].mxu0
  %v1241 = vadd.f32 0.0, %v1240
  %v1242 = vpop.f32.mrb[0].mxu0
  %1243 = vmatprep.mubr.bf16.mxu0 0
  %1244 = vmatmul.mubr.bf16.gmra.mrb[0].mxu0 %v973
  %v1245 = vpop.f32.mrb[0].mxu0
  %v1246 = vadd.f32 0.0, %v1245
  %v1247 = vpop.f32.mrb[0].mxu0
  %v1248 = vpop.f32.mrb[0].mxu0
  %v1249 = vadd.f32 0.0, %v1248
  %v1250 = vpop.f32.mrb[0].mxu0
  %1251 = vmatprep.mubr.bf16.mxu0 0
  %1252 = vmatmul.mubr.bf16.gmra.mrb[0].mxu0 %v974
  %v1253 = vpop.f32.mrb[0].mxu0
  %v1254 = vadd.f32 0.0, %v1253
  %v1255 = vpop.f32.mrb[0].mxu0
  %v1256 = vpop.f32.mrb[0].mxu0
  %v1257 = vadd.f32 0.0, %v1256
  %v1258 = vpop.f32.mrb[0].mxu0
  %1259 = vmatprep.mubr.bf16.mxu0 0
  %1260 = vmatmul.mubr.bf16.gmra.mrb[0].mxu0 %v975
  %v1261 = vpop.f32.mrb[0].mxu0
  %v1262 = vadd.f32 0.0, %v1261
  %v1263 = vpop.f32.mrb[0].mxu0
  %v1264 = vpop.f32.mrb[0].mxu0
  %v1265 = vadd.f32 0.0, %v1264
  %v1266 = vpop.f32.mrb[0].mxu0
  %1267 = vmatprep.mubr.bf16.mxu0 0
  %1268 = vmatmul.mubr.bf16.gmra.mrb[0].mxu0 %v976
  %v1269 = vpop.f32.mrb[0].mxu0
  %v1270 = vadd.f32 0.0, %v1269
  %v1271 = vpop.f32.mrb[0].mxu0
  %v1272 = vpop.f32.mrb[0].mxu0
  %v1273 = vadd.f32 0.0, %v1272
  %v1274 = vpop.f32.mrb[0].mxu0
  %1275 = vmatprep.mubr.bf16.mxu0 0
  %1276 = vmatmul.mubr.bf16.gmra.mrb[0].mxu0 %v977
  %v1277 = vpop.f32.mrb[0].mxu0
  %v1278 = vadd.f32 0.0, %v1277
  %v1279 = vpop.f32.mrb[0].mxu0
  %v1280 = vpop.f32.mrb[0].mxu0
  %v1281 = vadd.f32 0.0, %v1280
  %v1282 = vpop.f32.mrb[0].mxu0
  %1283 = vmatprep.mubr.bf16.mxu0 0
  %1284 = vmatmul.mubr.bf16.gmra.mrb[0].mxu0 %v978
  %v1285 = vpop.f32.mrb[0].mxu0
  %v1286 = vadd.f32 0.0, %v1285
  %v1287 = vpop.f32.mrb[0].mxu0
  %v1288 = vpop.f32.mrb[0].mxu0
  %v1289 = vadd.f32 0.0, %v1288
  %v1290 = vpop.f32.mrb[0].mxu0
  %1291 = vmatprep.mubr.bf16.mxu0 0
  %1292 = vmatmul.mubr.bf16.gmra.mrb[0].mxu0 %v979
  %v1293 = vpop.f32.mrb[0].mxu0
  %v1294 = vadd.f32 0.0, %v1293
  %v1295 = vpop.f32.mrb[0].mxu0
  %v1296 = vpop.f32.mrb[0].mxu0
  %v1297 = vadd.f32 0.0, %v1296
  %v1298 = vpop.f32.mrb[0].mxu0
  %1299 = vmatprep.mubr.bf16.mxu0 0
  %1300 = vmatmul.mubr.bf16.gmra.mrb[0].mxu0 %v980
  %v1301 = vpop.f32.mrb[0].mxu0
  %v1302 = vadd.f32 0.0, %v1301
  %v1303 = vpop.f32.mrb[0].mxu0
  %v1304 = vpop.f32.mrb[0].mxu0
  %v1305 = vadd.f32 0.0, %v1304
  %v1306 = vpop.f32.mrb[0].mxu0
  %1307 = vmatprep.mubr.bf16.mxu0 0
  %1308 = vmatmul.mubr.bf16.gmra.mrb[0].mxu0 %v981
  %v1309 = vpop.f32.mrb[0].mxu0
  %v1310 = vadd.f32 0.0, %v1309
  %v1311 = vpop.f32.mrb[0].mxu0
  %v1312 = vpop.f32.mrb[0].mxu0
  %v1313 = vadd.f32 0.0, %v1312
  %v1314 = vpop.f32.mrb[0].mxu0
  %1315 = vmatprep.mubr.bf16.mxu0 0
  %1316 = vmatmul.mubr.bf16.gmra.mrb[0].mxu0 %v982
  %v1317 = vpop.f32.mrb[0].mxu0
  %v1318 = vadd.f32 0.0, %v1317
  %v1319 = vpop.f32.mrb[0].mxu0
  %v1320 = vpop.f32.mrb[0].mxu0
  %v1321 = vadd.f32 0.0, %v1320
  %v1322 = vpop.f32.mrb[0].mxu0
  %1323 = vmatprep.mubr.bf16.mxu0 0
  %1324 = vmatmul.mubr.bf16.gmra.mrb[0].mxu0 %v983
  %v1325 = vpop.f32.mrb[0].mxu0
  %v1326 = vadd.f32 0.0, %v1325
  %v1327 = vpop.f32.mrb[0].mxu0
  %v1328 = vpop.f32.mrb[0].mxu0
  %v1329 = vadd.f32 0.0, %v1328
  %v1330 = vpop.f32.mrb[0].mxu0
  %1331 = vmatprep.mubr.bf16.mxu0 0
  %1332 = vmatmul.mubr.bf16.gmra.mrb[0].mxu0 %v984
  %v1333 = vpop.f32.mrb[0].mxu0
  %v1334 = vadd.f32 0.0, %v1333
  %v1335 = vpop.f32.mrb[0].mxu0
  %v1336 = vpop.f32.mrb[0].mxu0
  %v1337 = vadd.f32 0.0, %v1336
  %v1338 = vpop.f32.mrb[0].mxu0
  %1339 = vmatprep.mubr.bf16.mxu0 0
  %1340 = vmatmul.mubr.bf16.gmra.mrb[0].mxu0 %v985
  %v1341 = vpop.f32.mrb[0].mxu0
  %v1342 = vadd.f32 0.0, %v1341
  %v1343 = vpop.f32.mrb[0].mxu0
  %v1344 = vpop.f32.mrb[0].mxu0
  %v1345 = vadd.f32 0.0, %v1344
  %v1346 = vpop.f32.mrb[0].mxu0
  %1347 = vmatprep.mubr.bf16.mxu0 0
  %1348 = vmatmul.mubr.bf16.gmra.mrb[0].mxu0 %v986
  %v1349 = vpop.f32.mrb[0].mxu0
  %v1350 = vadd.f32 0.0, %v1349
  %v1351 = vpop.f32.mrb[0].mxu0
  %v1352 = vpop.f32.mrb[0].mxu0
  %v1353 = vadd.f32 0.0, %v1352
  %v1354 = vpop.f32.mrb[0].mxu0
  %1355 = vdwg.mxu0
  %v1356 = vpack.c.bf16 %v496, %v493
  %v1357 = vpack.c.bf16 %v504, %v501
  %v1358 = vpack.c.bf16 %v512, %v509
  %v1359 = vpack.c.bf16 %v520, %v517
  %v1360 = vpack.c.bf16 %v528, %v525
  %v1361 = vpack.c.bf16 %v536, %v533
  %v1362 = vpack.c.bf16 %v544, %v541
  %v1363 = vpack.c.bf16 %v552, %v549
  %v1364 = vpack.c.bf16 %v560, %v557
  %v1365 = vpack.c.bf16 %v568, %v565
  %v1366 = vpack.c.bf16 %v576, %v573
  %v1367 = vpack.c.bf16 %v584, %v581
  %v1368 = vpack.c.bf16 %v592, %v589
  %v1369 = vpack.c.bf16 %v600, %v597
  %v1370 = vpack.c.bf16 %v608, %v605
  %v1371 = vpack.c.bf16 %v616, %v613
  %v1372 = vpack.c.bf16 %v624, %v621
  %v1373 = vpack.c.bf16 %v632, %v629
  %v1374 = vpack.c.bf16 %v640, %v637
  %v1375 = vpack.c.bf16 %v648, %v645
  %v1376 = vpack.c.bf16 %v656, %v653
  %v1377 = vpack.c.bf16 %v664, %v661
  %v1378 = vpack.c.bf16 %v672, %v669
  %v1379 = vpack.c.bf16 %v680, %v677
  %v1380 = vpack.c.bf16 %v688, %v685
  %v1381 = vpack.c.bf16 %v696, %v693
  %v1382 = vpack.c.bf16 %v704, %v701
  %v1383 = vpack.c.bf16 %v712, %v709
  %v1384 = vpack.c.bf16 %v720, %v717
  %v1385 = vpack.c.bf16 %v728, %v725
  %v1386 = vpack.c.bf16 %v736, %v733
  %v1387 = vpack.c.bf16 %v744, %v741
  %v1420 = vunpack.c.l.b16 %v1356
  %v1421 = vunpack.c.h.b16 %v1356
  %v1422 = vunpack.c.l.b16 %v1357
  %v1423 = vunpack.c.h.b16 %v1357
  %v1424 = vunpack.c.l.b16 %v1358
  %v1425 = vunpack.c.h.b16 %v1358
  %v1426 = vunpack.c.l.b16 %v1359
  %v1427 = vunpack.c.h.b16 %v1359
  %v1428 = vunpack.c.l.b16 %v1360
  %v1429 = vunpack.c.h.b16 %v1360
  %v1430 = vunpack.c.l.b16 %v1361
  %v1431 = vunpack.c.h.b16 %v1361
  %v1432 = vunpack.c.l.b16 %v1362
  %v1433 = vunpack.c.h.b16 %v1362
  %v1434 = vunpack.c.l.b16 %v1363
  %v1435 = vunpack.c.h.b16 %v1363
  %v1436 = vunpack.c.l.b16 %v1364
  %v1437 = vunpack.c.h.b16 %v1364
  %v1438 = vunpack.c.l.b16 %v1365
  %v1439 = vunpack.c.h.b16 %v1365
  %v1440 = vunpack.c.l.b16 %v1366
  %v1441 = vunpack.c.h.b16 %v1366
  %v1442 = vunpack.c.l.b16 %v1367
  %v1443 = vunpack.c.h.b16 %v1367
  %v1444 = vunpack.c.l.b16 %v1368
  %v1445 = vunpack.c.h.b16 %v1368
  %v1446 = vunpack.c.l.b16 %v1369
  %v1447 = vunpack.c.h.b16 %v1369
  %v1448 = vunpack.c.l.b16 %v1370
  %v1449 = vunpack.c.h.b16 %v1370
  %v1450 = vunpack.c.l.b16 %v1371
  %v1451 = vunpack.c.h.b16 %v1371
  %v1452 = vunpack.c.l.b16 %v1372
  %v1453 = vunpack.c.h.b16 %v1372
  %v1454 = vunpack.c.l.b16 %v1373
  %v1455 = vunpack.c.h.b16 %v1373
  %v1456 = vunpack.c.l.b16 %v1374
  %v1457 = vunpack.c.h.b16 %v1374
  %v1458 = vunpack.c.l.b16 %v1375
  %v1459 = vunpack.c.h.b16 %v1375
  %v1460 = vunpack.c.l.b16 %v1376
  %v1461 = vunpack.c.h.b16 %v1376
  %v1462 = vunpack.c.l.b16 %v1377
  %v1463 = vunpack.c.h.b16 %v1377
  %v1464 = vunpack.c.l.b16 %v1378
  %v1465 = vunpack.c.h.b16 %v1378
  %v1466 = vunpack.c.l.b16 %v1379
  %v1467 = vunpack.c.h.b16 %v1379
  %v1468 = vunpack.c.l.b16 %v1380
  %v1469 = vunpack.c.h.b16 %v1380
  %v1470 = vunpack.c.l.b16 %v1381
  %v1471 = vunpack.c.h.b16 %v1381
  %v1472 = vunpack.c.l.b16 %v1382
  %v1473 = vunpack.c.h.b16 %v1382
  %v1474 = vunpack.c.l.b16 %v1383
  %v1475 = vunpack.c.h.b16 %v1383
  %v1476 = vunpack.c.l.b16 %v1384
  %v1477 = vunpack.c.h.b16 %v1384
  %v1478 = vunpack.c.l.b16 %v1385
  %v1479 = vunpack.c.h.b16 %v1385
  %v1480 = vunpack.c.l.b16 %v1386
  %v1481 = vunpack.c.h.b16 %v1386
  %v1482 = vunpack.c.l.b16 %v1387
  %v1483 = vunpack.c.h.b16 %v1387
  %v1484 = vpack.c.b16 %v1420, %v1420
  %v1485 = vpack.c.b16 %v1421, %v1421
  %v1486 = vpack.c.b16 %v1422, %v1422
  %v1487 = vpack.c.b16 %v1423, %v1423
  %v1488 = vpack.c.b16 %v1424, %v1424
  %v1489 = vpack.c.b16 %v1425, %v1425
  %v1490 = vpack.c.b16 %v1426, %v1426
  %v1491 = vpack.c.b16 %v1427, %v1427
  %v1492 = vpack.c.b16 %v1428, %v1428
  %v1493 = vpack.c.b16 %v1429, %v1429
  %v1494 = vpack.c.b16 %v1430, %v1430
  %v1495 = vpack.c.b16 %v1431, %v1431
  %v1496 = vpack.c.b16 %v1432, %v1432
  %v1497 = vpack.c.b16 %v1433, %v1433
  %v1498 = vpack.c.b16 %v1434, %v1434
  %v1499 = vpack.c.b16 %v1435, %v1435
  %v1500 = vpack.c.b16 %v1436, %v1436
  %v1501 = vpack.c.b16 %v1437, %v1437
  %v1502 = vpack.c.b16 %v1438, %v1438
  %v1503 = vpack.c.b16 %v1439, %v1439
  %v1504 = vpack.c.b16 %v1440, %v1440
  %v1505 = vpack.c.b16 %v1441, %v1441
  %v1506 = vpack.c.b16 %v1442, %v1442
  %v1507 = vpack.c.b16 %v1443, %v1443
  %v1508 = vpack.c.b16 %v1444, %v1444
  %v1509 = vpack.c.b16 %v1445, %v1445
  %v1510 = vpack.c.b16 %v1446, %v1446
  %v1511 = vpack.c.b16 %v1447, %v1447
  %v1512 = vpack.c.b16 %v1448, %v1448
  %v1513 = vpack.c.b16 %v1449, %v1449
  %v1514 = vpack.c.b16 %v1450, %v1450
  %v1515 = vpack.c.b16 %v1451, %v1451
  %v1516 = vpack.c.b16 %v1452, %v1452
  %v1517 = vpack.c.b16 %v1453, %v1453
  %v1518 = vpack.c.b16 %v1454, %v1454
  %v1519 = vpack.c.b16 %v1455, %v1455
  %v1520 = vpack.c.b16 %v1456, %v1456
  %v1521 = vpack.c.b16 %v1457, %v1457
  %v1522 = vpack.c.b16 %v1458, %v1458
  %v1523 = vpack.c.b16 %v1459, %v1459
  %v1524 = vpack.c.b16 %v1460, %v1460
  %v1525 = vpack.c.b16 %v1461, %v1461
  %v1526 = vpack.c.b16 %v1462, %v1462
  %v1527 = vpack.c.b16 %v1463, %v1463
  %v1528 = vpack.c.b16 %v1464, %v1464
  %v1529 = vpack.c.b16 %v1465, %v1465
  %v1530 = vpack.c.b16 %v1466, %v1466
  %v1531 = vpack.c.b16 %v1467, %v1467
  %v1532 = vpack.c.b16 %v1468, %v1468
  %v1533 = vpack.c.b16 %v1469, %v1469
  %v1534 = vpack.c.b16 %v1470, %v1470
  %v1535 = vpack.c.b16 %v1471, %v1471
  %v1536 = vpack.c.b16 %v1472, %v1472
  %v1537 = vpack.c.b16 %v1473, %v1473
  %v1538 = vpack.c.b16 %v1474, %v1474
  %v1539 = vpack.c.b16 %v1475, %v1475
  %v1540 = vpack.c.b16 %v1476, %v1476
  %v1541 = vpack.c.b16 %v1477, %v1477
  %v1542 = vpack.c.b16 %v1478, %v1478
  %v1543 = vpack.c.b16 %v1479, %v1479
  %v1544 = vpack.c.b16 %v1480, %v1480
  %v1545 = vpack.c.b16 %v1481, %v1481
  %v1546 = vpack.c.b16 %v1482, %v1482
  %v1547 = vpack.c.b16 %v1483, %v1483
  %1612 = vst [vmem:[%s6] sm:$0xf] %v1484
  %1613 = vst [vmem:[%s6 + $0x4] sm:$0xf] %v1485
  %1614 = vst [vmem:[%s6 + $0x8] sm:$0xf] %v1486
  %1615 = vst [vmem:[%s6 + $0xc] sm:$0xf] %v1487
  %1616 = vst [vmem:[%s6 + $0x10] sm:$0xf] %v1488
  %1617 = vst [vmem:[%s6 + $0x14] sm:$0xf] %v1489
  %1618 = vst [vmem:[%s6 + $0x18] sm:$0xf] %v1490
  %1619 = vst [vmem:[%s6 + $0x1c] sm:$0xf] %v1491
  %1620 = vst [vmem:[%s6 + $0x20] sm:$0xf] %v1492
  %1621 = vst [vmem:[%s6 + $0x24] sm:$0xf] %v1493
  %1622 = vst [vmem:[%s6 + $0x28] sm:$0xf] %v1494
  %1623 = vst [vmem:[%s6 + $0x2c] sm:$0xf] %v1495
  %1624 = vst [vmem:[%s6 + $0x30] sm:$0xf] %v1496
  %1625 = vst [vmem:[%s6 + $0x34] sm:$0xf] %v1497
  %1626 = vst [vmem:[%s6 + $0x38] sm:$0xf] %v1498
  %1627 = vst [vmem:[%s6 + $0x3c] sm:$0xf] %v1499
  %1628 = vst [vmem:[%s6 + $0x40] sm:$0xf] %v1500
  %1629 = vst [vmem:[%s6 + $0x44] sm:$0xf] %v1501
  %1630 = vst [vmem:[%s6 + $0x48] sm:$0xf] %v1502
  %1631 = vst [vmem:[%s6 + $0x4c] sm:$0xf] %v1503
  %1632 = vst [vmem:[%s6 + $0x50] sm:$0xf] %v1504
  %1633 = vst [vmem:[%s6 + $0x54] sm:$0xf] %v1505
  %1634 = vst [vmem:[%s6 + $0x58] sm:$0xf] %v1506
  %1635 = vst [vmem:[%s6 + $0x5c] sm:$0xf] %v1507
  %1636 = vst [vmem:[%s6 + $0x60] sm:$0xf] %v1508
  %1637 = vst [vmem:[%s6 + $0x64] sm:$0xf] %v1509
  %1638 = vst [vmem:[%s6 + $0x68] sm:$0xf] %v1510
  %1639 = vst [vmem:[%s6 + $0x6c] sm:$0xf] %v1511
  %1640 = vst [vmem:[%s6 + $0x70] sm:$0xf] %v1512
  %1641 = vst [vmem:[%s6 + $0x74] sm:$0xf] %v1513
  %1642 = vst [vmem:[%s6 + $0x78] sm:$0xf] %v1514
  %1643 = vst [vmem:[%s6 + $0x7c] sm:$0xf] %v1515
  %1644 = vst [vmem:[%s6 + $0x80] sm:$0xf] %v1516
  %1645 = vst [vmem:[%s6 + $0x84] sm:$0xf] %v1517
  %1646 = vst [vmem:[%s6 + $0x88] sm:$0xf] %v1518
  %1647 = vst [vmem:[%s6 + $0x8c] sm:$0xf] %v1519
  %1648 = vst [vmem:[%s6 + $0x90] sm:$0xf] %v1520
  %1649 = vst [vmem:[%s6 + $0x94] sm:$0xf] %v1521
  %1650 = vst [vmem:[%s6 + $0x98] sm:$0xf] %v1522
  %1651 = vst [vmem:[%s6 + $0x9c] sm:$0xf] %v1523
  %1652 = vst [vmem:[%s6 + $0xa0] sm:$0xf] %v1524
  %1653 = vst [vmem:[%s6 + $0xa4] sm:$0xf] %v1525
  %1654 = vst [vmem:[%s6 + $0xa8] sm:$0xf] %v1526
  %1655 = vst [vmem:[%s6 + $0xac] sm:$0xf] %v1527
  %1656 = vst [vmem:[%s6 + $0xb0] sm:$0xf] %v1528
  %1657 = vst [vmem:[%s6 + $0xb4] sm:$0xf] %v1529
  %1658 = vst [vmem:[%s6 + $0xb8] sm:$0xf] %v1530
  %1659 = vst [vmem:[%s6 + $0xbc] sm:$0xf] %v1531
  %1660 = vst [vmem:[%s6 + $0xc0] sm:$0xf] %v1532
  %1661 = vst [vmem:[%s6 + $0xc4] sm:$0xf] %v1533
  %1662 = vst [vmem:[%s6 + $0xc8] sm:$0xf] %v1534
  %1663 = vst [vmem:[%s6 + $0xcc] sm:$0xf] %v1535
  %1664 = vst [vmem:[%s6 + $0xd0] sm:$0xf] %v1536
  %1665 = vst [vmem:[%s6 + $0xd4] sm:$0xf] %v1537
  %1666 = vst [vmem:[%s6 + $0xd8] sm:$0xf] %v1538
  %1667 = vst [vmem:[%s6 + $0xdc] sm:$0xf] %v1539
  %1668 = vst [vmem:[%s6 + $0xe0] sm:$0xf] %v1540
  %1669 = vst [vmem:[%s6 + $0xe4] sm:$0xf] %v1541
  %1670 = vst [vmem:[%s6 + $0xe8] sm:$0xf] %v1542
  %1671 = vst [vmem:[%s6 + $0xec] sm:$0xf] %v1543
  %1672 = vst [vmem:[%s6 + $0xf0] sm:$0xf] %v1544
  %1673 = vst [vmem:[%s6 + $0xf4] sm:$0xf] %v1545
  %1674 = vst [vmem:[%s6 + $0xf8] sm:$0xf] %v1546
  %1675 = vst [vmem:[%s6 + $0xfc] sm:$0xf] %v1547
  %v1676 = vpack.c.bf16 %v1105, %v1102
  %v1677 = vpack.c.bf16 %v1113, %v1110
  %v1678 = vpack.c.bf16 %v1121, %v1118
  %v1679 = vpack.c.bf16 %v1129, %v1126
  %v1680 = vpack.c.bf16 %v1137, %v1134
  %v1681 = vpack.c.bf16 %v1145, %v1142
  %v1682 = vpack.c.bf16 %v1153, %v1150
  %v1683 = vpack.c.bf16 %v1161, %v1158
  %v1684 = vpack.c.bf16 %v1169, %v1166
  %v1685 = vpack.c.bf16 %v1177, %v1174
  %v1686 = vpack.c.bf16 %v1185, %v1182
  %v1687 = vpack.c.bf16 %v1193, %v1190
  %v1688 = vpack.c.bf16 %v1201, %v1198
  %v1689 = vpack.c.bf16 %v1209, %v1206
  %v1690 = vpack.c.bf16 %v1217, %v1214
  %v1691 = vpack.c.bf16 %v1225, %v1222
  %v1692 = vpack.c.bf16 %v1233, %v1230
  %v1693 = vpack.c.bf16 %v1241, %v1238
  %v1694 = vpack.c.bf16 %v1249, %v1246
  %v1695 = vpack.c.bf16 %v1257, %v1254
  %v1696 = vpack.c.bf16 %v1265, %v1262
  %v1697 = vpack.c.bf16 %v1273, %v1270
  %v1698 = vpack.c.bf16 %v1281, %v1278
  %v1699 = vpack.c.bf16 %v1289, %v1286
  %v1700 = vpack.c.bf16 %v1297, %v1294
  %v1701 = vpack.c.bf16 %v1305, %v1302
  %v1702 = vpack.c.bf16 %v1313, %v1310
  %v1703 = vpack.c.bf16 %v1321, %v1318
  %v1704 = vpack.c.bf16 %v1329, %v1326
  %v1705 = vpack.c.bf16 %v1337, %v1334
  %v1706 = vpack.c.bf16 %v1345, %v1342
  %v1707 = vpack.c.bf16 %v1353, %v1350
  %v1740 = vunpack.c.l.b16 %v1676
  %v1741 = vunpack.c.h.b16 %v1676
  %v1742 = vunpack.c.l.b16 %v1677
  %v1743 = vunpack.c.h.b16 %v1677
  %v1744 = vunpack.c.l.b16 %v1678
  %v1745 = vunpack.c.h.b16 %v1678
  %v1746 = vunpack.c.l.b16 %v1679
  %v1747 = vunpack.c.h.b16 %v1679
  %v1748 = vunpack.c.l.b16 %v1680
  %v1749 = vunpack.c.h.b16 %v1680
  %v1750 = vunpack.c.l.b16 %v1681
  %v1751 = vunpack.c.h.b16 %v1681
  %v1752 = vunpack.c.l.b16 %v1682
  %v1753 = vunpack.c.h.b16 %v1682
  %v1754 = vunpack.c.l.b16 %v1683
  %v1755 = vunpack.c.h.b16 %v1683
  %v1756 = vunpack.c.l.b16 %v1684
  %v1757 = vunpack.c.h.b16 %v1684
  %v1758 = vunpack.c.l.b16 %v1685
  %v1759 = vunpack.c.h.b16 %v1685
  %v1760 = vunpack.c.l.b16 %v1686
  %v1761 = vunpack.c.h.b16 %v1686
  %v1762 = vunpack.c.l.b16 %v1687
  %v1763 = vunpack.c.h.b16 %v1687
  %v1764 = vunpack.c.l.b16 %v1688
  %v1765 = vunpack.c.h.b16 %v1688
  %v1766 = vunpack.c.l.b16 %v1689
  %v1767 = vunpack.c.h.b16 %v1689
  %v1768 = vunpack.c.l.b16 %v1690
  %v1769 = vunpack.c.h.b16 %v1690
  %v1770 = vunpack.c.l.b16 %v1691
  %v1771 = vunpack.c.h.b16 %v1691
  %v1772 = vunpack.c.l.b16 %v1692
  %v1773 = vunpack.c.h.b16 %v1692
  %v1774 = vunpack.c.l.b16 %v1693
  %v1775 = vunpack.c.h.b16 %v1693
  %v1776 = vunpack.c.l.b16 %v1694
  %v1777 = vunpack.c.h.b16 %v1694
  %v1778 = vunpack.c.l.b16 %v1695
  %v1779 = vunpack.c.h.b16 %v1695
  %v1780 = vunpack.c.l.b16 %v1696
  %v1781 = vunpack.c.h.b16 %v1696
  %v1782 = vunpack.c.l.b16 %v1697
  %v1783 = vunpack.c.h.b16 %v1697
  %v1784 = vunpack.c.l.b16 %v1698
  %v1785 = vunpack.c.h.b16 %v1698
  %v1786 = vunpack.c.l.b16 %v1699
  %v1787 = vunpack.c.h.b16 %v1699
  %v1788 = vunpack.c.l.b16 %v1700
  %v1789 = vunpack.c.h.b16 %v1700
  %v1790 = vunpack.c.l.b16 %v1701
  %v1791 = vunpack.c.h.b16 %v1701
  %v1792 = vunpack.c.l.b16 %v1702
  %v1793 = vunpack.c.h.b16 %v1702
  %v1794 = vunpack.c.l.b16 %v1703
  %v1795 = vunpack.c.h.b16 %v1703
  %v1796 = vunpack.c.l.b16 %v1704
  %v1797 = vunpack.c.h.b16 %v1704
  %v1798 = vunpack.c.l.b16 %v1705
  %v1799 = vunpack.c.h.b16 %v1705
  %v1800 = vunpack.c.l.b16 %v1706
  %v1801 = vunpack.c.h.b16 %v1706
  %v1802 = vunpack.c.l.b16 %v1707
  %v1803 = vunpack.c.h.b16 %v1707
  %v1804 = vpack.c.b16 %v1740, %v1740
  %v1805 = vpack.c.b16 %v1741, %v1741
  %v1806 = vpack.c.b16 %v1742, %v1742
  %v1807 = vpack.c.b16 %v1743, %v1743
  %v1808 = vpack.c.b16 %v1744, %v1744
  %v1809 = vpack.c.b16 %v1745, %v1745
  %v1810 = vpack.c.b16 %v1746, %v1746
  %v1811 = vpack.c.b16 %v1747, %v1747
  %v1812 = vpack.c.b16 %v1748, %v1748
  %v1813 = vpack.c.b16 %v1749, %v1749
  %v1814 = vpack.c.b16 %v1750, %v1750
  %v1815 = vpack.c.b16 %v1751, %v1751
  %v1816 = vpack.c.b16 %v1752, %v1752
  %v1817 = vpack.c.b16 %v1753, %v1753
  %v1818 = vpack.c.b16 %v1754, %v1754
  %v1819 = vpack.c.b16 %v1755, %v1755
  %v1820 = vpack.c.b16 %v1756, %v1756
  %v1821 = vpack.c.b16 %v1757, %v1757
  %v1822 = vpack.c.b16 %v1758, %v1758
  %v1823 = vpack.c.b16 %v1759, %v1759
  %v1824 = vpack.c.b16 %v1760, %v1760
  %v1825 = vpack.c.b16 %v1761, %v1761
  %v1826 = vpack.c.b16 %v1762, %v1762
  %v1827 = vpack.c.b16 %v1763, %v1763
  %v1828 = vpack.c.b16 %v1764, %v1764
  %v1829 = vpack.c.b16 %v1765, %v1765
  %v1830 = vpack.c.b16 %v1766, %v1766
  %v1831 = vpack.c.b16 %v1767, %v1767
  %v1832 = vpack.c.b16 %v1768, %v1768
  %v1833 = vpack.c.b16 %v1769, %v1769
  %v1834 = vpack.c.b16 %v1770, %v1770
  %v1835 = vpack.c.b16 %v1771, %v1771
  %v1836 = vpack.c.b16 %v1772, %v1772
  %v1837 = vpack.c.b16 %v1773, %v1773
  %v1838 = vpack.c.b16 %v1774, %v1774
  %v1839 = vpack.c.b16 %v1775, %v1775
  %v1840 = vpack.c.b16 %v1776, %v1776
  %v1841 = vpack.c.b16 %v1777, %v1777
  %v1842 = vpack.c.b16 %v1778, %v1778
  %v1843 = vpack.c.b16 %v1779, %v1779
  %v1844 = vpack.c.b16 %v1780, %v1780
  %v1845 = vpack.c.b16 %v1781, %v1781
  %v1846 = vpack.c.b16 %v1782, %v1782
  %v1847 = vpack.c.b16 %v1783, %v1783
  %v1848 = vpack.c.b16 %v1784, %v1784
  %v1849 = vpack.c.b16 %v1785, %v1785
  %v1850 = vpack.c.b16 %v1786, %v1786
  %v1851 = vpack.c.b16 %v1787, %v1787
  %v1852 = vpack.c.b16 %v1788, %v1788
  %v1853 = vpack.c.b16 %v1789, %v1789
  %v1854 = vpack.c.b16 %v1790, %v1790
  %v1855 = vpack.c.b16 %v1791, %v1791
  %v1856 = vpack.c.b16 %v1792, %v1792
  %v1857 = vpack.c.b16 %v1793, %v1793
  %v1858 = vpack.c.b16 %v1794, %v1794
  %v1859 = vpack.c.b16 %v1795, %v1795
  %v1860 = vpack.c.b16 %v1796, %v1796
  %v1861 = vpack.c.b16 %v1797, %v1797
  %v1862 = vpack.c.b16 %v1798, %v1798
  %v1863 = vpack.c.b16 %v1799, %v1799
  %v1864 = vpack.c.b16 %v1800, %v1800
  %v1865 = vpack.c.b16 %v1801, %v1801
  %v1866 = vpack.c.b16 %v1802, %v1802
  %v1867 = vpack.c.b16 %v1803, %v1803
  %1932 = vst [vmem:[%s7] sm:$0xf] %v1804
  %1933 = vst [vmem:[%s7 + $0x4] sm:$0xf] %v1805
  %1934 = vst [vmem:[%s7 + $0x8] sm:$0xf] %v1806
  %1935 = vst [vmem:[%s7 + $0xc] sm:$0xf] %v1807
  %1936 = vst [vmem:[%s7 + $0x10] sm:$0xf] %v1808
  %1937 = vst [vmem:[%s7 + $0x14] sm:$0xf] %v1809
  %1938 = vst [vmem:[%s7 + $0x18] sm:$0xf] %v1810
  %1939 = vst [vmem:[%s7 + $0x1c] sm:$0xf] %v1811
  %1940 = vst [vmem:[%s7 + $0x20] sm:$0xf] %v1812
  %1941 = vst [vmem:[%s7 + $0x24] sm:$0xf] %v1813
  %1942 = vst [vmem:[%s7 + $0x28] sm:$0xf] %v1814
  %1943 = vst [vmem:[%s7 + $0x2c] sm:$0xf] %v1815
  %1944 = vst [vmem:[%s7 + $0x30] sm:$0xf] %v1816
  %1945 = vst [vmem:[%s7 + $0x34] sm:$0xf] %v1817
  %1946 = vst [vmem:[%s7 + $0x38] sm:$0xf] %v1818
  %1947 = vst [vmem:[%s7 + $0x3c] sm:$0xf] %v1819
  %1948 = vst [vmem:[%s7 + $0x40] sm:$0xf] %v1820
  %1949 = vst [vmem:[%s7 + $0x44] sm:$0xf] %v1821
  %1950 = vst [vmem:[%s7 + $0x48] sm:$0xf] %v1822
  %1951 = vst [vmem:[%s7 + $0x4c] sm:$0xf] %v1823
  %1952 = vst [vmem:[%s7 + $0x50] sm:$0xf] %v1824
  %1953 = vst [vmem:[%s7 + $0x54] sm:$0xf] %v1825
  %1954 = vst [vmem:[%s7 + $0x58] sm:$0xf] %v1826
  %1955 = vst [vmem:[%s7 + $0x5c] sm:$0xf] %v1827
  %1956 = vst [vmem:[%s7 + $0x60] sm:$0xf] %v1828
  %1957 = vst [vmem:[%s7 + $0x64] sm:$0xf] %v1829
  %1958 = vst [vmem:[%s7 + $0x68] sm:$0xf] %v1830
  %1959 = vst [vmem:[%s7 + $0x6c] sm:$0xf] %v1831
  %1960 = vst [vmem:[%s7 + $0x70] sm:$0xf] %v1832
  %1961 = vst [vmem:[%s7 + $0x74] sm:$0xf] %v1833
  %1962 = vst [vmem:[%s7 + $0x78] sm:$0xf] %v1834
  %1963 = vst [vmem:[%s7 + $0x7c] sm:$0xf] %v1835
  %1964 = vst [vmem:[%s7 + $0x80] sm:$0xf] %v1836
  %1965 = vst [vmem:[%s7 + $0x84] sm:$0xf] %v1837
  %1966 = vst [vmem:[%s7 + $0x88] sm:$0xf] %v1838
  %1967 = vst [vmem:[%s7 + $0x8c] sm:$0xf] %v1839
  %1968 = vst [vmem:[%s7 + $0x90] sm:$0xf] %v1840
  %1969 = vst [vmem:[%s7 + $0x94] sm:$0xf] %v1841
  %1970 = vst [vmem:[%s7 + $0x98] sm:$0xf] %v1842
  %1971 = vst [vmem:[%s7 + $0x9c] sm:$0xf] %v1843
  %1972 = vst [vmem:[%s7 + $0xa0] sm:$0xf] %v1844
  %1973 = vst [vmem:[%s7 + $0xa4] sm:$0xf] %v1845
  %1974 = vst [vmem:[%s7 + $0xa8] sm:$0xf] %v1846
  %1975 = vst [vmem:[%s7 + $0xac] sm:$0xf] %v1847
  %1976 = vst [vmem:[%s7 + $0xb0] sm:$0xf] %v1848
  %1977 = vst [vmem:[%s7 + $0xb4] sm:$0xf] %v1849
  %1978 = vst [vmem:[%s7 + $0xb8] sm:$0xf] %v1850
  %1979 = vst [vmem:[%s7 + $0xbc] sm:$0xf] %v1851
  %1980 = vst [vmem:[%s7 + $0xc0] sm:$0xf] %v1852
  %1981 = vst [vmem:[%s7 + $0xc4] sm:$0xf] %v1853
  %1982 = vst [vmem:[%s7 + $0xc8] sm:$0xf] %v1854
  %1983 = vst [vmem:[%s7 + $0xcc] sm:$0xf] %v1855
  %1984 = vst [vmem:[%s7 + $0xd0] sm:$0xf] %v1856
  %1985 = vst [vmem:[%s7 + $0xd4] sm:$0xf] %v1857
  %1986 = vst [vmem:[%s7 + $0xd8] sm:$0xf] %v1858
  %1987 = vst [vmem:[%s7 + $0xdc] sm:$0xf] %v1859
  %1988 = vst [vmem:[%s7 + $0xe0] sm:$0xf] %v1860
  %1989 = vst [vmem:[%s7 + $0xe4] sm:$0xf] %v1861
  %1990 = vst [vmem:[%s7 + $0xe8] sm:$0xf] %v1862
  %1991 = vst [vmem:[%s7 + $0xec] sm:$0xf] %v1863
  %1992 = vst [vmem:[%s7 + $0xf0] sm:$0xf] %v1864
  %1993 = vst [vmem:[%s7 + $0xf4] sm:$0xf] %v1865
  %1994 = vst [vmem:[%s7 + $0xf8] sm:$0xf] %v1866
  %1995 = vst [vmem:[%s7 + $0xfc] sm:$0xf] %v1867
  %v1996 = vadd.f32 %v493, %v496
  %v1997 = vadd.f32 %v1996, %v501
  %v1998 = vadd.f32 %v1997, %v504
  %v1999 = vadd.f32 %v1998, %v509
  %v2000 = vadd.f32 %v1999, %v512
  %v2001 = vadd.f32 %v2000, %v517
  %v2002 = vadd.f32 %v2001, %v520
  %v2003 = vadd.f32 %v2002, %v525
  %v2004 = vadd.f32 %v2003, %v528
  %v2005 = vadd.f32 %v2004, %v533
  %v2006 = vadd.f32 %v2005, %v536
  %v2007 = vadd.f32 %v2006, %v541
  %v2008 = vadd.f32 %v2007, %v544
  %v2009 = vadd.f32 %v2008, %v549
  %v2010 = vadd.f32 %v2009, %v552
  %v2011 = vadd.f32 %v2010, %v557
  %v2012 = vadd.f32 %v2011, %v560
  %v2013 = vadd.f32 %v2012, %v565
  %v2014 = vadd.f32 %v2013, %v568
  %v2015 = vadd.f32 %v2014, %v573
  %v2016 = vadd.f32 %v2015, %v576
  %v2017 = vadd.f32 %v2016, %v581
  %v2018 = vadd.f32 %v2017, %v584
  %v2019 = vadd.f32 %v2018, %v589
  %v2020 = vadd.f32 %v2019, %v592
  %v2021 = vadd.f32 %v2020, %v597
  %v2022 = vadd.f32 %v2021, %v600
  %v2023 = vadd.f32 %v2022, %v605
  %v2024 = vadd.f32 %v2023, %v608
  %v2025 = vadd.f32 %v2024, %v613
  %v2026 = vadd.f32 %v2025, %v616
  %v2027 = vadd.f32 %v2026, %v621
  %v2028 = vadd.f32 %v2027, %v624
  %v2029 = vadd.f32 %v2028, %v629
  %v2030 = vadd.f32 %v2029, %v632
  %v2031 = vadd.f32 %v2030, %v637
  %v2032 = vadd.f32 %v2031, %v640
  %v2033 = vadd.f32 %v2032, %v645
  %v2034 = vadd.f32 %v2033, %v648
  %v2035 = vadd.f32 %v2034, %v653
  %v2036 = vadd.f32 %v2035, %v656
  %v2037 = vadd.f32 %v2036, %v661
  %v2038 = vadd.f32 %v2037, %v664
  %v2039 = vadd.f32 %v2038, %v669
  %v2040 = vadd.f32 %v2039, %v672
  %v2041 = vadd.f32 %v2040, %v677
  %v2042 = vadd.f32 %v2041, %v680
  %v2043 = vadd.f32 %v2042, %v685
  %v2044 = vadd.f32 %v2043, %v688
  %v2045 = vadd.f32 %v2044, %v693
  %v2046 = vadd.f32 %v2045, %v696
  %v2047 = vadd.f32 %v2046, %v701
  %v2048 = vadd.f32 %v2047, %v704
  %v2049 = vadd.f32 %v2048, %v709
  %v2050 = vadd.f32 %v2049, %v712
  %v2051 = vadd.f32 %v2050, %v717
  %v2052 = vadd.f32 %v2051, %v720
  %v2053 = vadd.f32 %v2052, %v725
  %v2054 = vadd.f32 %v2053, %v728
  %v2055 = vadd.f32 %v2054, %v733
  %v2056 = vadd.f32 %v2055, %v736
  %v2057 = vadd.f32 %v2056, %v741
  %v2058 = vadd.f32 %v2057, %v744
  %v2059 = vrot.slane %v2058, 4
  %v2060 = vadd.f32 %v2058, %v2059
  %v2061 = vrot.slane %v2060, 2
  %v2062 = vadd.f32 %v2060, %v2061
  %v2063 = vrot.slane %v2062, 1
  %v2064 = vadd.f32 %v2062, %v2063
  %v2065 = vmul.f32 %v493, %v493
  %v2066 = vmul.f32 %v496, %v496
  %v2067 = vmul.f32 %v501, %v501
  %v2068 = vmul.f32 %v504, %v504
  %v2069 = vmul.f32 %v509, %v509
  %v2070 = vmul.f32 %v512, %v512
  %v2071 = vmul.f32 %v517, %v517
  %v2072 = vmul.f32 %v520, %v520
  %v2073 = vmul.f32 %v525, %v525
  %v2074 = vmul.f32 %v528, %v528
  %v2075 = vmul.f32 %v533, %v533
  %v2076 = vmul.f32 %v536, %v536
  %v2077 = vmul.f32 %v541, %v541
  %v2078 = vmul.f32 %v544, %v544
  %v2079 = vmul.f32 %v549, %v549
  %v2080 = vmul.f32 %v552, %v552
  %v2081 = vmul.f32 %v557, %v557
  %v2082 = vmul.f32 %v560, %v560
  %v2083 = vmul.f32 %v565, %v565
  %v2084 = vmul.f32 %v568, %v568
  %v2085 = vmul.f32 %v573, %v573
  %v2086 = vmul.f32 %v576, %v576
  %v2087 = vmul.f32 %v581, %v581
  %v2088 = vmul.f32 %v584, %v584
  %v2089 = vmul.f32 %v589, %v589
  %v2090 = vmul.f32 %v592, %v592
  %v2091 = vmul.f32 %v597, %v597
  %v2092 = vmul.f32 %v600, %v600
  %v2093 = vmul.f32 %v605, %v605
  %v2094 = vmul.f32 %v608, %v608
  %v2095 = vmul.f32 %v613, %v613
  %v2096 = vmul.f32 %v616, %v616
  %v2097 = vmul.f32 %v621, %v621
  %v2098 = vmul.f32 %v624, %v624
  %v2099 = vmul.f32 %v629, %v629
  %v2100 = vmul.f32 %v632, %v632
  %v2101 = vmul.f32 %v637, %v637
  %v2102 = vmul.f32 %v640, %v640
  %v2103 = vmul.f32 %v645, %v645
  %v2104 = vmul.f32 %v648, %v648
  %v2105 = vmul.f32 %v653, %v653
  %v2106 = vmul.f32 %v656, %v656
  %v2107 = vmul.f32 %v661, %v661
  %v2108 = vmul.f32 %v664, %v664
  %v2109 = vmul.f32 %v669, %v669
  %v2110 = vmul.f32 %v672, %v672
  %v2111 = vmul.f32 %v677, %v677
  %v2112 = vmul.f32 %v680, %v680
  %v2113 = vmul.f32 %v685, %v685
  %v2114 = vmul.f32 %v688, %v688
  %v2115 = vmul.f32 %v693, %v693
  %v2116 = vmul.f32 %v696, %v696
  %v2117 = vmul.f32 %v701, %v701
  %v2118 = vmul.f32 %v704, %v704
  %v2119 = vmul.f32 %v709, %v709
  %v2120 = vmul.f32 %v712, %v712
  %v2121 = vmul.f32 %v717, %v717
  %v2122 = vmul.f32 %v720, %v720
  %v2123 = vmul.f32 %v725, %v725
  %v2124 = vmul.f32 %v728, %v728
  %v2125 = vmul.f32 %v733, %v733
  %v2126 = vmul.f32 %v736, %v736
  %v2127 = vmul.f32 %v741, %v741
  %v2128 = vmul.f32 %v744, %v744
  %v2129 = vadd.f32 %v2065, %v2066
  %v2130 = vadd.f32 %v2129, %v2067
  %v2131 = vadd.f32 %v2130, %v2068
  %v2132 = vadd.f32 %v2131, %v2069
  %v2133 = vadd.f32 %v2132, %v2070
  %v2134 = vadd.f32 %v2133, %v2071
  %v2135 = vadd.f32 %v2134, %v2072
  %v2136 = vadd.f32 %v2135, %v2073
  %v2137 = vadd.f32 %v2136, %v2074
  %v2138 = vadd.f32 %v2137, %v2075
  %v2139 = vadd.f32 %v2138, %v2076
  %v2140 = vadd.f32 %v2139, %v2077
  %v2141 = vadd.f32 %v2140, %v2078
  %v2142 = vadd.f32 %v2141, %v2079
  %v2143 = vadd.f32 %v2142, %v2080
  %v2144 = vadd.f32 %v2143, %v2081
  %v2145 = vadd.f32 %v2144, %v2082
  %v2146 = vadd.f32 %v2145, %v2083
  %v2147 = vadd.f32 %v2146, %v2084
  %v2148 = vadd.f32 %v2147, %v2085
  %v2149 = vadd.f32 %v2148, %v2086
  %v2150 = vadd.f32 %v2149, %v2087
  %v2151 = vadd.f32 %v2150, %v2088
  %v2152 = vadd.f32 %v2151, %v2089
  %v2153 = vadd.f32 %v2152, %v2090
  %v2154 = vadd.f32 %v2153, %v2091
  %v2155 = vadd.f32 %v2154, %v2092
  %v2156 = vadd.f32 %v2155, %v2093
  %v2157 = vadd.f32 %v2156, %v2094
  %v2158 = vadd.f32 %v2157, %v2095
  %v2159 = vadd.f32 %v2158, %v2096
  %v2160 = vadd.f32 %v2159, %v2097
  %v2161 = vadd.f32 %v2160, %v2098
  %v2162 = vadd.f32 %v2161, %v2099
  %v2163 = vadd.f32 %v2162, %v2100
  %v2164 = vadd.f32 %v2163, %v2101
  %v2165 = vadd.f32 %v2164, %v2102
  %v2166 = vadd.f32 %v2165, %v2103
  %v2167 = vadd.f32 %v2166, %v2104
  %v2168 = vadd.f32 %v2167, %v2105
  %v2169 = vadd.f32 %v2168, %v2106
  %v2170 = vadd.f32 %v2169, %v2107
  %v2171 = vadd.f32 %v2170, %v2108
  %v2172 = vadd.f32 %v2171, %v2109
  %v2173 = vadd.f32 %v2172, %v2110
  %v2174 = vadd.f32 %v2173, %v2111
  %v2175 = vadd.f32 %v2174, %v2112
  %v2176 = vadd.f32 %v2175, %v2113
  %v2177 = vadd.f32 %v2176, %v2114
  %v2178 = vadd.f32 %v2177, %v2115
  %v2179 = vadd.f32 %v2178, %v2116
  %v2180 = vadd.f32 %v2179, %v2117
  %v2181 = vadd.f32 %v2180, %v2118
  %v2182 = vadd.f32 %v2181, %v2119
  %v2183 = vadd.f32 %v2182, %v2120
  %v2184 = vadd.f32 %v2183, %v2121
  %v2185 = vadd.f32 %v2184, %v2122
  %v2186 = vadd.f32 %v2185, %v2123
  %v2187 = vadd.f32 %v2186, %v2124
  %v2188 = vadd.f32 %v2187, %v2125
  %v2189 = vadd.f32 %v2188, %v2126
  %v2190 = vadd.f32 %v2189, %v2127
  %v2191 = vadd.f32 %v2190, %v2128
  %v2192 = vrot.slane %v2191, 4
  %v2193 = vadd.f32 %v2191, %v2192
  %v2194 = vrot.slane %v2193, 2
  %v2195 = vadd.f32 %v2193, %v2194
  %v2196 = vrot.slane %v2195, 1
  %v2197 = vadd.f32 %v2195, %v2196
  %vm2198 = vcmask 1040384
  %v2199 = vsel %vm2198, %v2064, %v2197
  %2200 = vst [vmem:[%s8] sm:$0x3] %v2199
  %v2201 = vadd.f32 %v1102, %v1105
  %v2202 = vadd.f32 %v2201, %v1110
  %v2203 = vadd.f32 %v2202, %v1113
  %v2204 = vadd.f32 %v2203, %v1118
  %v2205 = vadd.f32 %v2204, %v1121
  %v2206 = vadd.f32 %v2205, %v1126
  %v2207 = vadd.f32 %v2206, %v1129
  %v2208 = vadd.f32 %v2207, %v1134
  %v2209 = vadd.f32 %v2208, %v1137
  %v2210 = vadd.f32 %v2209, %v1142
  %v2211 = vadd.f32 %v2210, %v1145
  %v2212 = vadd.f32 %v2211, %v1150
  %v2213 = vadd.f32 %v2212, %v1153
  %v2214 = vadd.f32 %v2213, %v1158
  %v2215 = vadd.f32 %v2214, %v1161
  %v2216 = vadd.f32 %v2215, %v1166
  %v2217 = vadd.f32 %v2216, %v1169
  %v2218 = vadd.f32 %v2217, %v1174
  %v2219 = vadd.f32 %v2218, %v1177
  %v2220 = vadd.f32 %v2219, %v1182
  %v2221 = vadd.f32 %v2220, %v1185
  %v2222 = vadd.f32 %v2221, %v1190
  %v2223 = vadd.f32 %v2222, %v1193
  %v2224 = vadd.f32 %v2223, %v1198
  %v2225 = vadd.f32 %v2224, %v1201
  %v2226 = vadd.f32 %v2225, %v1206
  %v2227 = vadd.f32 %v2226, %v1209
  %v2228 = vadd.f32 %v2227, %v1214
  %v2229 = vadd.f32 %v2228, %v1217
  %v2230 = vadd.f32 %v2229, %v1222
  %v2231 = vadd.f32 %v2230, %v1225
  %v2232 = vadd.f32 %v2231, %v1230
  %v2233 = vadd.f32 %v2232, %v1233
  %v2234 = vadd.f32 %v2233, %v1238
  %v2235 = vadd.f32 %v2234, %v1241
  %v2236 = vadd.f32 %v2235, %v1246
  %v2237 = vadd.f32 %v2236, %v1249
  %v2238 = vadd.f32 %v2237, %v1254
  %v2239 = vadd.f32 %v2238, %v1257
  %v2240 = vadd.f32 %v2239, %v1262
  %v2241 = vadd.f32 %v2240, %v1265
  %v2242 = vadd.f32 %v2241, %v1270
  %v2243 = vadd.f32 %v2242, %v1273
  %v2244 = vadd.f32 %v2243, %v1278
  %v2245 = vadd.f32 %v2244, %v1281
  %v2246 = vadd.f32 %v2245, %v1286
  %v2247 = vadd.f32 %v2246, %v1289
  %v2248 = vadd.f32 %v2247, %v1294
  %v2249 = vadd.f32 %v2248, %v1297
  %v2250 = vadd.f32 %v2249, %v1302
  %v2251 = vadd.f32 %v2250, %v1305
  %v2252 = vadd.f32 %v2251, %v1310
  %v2253 = vadd.f32 %v2252, %v1313
  %v2254 = vadd.f32 %v2253, %v1318
  %v2255 = vadd.f32 %v2254, %v1321
  %v2256 = vadd.f32 %v2255, %v1326
  %v2257 = vadd.f32 %v2256, %v1329
  %v2258 = vadd.f32 %v2257, %v1334
  %v2259 = vadd.f32 %v2258, %v1337
  %v2260 = vadd.f32 %v2259, %v1342
  %v2261 = vadd.f32 %v2260, %v1345
  %v2262 = vadd.f32 %v2261, %v1350
  %v2263 = vadd.f32 %v2262, %v1353
  %v2264 = vrot.slane %v2263, 4
  %v2265 = vadd.f32 %v2263, %v2264
  %v2266 = vrot.slane %v2265, 2
  %v2267 = vadd.f32 %v2265, %v2266
  %v2268 = vrot.slane %v2267, 1
  %v2269 = vadd.f32 %v2267, %v2268
  %v2270 = vmul.f32 %v1102, %v1102
  %v2271 = vmul.f32 %v1105, %v1105
  %v2272 = vmul.f32 %v1110, %v1110
  %v2273 = vmul.f32 %v1113, %v1113
  %v2274 = vmul.f32 %v1118, %v1118
  %v2275 = vmul.f32 %v1121, %v1121
  %v2276 = vmul.f32 %v1126, %v1126
  %v2277 = vmul.f32 %v1129, %v1129
  %v2278 = vmul.f32 %v1134, %v1134
  %v2279 = vmul.f32 %v1137, %v1137
  %v2280 = vmul.f32 %v1142, %v1142
  %v2281 = vmul.f32 %v1145, %v1145
  %v2282 = vmul.f32 %v1150, %v1150
  %v2283 = vmul.f32 %v1153, %v1153
  %v2284 = vmul.f32 %v1158, %v1158
  %v2285 = vmul.f32 %v1161, %v1161
  %v2286 = vmul.f32 %v1166, %v1166
  %v2287 = vmul.f32 %v1169, %v1169
  %v2288 = vmul.f32 %v1174, %v1174
  %v2289 = vmul.f32 %v1177, %v1177
  %v2290 = vmul.f32 %v1182, %v1182
  %v2291 = vmul.f32 %v1185, %v1185
  %v2292 = vmul.f32 %v1190, %v1190
  %v2293 = vmul.f32 %v1193, %v1193
  %v2294 = vmul.f32 %v1198, %v1198
  %v2295 = vmul.f32 %v1201, %v1201
  %v2296 = vmul.f32 %v1206, %v1206
  %v2297 = vmul.f32 %v1209, %v1209
  %v2298 = vmul.f32 %v1214, %v1214
  %v2299 = vmul.f32 %v1217, %v1217
  %v2300 = vmul.f32 %v1222, %v1222
  %v2301 = vmul.f32 %v1225, %v1225
  %v2302 = vmul.f32 %v1230, %v1230
  %v2303 = vmul.f32 %v1233, %v1233
  %v2304 = vmul.f32 %v1238, %v1238
  %v2305 = vmul.f32 %v1241, %v1241
  %v2306 = vmul.f32 %v1246, %v1246
  %v2307 = vmul.f32 %v1249, %v1249
  %v2308 = vmul.f32 %v1254, %v1254
  %v2309 = vmul.f32 %v1257, %v1257
  %v2310 = vmul.f32 %v1262, %v1262
  %v2311 = vmul.f32 %v1265, %v1265
  %v2312 = vmul.f32 %v1270, %v1270
  %v2313 = vmul.f32 %v1273, %v1273
  %v2314 = vmul.f32 %v1278, %v1278
  %v2315 = vmul.f32 %v1281, %v1281
  %v2316 = vmul.f32 %v1286, %v1286
  %v2317 = vmul.f32 %v1289, %v1289
  %v2318 = vmul.f32 %v1294, %v1294
  %v2319 = vmul.f32 %v1297, %v1297
  %v2320 = vmul.f32 %v1302, %v1302
  %v2321 = vmul.f32 %v1305, %v1305
  %v2322 = vmul.f32 %v1310, %v1310
  %v2323 = vmul.f32 %v1313, %v1313
  %v2324 = vmul.f32 %v1318, %v1318
  %v2325 = vmul.f32 %v1321, %v1321
  %v2326 = vmul.f32 %v1326, %v1326
  %v2327 = vmul.f32 %v1329, %v1329
  %v2328 = vmul.f32 %v1334, %v1334
  %v2329 = vmul.f32 %v1337, %v1337
  %v2330 = vmul.f32 %v1342, %v1342
  %v2331 = vmul.f32 %v1345, %v1345
  %v2332 = vmul.f32 %v1350, %v1350
  %v2333 = vmul.f32 %v1353, %v1353
  %v2334 = vadd.f32 %v2270, %v2271
  %v2335 = vadd.f32 %v2334, %v2272
  %v2336 = vadd.f32 %v2335, %v2273
  %v2337 = vadd.f32 %v2336, %v2274
  %v2338 = vadd.f32 %v2337, %v2275
  %v2339 = vadd.f32 %v2338, %v2276
  %v2340 = vadd.f32 %v2339, %v2277
  %v2341 = vadd.f32 %v2340, %v2278
  %v2342 = vadd.f32 %v2341, %v2279
  %v2343 = vadd.f32 %v2342, %v2280
  %v2344 = vadd.f32 %v2343, %v2281
  %v2345 = vadd.f32 %v2344, %v2282
  %v2346 = vadd.f32 %v2345, %v2283
  %v2347 = vadd.f32 %v2346, %v2284
  %v2348 = vadd.f32 %v2347, %v2285
  %v2349 = vadd.f32 %v2348, %v2286
  %v2350 = vadd.f32 %v2349, %v2287
  %v2351 = vadd.f32 %v2350, %v2288
  %v2352 = vadd.f32 %v2351, %v2289
  %v2353 = vadd.f32 %v2352, %v2290
  %v2354 = vadd.f32 %v2353, %v2291
  %v2355 = vadd.f32 %v2354, %v2292
  %v2356 = vadd.f32 %v2355, %v2293
  %v2357 = vadd.f32 %v2356, %v2294
  %v2358 = vadd.f32 %v2357, %v2295
  %v2359 = vadd.f32 %v2358, %v2296
  %v2360 = vadd.f32 %v2359, %v2297
  %v2361 = vadd.f32 %v2360, %v2298
  %v2362 = vadd.f32 %v2361, %v2299
  %v2363 = vadd.f32 %v2362, %v2300
  %v2364 = vadd.f32 %v2363, %v2301
  %v2365 = vadd.f32 %v2364, %v2302
  %v2366 = vadd.f32 %v2365, %v2303
  %v2367 = vadd.f32 %v2366, %v2304
  %v2368 = vadd.f32 %v2367, %v2305
  %v2369 = vadd.f32 %v2368, %v2306
  %v2370 = vadd.f32 %v2369, %v2307
  %v2371 = vadd.f32 %v2370, %v2308
  %v2372 = vadd.f32 %v2371, %v2309
  %v2373 = vadd.f32 %v2372, %v2310
  %v2374 = vadd.f32 %v2373, %v2311
  %v2375 = vadd.f32 %v2374, %v2312
  %v2376 = vadd.f32 %v2375, %v2313
  %v2377 = vadd.f32 %v2376, %v2314
  %v2378 = vadd.f32 %v2377, %v2315
  %v2379 = vadd.f32 %v2378, %v2316
  %v2380 = vadd.f32 %v2379, %v2317
  %v2381 = vadd.f32 %v2380, %v2318
  %v2382 = vadd.f32 %v2381, %v2319
  %v2383 = vadd.f32 %v2382, %v2320
  %v2384 = vadd.f32 %v2383, %v2321
  %v2385 = vadd.f32 %v2384, %v2322
  %v2386 = vadd.f32 %v2385, %v2323
  %v2387 = vadd.f32 %v2386, %v2324
  %v2388 = vadd.f32 %v2387, %v2325
  %v2389 = vadd.f32 %v2388, %v2326
  %v2390 = vadd.f32 %v2389, %v2327
  %v2391 = vadd.f32 %v2390, %v2328
  %v2392 = vadd.f32 %v2391, %v2329
  %v2393 = vadd.f32 %v2392, %v2330
  %v2394 = vadd.f32 %v2393, %v2331
  %v2395 = vadd.f32 %v2394, %v2332
  %v2396 = vadd.f32 %v2395, %v2333
  %v2397 = vrot.slane %v2396, 4
  %v2398 = vadd.f32 %v2396, %v2397
  %v2399 = vrot.slane %v2398, 2
  %v2400 = vadd.f32 %v2398, %v2399
  %v2401 = vrot.slane %v2400, 1
  %v2402 = vadd.f32 %v2400, %v2401
  %v2403 = vsel %vm2198, %v2269, %v2402
  %2404 = vst [vmem:[%s9] sm:$0x3] %v2403
  // Predicated region
  $region26: #{bottleneck_forward.6} parent=0 // pred_check
    _
  $region27: #{bottleneck_forward.6} parent=0 // pred_check_branch
    %2406 = sbr.rel (0) target = $region29
  $region28: #{bottleneck_forward.6} parent=0 // pred_region
    _
  $region29: #{bottleneck_forward.6} parent=0 // pred_fallthru
    _
  // Predicated region
  $region30: #{bottleneck_forward.6} parent=0 // pred_check
    _
  $region31: #{bottleneck_forward.6} parent=0 // pred_check_branch
    %2408 = sbr.rel (0) target = $region33
  $region32: #{bottleneck_forward.6} parent=0 // pred_region
    _
  $region33: #{bottleneck_forward.6} parent=0 // pred_fallthru
    _
  // Predicated region
  $region34: #{bottleneck_forward.6} parent=0 // pred_check
    _
  $region35: #{bottleneck_forward.6} parent=0 // pred_check_branch
    %2410 = sbr.rel (0) target = $region37
  $region36: #{bottleneck_forward.6} parent=0 // pred_region
    _
  $region37: #{bottleneck_forward.6} parent=0 // pred_fallthru
    _
  // Predicated region
  $region38: #{bottleneck_forward.6} parent=0 // pred_check
    _
  $region39: #{bottleneck_forward.6} parent=0 // pred_check_branch
    %2412 = sbr.rel (0) target = $region41
  $region40: #{bottleneck_forward.6} parent=0 // pred_region
    _
  $region41: #{bottleneck_forward.6} parent=0 // pred_fallthru
    _
  // Predicated region
  $region42: #{bottleneck_forward.6} parent=0 // pred_check
    _
  $region43: #{bottleneck_forward.6} parent=0 // pred_check_branch
    %2414 = sbr.rel (0) target = $region45
  $region44: #{bottleneck_forward.6} parent=0 // pred_region
    _
  $region45: #{bottleneck_forward.6} parent=0 // pred_fallthru
    _
  // Predicated region
  $region46: #{bottleneck_forward.6} parent=0 // pred_check
    _
  $region47: #{bottleneck_forward.6} parent=0 // pred_check_branch
    %2416 = sbr.rel (0) target = $region49
  $region48: #{bottleneck_forward.6} parent=0 // pred_region
    _
  $region49: #{bottleneck_forward.6} parent=0 // pred_fallthru
    _
  // Predicated region
  $region50: #{bottleneck_forward.6} parent=0 // pred_check
    _
  $region51: #{bottleneck_forward.6} parent=0 // pred_check_branch
    %2418 = sbr.rel (0) target = $region53
  $region52: #{bottleneck_forward.6} parent=0 // pred_region
    _
  $region53: #{bottleneck_forward.6} parent=0 // pred_fallthru
    _
  // Predicated region
  $region54: #{bottleneck_forward.6} parent=0 // pred_check
    _
  $region55: #{bottleneck_forward.6} parent=0 // pred_check_branch
    %2420 = sbr.rel (0) target = $region57
  $region56: #{bottleneck_forward.6} parent=0 // pred_region
    _
  $region57: #{bottleneck_forward.6} parent=0 // pred_fallthru
    _

// kernel: bottleneck_forward.5
$region0: #{bottleneck_forward.5}
  #allocation0 [shape = 'u32[]', space=smem, size = 0x4, offset = 0x4, fixed_abs, tag = 'smem constant byte address 0x4 - core index']
  #allocation1 [shape = 'u32[144,128]{1,0:T(1,128)}', space=vmem, size = 0x12000, scoped, tag = 'internal scratch']
  #allocation2 [shape = 'bf16[18,24,128]{2,1,0:T(8,128)(2,1)}', space=vmem, size = 0x1b000, scoped, tag = 'scratch operand']
  #allocation3 [shape = 'bf16[256,1152]{1,0:T(16,128)(2,1)}', space=vmem, size = 0x90000, scoped, tag = 'scratch operand']
  %s0 = inlined_call_operand.vmem [shape: bf16[2,16,16,128], index: 0, kind: input, shape index: {}]
  %s1 = inlined_call_operand.vmem [shape: f32[1,128], index: 1, kind: input, shape index: {}]
  %s2 = inlined_call_operand.vmem [shape: f32[1,128], index: 2, kind: input, shape index: {}]
  %s3 = inlined_call_operand.vmem [shape: bf16[1152,128], index: 3, kind: input, shape index: {}]
  %s4 = inlined_call_operand.vmem [shape: bf16[2,16,16,128], index: 4, kind: output, shape index: {0}]
  %s5 = inlined_call_operand.vmem [shape: f32[2,2,128], index: 5, kind: output, shape index: {1}]
  %6 = xla_tuple %s4, %s5
  %s7 = sld [smem:[#allocation0]]
  $region57: #{bottleneck_forward.5} parent=0
    _
  %s9 = ssub.s32 1, %s7
  %s10 = scalar_select 0, %s9, %s7
  loop: start=0, step=1, limit=4
  $region2: #{bottleneck_forward.5} parent=0 // loop_pre_header
    _
  $region3: #{bottleneck_forward.5} parent=0 // loop_header
    %s12 = sphi 0, %s16
    %p13 = scmp.ge.s32.totalorder %s12, 4
    %s22 = sphi 0, %s24
    %s25 = sphi 0, %s22
    %s26 = sphi 0, %s25
    %s42 = sphi 0, %s26
    %s46 = sphi 0, %s46
    %s48 = sphi 0, %s46
    %s49 = sphi 0, %s48
    %s63 = sphi 0, %s49
    %s67 = sphi 0, %s67
    %s69 = sphi 0, %s67
    %s70 = sphi 0, %s69
    %s84 = sphi 0, %s70
    %s88 = sphi 0, %s88
    %s90 = sphi 0, %s88
    %s91 = sphi 0, %s90
    %s105 = sphi 0, %s91
    %s111 = sphi 0, %s113
    %s114 = sphi 0, %s111
    %s115 = sphi 0, %s114
    %s131 = sphi 0, %s115
    %s137 = sphi 0, %s139
    %s140 = sphi 0, %s137
    %s141 = sphi 0, %s140
    %s157 = sphi 0, %s141
  $region4: #{bottleneck_forward.5} parent=0 // loop_header_branch
    %15 = sbr.rel (%p13) target = $region8
  $region5: #{bottleneck_forward.5} parent=0 // loop_body
    %s17 = ssub.s32 %s12, 1
    %s18 = ssub.s32 %s12, 2
    %s19 = sadd.s32 %s12, 1
    %s20 = ssub.s32 %s12, %s19
    %p21 = scmp.eq.s32.totalorder %s20, 0
    %s23 = sadd.s32 %s22, 1
    %s24 = scalar_select %p21, %s22, %s23
    %p27 = pneg %p21
    %p28 = scmp.eq.s32.totalorder %s12, 1
    %p29 = por %p27, %p28
    %p30 = scmp.ne.s32.totalorder %s22, %s25
    %p31 = scmp.eq.s32.totalorder %s12, 0
    %p32 = por %p30, %p31
    %p33 = scmp.ne.s32.totalorder %s22, %s25
    %p34 = scmp.eq.s32.totalorder %s17, 1
    %p35 = por %p33, %p34
    %p36 = scmp.ne.s32.totalorder %s25, %s26
    %p37 = scmp.eq.s32.totalorder %s17, 0
    %p38 = por %p36, %p37
    %p39 = scmp.ne.s32.totalorder %s25, %s26
    %p40 = scmp.eq.s32.totalorder %s18, 1
    %p41 = por %p39, %p40
    %p43 = scmp.ne.s32.totalorder %s26, %s42
    %p44 = scmp.eq.s32.totalorder %s18, 0
    %p45 = por %p43, %p44
    %s47 = sadd.s32 %s46, 1
    %p50 = scmp.eq.s32.totalorder %s12, 1
    %p51 = scmp.ne.s32.totalorder %s46, %s48
    %p52 = scmp.eq.s32.totalorder %s12, 0
    %p53 = por %p51, %p52
    %p54 = scmp.ne.s32.totalorder %s46, %s48
    %p55 = scmp.eq.s32.totalorder %s17, 1
    %p56 = por %p54, %p55
    %p57 = scmp.ne.s32.totalorder %s48, %s49
    %p58 = scmp.eq.s32.totalorder %s17, 0
    %p59 = por %p57, %p58
    %p60 = scmp.ne.s32.totalorder %s48, %s49
    %p61 = scmp.eq.s32.totalorder %s18, 1
    %p62 = por %p60, %p61
    %p64 = scmp.ne.s32.totalorder %s49, %s63
    %p65 = scmp.eq.s32.totalorder %s18, 0
    %p66 = por %p64, %p65
    %s68 = sadd.s32 %s67, 1
    %p71 = scmp.eq.s32.totalorder %s12, 1
    %p72 = scmp.ne.s32.totalorder %s67, %s69
    %p73 = scmp.eq.s32.totalorder %s12, 0
    %p74 = por %p72, %p73
    %p75 = scmp.ne.s32.totalorder %s67, %s69
    %p76 = scmp.eq.s32.totalorder %s17, 1
    %p77 = por %p75, %p76
    %p78 = scmp.ne.s32.totalorder %s69, %s70
    %p79 = scmp.eq.s32.totalorder %s17, 0
    %p80 = por %p78, %p79
    %p81 = scmp.ne.s32.totalorder %s69, %s70
    %p82 = scmp.eq.s32.totalorder %s18, 1
    %p83 = por %p81, %p82
    %p85 = scmp.ne.s32.totalorder %s70, %s84
    %p86 = scmp.eq.s32.totalorder %s18, 0
    %p87 = por %p85, %p86
    %s89 = sadd.s32 %s88, 1
    %p92 = scmp.eq.s32.totalorder %s12, 1
    %p93 = scmp.ne.s32.totalorder %s88, %s90
    %p94 = scmp.eq.s32.totalorder %s12, 0
    %p95 = por %p93, %p94
    %p96 = scmp.ne.s32.totalorder %s88, %s90
    %p97 = scmp.eq.s32.totalorder %s17, 1
    %p98 = por %p96, %p97
    %p99 = scmp.ne.s32.totalorder %s90, %s91
    %p100 = scmp.eq.s32.totalorder %s17, 0
    %p101 = por %p99, %p100
    %p102 = scmp.ne.s32.totalorder %s90, %s91
    %p103 = scmp.eq.s32.totalorder %s18, 1
    %p104 = por %p102, %p103
    %p106 = scmp.ne.s32.totalorder %s91, %s105
    %p107 = scmp.eq.s32.totalorder %s18, 0
    %p108 = por %p106, %p107
    %s109 = ssub.s32 %s12, %s19
    %p110 = scmp.eq.s32.totalorder %s109, 0
    %s112 = sadd.s32 %s111, 1
    %s113 = scalar_select %p110, %s111, %s112
    %p116 = pneg %p110
    %p117 = scmp.eq.s32.totalorder %s12, 1
    %p118 = por %p116, %p117
    %p119 = scmp.ne.s32.totalorder %s111, %s114
    %p120 = scmp.eq.s32.totalorder %s12, 0
    %p121 = por %p119, %p120
    %p122 = scmp.ne.s32.totalorder %s111, %s114
    %p123 = scmp.eq.s32.totalorder %s17, 1
    %p124 = por %p122, %p123
    %p125 = scmp.ne.s32.totalorder %s114, %s115
    %p126 = scmp.eq.s32.totalorder %s17, 0
    %p127 = por %p125, %p126
    %p128 = scmp.ne.s32.totalorder %s114, %s115
    %p129 = scmp.eq.s32.totalorder %s18, 1
    %p130 = por %p128, %p129
    %p132 = scmp.ne.s32.totalorder %s115, %s131
    %p133 = scmp.eq.s32.totalorder %s18, 0
    %p134 = por %p132, %p133
    %s135 = ssub.s32 %s12, %s19
    %p136 = scmp.eq.s32.totalorder %s135, 0
    %s138 = sadd.s32 %s137, 1
    %s139 = scalar_select %p136, %s137, %s138
    %p142 = pneg %p136
    %p143 = scmp.eq.s32.totalorder %s12, 1
    %p144 = por %p142, %p143
    %p145 = scmp.ne.s32.totalorder %s137, %s140
    %p146 = scmp.eq.s32.totalorder %s12, 0
    %p147 = por %p145, %p146
    %p148 = scmp.ne.s32.totalorder %s137, %s140
    %p149 = scmp.eq.s32.totalorder %s17, 1
    %p150 = por %p148, %p149
    %p151 = scmp.ne.s32.totalorder %s140, %s141
    %p152 = scmp.eq.s32.totalorder %s17, 0
    %p153 = por %p151, %p152
    %p154 = scmp.ne.s32.totalorder %s140, %s141
    %p155 = scmp.eq.s32.totalorder %s18, 1
    %p156 = por %p154, %p155
    %p158 = scmp.ne.s32.totalorder %s141, %s157
    %p159 = scmp.eq.s32.totalorder %s18, 0
    %p160 = por %p158, %p159
    %p161 = scmp.le.s32.totalorder 1, %s12
    %p162 = scmp.lt.s32.totalorder %s12, 3
    %p163 = pnand %p161, %p162
    %p164 = pneg %p163
    // Predicated region
    $region9: #{bottleneck_forward.5} parent=5 // pred_check
      _
    $region10: #{bottleneck_forward.5} parent=5 // pred_check_branch
      %166 = sbr.rel (%p163) target = $region12
    $region11: #{bottleneck_forward.5} parent=5 // pred_region
      %s167 = ssub.s32 %s12, 1
      // Predicated region
      $region13: #{bottleneck_forward.5} parent=11 // pred_check
        %p168 = pneg %p59
      $region14: #{bottleneck_forward.5} parent=11 // pred_check_branch
        %170 = sbr.rel (%p168) target = $region16
      $region15: #{bottleneck_forward.5} parent=11 // pred_region
        _
      $region16: #{bottleneck_forward.5} parent=11 // pred_fallthru
        _
      // Predicated region
      $region17: #{bottleneck_forward.5} parent=11 // pred_check
        %p171 = pneg %p80
      $region18: #{bottleneck_forward.5} parent=11 // pred_check_branch
        %173 = sbr.rel (%p171) target = $region20
      $region19: #{bottleneck_forward.5} parent=11 // pred_region
        _
      $region20: #{bottleneck_forward.5} parent=11 // pred_fallthru
        _
      // Predicated region
      $region21: #{bottleneck_forward.5} parent=11 // pred_check
        %p174 = pneg %p101
      $region22: #{bottleneck_forward.5} parent=11 // pred_check_branch
        %176 = sbr.rel (%p174) target = $region24
      $region23: #{bottleneck_forward.5} parent=11 // pred_region
        _
      $region24: #{bottleneck_forward.5} parent=11 // pred_fallthru
        _
    $region12: #{bottleneck_forward.5} parent=5 // pred_fallthru
      _
    %p177 = scmp.lt.s32.totalorder %s12, 2
    // Predicated region
    $region25: #{bottleneck_forward.5} parent=5 // pred_check
      %p178 = pneg %p177
    $region26: #{bottleneck_forward.5} parent=5 // pred_check_branch
      %180 = sbr.rel (%p178) target = $region28
    $region27: #{bottleneck_forward.5} parent=5 // pred_region
      // Predicated region
      $region29: #{bottleneck_forward.5} parent=27 // pred_check
        %p181 = pneg %p32
      $region30: #{bottleneck_forward.5} parent=27 // pred_check_branch
        %183 = sbr.rel (%p181) target = $region32
      $region31: #{bottleneck_forward.5} parent=27 // pred_region
        %p184 = scmp.lt.s32.totalorder %s12, 1
        %s185 = scalar_select %p184, %s12, 1
        %s186 = smul.addr %s185, 32
        %s187 = smul.addr %s186, 4
        %s188 = scalar_lea.vmem %s0, %s187
      $region32: #{bottleneck_forward.5} parent=27 // pred_fallthru
        _
    $region28: #{bottleneck_forward.5} parent=5 // pred_fallthru
      _
    %p189 = scmp.le.s32.totalorder 1, %s12
    %p190 = scmp.lt.s32.totalorder %s12, 3
    %p191 = pnand %p189, %p190
    %p192 = pneg %p191
    // Predicated region
    $region33: #{bottleneck_forward.5} parent=5 // pred_check
      _
    $region34: #{bottleneck_forward.5} parent=5 // pred_check_branch
      %194 = sbr.rel (%p191) target = $region36
    $region35: #{bottleneck_forward.5} parent=5 // pred_region
      %s195 = ssub.s32 %s12, 1
      %p196 = scmp.lt.s32.totalorder %s17, 1
      %s197 = scalar_select %p196, %s17, 1
      %s198 = smul.addr %s197, 32
      %s199 = smul.addr %s198, 4
      %s200 = scalar_lea.vmem %s0, %s199
      %p201 = pneg %p38
      %p202 = pneg %p35
      %p203 = pneg %p59
      %p204 = pneg %p56
      %p205 = pneg %p80
      %p206 = pneg %p77
      %p207 = pneg %p101
      %p208 = pneg %p98
      %p209 = pneg %p127
      %p210 = pneg %p124
      %p211 = scmp.lt.s32.totalorder %s17, 1
      %s212 = scalar_select %p211, %s17, 1
      %s213 = smul.addr %s212, 32
      %s214 = smul.addr %s213, 4
      %s215 = scalar_lea.vmem %s4, %s214
      %p216 = pneg %p153
      %p217 = pneg %p150
      %p218 = scmp.lt.s32.totalorder %s17, 1
      %s219 = scalar_select %p218, %s17, 1
      %s220 = smul.addr %s219, 2
      %s221 = scalar_lea.vmem %s5, %s220
      %p222 = scmp.lt.s32.totalorder %s17, 1
      %s223 = scalar_select %p222, %s17, 1
      %s224 = smul.addr %s223, 32
      %s225 = smul.addr %s224, 4
      %s226 = scalar_lea.vmem %s0, %s225
      %p227 = scmp.lt.s32.totalorder %s17, 1
      %s228 = scalar_select %p227, %s17, 1
      %s229 = smul.addr %s228, 32
      %s230 = smul.addr %s229, 4
      %s231 = scalar_lea.vmem %s4, %s230
      %p232 = scmp.lt.s32.totalorder %s17, 1
      %s233 = scalar_select %p232, %s17, 1
      %s234 = smul.addr %s233, 2
      %s235 = scalar_lea.vmem %s5, %s234
      %237 = vst [vmem:[#allocation2] sm:$0xf] 0
      %238 = vst [vmem:[#allocation2 + $0x4] sm:$0xf] 0
      %239 = vst [vmem:[#allocation2 + $0x8] sm:$0xf] 0
      %s240 = scalar_lea.vmem [#allocation2], 204
      %241 = vst [vmem:[%s240] sm:$0xf] 0
      %242 = vst [vmem:[%s240 + $0x4] sm:$0xf] 0
      %243 = vst [vmem:[%s240 + $0x8] sm:$0xf] 0
      %s244 = scalar_lea.vmem [#allocation2], 12
      %vm245 = vcmask 1040384
      %vm246 = vsmask.f32 256
      %vm247 = vmand %vm245, %vm246
      %v248 = vld [vmem:[%s244] sm:$0x1]
      %v249 = vsel %vm247, 0, %v248
      %250 = vst [vmem:[%s244] sm:$0x1] %v249
      %v251 = vld [vmem:[%s244 + $0xc] sm:$0x1]
      %v252 = vsel %vm247, 0, %v251
      %253 = vst [vmem:[%s244 + $0xc] sm:$0x1] %v252
      %v254 = vld [vmem:[%s244 + $0x18] sm:$0x1]
      %v255 = vsel %vm247, 0, %v254
      %256 = vst [vmem:[%s244 + $0x18] sm:$0x1] %v255
      %v257 = vld [vmem:[%s244 + $0x24] sm:$0x1]
      %v258 = vsel %vm247, 0, %v257
      %259 = vst [vmem:[%s244 + $0x24] sm:$0x1] %v258
      %v260 = vld [vmem:[%s244 + $0x30] sm:$0x1]
      %v261 = vsel %vm247, 0, %v260
      %262 = vst [vmem:[%s244 + $0x30] sm:$0x1] %v261
      %v263 = vld [vmem:[%s244 + $0x3c] sm:$0x1]
      %v264 = vsel %vm247, 0, %v263
      %265 = vst [vmem:[%s244 + $0x3c] sm:$0x1] %v264
      %v266 = vld [vmem:[%s244 + $0x48] sm:$0x1]
      %v267 = vsel %vm247, 0, %v266
      %268 = vst [vmem:[%s244 + $0x48] sm:$0x1] %v267
      %v269 = vld [vmem:[%s244 + $0x54] sm:$0x1]
      %v270 = vsel %vm247, 0, %v269
      %271 = vst [vmem:[%s244 + $0x54] sm:$0x1] %v270
      %v272 = vld [vmem:[%s244 + $0x60] sm:$0x1]
      %v273 = vsel %vm247, 0, %v272
      %274 = vst [vmem:[%s244 + $0x60] sm:$0x1] %v273
      %v275 = vld [vmem:[%s244 + $0x6c] sm:$0x1]
      %v276 = vsel %vm247, 0, %v275
      %277 = vst [vmem:[%s244 + $0x6c] sm:$0x1] %v276
      %v278 = vld [vmem:[%s244 + $0x78] sm:$0x1]
      %v279 = vsel %vm247, 0, %v278
      %280 = vst [vmem:[%s244 + $0x78] sm:$0x1] %v279
      %v281 = vld [vmem:[%s244 + $0x84] sm:$0x1]
      %v282 = vsel %vm247, 0, %v281
      %283 = vst [vmem:[%s244 + $0x84] sm:$0x1] %v282
      %v284 = vld [vmem:[%s244 + $0x90] sm:$0x1]
      %v285 = vsel %vm247, 0, %v284
      %286 = vst [vmem:[%s244 + $0x90] sm:$0x1] %v285
      %v287 = vld [vmem:[%s244 + $0x9c] sm:$0x1]
      %v288 = vsel %vm247, 0, %v287
      %289 = vst [vmem:[%s244 + $0x9c] sm:$0x1] %v288
      %v290 = vld [vmem:[%s244 + $0xa8] sm:$0x1]
      %v291 = vsel %vm247, 0, %v290
      %292 = vst [vmem:[%s244 + $0xa8] sm:$0x1] %v291
      %v293 = vld [vmem:[%s244 + $0xb4] sm:$0x1]
      %v294 = vsel %vm247, 0, %v293
      %295 = vst [vmem:[%s244 + $0xb4] sm:$0x1] %v294
      %vm296 = vcmask 1043456
      %vm297 = vsmask.f32 7938
      %vm298 = vmand %vm296, %vm297
      %v299 = vld [vmem:[%s244 + $0x8] sm:$0xf]
      %v300 = vsel %vm298, 0, %v299
      %301 = vst [vmem:[%s244 + $0x8] sm:$0xf] %v300
      %v302 = vld [vmem:[%s244 + $0x14] sm:$0xf]
      %v303 = vsel %vm298, 0, %v302
      %304 = vst [vmem:[%s244 + $0x14] sm:$0xf] %v303
      %v305 = vld [vmem:[%s244 + $0x20] sm:$0xf]
      %v306 = vsel %vm298, 0, %v305
      %307 = vst [vmem:[%s244 + $0x20] sm:$0xf] %v306
      %v308 = vld [vmem:[%s244 + $0x2c] sm:$0xf]
      %v309 = vsel %vm298, 0, %v308
      %310 = vst [vmem:[%s244 + $0x2c] sm:$0xf] %v309
      %v311 = vld [vmem:[%s244 + $0x38] sm:$0xf]
      %v312 = vsel %vm298, 0, %v311
      %313 = vst [vmem:[%s244 + $0x38] sm:$0xf] %v312
      %v314 = vld [vmem:[%s244 + $0x44] sm:$0xf]
      %v315 = vsel %vm298, 0, %v314
      %316 = vst [vmem:[%s244 + $0x44] sm:$0xf] %v315
      %v317 = vld [vmem:[%s244 + $0x50] sm:$0xf]
      %v318 = vsel %vm298, 0, %v317
      %319 = vst [vmem:[%s244 + $0x50] sm:$0xf] %v318
      %v320 = vld [vmem:[%s244 + $0x5c] sm:$0xf]
      %v321 = vsel %vm298, 0, %v320
      %322 = vst [vmem:[%s244 + $0x5c] sm:$0xf] %v321
      %v323 = vld [vmem:[%s244 + $0x68] sm:$0xf]
      %v324 = vsel %vm298, 0, %v323
      %325 = vst [vmem:[%s244 + $0x68] sm:$0xf] %v324
      %v326 = vld [vmem:[%s244 + $0x74] sm:$0xf]
      %v327 = vsel %vm298, 0, %v326
      %328 = vst [vmem:[%s244 + $0x74] sm:$0xf] %v327
      %v329 = vld [vmem:[%s244 + $0x80] sm:$0xf]
      %v330 = vsel %vm298, 0, %v329
      %331 = vst [vmem:[%s244 + $0x80] sm:$0xf] %v330
      %v332 = vld [vmem:[%s244 + $0x8c] sm:$0xf]
      %v333 = vsel %vm298, 0, %v332
      %334 = vst [vmem:[%s244 + $0x8c] sm:$0xf] %v333
      %v335 = vld [vmem:[%s244 + $0x98] sm:$0xf]
      %v336 = vsel %vm298, 0, %v335
      %337 = vst [vmem:[%s244 + $0x98] sm:$0xf] %v336
      %v338 = vld [vmem:[%s244 + $0xa4] sm:$0xf]
      %v339 = vsel %vm298, 0, %v338
      %340 = vst [vmem:[%s244 + $0xa4] sm:$0xf] %v339
      %v341 = vld [vmem:[%s244 + $0xb0] sm:$0xf]
      %v342 = vsel %vm298, 0, %v341
      %343 = vst [vmem:[%s244 + $0xb0] sm:$0xf] %v342
      %v344 = vld [vmem:[%s244 + $0xbc] sm:$0xf]
      %v345 = vsel %vm298, 0, %v344
      %346 = vst [vmem:[%s244 + $0xbc] sm:$0xf] %v345
      %v347 = vld [vmem:[%s226] sm:$0xf]
      %v348 = vld [vmem:[%s226 + $0x4] sm:$0xf]
      %v349 = vld [vmem:[%s226 + $0x8] sm:$0xf]
      %v350 = vld [vmem:[%s226 + $0xc] sm:$0xf]
      %v351 = vld [vmem:[%s226 + $0x10] sm:$0xf]
      %v352 = vld [vmem:[%s226 + $0x14] sm:$0xf]
      %v353 = vld [vmem:[%s226 + $0x18] sm:$0xf]
      %v354 = vld [vmem:[%s226 + $0x1c] sm:$0xf]
      %v355 = vld [vmem:[%s226 + $0x20] sm:$0xf]
      %v356 = vld [vmem:[%s226 + $0x24] sm:$0xf]
      %v357 = vld [vmem:[%s226 + $0x28] sm:$0xf]
      %v358 = vld [vmem:[%s226 + $0x2c] sm:$0xf]
      %v359 = vld [vmem:[%s226 + $0x30] sm:$0xf]
      %v360 = vld [vmem:[%s226 + $0x34] sm:$0xf]
      %v361 = vld [vmem:[%s226 + $0x38] sm:$0xf]
      %v362 = vld [vmem:[%s226 + $0x3c] sm:$0xf]
      %v363 = vld [vmem:[%s226 + $0x40] sm:$0xf]
      %v364 = vld [vmem:[%s226 + $0x44] sm:$0xf]
      %v365 = vld [vmem:[%s226 + $0x48] sm:$0xf]
      %v366 = vld [vmem:[%s226 + $0x4c] sm:$0xf]
      %v367 = vld [vmem:[%s226 + $0x50] sm:$0xf]
      %v368 = vld [vmem:[%s226 + $0x54] sm:$0xf]
      %v369 = vld [vmem:[%s226 + $0x58] sm:$0xf]
      %v370 = vld [vmem:[%s226 + $0x5c] sm:$0xf]
      %v371 = vld [vmem:[%s226 + $0x60] sm:$0xf]
      %v372 = vld [vmem:[%s226 + $0x64] sm:$0xf]
      %v373 = vld [vmem:[%s226 + $0x68] sm:$0xf]
      %v374 = vld [vmem:[%s226 + $0x6c] sm:$0xf]
      %v375 = vld [vmem:[%s226 + $0x70] sm:$0xf]
      %v376 = vld [vmem:[%s226 + $0x74] sm:$0xf]
      %v377 = vld [vmem:[%s226 + $0x78] sm:$0xf]
      %v378 = vld [vmem:[%s226 + $0x7c] sm:$0xf]
      %v379 = vunpack.c.l.bf16 %v347
      %v380 = vunpack.c.l.bf16 %v348
      %v381 = vunpack.c.l.bf16 %v349
      %v382 = vunpack.c.l.bf16 %v350
      %v383 = vunpack.c.l.bf16 %v351
      %v384 = vunpack.c.l.bf16 %v352
      %v385 = vunpack.c.l.bf16 %v353
      %v386 = vunpack.c.l.bf16 %v354
      %v387 = vunpack.c.l.bf16 %v355
      %v388 = vunpack.c.l.bf16 %v356
      %v389 = vunpack.c.l.bf16 %v357
      %v390 = vunpack.c.l.bf16 %v358
      %v391 = vunpack.c.l.bf16 %v359
      %v392 = vunpack.c.l.bf16 %v360
      %v393 = vunpack.c.l.bf16 %v361
      %v394 = vunpack.c.l.bf16 %v362
      %v395 = vunpack.c.l.bf16 %v363
      %v396 = vunpack.c.l.bf16 %v364
      %v397 = vunpack.c.l.bf16 %v365
      %v398 = vunpack.c.l.bf16 %v366
      %v399 = vunpack.c.l.bf16 %v367
      %v400 = vunpack.c.l.bf16 %v368
      %v401 = vunpack.c.l.bf16 %v369
      %v402 = vunpack.c.l.bf16 %v370
      %v403 = vunpack.c.l.bf16 %v371
      %v404 = vunpack.c.l.bf16 %v372
      %v405 = vunpack.c.l.bf16 %v373
      %v406 = vunpack.c.l.bf16 %v374
      %v407 = vunpack.c.l.bf16 %v375
      %v408 = vunpack.c.l.bf16 %v376
      %v409 = vunpack.c.l.bf16 %v377
      %v410 = vunpack.c.l.bf16 %v378
      %v411 = vld [vmem:[%s1] sm:$0x1]
      %v413 = vlaneseq
      %v414 = vshrl.u32 %v413, 7
      %v415 = vsub.s32 0, %v414
      %v416 = vrot.slane %v411, %v415
      %v418 = vmul.f32 %v379, %v416
      %v419 = vmul.f32 %v380, %v416
      %v420 = vmul.f32 %v381, %v416
      %v421 = vmul.f32 %v382, %v416
      %v422 = vmul.f32 %v383, %v416
      %v423 = vmul.f32 %v384, %v416
      %v424 = vmul.f32 %v385, %v416
      %v425 = vmul.f32 %v386, %v416
      %v426 = vmul.f32 %v387, %v416
      %v427 = vmul.f32 %v388, %v416
      %v428 = vmul.f32 %v389, %v416
      %v429 = vmul.f32 %v390, %v416
      %v430 = vmul.f32 %v391, %v416
      %v431 = vmul.f32 %v392, %v416
      %v432 = vmul.f32 %v393, %v416
      %v433 = vmul.f32 %v394, %v416
      %v434 = vmul.f32 %v395, %v416
      %v435 = vmul.f32 %v396, %v416
      %v436 = vmul.f32 %v397, %v416
      %v437 = vmul.f32 %v398, %v416
      %v438 = vmul.f32 %v399, %v416
      %v439 = vmul.f32 %v400, %v416
      %v440 = vmul.f32 %v401, %v416
      %v441 = vmul.f32 %v402, %v416
      %v442 = vmul.f32 %v403, %v416
      %v443 = vmul.f32 %v404, %v416
      %v444 = vmul.f32 %v405, %v416
      %v445 = vmul.f32 %v406, %v416
      %v446 = vmul.f32 %v407, %v416
      %v447 = vmul.f32 %v408, %v416
      %v448 = vmul.f32 %v409, %v416
      %v449 = vmul.f32 %v410, %v416
      %v450 = vld [vmem:[%s2] sm:$0x1]
      %v452 = vlaneseq
      %v453 = vshrl.u32 %v452, 7
      %v454 = vsub.s32 0, %v453
      %v455 = vrot.slane %v450, %v454
      %v457 = vadd.f32 %v418, %v455
      %v458 = vadd.f32 %v419, %v455
      %v459 = vadd.f32 %v420, %v455
      %v460 = vadd.f32 %v421, %v455
      %v461 = vadd.f32 %v422, %v455
      %v462 = vadd.f32 %v423, %v455
      %v463 = vadd.f32 %v424, %v455
      %v464 = vadd.f32 %v425, %v455
      %v465 = vadd.f32 %v426, %v455
      %v466 = vadd.f32 %v427, %v455
      %v467 = vadd.f32 %v428, %v455
      %v468 = vadd.f32 %v429, %v455
      %v469 = vadd.f32 %v430, %v455
      %v470 = vadd.f32 %v431, %v455
      %v471 = vadd.f32 %v432, %v455
      %v472 = vadd.f32 %v433, %v455
      %v473 = vadd.f32 %v434, %v455
      %v474 = vadd.f32 %v435, %v455
      %v475 = vadd.f32 %v436, %v455
      %v476 = vadd.f32 %v437, %v455
      %v477 = vadd.f32 %v438, %v455
      %v478 = vadd.f32 %v439, %v455
      %v479 = vadd.f32 %v440, %v455
      %v480 = vadd.f32 %v441, %v455
      %v481 = vadd.f32 %v442, %v455
      %v482 = vadd.f32 %v443, %v455
      %v483 = vadd.f32 %v444, %v455
      %v484 = vadd.f32 %v445, %v455
      %v485 = vadd.f32 %v446, %v455
      %v486 = vadd.f32 %v447, %v455
      %v487 = vadd.f32 %v448, %v455
      %v488 = vadd.f32 %v449, %v455
      %v489 = vmax.f32 %v457, 0.0
      %v490 = vmax.f32 %v458, 0.0
      %v491 = vmax.f32 %v459, 0.0
      %v492 = vmax.f32 %v460, 0.0
      %v493 = vmax.f32 %v461, 0.0
      %v494 = vmax.f32 %v462, 0.0
      %v495 = vmax.f32 %v463, 0.0
      %v496 = vmax.f32 %v464, 0.0
      %v497 = vmax.f32 %v465, 0.0
      %v498 = vmax.f32 %v466, 0.0
      %v499 = vmax.f32 %v467, 0.0
      %v500 = vmax.f32 %v468, 0.0
      %v501 = vmax.f32 %v469, 0.0
      %v502 = vmax.f32 %v470, 0.0
      %v503 = vmax.f32 %v471, 0.0
      %v504 = vmax.f32 %v472, 0.0
      %v505 = vmax.f32 %v473, 0.0
      %v506 = vmax.f32 %v474, 0.0
      %v507 = vmax.f32 %v475, 0.0
      %v508 = vmax.f32 %v476, 0.0
      %v509 = vmax.f32 %v477, 0.0
      %v510 = vmax.f32 %v478, 0.0
      %v511 = vmax.f32 %v479, 0.0
      %v512 = vmax.f32 %v480, 0.0
      %v513 = vmax.f32 %v481, 0.0
      %v514 = vmax.f32 %v482, 0.0
      %v515 = vmax.f32 %v483, 0.0
      %v516 = vmax.f32 %v484, 0.0
      %v517 = vmax.f32 %v485, 0.0
      %v518 = vmax.f32 %v486, 0.0
      %v519 = vmax.f32 %v487, 0.0
      %v520 = vmax.f32 %v488, 0.0
      %v521 = vpack.c.bf16 %v490, %v489
      %v522 = vpack.c.bf16 %v492, %v491
      %v523 = vpack.c.bf16 %v494, %v493
      %v524 = vpack.c.bf16 %v496, %v495
      %v525 = vpack.c.bf16 %v498, %v497
      %v526 = vpack.c.bf16 %v500, %v499
      %v527 = vpack.c.bf16 %v502, %v501
      %v528 = vpack.c.bf16 %v504, %v503
      %v529 = vpack.c.bf16 %v506, %v505
      %v530 = vpack.c.bf16 %v508, %v507
      %v531 = vpack.c.bf16 %v510, %v509
      %v532 = vpack.c.bf16 %v512, %v511
      %v533 = vpack.c.bf16 %v514, %v513
      %v534 = vpack.c.bf16 %v516, %v515
      %v535 = vpack.c.bf16 %v518, %v517
      %v536 = vpack.c.bf16 %v520, %v519
      %v553 = vunpack.c.l.b16 %v521
      %v554 = vunpack.c.h.b16 %v521
      %v555 = vunpack.c.l.b16 %v522
      %v556 = vunpack.c.h.b16 %v522
      %v557 = vunpack.c.l.b16 %v523
      %v558 = vunpack.c.h.b16 %v523
      %v559 = vunpack.c.l.b16 %v524
      %v560 = vunpack.c.h.b16 %v524
      %v561 = vunpack.c.l.b16 %v525
      %v562 = vunpack.c.h.b16 %v525
      %v563 = vunpack.c.l.b16 %v526
      %v564 = vunpack.c.h.b16 %v526
      %v565 = vunpack.c.l.b16 %v527
      %v566 = vunpack.c.h.b16 %v527
      %v567 = vunpack.c.l.b16 %v528
      %v568 = vunpack.c.h.b16 %v528
      %v569 = vunpack.c.l.b16 %v529
      %v570 = vunpack.c.h.b16 %v529
      %v571 = vunpack.c.l.b16 %v530
      %v572 = vunpack.c.h.b16 %v530
      %v573 = vunpack.c.l.b16 %v531
      %v574 = vunpack.c.h.b16 %v531
      %v575 = vunpack.c.l.b16 %v532
      %v576 = vunpack.c.h.b16 %v532
      %v577 = vunpack.c.l.b16 %v533
      %v578 = vunpack.c.h.b16 %v533
      %v579 = vunpack.c.l.b16 %v534
      %v580 = vunpack.c.h.b16 %v534
      %v581 = vunpack.c.l.b16 %v535
      %v582 = vunpack.c.h.b16 %v535
      %v583 = vunpack.c.l.b16 %v536
      %v584 = vunpack.c.h.b16 %v536
      %v585 = vpack.c.b16 %v553, %v553
      %v586 = vpack.c.b16 %v554, %v554
      %v587 = vpack.c.b16 %v555, %v555
      %v588 = vpack.c.b16 %v556, %v556
      %v589 = vpack.c.b16 %v557, %v557
      %v590 = vpack.c.b16 %v558, %v558
      %v591 = vpack.c.b16 %v559, %v559
      %v592 = vpack.c.b16 %v560, %v560
      %v593 = vpack.c.b16 %v561, %v561
      %v594 = vpack.c.b16 %v562, %v562
      %v595 = vpack.c.b16 %v563, %v563
      %v596 = vpack.c.b16 %v564, %v564
      %v597 = vpack.c.b16 %v565, %v565
      %v598 = vpack.c.b16 %v566, %v566
      %v599 = vpack.c.b16 %v567, %v567
      %v600 = vpack.c.b16 %v568, %v568
      %v601 = vpack.c.b16 %v569, %v569
      %v602 = vpack.c.b16 %v570, %v570
      %v603 = vpack.c.b16 %v571, %v571
      %v604 = vpack.c.b16 %v572, %v572
      %v605 = vpack.c.b16 %v573, %v573
      %v606 = vpack.c.b16 %v574, %v574
      %v607 = vpack.c.b16 %v575, %v575
      %v608 = vpack.c.b16 %v576, %v576
      %v609 = vpack.c.b16 %v577, %v577
      %v610 = vpack.c.b16 %v578, %v578
      %v611 = vpack.c.b16 %v579, %v579
      %v612 = vpack.c.b16 %v580, %v580
      %v613 = vpack.c.b16 %v581, %v581
      %v614 = vpack.c.b16 %v582, %v582
      %v615 = vpack.c.b16 %v583, %v583
      %v616 = vpack.c.b16 %v584, %v584
      %vm617 = vsmask.f32 4368
      %vm618 = vmor %vm246, %vm617
      %v620 = vshrl.u32 %v585, 16
      %v622 = vrot.slane %v620, 7
      %v623 = vshll.u32 %v585, 16
      %v625 = vor.u32 %v622, %v623
      %v626 = vrot.slane %v622, 4
      %v628 = vshrl.u32 %v586, 16
      %v630 = vrot.slane %v628, 7
      %v631 = vshll.u32 %v586, 16
      %v633 = vor.u32 %v630, %v631
      %v634 = vsel %vm618, %v626, %v633
      %v635 = vrot.slane %v630, 4
      %v637 = vshrl.u32 %v587, 16
      %v639 = vrot.slane %v637, 7
      %v640 = vshll.u32 %v587, 16
      %v642 = vor.u32 %v639, %v640
      %v643 = vrot.slane %v639, 4
      %v645 = vshrl.u32 %v588, 16
      %v647 = vrot.slane %v645, 7
      %v648 = vshll.u32 %v588, 16
      %v650 = vor.u32 %v647, %v648
      %v651 = vsel %vm618, %v643, %v650
      %v652 = vrot.slane %v647, 4
      %v654 = vshrl.u32 %v589, 16
      %v656 = vrot.slane %v654, 7
      %v657 = vshll.u32 %v589, 16
      %v659 = vor.u32 %v656, %v657
      %v660 = vrot.slane %v656, 4
      %v662 = vshrl.u32 %v590, 16
      %v664 = vrot.slane %v662, 7
      %v665 = vshll.u32 %v590, 16
      %v667 = vor.u32 %v664, %v665
      %v668 = vsel %vm618, %v660, %v667
      %v669 = vrot.slane %v664, 4
      %v671 = vshrl.u32 %v591, 16
      %v673 = vrot.slane %v671, 7
      %v674 = vshll.u32 %v591, 16
      %v676 = vor.u32 %v673, %v674
      %v677 = vrot.slane %v673, 4
      %v679 = vshrl.u32 %v592, 16
      %v681 = vrot.slane %v679, 7
      %v682 = vshll.u32 %v592, 16
      %v684 = vor.u32 %v681, %v682
      %v685 = vsel %vm618, %v677, %v684
      %v686 = vrot.slane %v681, 4
      %v688 = vshrl.u32 %v593, 16
      %v690 = vrot.slane %v688, 7
      %v691 = vshll.u32 %v593, 16
      %v693 = vor.u32 %v690, %v691
      %v694 = vrot.slane %v690, 4
      %v696 = vshrl.u32 %v594, 16
      %v698 = vrot.slane %v696, 7
      %v699 = vshll.u32 %v594, 16
      %v701 = vor.u32 %v698, %v699
      %v702 = vsel %vm618, %v694, %v701
      %v703 = vrot.slane %v698, 4
      %v705 = vshrl.u32 %v595, 16
      %v707 = vrot.slane %v705, 7
      %v708 = vshll.u32 %v595, 16
      %v710 = vor.u32 %v707, %v708
      %v711 = vrot.slane %v707, 4
      %v713 = vshrl.u32 %v596, 16
      %v715 = vrot.slane %v713, 7
      %v716 = vshll.u32 %v596, 16
      %v718 = vor.u32 %v715, %v716
      %v719 = vsel %vm618, %v711, %v718
      %v720 = vrot.slane %v715, 4
      %v722 = vshrl.u32 %v597, 16
      %v724 = vrot.slane %v722, 7
      %v725 = vshll.u32 %v597, 16
      %v727 = vor.u32 %v724, %v725
      %v728 = vrot.slane %v724, 4
      %v730 = vshrl.u32 %v598, 16
      %v732 = vrot.slane %v730, 7
      %v733 = vshll.u32 %v598, 16
      %v735 = vor.u32 %v732, %v733
      %v736 = vsel %vm618, %v728, %v735
      %v737 = vrot.slane %v732, 4
      %v739 = vshrl.u32 %v599, 16
      %v741 = vrot.slane %v739, 7
      %v742 = vshll.u32 %v599, 16
      %v744 = vor.u32 %v741, %v742
      %v745 = vrot.slane %v741, 4
      %v747 = vshrl.u32 %v600, 16
      %v749 = vrot.slane %v747, 7
      %v750 = vshll.u32 %v600, 16
      %v752 = vor.u32 %v749, %v750
      %v753 = vsel %vm618, %v745, %v752
      %v754 = vrot.slane %v749, 4
      %v756 = vshrl.u32 %v601, 16
      %v758 = vrot.slane %v756, 7
      %v759 = vshll.u32 %v601, 16
      %v761 = vor.u32 %v758, %v759
      %v762 = vrot.slane %v758, 4
      %v764 = vshrl.u32 %v602, 16
      %v766 = vrot.slane %v764, 7
      %v767 = vshll.u32 %v602, 16
      %v769 = vor.u32 %v766, %v767
      %v770 = vsel %vm618, %v762, %v769
      %v771 = vrot.slane %v766, 4
      %v773 = vshrl.u32 %v603, 16
      %v775 = vrot.slane %v773, 7
      %v776 = vshll.u32 %v603, 16
      %v778 = vor.u32 %v775, %v776
      %v779 = vrot.slane %v775, 4
      %v781 = vshrl.u32 %v604, 16
      %v783 = vrot.slane %v781, 7
      %v784 = vshll.u32 %v604, 16
      %v786 = vor.u32 %v783, %v784
      %v787 = vsel %vm618, %v779, %v786
      %v788 = vrot.slane %v783, 4
      %v790 = vshrl.u32 %v605, 16
      %v792 = vrot.slane %v790, 7
      %v793 = vshll.u32 %v605, 16
      %v795 = vor.u32 %v792, %v793
      %v796 = vrot.slane %v792, 4
      %v798 = vshrl.u32 %v606, 16
      %v800 = vrot.slane %v798, 7
      %v801 = vshll.u32 %v606, 16
      %v803 = vor.u32 %v800, %v801
      %v804 = vsel %vm618, %v796, %v803
      %v805 = vrot.slane %v800, 4
      %v807 = vshrl.u32 %v607, 16
      %v809 = vrot.slane %v807, 7
      %v810 = vshll.u32 %v607, 16
      %v812 = vor.u32 %v809, %v810
      %v813 = vrot.slane %v809, 4
      %v815 = vshrl.u32 %v608, 16
      %v817 = vrot.slane %v815, 7
      %v818 = vshll.u32 %v608, 16
      %v820 = vor.u32 %v817, %v818
      %v821 = vsel %vm618, %v813, %v820
      %v822 = vrot.slane %v817, 4
      %v824 = vshrl.u32 %v609, 16
      %v826 = vrot.slane %v824, 7
      %v827 = vshll.u32 %v609, 16
      %v829 = vor.u32 %v826, %v827
      %v830 = vrot.slane %v826, 4
      %v832 = vshrl.u32 %v610, 16
      %v834 = vrot.slane %v832, 7
      %v835 = vshll.u32 %v610, 16
      %v837 = vor.u32 %v834, %v835
      %v838 = vsel %vm618, %v830, %v837
      %v839 = vrot.slane %v834, 4
      %v841 = vshrl.u32 %v611, 16
      %v843 = vrot.slane %v841, 7
      %v844 = vshll.u32 %v611, 16
      %v846 = vor.u32 %v843, %v844
      %v847 = vrot.slane %v843, 4
      %v849 = vshrl.u32 %v612, 16
      %v851 = vrot.slane %v849, 7
      %v852 = vshll.u32 %v612, 16
      %v854 = vor.u32 %v851, %v852
      %v855 = vsel %vm618, %v847, %v854
      %v856 = vrot.slane %v851, 4
      %v858 = vshrl.u32 %v613, 16
      %v860 = vrot.slane %v858, 7
      %v861 = vshll.u32 %v613, 16
      %v863 = vor.u32 %v860, %v861
      %v864 = vrot.slane %v860, 4
      %v866 = vshrl.u32 %v614, 16
      %v868 = vrot.slane %v866, 7
      %v869 = vshll.u32 %v614, 16
      %v871 = vor.u32 %v868, %v869
      %v872 = vsel %vm618, %v864, %v871
      %v873 = vrot.slane %v868, 4
      %v875 = vshrl.u32 %v615, 16
      %v877 = vrot.slane %v875, 7
      %v878 = vshll.u32 %v615, 16
      %v880 = vor.u32 %v877, %v878
      %v881 = vrot.slane %v877, 4
      %v883 = vshrl.u32 %v616, 16
      %v885 = vrot.slane %v883, 7
      %v886 = vshll.u32 %v616, 16
      %v888 = vor.u32 %v885, %v886
      %v889 = vsel %vm618, %v881, %v888
      %v890 = vrot.slane %v885, 4
      %v939 = vld [vmem:[%s244] sm:$0xf]
      %v940 = vsel %vm298, %v625, %v939
      %941 = vst [vmem:[%s244] sm:$0xf] %v940
      %942 = vst [vmem:[%s244 + $0x4] sm:$0xf] %v634
      %v943 = vld [vmem:[%s244 + $0x8] sm:$0x1]
      %v944 = vsel %vm247, %v635, %v943
      %945 = vst [vmem:[%s244 + $0x8] sm:$0x1] %v944
      %v946 = vld [vmem:[%s244 + $0xc] sm:$0xf]
      %v947 = vsel %vm298, %v642, %v946
      %948 = vst [vmem:[%s244 + $0xc] sm:$0xf] %v947
      %949 = vst [vmem:[%s244 + $0x10] sm:$0xf] %v651
      %v950 = vld [vmem:[%s244 + $0x14] sm:$0x1]
      %v951 = vsel %vm247, %v652, %v950
      %952 = vst [vmem:[%s244 + $0x14] sm:$0x1] %v951
      %v953 = vld [vmem:[%s244 + $0x18] sm:$0xf]
      %v954 = vsel %vm298, %v659, %v953
      %955 = vst [vmem:[%s244 + $0x18] sm:$0xf] %v954
      %956 = vst [vmem:[%s244 + $0x1c] sm:$0xf] %v668
      %v957 = vld [vmem:[%s244 + $0x20] sm:$0x1]
      %v958 = vsel %vm247, %v669, %v957
      %959 = vst [vmem:[%s244 + $0x20] sm:$0x1] %v958
      %v960 = vld [vmem:[%s244 + $0x24] sm:$0xf]
      %v961 = vsel %vm298, %v676, %v960
      %962 = vst [vmem:[%s244 + $0x24] sm:$0xf] %v961
      %963 = vst [vmem:[%s244 + $0x28] sm:$0xf] %v685
      %v964 = vld [vmem:[%s244 + $0x2c] sm:$0x1]
      %v965 = vsel %vm247, %v686, %v964
      %966 = vst [vmem:[%s244 + $0x2c] sm:$0x1] %v965
      %v967 = vld [vmem:[%s244 + $0x30] sm:$0xf]
      %v968 = vsel %vm298, %v693, %v967
      %969 = vst [vmem:[%s244 + $0x30] sm:$0xf] %v968
      %970 = vst [vmem:[%s244 + $0x34] sm:$0xf] %v702
      %v971 = vld [vmem:[%s244 + $0x38] sm:$0x1]
      %v972 = vsel %vm247, %v703, %v971
      %973 = vst [vmem:[%s244 + $0x38] sm:$0x1] %v972
      %v974 = vld [vmem:[%s244 + $0x3c] sm:$0xf]
      %v975 = vsel %vm298, %v710, %v974
      %976 = vst [vmem:[%s244 + $0x3c] sm:$0xf] %v975
      %977 = vst [vmem:[%s244 + $0x40] sm:$0xf] %v719
      %v978 = vld [vmem:[%s244 + $0x44] sm:$0x1]
      %v979 = vsel %vm247, %v720, %v978
      %980 = vst [vmem:[%s244 + $0x44] sm:$0x1] %v979
      %v981 = vld [vmem:[%s244 + $0x48] sm:$0xf]
      %v982 = vsel %vm298, %v727, %v981
      %983 = vst [vmem:[%s244 + $0x48] sm:$0xf] %v982
      %984 = vst [vmem:[%s244 + $0x4c] sm:$0xf] %v736
      %v985 = vld [vmem:[%s244 + $0x50] sm:$0x1]
      %v986 = vsel %vm247, %v737, %v985
      %987 = vst [vmem:[%s244 + $0x50] sm:$0x1] %v986
      %v988 = vld [vmem:[%s244 + $0x54] sm:$0xf]
      %v989 = vsel %vm298, %v744, %v988
      %990 = vst [vmem:[%s244 + $0x54] sm:$0xf] %v989
      %991 = vst [vmem:[%s244 + $0x58] sm:$0xf] %v753
      %v992 = vld [vmem:[%s244 + $0x5c] sm:$0x1]
      %v993 = vsel %vm247, %v754, %v992
      %994 = vst [vmem:[%s244 + $0x5c] sm:$0x1] %v993
      %v995 = vld [vmem:[%s244 + $0x60] sm:$0xf]
      %v996 = vsel %vm298, %v761, %v995
      %997 = vst [vmem:[%s244 + $0x60] sm:$0xf] %v996
      %998 = vst [vmem:[%s244 + $0x64] sm:$0xf] %v770
      %v999 = vld [vmem:[%s244 + $0x68] sm:$0x1]
      %v1000 = vsel %vm247, %v771, %v999
      %1001 = vst [vmem:[%s244 + $0x68] sm:$0x1] %v1000
      %v1002 = vld [vmem:[%s244 + $0x6c] sm:$0xf]
      %v1003 = vsel %vm298, %v778, %v1002
      %1004 = vst [vmem:[%s244 + $0x6c] sm:$0xf] %v1003
      %1005 = vst [vmem:[%s244 + $0x70] sm:$0xf] %v787
      %v1006 = vld [vmem:[%s244 + $0x74] sm:$0x1]
      %v1007 = vsel %vm247, %v788, %v1006
      %1008 = vst [vmem:[%s244 + $0x74] sm:$0x1] %v1007
      %v1009 = vld [vmem:[%s244 + $0x78] sm:$0xf]
      %v1010 = vsel %vm298, %v795, %v1009
      %1011 = vst [vmem:[%s244 + $0x78] sm:$0xf] %v1010
      %1012 = vst [vmem:[%s244 + $0x7c] sm:$0xf] %v804
      %v1013 = vld [vmem:[%s244 + $0x80] sm:$0x1]
      %v1014 = vsel %vm247, %v805, %v1013
      %1015 = vst [vmem:[%s244 + $0x80] sm:$0x1] %v1014
      %v1016 = vld [vmem:[%s244 + $0x84] sm:$0xf]
      %v1017 = vsel %vm298, %v812, %v1016
      %1018 = vst [vmem:[%s244 + $0x84] sm:$0xf] %v1017
      %1019 = vst [vmem:[%s244 + $0x88] sm:$0xf] %v821
      %v1020 = vld [vmem:[%s244 + $0x8c] sm:$0x1]
      %v1021 = vsel %vm247, %v822, %v1020
      %1022 = vst [vmem:[%s244 + $0x8c] sm:$0x1] %v1021
      %v1023 = vld [vmem:[%s244 + $0x90] sm:$0xf]
      %v1024 = vsel %vm298, %v829, %v1023
      %1025 = vst [vmem:[%s244 + $0x90] sm:$0xf] %v1024
      %1026 = vst [vmem:[%s244 + $0x94] sm:$0xf] %v838
      %v1027 = vld [vmem:[%s244 + $0x98] sm:$0x1]
      %v1028 = vsel %vm247, %v839, %v1027
      %1029 = vst [vmem:[%s244 + $0x98] sm:$0x1] %v1028
      %v1030 = vld [vmem:[%s244 + $0x9c] sm:$0xf]
      %v1031 = vsel %vm298, %v846, %v1030
      %1032 = vst [vmem:[%s244 + $0x9c] sm:$0xf] %v1031
      %1033 = vst [vmem:[%s244 + $0xa0] sm:$0xf] %v855
      %v1034 = vld [vmem:[%s244 + $0xa4] sm:$0x1]
      %v1035 = vsel %vm247, %v856, %v1034
      %1036 = vst [vmem:[%s244 + $0xa4] sm:$0x1] %v1035
      %v1037 = vld [vmem:[%s244 + $0xa8] sm:$0xf]
      %v1038 = vsel %vm298, %v863, %v1037
      %1039 = vst [vmem:[%s244 + $0xa8] sm:$0xf] %v1038
      %1040 = vst [vmem:[%s244 + $0xac] sm:$0xf] %v872
      %v1041 = vld [vmem:[%s244 + $0xb0] sm:$0x1]
      %v1042 = vsel %vm247, %v873, %v1041
      %1043 = vst [vmem:[%s244 + $0xb0] sm:$0x1] %v1042
      %v1044 = vld [vmem:[%s244 + $0xb4] sm:$0xf]
      %v1045 = vsel %vm298, %v880, %v1044
      %1046 = vst [vmem:[%s244 + $0xb4] sm:$0xf] %v1045
      %1047 = vst [vmem:[%s244 + $0xb8] sm:$0xf] %v889
      %v1048 = vld [vmem:[%s244 + $0xbc] sm:$0x1]
      %v1049 = vsel %vm247, %v890, %v1048
      %1050 = vst [vmem:[%s244 + $0xbc] sm:$0x1] %v1049
      %v1051 = vld [vmem:[#allocation2] sm:$0xf]
      %v1052 = vld [vmem:[#allocation2 + $0x4] sm:$0xf]
      %v1053 = vld [vmem:[#allocation2 + $0x8] sm:$0xf]
      %v1054 = vld [vmem:[#allocation2 + $0xc] sm:$0xf]
      %v1055 = vld [vmem:[#allocation2 + $0x10] sm:$0xf]
      %v1056 = vld [vmem:[#allocation2 + $0x14] sm:$0xf]
      %v1057 = vld [vmem:[#allocation2 + $0x18] sm:$0xf]
      %v1058 = vld [vmem:[#allocation2 + $0x1c] sm:$0xf]
      %v1059 = vld [vmem:[#allocation2 + $0x20] sm:$0xf]
      %v1060 = vld [vmem:[#allocation2 + $0x24] sm:$0xf]
      %v1061 = vld [vmem:[#allocation2 + $0x28] sm:$0xf]
      %v1062 = vld [vmem:[#allocation2 + $0x2c] sm:$0xf]
      %v1063 = vld [vmem:[#allocation2 + $0x30] sm:$0xf]
      %v1064 = vld [vmem:[#allocation2 + $0x34] sm:$0xf]
      %v1065 = vld [vmem:[#allocation2 + $0x38] sm:$0xf]
      %v1066 = vld [vmem:[#allocation2 + $0x3c] sm:$0xf]
      %v1067 = vld [vmem:[#allocation2 + $0x40] sm:$0xf]
      %v1068 = vld [vmem:[#allocation2 + $0x44] sm:$0xf]
      %v1069 = vld [vmem:[#allocation2 + $0x48] sm:$0xf]
      %v1070 = vld [vmem:[#allocation2 + $0x4c] sm:$0xf]
      %v1071 = vld [vmem:[#allocation2 + $0x50] sm:$0xf]
      %v1072 = vld [vmem:[#allocation2 + $0x54] sm:$0xf]
      %v1073 = vld [vmem:[#allocation2 + $0x58] sm:$0xf]
      %v1074 = vld [vmem:[#allocation2 + $0x5c] sm:$0xf]
      %v1075 = vld [vmem:[#allocation2 + $0x60] sm:$0xf]
      %v1076 = vld [vmem:[#allocation2 + $0x64] sm:$0xf]
      %v1077 = vld [vmem:[#allocation2 + $0x68] sm:$0xf]
      %v1078 = vld [vmem:[#allocation2 + $0x6c] sm:$0xf]
      %v1079 = vld [vmem:[#allocation2 + $0x70] sm:$0xf]
      %v1080 = vld [vmem:[#allocation2 + $0x74] sm:$0xf]
      %v1081 = vld [vmem:[#allocation2 + $0x78] sm:$0xf]
      %v1082 = vld [vmem:[#allocation2 + $0x7c] sm:$0xf]
      %v1083 = vld [vmem:[#allocation2 + $0x80] sm:$0xf]
      %v1084 = vld [vmem:[#allocation2 + $0x84] sm:$0xf]
      %v1085 = vld [vmem:[#allocation2 + $0x88] sm:$0xf]
      %v1086 = vld [vmem:[#allocation2 + $0x8c] sm:$0xf]
      %v1087 = vld [vmem:[#allocation2 + $0x90] sm:$0xf]
      %v1088 = vld [vmem:[#allocation2 + $0x94] sm:$0xf]
      %v1089 = vld [vmem:[#allocation2 + $0x98] sm:$0xf]
      %v1090 = vld [vmem:[#allocation2 + $0x9c] sm:$0xf]
      %v1091 = vld [vmem:[#allocation2 + $0xa0] sm:$0xf]
      %v1092 = vld [vmem:[#allocation2 + $0xa4] sm:$0xf]
      %v1093 = vld [vmem:[#allocation2 + $0xa8] sm:$0xf]
      %v1094 = vld [vmem:[#allocation2 + $0xac] sm:$0xf]
      %v1095 = vld [vmem:[#allocation2 + $0xb0] sm:$0xf]
      %v1096 = vld [vmem:[#allocation2 + $0xb4] sm:$0xf]
      %v1097 = vld [vmem:[#allocation2 + $0xb8] sm:$0xf]
      %v1098 = vld [vmem:[#allocation2 + $0xbc] sm:$0xf]
      %v1131 = vunpack.c.l.b16 %v1051
      %v1132 = vunpack.c.l.b16 %v1052
      %v1133 = vunpack.c.l.b16 %v1054
      %v1134 = vunpack.c.l.b16 %v1055
      %v1135 = vunpack.c.l.b16 %v1057
      %v1136 = vunpack.c.l.b16 %v1058
      %v1137 = vunpack.c.l.b16 %v1060
      %v1138 = vunpack.c.l.b16 %v1061
      %v1139 = vunpack.c.l.b16 %v1063
      %v1140 = vunpack.c.l.b16 %v1064
      %v1141 = vunpack.c.l.b16 %v1066
      %v1142 = vunpack.c.l.b16 %v1067
      %v1143 = vunpack.c.l.b16 %v1069
      %v1144 = vunpack.c.l.b16 %v1070
      %v1145 = vunpack.c.l.b16 %v1072
      %v1146 = vunpack.c.l.b16 %v1073
      %v1147 = vunpack.c.l.b16 %v1075
      %v1148 = vunpack.c.l.b16 %v1076
      %v1149 = vunpack.c.l.b16 %v1078
      %v1150 = vunpack.c.l.b16 %v1079
      %v1151 = vunpack.c.l.b16 %v1081
      %v1152 = vunpack.c.l.b16 %v1082
      %v1153 = vunpack.c.l.b16 %v1084
      %v1154 = vunpack.c.l.b16 %v1085
      %v1155 = vunpack.c.l.b16 %v1087
      %v1156 = vunpack.c.l.b16 %v1088
      %v1157 = vunpack.c.l.b16 %v1090
      %v1158 = vunpack.c.l.b16 %v1091
      %v1159 = vunpack.c.l.b16 %v1093
      %v1160 = vunpack.c.l.b16 %v1094
      %v1161 = vunpack.c.l.b16 %v1096
      %v1162 = vunpack.c.l.b16 %v1097
      %v1163 = vpack.c.b16 %v1132, %v1131
      %v1164 = vpack.c.b16 %v1134, %v1133
      %v1165 = vpack.c.b16 %v1136, %v1135
      %v1166 = vpack.c.b16 %v1138, %v1137
      %v1167 = vpack.c.b16 %v1140, %v1139
      %v1168 = vpack.c.b16 %v1142, %v1141
      %v1169 = vpack.c.b16 %v1144, %v1143
      %v1170 = vpack.c.b16 %v1146, %v1145
      %v1171 = vpack.c.b16 %v1148, %v1147
      %v1172 = vpack.c.b16 %v1150, %v1149
      %v1173 = vpack.c.b16 %v1152, %v1151
      %v1174 = vpack.c.b16 %v1154, %v1153
      %v1175 = vpack.c.b16 %v1156, %v1155
      %v1176 = vpack.c.b16 %v1158, %v1157
      %v1177 = vpack.c.b16 %v1160, %v1159
      %v1178 = vpack.c.b16 %v1162, %v1161
      %1195 = vst [vmem:[#allocation3] sm:$0xff] %v1163
      %1196 = vst [vmem:[#allocation3 + $0x48] sm:$0xff] %v1164
      %1197 = vst [vmem:[#allocation3 + $0x90] sm:$0xff] %v1165
      %1198 = vst [vmem:[#allocation3 + $0xd8] sm:$0xff] %v1166
      %1199 = vst [vmem:[#allocation3 + $0x120] sm:$0xff] %v1167
      %1200 = vst [vmem:[#allocation3 + $0x168] sm:$0xff] %v1168
      %1201 = vst [vmem:[#allocation3 + $0x1b0] sm:$0xff] %v1169
      %1202 = vst [vmem:[#allocation3 + $0x1f8] sm:$0xff] %v1170
      %1203 = vst [vmem:[#allocation3 + $0x240] sm:$0xff] %v1171
      %1204 = vst [vmem:[#allocation3 + $0x288] sm:$0xff] %v1172
      %1205 = vst [vmem:[#allocation3 + $0x2d0] sm:$0xff] %v1173
      %1206 = vst [vmem:[#allocation3 + $0x318] sm:$0xff] %v1174
      %1207 = vst [vmem:[#allocation3 + $0x360] sm:$0xff] %v1175
      %1208 = vst [vmem:[#allocation3 + $0x3a8] sm:$0xff] %v1176
      %1209 = vst [vmem:[#allocation3 + $0x3f0] sm:$0xff] %v1177
      %1210 = vst [vmem:[#allocation3 + $0x438] sm:$0xff] %v1178
      %vm1211 = vsmask.f32 3328
      %vm1212 = vsmask.f32 7440
      %vm1213 = vmor %vm1211, %vm1212
      %v1215 = vshrl.u32 %v1051, 16
      %v1217 = vrot.slane %v1215, 4
      %v1218 = vshll.u32 %v1051, 16
      %v1220 = vrot.slane %v1218, 5
      %v1221 = vor.u32 %v1217, %v1220
      %v1222 = vrot.slane %v1221, 4
      %v1224 = vshll.u32 %v1052, 16
      %v1226 = vrot.slane %v1224, 5
      %v1227 = vsel %vm1213, %v1222, %v1226
      %v1228 = vshrl.u32 %v1052, 16
      %v1230 = vrot.slane %v1228, 4
      %v1231 = vor.u32 %v1230, %v1226
      %v1232 = vrot.slane %v1231, 4
      %v1234 = vshll.u32 %v1053, 16
      %v1236 = vrot.slane %v1234, 5
      %v1237 = vsel %vm1213, %v1232, %v1236
      %v1239 = vshrl.u32 %v1054, 16
      %v1241 = vrot.slane %v1239, 4
      %v1242 = vshll.u32 %v1054, 16
      %v1244 = vrot.slane %v1242, 5
      %v1245 = vor.u32 %v1241, %v1244
      %v1246 = vrot.slane %v1245, 4
      %v1248 = vshll.u32 %v1055, 16
      %v1250 = vrot.slane %v1248, 5
      %v1251 = vsel %vm1213, %v1246, %v1250
      %v1252 = vshrl.u32 %v1055, 16
      %v1254 = vrot.slane %v1252, 4
      %v1255 = vor.u32 %v1254, %v1250
      %v1256 = vrot.slane %v1255, 4
      %v1258 = vshll.u32 %v1056, 16
      %v1260 = vrot.slane %v1258, 5
      %v1261 = vsel %vm1213, %v1256, %v1260
      %v1263 = vshrl.u32 %v1057, 16
      %v1265 = vrot.slane %v1263, 4
      %v1266 = vshll.u32 %v1057, 16
      %v1268 = vrot.slane %v1266, 5
      %v1269 = vor.u32 %v1265, %v1268
      %v1270 = vrot.slane %v1269, 4
      %v1272 = vshll.u32 %v1058, 16
      %v1274 = vrot.slane %v1272, 5
      %v1275 = vsel %vm1213, %v1270, %v1274
      %v1276 = vshrl.u32 %v1058, 16
      %v1278 = vrot.slane %v1276, 4
      %v1279 = vor.u32 %v1278, %v1274
      %v1280 = vrot.slane %v1279, 4
      %v1282 = vshll.u32 %v1059, 16
      %v1284 = vrot.slane %v1282, 5
      %v1285 = vsel %vm1213, %v1280, %v1284
      %v1287 = vshrl.u32 %v1060, 16
      %v1289 = vrot.slane %v1287, 4
      %v1290 = vshll.u32 %v1060, 16
      %v1292 = vrot.slane %v1290, 5
      %v1293 = vor.u32 %v1289, %v1292
      %v1294 = vrot.slane %v1293, 4
      %v1296 = vshll.u32 %v1061, 16
      %v1298 = vrot.slane %v1296, 5
      %v1299 = vsel %vm1213, %v1294, %v1298
      %v1300 = vshrl.u32 %v1061, 16
      %v1302 = vrot.slane %v1300, 4
      %v1303 = vor.u32 %v1302, %v1298
      %v1304 = vrot.slane %v1303, 4
      %v1306 = vshll.u32 %v1062, 16
      %v1308 = vrot.slane %v1306, 5
      %v1309 = vsel %vm1213, %v1304, %v1308
      %v1311 = vshrl.u32 %v1063, 16
      %v1313 = vrot.slane %v1311, 4
      %v1314 = vshll.u32 %v1063, 16
      %v1316 = vrot.slane %v1314, 5
      %v1317 = vor.u32 %v1313, %v1316
      %v1318 = vrot.slane %v1317, 4
      %v1320 = vshll.u32 %v1064, 16
      %v1322 = vrot.slane %v1320, 5
      %v1323 = vsel %vm1213, %v1318, %v1322
      %v1324 = vshrl.u32 %v1064, 16
      %v1326 = vrot.slane %v1324, 4
      %v1327 = vor.u32 %v1326, %v1322
      %v1328 = vrot.slane %v1327, 4
      %v1330 = vshll.u32 %v1065, 16
      %v1332 = vrot.slane %v1330, 5
      %v1333 = vsel %vm1213, %v1328, %v1332
      %v1335 = vshrl.u32 %v1066, 16
      %v1337 = vrot.slane %v1335, 4
      %v1338 = vshll.u32 %v1066, 16
      %v1340 = vrot.slane %v1338, 5
      %v1341 = vor.u32 %v1337, %v1340
      %v1342 = vrot.slane %v1341, 4
      %v1344 = vshll.u32 %v1067, 16
      %v1346 = vrot.slane %v1344, 5
      %v1347 = vsel %vm1213, %v1342, %v1346
      %v1348 = vshrl.u32 %v1067, 16
      %v1350 = vrot.slane %v1348, 4
      %v1351 = vor.u32 %v1350, %v1346
      %v1352 = vrot.slane %v1351, 4
      %v1354 = vshll.u32 %v1068, 16
      %v1356 = vrot.slane %v1354, 5
      %v1357 = vsel %vm1213, %v1352, %v1356
      %v1359 = vshrl.u32 %v1069, 16
      %v1361 = vrot.slane %v1359, 4
      %v1362 = vshll.u32 %v1069, 16
      %v1364 = vrot.slane %v1362, 5
      %v1365 = vor.u32 %v1361, %v1364
      %v1366 = vrot.slane %v1365, 4
      %v1368 = vshll.u32 %v1070, 16
      %v1370 = vrot.slane %v1368, 5
      %v1371 = vsel %vm1213, %v1366, %v1370
      %v1372 = vshrl.u32 %v1070, 16
      %v1374 = vrot.slane %v1372, 4
      %v1375 = vor.u32 %v1374, %v1370
      %v1376 = vrot.slane %v1375, 4
      %v1378 = vshll.u32 %v1071, 16
      %v1380 = vrot.slane %v1378, 5
      %v1381 = vsel %vm1213, %v1376, %v1380
      %v1383 = vshrl.u32 %v1072, 16
      %v1385 = vrot.slane %v1383, 4
      %v1386 = vshll.u32 %v1072, 16
      %v1388 = vrot.slane %v1386, 5
      %v1389 = vor.u32 %v1385, %v1388
      %v1390 = vrot.slane %v1389, 4
      %v1392 = vshll.u32 %v1073, 16
      %v1394 = vrot.slane %v1392, 5
      %v1395 = vsel %vm1213, %v1390, %v1394
      %v1396 = vshrl.u32 %v1073, 16
      %v1398 = vrot.slane %v1396, 4
      %v1399 = vor.u32 %v1398, %v1394
      %v1400 = vrot.slane %v1399, 4
      %v1402 = vshll.u32 %v1074, 16
      %v1404 = vrot.slane %v1402, 5
      %v1405 = vsel %vm1213, %v1400, %v1404
      %v1407 = vshrl.u32 %v1075, 16
      %v1409 = vrot.slane %v1407, 4
      %v1410 = vshll.u32 %v1075, 16
      %v1412 = vrot.slane %v1410, 5
      %v1413 = vor.u32 %v1409, %v1412
      %v1414 = vrot.slane %v1413, 4
      %v1416 = vshll.u32 %v1076, 16
      %v1418 = vrot.slane %v1416, 5
      %v1419 = vsel %vm1213, %v1414, %v1418
      %v1420 = vshrl.u32 %v1076, 16
      %v1422 = vrot.slane %v1420, 4
      %v1423 = vor.u32 %v1422, %v1418
      %v1424 = vrot.slane %v1423, 4
      %v1426 = vshll.u32 %v1077, 16
      %v1428 = vrot.slane %v1426, 5
      %v1429 = vsel %vm1213, %v1424, %v1428
      %v1431 = vshrl.u32 %v1078, 16
      %v1433 = vrot.slane %v1431, 4
      %v1434 = vshll.u32 %v1078, 16
      %v1436 = vrot.slane %v1434, 5
      %v1437 = vor.u32 %v1433, %v1436
      %v1438 = vrot.slane %v1437, 4
      %v1440 = vshll.u32 %v1079, 16
      %v1442 = vrot.slane %v1440, 5
      %v1443 = vsel %vm1213, %v1438, %v1442
      %v1444 = vshrl.u32 %v1079, 16
      %v1446 = vrot.slane %v1444, 4
      %v1447 = vor.u32 %v1446, %v1442
      %v1448 = vrot.slane %v1447, 4
      %v1450 = vshll.u32 %v1080, 16
      %v1452 = vrot.slane %v1450, 5
      %v1453 = vsel %vm1213, %v1448, %v1452
      %v1455 = vshrl.u32 %v1081, 16
      %v1457 = vrot.slane %v1455, 4
      %v1458 = vshll.u32 %v1081, 16
      %v1460 = vrot.slane %v1458, 5
      %v1461 = vor.u32 %v1457, %v1460
      %v1462 = vrot.slane %v1461, 4
      %v1464 = vshll.u32 %v1082, 16
      %v1466 = vrot.slane %v1464, 5
      %v1467 = vsel %vm1213, %v1462, %v1466
      %v1468 = vshrl.u32 %v1082, 16
      %v1470 = vrot.slane %v1468, 4
      %v1471 = vor.u32 %v1470, %v1466
      %v1472 = vrot.slane %v1471, 4
      %v1474 = vshll.u32 %v1083, 16
      %v1476 = vrot.slane %v1474, 5
      %v1477 = vsel %vm1213, %v1472, %v1476
      %v1479 = vshrl.u32 %v1084, 16
      %v1481 = vrot.slane %v1479, 4
      %v1482 = vshll.u32 %v1084, 16
      %v1484 = vrot.slane %v1482, 5
      %v1485 = vor.u32 %v1481, %v1484
      %v1486 = vrot.slane %v1485, 4
      %v1488 = vshll.u32 %v1085, 16
      %v1490 = vrot.slane %v1488, 5
      %v1491 = vsel %vm1213, %v1486, %v1490
      %v1492 = vshrl.u32 %v1085, 16
      %v1494 = vrot.slane %v1492, 4
      %v1495 = vor.u32 %v1494, %v1490
      %v1496 = vrot.slane %v1495, 4
      %v1498 = vshll.u32 %v1086, 16
      %v1500 = vrot.slane %v1498, 5
      %v1501 = vsel %vm1213, %v1496, %v1500
      %v1503 = vshrl.u32 %v1087, 16
      %v1505 = vrot.slane %v1503, 4
      %v1506 = vshll.u32 %v1087, 16
      %v1508 = vrot.slane %v1506, 5
      %v1509 = vor.u32 %v1505, %v1508
      %v1510 = vrot.slane %v1509, 4
      %v1512 = vshll.u32 %v1088, 16
      %v1514 = vrot.slane %v1512, 5
      %v1515 = vsel %vm1213, %v1510, %v1514
      %v1516 = vshrl.u32 %v1088, 16
      %v1518 = vrot.slane %v1516, 4
      %v1519 = vor.u32 %v1518, %v1514
      %v1520 = vrot.slane %v1519, 4
      %v1522 = vshll.u32 %v1089, 16
      %v1524 = vrot.slane %v1522, 5
      %v1525 = vsel %vm1213, %v1520, %v1524
      %v1527 = vshrl.u32 %v1090, 16
      %v1529 = vrot.slane %v1527, 4
      %v1530 = vshll.u32 %v1090, 16
      %v1532 = vrot.slane %v1530, 5
      %v1533 = vor.u32 %v1529, %v1532
      %v1534 = vrot.slane %v1533, 4
      %v1536 = vshll.u32 %v1091, 16
      %v1538 = vrot.slane %v1536, 5
      %v1539 = vsel %vm1213, %v1534, %v1538
      %v1540 = vshrl.u32 %v1091, 16
      %v1542 = vrot.slane %v1540, 4
      %v1543 = vor.u32 %v1542, %v1538
      %v1544 = vrot.slane %v1543, 4
      %v1546 = vshll.u32 %v1092, 16
      %v1548 = vrot.slane %v1546, 5
      %v1549 = vsel %vm1213, %v1544, %v1548
      %v1551 = vshrl.u32 %v1093, 16
      %v1553 = vrot.slane %v1551, 4
      %v1554 = vshll.u32 %v1093, 16
      %v1556 = vrot.slane %v1554, 5
      %v1557 = vor.u32 %v1553, %v1556
      %v1558 = vrot.slane %v1557, 4
      %v1560 = vshll.u32 %v1094, 16
      %v1562 = vrot.slane %v1560, 5
      %v1563 = vsel %vm1213, %v1558, %v1562
      %v1564 = vshrl.u32 %v1094, 16
      %v1566 = vrot.slane %v1564, 4
      %v1567 = vor.u32 %v1566, %v1562
      %v1568 = vrot.slane %v1567, 4
      %v1570 = vshll.u32 %v1095, 16
      %v1572 = vrot.slane %v1570, 5
      %v1573 = vsel %vm1213, %v1568, %v1572
      %v1575 = vshrl.u32 %v1096, 16
      %v1577 = vrot.slane %v1575, 4
      %v1578 = vshll.u32 %v1096, 16
      %v1580 = vrot.slane %v1578, 5
      %v1581 = vor.u32 %v1577, %v1580
      %v1582 = vrot.slane %v1581, 4
      %v1584 = vshll.u32 %v1097, 16
      %v1586 = vrot.slane %v1584, 5
      %v1587 = vsel %vm1213, %v1582, %v1586
      %v1588 = vshrl.u32 %v1097, 16
      %v1590 = vrot.slane %v1588, 4
      %v1591 = vor.u32 %v1590, %v1586
      %v1592 = vrot.slane %v1591, 4
      %v1594 = vshll.u32 %v1098, 16
      %v1596 = vrot.slane %v1594, 5
      %v1597 = vsel %vm1213, %v1592, %v1596
      %v1598 = vunpack.c.l.b16 %v1227
      %v1599 = vunpack.c.l.b16 %v1237
      %v1600 = vunpack.c.l.b16 %v1251
      %v1601 = vunpack.c.l.b16 %v1261
      %v1602 = vunpack.c.l.b16 %v1275
      %v1603 = vunpack.c.l.b16 %v1285
      %v1604 = vunpack.c.l.b16 %v1299
      %v1605 = vunpack.c.l.b16 %v1309
      %v1606 = vunpack.c.l.b16 %v1323
      %v1607 = vunpack.c.l.b16 %v1333
      %v1608 = vunpack.c.l.b16 %v1347
      %v1609 = vunpack.c.l.b16 %v1357
      %v1610 = vunpack.c.l.b16 %v1371
      %v1611 = vunpack.c.l.b16 %v1381
      %v1612 = vunpack.c.l.b16 %v1395
      %v1613 = vunpack.c.l.b16 %v1405
      %v1614 = vunpack.c.l.b16 %v1419
      %v1615 = vunpack.c.l.b16 %v1429
      %v1616 = vunpack.c.l.b16 %v1443
      %v1617 = vunpack.c.l.b16 %v1453
      %v1618 = vunpack.c.l.b16 %v1467
      %v1619 = vunpack.c.l.b16 %v1477
      %v1620 = vunpack.c.l.b16 %v1491
      %v1621 = vunpack.c.l.b16 %v1501
      %v1622 = vunpack.c.l.b16 %v1515
      %v1623 = vunpack.c.l.b16 %v1525
      %v1624 = vunpack.c.l.b16 %v1539
      %v1625 = vunpack.c.l.b16 %v1549
      %v1626 = vunpack.c.l.b16 %v1563
      %v1627 = vunpack.c.l.b16 %v1573
      %v1628 = vunpack.c.l.b16 %v1587
      %v1629 = vunpack.c.l.b16 %v1597
      %v1630 = vpack.c.b16 %v1599, %v1598
      %v1631 = vpack.c.b16 %v1601, %v1600
      %v1632 = vpack.c.b16 %v1603, %v1602
      %v1633 = vpack.c.b16 %v1605, %v1604
      %v1634 = vpack.c.b16 %v1607, %v1606
      %v1635 = vpack.c.b16 %v1609, %v1608
      %v1636 = vpack.c.b16 %v1611, %v1610
      %v1637 = vpack.c.b16 %v1613, %v1612
      %v1638 = vpack.c.b16 %v1615, %v1614
      %v1639 = vpack.c.b16 %v1617, %v1616
      %v1640 = vpack.c.b16 %v1619, %v1618
      %v1641 = vpack.c.b16 %v1621, %v1620
      %v1642 = vpack.c.b16 %v1623, %v1622
      %v1643 = vpack.c.b16 %v1625, %v1624
      %v1644 = vpack.c.b16 %v1627, %v1626
      %v1645 = vpack.c.b16 %v1629, %v1628
      %1662 = vst [vmem:[#allocation3 + $0x8] sm:$0xff] %v1630
      %1663 = vst [vmem:[#allocation3 + $0x50] sm:$0xff] %v1631
      %1664 = vst [vmem:[#allocation3 + $0x98] sm:$0xff] %v1632
      %1665 = vst [vmem:[#allocation3 + $0xe0] sm:$0xff] %v1633
      %1666 = vst [vmem:[#allocation3 + $0x128] sm:$0xff] %v1634
      %1667 = vst [vmem:[#allocation3 + $0x170] sm:$0xff] %v1635
      %1668 = vst [vmem:[#allocation3 + $0x1b8] sm:$0xff] %v1636
      %1669 = vst [vmem:[#allocation3 + $0x200] sm:$0xff] %v1637
      %1670 = vst [vmem:[#allocation3 + $0x248] sm:$0xff] %v1638
      %1671 = vst [vmem:[#allocation3 + $0x290] sm:$0xff] %v1639
      %1672 = vst [vmem:[#allocation3 + $0x2d8] sm:$0xff] %v1640
      %1673 = vst [vmem:[#allocation3 + $0x320] sm:$0xff] %v1641
      %1674 = vst [vmem:[#allocation3 + $0x368] sm:$0xff] %v1642
      %1675 = vst [vmem:[#allocation3 + $0x3b0] sm:$0xff] %v1643
      %1676 = vst [vmem:[#allocation3 + $0x3f8] sm:$0xff] %v1644
      %1677 = vst [vmem:[#allocation3 + $0x440] sm:$0xff] %v1645
      %vm1694 = vcmask 1042432
      %vm1695 = vcmask 1046532
      %vm1696 = vmor %vm1694, %vm1695
      %v1697 = vrot.slane %v1051, 5
      %v1698 = vrot.slane %v1697, 4
      %v1699 = vrot.slane %v1052, 5
      %v1700 = vsel %vm1696, %v1698, %v1699
      %v1701 = vrot.slane %v1699, 4
      %v1702 = vrot.slane %v1053, 5
      %v1703 = vsel %vm1696, %v1701, %v1702
      %v1704 = vrot.slane %v1054, 5
      %v1705 = vrot.slane %v1704, 4
      %v1706 = vrot.slane %v1055, 5
      %v1707 = vsel %vm1696, %v1705, %v1706
      %v1708 = vrot.slane %v1706, 4
      %v1709 = vrot.slane %v1056, 5
      %v1710 = vsel %vm1696, %v1708, %v1709
      %v1711 = vrot.slane %v1057, 5
      %v1712 = vrot.slane %v1711, 4
      %v1713 = vrot.slane %v1058, 5
      %v1714 = vsel %vm1696, %v1712, %v1713
      %v1715 = vrot.slane %v1713, 4
      %v1716 = vrot.slane %v1059, 5
      %v1717 = vsel %vm1696, %v1715, %v1716
      %v1718 = vrot.slane %v1060, 5
      %v1719 = vrot.slane %v1718, 4
      %v1720 = vrot.slane %v1061, 5
      %v1721 = vsel %vm1696, %v1719, %v1720
      %v1722 = vrot.slane %v1720, 4
      %v1723 = vrot.slane %v1062, 5
      %v1724 = vsel %vm1696, %v1722, %v1723
      %v1725 = vrot.slane %v1063, 5
      %v1726 = vrot.slane %v1725, 4
      %v1727 = vrot.slane %v1064, 5
      %v1728 = vsel %vm1696, %v1726, %v1727
      %v1729 = vrot.slane %v1727, 4
      %v1730 = vrot.slane %v1065, 5
      %v1731 = vsel %vm1696, %v1729, %v1730
      %v1732 = vrot.slane %v1066, 5
      %v1733 = vrot.slane %v1732, 4
      %v1734 = vrot.slane %v1067, 5
      %v1735 = vsel %vm1696, %v1733, %v1734
      %v1736 = vrot.slane %v1734, 4
      %v1737 = vrot.slane %v1068, 5
      %v1738 = vsel %vm1696, %v1736, %v1737
      %v1739 = vrot.slane %v1069, 5
      %v1740 = vrot.slane %v1739, 4
      %v1741 = vrot.slane %v1070, 5
      %v1742 = vsel %vm1696, %v1740, %v1741
      %v1743 = vrot.slane %v1741, 4
      %v1744 = vrot.slane %v1071, 5
      %v1745 = vsel %vm1696, %v1743, %v1744
      %v1746 = vrot.slane %v1072, 5
      %v1747 = vrot.slane %v1746, 4
      %v1748 = vrot.slane %v1073, 5
      %v1749 = vsel %vm1696, %v1747, %v1748
      %v1750 = vrot.slane %v1748, 4
      %v1751 = vrot.slane %v1074, 5
      %v1752 = vsel %vm1696, %v1750, %v1751
      %v1753 = vrot.slane %v1075, 5
      %v1754 = vrot.slane %v1753, 4
      %v1755 = vrot.slane %v1076, 5
      %v1756 = vsel %vm1696, %v1754, %v1755
      %v1757 = vrot.slane %v1755, 4
      %v1758 = vrot.slane %v1077, 5
      %v1759 = vsel %vm1696, %v1757, %v1758
      %v1760 = vrot.slane %v1078, 5
      %v1761 = vrot.slane %v1760, 4
      %v1762 = vrot.slane %v1079, 5
      %v1763 = vsel %vm1696, %v1761, %v1762
      %v1764 = vrot.slane %v1762, 4
      %v1765 = vrot.slane %v1080, 5
      %v1766 = vsel %vm1696, %v1764, %v1765
      %v1767 = vrot.slane %v1081, 5
      %v1768 = vrot.slane %v1767, 4
      %v1769 = vrot.slane %v1082, 5
      %v1770 = vsel %vm1696, %v1768, %v1769
      %v1771 = vrot.slane %v1769, 4
      %v1772 = vrot.slane %v1083, 5
      %v1773 = vsel %vm1696, %v1771, %v1772
      %v1774 = vrot.slane %v1084, 5
      %v1775 = vrot.slane %v1774, 4
      %v1776 = vrot.slane %v1085, 5
      %v1777 = vsel %vm1696, %v1775, %v1776
      %v1778 = vrot.slane %v1776, 4
      %v1779 = vrot.slane %v1086, 5
      %v1780 = vsel %vm1696, %v1778, %v1779
      %v1781 = vrot.slane %v1087, 5
      %v1782 = vrot.slane %v1781, 4
      %v1783 = vrot.slane %v1088, 5
      %v1784 = vsel %vm1696, %v1782, %v1783
      %v1785 = vrot.slane %v1783, 4
      %v1786 = vrot.slane %v1089, 5
      %v1787 = vsel %vm1696, %v1785, %v1786
      %v1788 = vrot.slane %v1090, 5
      %v1789 = vrot.slane %v1788, 4
      %v1790 = vrot.slane %v1091, 5
      %v1791 = vsel %vm1696, %v1789, %v1790
      %v1792 = vrot.slane %v1790, 4
      %v1793 = vrot.slane %v1092, 5
      %v1794 = vsel %vm1696, %v1792, %v1793
      %v1795 = vrot.slane %v1093, 5
      %v1796 = vrot.slane %v1795, 4
      %v1797 = vrot.slane %v1094, 5
      %v1798 = vsel %vm1696, %v1796, %v1797
      %v1799 = vrot.slane %v1797, 4
      %v1800 = vrot.slane %v1095, 5
      %v1801 = vsel %vm1696, %v1799, %v1800
      %v1802 = vrot.slane %v1096, 5
      %v1803 = vrot.slane %v1802, 4
      %v1804 = vrot.slane %v1097, 5
      %v1805 = vsel %vm1696, %v1803, %v1804
      %v1806 = vrot.slane %v1804, 4
      %v1807 = vrot.slane %v1098, 5
      %v1808 = vsel %vm1696, %v1806, %v1807
      %v1809 = vunpack.c.l.b16 %v1700
      %v1810 = vunpack.c.l.b16 %v1703
      %v1811 = vunpack.c.l.b16 %v1707
      %v1812 = vunpack.c.l.b16 %v1710
      %v1813 = vunpack.c.l.b16 %v1714
      %v1814 = vunpack.c.l.b16 %v1717
      %v1815 = vunpack.c.l.b16 %v1721
      %v1816 = vunpack.c.l.b16 %v1724
      %v1817 = vunpack.c.l.b16 %v1728
      %v1818 = vunpack.c.l.b16 %v1731
      %v1819 = vunpack.c.l.b16 %v1735
      %v1820 = vunpack.c.l.b16 %v1738
      %v1821 = vunpack.c.l.b16 %v1742
      %v1822 = vunpack.c.l.b16 %v1745
      %v1823 = vunpack.c.l.b16 %v1749
      %v1824 = vunpack.c.l.b16 %v1752
      %v1825 = vunpack.c.l.b16 %v1756
      %v1826 = vunpack.c.l.b16 %v1759
      %v1827 = vunpack.c.l.b16 %v1763
      %v1828 = vunpack.c.l.b16 %v1766
      %v1829 = vunpack.c.l.b16 %v1770
      %v1830 = vunpack.c.l.b16 %v1773
      %v1831 = vunpack.c.l.b16 %v1777
      %v1832 = vunpack.c.l.b16 %v1780
      %v1833 = vunpack.c.l.b16 %v1784
      %v1834 = vunpack.c.l.b16 %v1787
      %v1835 = vunpack.c.l.b16 %v1791
      %v1836 = vunpack.c.l.b16 %v1794
      %v1837 = vunpack.c.l.b16 %v1798
      %v1838 = vunpack.c.l.b16 %v1801
      %v1839 = vunpack.c.l.b16 %v1805
      %v1840 = vunpack.c.l.b16 %v1808
      %v1841 = vpack.c.b16 %v1810, %v1809
      %v1842 = vpack.c.b16 %v1812, %v1811
      %v1843 = vpack.c.b16 %v1814, %v1813
      %v1844 = vpack.c.b16 %v1816, %v1815
      %v1845 = vpack.c.b16 %v1818, %v1817
      %v1846 = vpack.c.b16 %v1820, %v1819
      %v1847 = vpack.c.b16 %v1822, %v1821
      %v1848 = vpack.c.b16 %v1824, %v1823
      %v1849 = vpack.c.b16 %v1826, %v1825
      %v1850 = vpack.c.b16 %v1828, %v1827
      %v1851 = vpack.c.b16 %v1830, %v1829
      %v1852 = vpack.c.b16 %v1832, %v1831
      %v1853 = vpack.c.b16 %v1834, %v1833
      %v1854 = vpack.c.b16 %v1836, %v1835
      %v1855 = vpack.c.b16 %v1838, %v1837
      %v1856 = vpack.c.b16 %v1840, %v1839
      %1873 = vst [vmem:[#allocation3 + $0x10] sm:$0xff] %v1841
      %1874 = vst [vmem:[#allocation3 + $0x58] sm:$0xff] %v1842
      %1875 = vst [vmem:[#allocation3 + $0xa0] sm:$0xff] %v1843
      %1876 = vst [vmem:[#allocation3 + $0xe8] sm:$0xff] %v1844
      %1877 = vst [vmem:[#allocation3 + $0x130] sm:$0xff] %v1845
      %1878 = vst [vmem:[#allocation3 + $0x178] sm:$0xff] %v1846
      %1879 = vst [vmem:[#allocation3 + $0x1c0] sm:$0xff] %v1847
      %1880 = vst [vmem:[#allocation3 + $0x208] sm:$0xff] %v1848
      %1881 = vst [vmem:[#allocation3 + $0x250] sm:$0xff] %v1849
      %1882 = vst [vmem:[#allocation3 + $0x298] sm:$0xff] %v1850
      %1883 = vst [vmem:[#allocation3 + $0x2e0] sm:$0xff] %v1851
      %1884 = vst [vmem:[#allocation3 + $0x328] sm:$0xff] %v1852
      %1885 = vst [vmem:[#allocation3 + $0x370] sm:$0xff] %v1853
      %1886 = vst [vmem:[#allocation3 + $0x3b8] sm:$0xff] %v1854
      %1887 = vst [vmem:[#allocation3 + $0x400] sm:$0xff] %v1855
      %1888 = vst [vmem:[#allocation3 + $0x448] sm:$0xff] %v1856
      %v1889 = vld [vmem:[%s244] sm:$0xf]
      %v1890 = vld [vmem:[%s244 + $0x4] sm:$0xf]
      %v1891 = vld [vmem:[%s244 + $0x8] sm:$0xf]
      %v1892 = vld [vmem:[%s244 + $0xc] sm:$0xf]
      %v1893 = vld [vmem:[%s244 + $0x10] sm:$0xf]
      %v1894 = vld [vmem:[%s244 + $0x14] sm:$0xf]
      %v1895 = vld [vmem:[%s244 + $0x18] sm:$0xf]
      %v1896 = vld [vmem:[%s244 + $0x1c] sm:$0xf]
      %v1897 = vld [vmem:[%s244 + $0x20] sm:$0xf]
      %v1898 = vld [vmem:[%s244 + $0x24] sm:$0xf]
      %v1899 = vld [vmem:[%s244 + $0x28] sm:$0xf]
      %v1900 = vld [vmem:[%s244 + $0x2c] sm:$0xf]
      %v1901 = vld [vmem:[%s244 + $0x30] sm:$0xf]
      %v1902 = vld [vmem:[%s244 + $0x34] sm:$0xf]
      %v1903 = vld [vmem:[%s244 + $0x38] sm:$0xf]
      %v1904 = vld [vmem:[%s244 + $0x3c] sm:$0xf]
      %v1905 = vld [vmem:[%s244 + $0x40] sm:$0xf]
      %v1906 = vld [vmem:[%s244 + $0x44] sm:$0xf]
      %v1907 = vld [vmem:[%s244 + $0x48] sm:$0xf]
      %v1908 = vld [vmem:[%s244 + $0x4c] sm:$0xf]
      %v1909 = vld [vmem:[%s244 + $0x50] sm:$0xf]
      %v1910 = vld [vmem:[%s244 + $0x54] sm:$0xf]
      %v1911 = vld [vmem:[%s244 + $0x58] sm:$0xf]
      %v1912 = vld [vmem:[%s244 + $0x5c] sm:$0xf]
      %v1913 = vld [vmem:[%s244 + $0x60] sm:$0xf]
      %v1914 = vld [vmem:[%s244 + $0x64] sm:$0xf]
      %v1915 = vld [vmem:[%s244 + $0x68] sm:$0xf]
      %v1916 = vld [vmem:[%s244 + $0x6c] sm:$0xf]
      %v1917 = vld [vmem:[%s244 + $0x70] sm:$0xf]
      %v1918 = vld [vmem:[%s244 + $0x74] sm:$0xf]
      %v1919 = vld [vmem:[%s244 + $0x78] sm:$0xf]
      %v1920 = vld [vmem:[%s244 + $0x7c] sm:$0xf]
      %v1921 = vld [vmem:[%s244 + $0x80] sm:$0xf]
      %v1922 = vld [vmem:[%s244 + $0x84] sm:$0xf]
      %v1923 = vld [vmem:[%s244 + $0x88] sm:$0xf]
      %v1924 = vld [vmem:[%s244 + $0x8c] sm:$0xf]
      %v1925 = vld [vmem:[%s244 + $0x90] sm:$0xf]
      %v1926 = vld [vmem:[%s244 + $0x94] sm:$0xf]
      %v1927 = vld [vmem:[%s244 + $0x98] sm:$0xf]
      %v1928 = vld [vmem:[%s244 + $0x9c] sm:$0xf]
      %v1929 = vld [vmem:[%s244 + $0xa0] sm:$0xf]
      %v1930 = vld [vmem:[%s244 + $0xa4] sm:$0xf]
      %v1931 = vld [vmem:[%s244 + $0xa8] sm:$0xf]
      %v1932 = vld [vmem:[%s244 + $0xac] sm:$0xf]
      %v1933 = vld [vmem:[%s244 + $0xb0] sm:$0xf]
      %v1934 = vld [vmem:[%s244 + $0xb4] sm:$0xf]
      %v1935 = vld [vmem:[%s244 + $0xb8] sm:$0xf]
      %v1936 = vld [vmem:[%s244 + $0xbc] sm:$0xf]
      %v1969 = vunpack.c.l.b16 %v1889
      %v1970 = vunpack.c.l.b16 %v1890
      %v1971 = vunpack.c.l.b16 %v1892
      %v1972 = vunpack.c.l.b16 %v1893
      %v1973 = vunpack.c.l.b16 %v1895
      %v1974 = vunpack.c.l.b16 %v1896
      %v1975 = vunpack.c.l.b16 %v1898
      %v1976 = vunpack.c.l.b16 %v1899
      %v1977 = vunpack.c.l.b16 %v1901
      %v1978 = vunpack.c.l.b16 %v1902
      %v1979 = vunpack.c.l.b16 %v1904
      %v1980 = vunpack.c.l.b16 %v1905
      %v1981 = vunpack.c.l.b16 %v1907
      %v1982 = vunpack.c.l.b16 %v1908
      %v1983 = vunpack.c.l.b16 %v1910
      %v1984 = vunpack.c.l.b16 %v1911
      %v1985 = vunpack.c.l.b16 %v1913
      %v1986 = vunpack.c.l.b16 %v1914
      %v1987 = vunpack.c.l.b16 %v1916
      %v1988 = vunpack.c.l.b16 %v1917
      %v1989 = vunpack.c.l.b16 %v1919
      %v1990 = vunpack.c.l.b16 %v1920
      %v1991 = vunpack.c.l.b16 %v1922
      %v1992 = vunpack.c.l.b16 %v1923
      %v1993 = vunpack.c.l.b16 %v1925
      %v1994 = vunpack.c.l.b16 %v1926
      %v1995 = vunpack.c.l.b16 %v1928
      %v1996 = vunpack.c.l.b16 %v1929
      %v1997 = vunpack.c.l.b16 %v1931
      %v1998 = vunpack.c.l.b16 %v1932
      %v1999 = vunpack.c.l.b16 %v1934
      %v2000 = vunpack.c.l.b16 %v1935
      %v2001 = vpack.c.b16 %v1970, %v1969
      %v2002 = vpack.c.b16 %v1972, %v1971
      %v2003 = vpack.c.b16 %v1974, %v1973
      %v2004 = vpack.c.b16 %v1976, %v1975
      %v2005 = vpack.c.b16 %v1978, %v1977
      %v2006 = vpack.c.b16 %v1980, %v1979
      %v2007 = vpack.c.b16 %v1982, %v1981
      %v2008 = vpack.c.b16 %v1984, %v1983
      %v2009 = vpack.c.b16 %v1986, %v1985
      %v2010 = vpack.c.b16 %v1988, %v1987
      %v2011 = vpack.c.b16 %v1990, %v1989
      %v2012 = vpack.c.b16 %v1992, %v1991
      %v2013 = vpack.c.b16 %v1994, %v1993
      %v2014 = vpack.c.b16 %v1996, %v1995
      %v2015 = vpack.c.b16 %v1998, %v1997
      %v2016 = vpack.c.b16 %v2000, %v1999
      %2033 = vst [vmem:[#allocation3 + $0x18] sm:$0xff] %v2001
      %2034 = vst [vmem:[#allocation3 + $0x60] sm:$0xff] %v2002
      %2035 = vst [vmem:[#allocation3 + $0xa8] sm:$0xff] %v2003
      %2036 = vst [vmem:[#allocation3 + $0xf0] sm:$0xff] %v2004
      %2037 = vst [vmem:[#allocation3 + $0x138] sm:$0xff] %v2005
      %2038 = vst [vmem:[#allocation3 + $0x180] sm:$0xff] %v2006
      %2039 = vst [vmem:[#allocation3 + $0x1c8] sm:$0xff] %v2007
      %2040 = vst [vmem:[#allocation3 + $0x210] sm:$0xff] %v2008
      %2041 = vst [vmem:[#allocation3 + $0x258] sm:$0xff] %v2009
      %2042 = vst [vmem:[#allocation3 + $0x2a0] sm:$0xff] %v2010
      %2043 = vst [vmem:[#allocation3 + $0x2e8] sm:$0xff] %v2011
      %2044 = vst [vmem:[#allocation3 + $0x330] sm:$0xff] %v2012
      %2045 = vst [vmem:[#allocation3 + $0x378] sm:$0xff] %v2013
      %2046 = vst [vmem:[#allocation3 + $0x3c0] sm:$0xff] %v2014
      %2047 = vst [vmem:[#allocation3 + $0x408] sm:$0xff] %v2015
      %2048 = vst [vmem:[#allocation3 + $0x450] sm:$0xff] %v2016
      %v2050 = vshrl.u32 %v1889, 16
      %v2052 = vrot.slane %v2050, 4
      %v2053 = vshll.u32 %v1889, 16
      %v2055 = vrot.slane %v2053, 5
      %v2056 = vor.u32 %v2052, %v2055
      %v2057 = vrot.slane %v2056, 4
      %v2059 = vshll.u32 %v1890, 16
      %v2061 = vrot.slane %v2059, 5
      %v2062 = vsel %vm1213, %v2057, %v2061
      %v2063 = vshrl.u32 %v1890, 16
      %v2065 = vrot.slane %v2063, 4
      %v2066 = vor.u32 %v2065, %v2061
      %v2067 = vrot.slane %v2066, 4
      %v2069 = vshll.u32 %v1891, 16
      %v2071 = vrot.slane %v2069, 5
      %v2072 = vsel %vm1213, %v2067, %v2071
      %v2074 = vshrl.u32 %v1892, 16
      %v2076 = vrot.slane %v2074, 4
      %v2077 = vshll.u32 %v1892, 16
      %v2079 = vrot.slane %v2077, 5
      %v2080 = vor.u32 %v2076, %v2079
      %v2081 = vrot.slane %v2080, 4
      %v2083 = vshll.u32 %v1893, 16
      %v2085 = vrot.slane %v2083, 5
      %v2086 = vsel %vm1213, %v2081, %v2085
      %v2087 = vshrl.u32 %v1893, 16
      %v2089 = vrot.slane %v2087, 4
      %v2090 = vor.u32 %v2089, %v2085
      %v2091 = vrot.slane %v2090, 4
      %v2093 = vshll.u32 %v1894, 16
      %v2095 = vrot.slane %v2093, 5
      %v2096 = vsel %vm1213, %v2091, %v2095
      %v2098 = vshrl.u32 %v1895, 16
      %v2100 = vrot.slane %v2098, 4
      %v2101 = vshll.u32 %v1895, 16
      %v2103 = vrot.slane %v2101, 5
      %v2104 = vor.u32 %v2100, %v2103
      %v2105 = vrot.slane %v2104, 4
      %v2107 = vshll.u32 %v1896, 16
      %v2109 = vrot.slane %v2107, 5
      %v2110 = vsel %vm1213, %v2105, %v2109
      %v2111 = vshrl.u32 %v1896, 16
      %v2113 = vrot.slane %v2111, 4
      %v2114 = vor.u32 %v2113, %v2109
      %v2115 = vrot.slane %v2114, 4
      %v2117 = vshll.u32 %v1897, 16
      %v2119 = vrot.slane %v2117, 5
      %v2120 = vsel %vm1213, %v2115, %v2119
      %v2122 = vshrl.u32 %v1898, 16
      %v2124 = vrot.slane %v2122, 4
      %v2125 = vshll.u32 %v1898, 16
      %v2127 = vrot.slane %v2125, 5
      %v2128 = vor.u32 %v2124, %v2127
      %v2129 = vrot.slane %v2128, 4
      %v2131 = vshll.u32 %v1899, 16
      %v2133 = vrot.slane %v2131, 5
      %v2134 = vsel %vm1213, %v2129, %v2133
      %v2135 = vshrl.u32 %v1899, 16
      %v2137 = vrot.slane %v2135, 4
      %v2138 = vor.u32 %v2137, %v2133
      %v2139 = vrot.slane %v2138, 4
      %v2141 = vshll.u32 %v1900, 16
      %v2143 = vrot.slane %v2141, 5
      %v2144 = vsel %vm1213, %v2139, %v2143
      %v2146 = vshrl.u32 %v1901, 16
      %v2148 = vrot.slane %v2146, 4
      %v2149 = vshll.u32 %v1901, 16
      %v2151 = vrot.slane %v2149, 5
      %v2152 = vor.u32 %v2148, %v2151
      %v2153 = vrot.slane %v2152, 4
      %v2155 = vshll.u32 %v1902, 16
      %v2157 = vrot.slane %v2155, 5
      %v2158 = vsel %vm1213, %v2153, %v2157
      %v2159 = vshrl.u32 %v1902, 16
      %v2161 = vrot.slane %v2159, 4
      %v2162 = vor.u32 %v2161, %v2157
      %v2163 = vrot.slane %v2162, 4
      %v2165 = vshll.u32 %v1903, 16
      %v2167 = vrot.slane %v2165, 5
      %v2168 = vsel %vm1213, %v2163, %v2167
      %v2170 = vshrl.u32 %v1904, 16
      %v2172 = vrot.slane %v2170, 4
      %v2173 = vshll.u32 %v1904, 16
      %v2175 = vrot.slane %v2173, 5
      %v2176 = vor.u32 %v2172, %v2175
      %v2177 = vrot.slane %v2176, 4
      %v2179 = vshll.u32 %v1905, 16
      %v2181 = vrot.slane %v2179, 5
      %v2182 = vsel %vm1213, %v2177, %v2181
      %v2183 = vshrl.u32 %v1905, 16
      %v2185 = vrot.slane %v2183, 4
      %v2186 = vor.u32 %v2185, %v2181
      %v2187 = vrot.slane %v2186, 4
      %v2189 = vshll.u32 %v1906, 16
      %v2191 = vrot.slane %v2189, 5
      %v2192 = vsel %vm1213, %v2187, %v2191
      %v2194 = vshrl.u32 %v1907, 16
      %v2196 = vrot.slane %v2194, 4
      %v2197 = vshll.u32 %v1907, 16
      %v2199 = vrot.slane %v2197, 5
      %v2200 = vor.u32 %v2196, %v2199
      %v2201 = vrot.slane %v2200, 4
      %v2203 = vshll.u32 %v1908, 16
      %v2205 = vrot.slane %v2203, 5
      %v2206 = vsel %vm1213, %v2201, %v2205
      %v2207 = vshrl.u32 %v1908, 16
      %v2209 = vrot.slane %v2207, 4
      %v2210 = vor.u32 %v2209, %v2205
      %v2211 = vrot.slane %v2210, 4
      %v2213 = vshll.u32 %v1909, 16
      %v2215 = vrot.slane %v2213, 5
      %v2216 = vsel %vm1213, %v2211, %v2215
      %v2218 = vshrl.u32 %v1910, 16
      %v2220 = vrot.slane %v2218, 4
      %v2221 = vshll.u32 %v1910, 16
      %v2223 = vrot.slane %v2221, 5
      %v2224 = vor.u32 %v2220, %v2223
      %v2225 = vrot.slane %v2224, 4
      %v2227 = vshll.u32 %v1911, 16
      %v2229 = vrot.slane %v2227, 5
      %v2230 = vsel %vm1213, %v2225, %v2229
      %v2231 = vshrl.u32 %v1911, 16
      %v2233 = vrot.slane %v2231, 4
      %v2234 = vor.u32 %v2233, %v2229
      %v2235 = vrot.slane %v2234, 4
      %v2237 = vshll.u32 %v1912, 16
      %v2239 = vrot.slane %v2237, 5
      %v2240 = vsel %vm1213, %v2235, %v2239
      %v2242 = vshrl.u32 %v1913, 16
      %v2244 = vrot.slane %v2242, 4
      %v2245 = vshll.u32 %v1913, 16
      %v2247 = vrot.slane %v2245, 5
      %v2248 = vor.u32 %v2244, %v2247
      %v2249 = vrot.slane %v2248, 4
      %v2251 = vshll.u32 %v1914, 16
      %v2253 = vrot.slane %v2251, 5
      %v2254 = vsel %vm1213, %v2249, %v2253
      %v2255 = vshrl.u32 %v1914, 16
      %v2257 = vrot.slane %v2255, 4
      %v2258 = vor.u32 %v2257, %v2253
      %v2259 = vrot.slane %v2258, 4
      %v2261 = vshll.u32 %v1915, 16
      %v2263 = vrot.slane %v2261, 5
      %v2264 = vsel %vm1213, %v2259, %v2263
      %v2266 = vshrl.u32 %v1916, 16
      %v2268 = vrot.slane %v2266, 4
      %v2269 = vshll.u32 %v1916, 16
      %v2271 = vrot.slane %v2269, 5
      %v2272 = vor.u32 %v2268, %v2271
      %v2273 = vrot.slane %v2272, 4
      %v2275 = vshll.u32 %v1917, 16
      %v2277 = vrot.slane %v2275, 5
      %v2278 = vsel %vm1213, %v2273, %v2277
      %v2279 = vshrl.u32 %v1917, 16
      %v2281 = vrot.slane %v2279, 4
      %v2282 = vor.u32 %v2281, %v2277
      %v2283 = vrot.slane %v2282, 4
      %v2285 = vshll.u32 %v1918, 16
      %v2287 = vrot.slane %v2285, 5
      %v2288 = vsel %vm1213, %v2283, %v2287
      %v2290 = vshrl.u32 %v1919, 16
      %v2292 = vrot.slane %v2290, 4
      %v2293 = vshll.u32 %v1919, 16
      %v2295 = vrot.slane %v2293, 5
      %v2296 = vor.u32 %v2292, %v2295
      %v2297 = vrot.slane %v2296, 4
      %v2299 = vshll.u32 %v1920, 16
      %v2301 = vrot.slane %v2299, 5
      %v2302 = vsel %vm1213, %v2297, %v2301
      %v2303 = vshrl.u32 %v1920, 16
      %v2305 = vrot.slane %v2303, 4
      %v2306 = vor.u32 %v2305, %v2301
      %v2307 = vrot.slane %v2306, 4
      %v2309 = vshll.u32 %v1921, 16
      %v2311 = vrot.slane %v2309, 5
      %v2312 = vsel %vm1213, %v2307, %v2311
      %v2314 = vshrl.u32 %v1922, 16
      %v2316 = vrot.slane %v2314, 4
      %v2317 = vshll.u32 %v1922, 16
      %v2319 = vrot.slane %v2317, 5
      %v2320 = vor.u32 %v2316, %v2319
      %v2321 = vrot.slane %v2320, 4
      %v2323 = vshll.u32 %v1923, 16
      %v2325 = vrot.slane %v2323, 5
      %v2326 = vsel %vm1213, %v2321, %v2325
      %v2327 = vshrl.u32 %v1923, 16
      %v2329 = vrot.slane %v2327, 4
      %v2330 = vor.u32 %v2329, %v2325
      %v2331 = vrot.slane %v2330, 4
      %v2333 = vshll.u32 %v1924, 16
      %v2335 = vrot.slane %v2333, 5
      %v2336 = vsel %vm1213, %v2331, %v2335
      %v2338 = vshrl.u32 %v1925, 16
      %v2340 = vrot.slane %v2338, 4
      %v2341 = vshll.u32 %v1925, 16
      %v2343 = vrot.slane %v2341, 5
      %v2344 = vor.u32 %v2340, %v2343
      %v2345 = vrot.slane %v2344, 4
      %v2347 = vshll.u32 %v1926, 16
      %v2349 = vrot.slane %v2347, 5
      %v2350 = vsel %vm1213, %v2345, %v2349
      %v2351 = vshrl.u32 %v1926, 16
      %v2353 = vrot.slane %v2351, 4
      %v2354 = vor.u32 %v2353, %v2349
      %v2355 = vrot.slane %v2354, 4
      %v2357 = vshll.u32 %v1927, 16
      %v2359 = vrot.slane %v2357, 5
      %v2360 = vsel %vm1213, %v2355, %v2359
      %v2362 = vshrl.u32 %v1928, 16
      %v2364 = vrot.slane %v2362, 4
      %v2365 = vshll.u32 %v1928, 16
      %v2367 = vrot.slane %v2365, 5
      %v2368 = vor.u32 %v2364, %v2367
      %v2369 = vrot.slane %v2368, 4
      %v2371 = vshll.u32 %v1929, 16
      %v2373 = vrot.slane %v2371, 5
      %v2374 = vsel %vm1213, %v2369, %v2373
      %v2375 = vshrl.u32 %v1929, 16
      %v2377 = vrot.slane %v2375, 4
      %v2378 = vor.u32 %v2377, %v2373
      %v2379 = vrot.slane %v2378, 4
      %v2381 = vshll.u32 %v1930, 16
      %v2383 = vrot.slane %v2381, 5
      %v2384 = vsel %vm1213, %v2379, %v2383
      %v2386 = vshrl.u32 %v1931, 16
      %v2388 = vrot.slane %v2386, 4
      %v2389 = vshll.u32 %v1931, 16
      %v2391 = vrot.slane %v2389, 5
      %v2392 = vor.u32 %v2388, %v2391
      %v2393 = vrot.slane %v2392, 4
      %v2395 = vshll.u32 %v1932, 16
      %v2397 = vrot.slane %v2395, 5
      %v2398 = vsel %vm1213, %v2393, %v2397
      %v2399 = vshrl.u32 %v1932, 16
      %v2401 = vrot.slane %v2399, 4
      %v2402 = vor.u32 %v2401, %v2397
      %v2403 = vrot.slane %v2402, 4
      %v2405 = vshll.u32 %v1933, 16
      %v2407 = vrot.slane %v2405, 5
      %v2408 = vsel %vm1213, %v2403, %v2407
      %v2410 = vshrl.u32 %v1934, 16
      %v2412 = vrot.slane %v2410, 4
      %v2413 = vshll.u32 %v1934, 16
      %v2415 = vrot.slane %v2413, 5
      %v2416 = vor.u32 %v2412, %v2415
      %v2417 = vrot.slane %v2416, 4
      %v2419 = vshll.u32 %v1935, 16
      %v2421 = vrot.slane %v2419, 5
      %v2422 = vsel %vm1213, %v2417, %v2421
      %v2423 = vshrl.u32 %v1935, 16
      %v2425 = vrot.slane %v2423, 4
      %v2426 = vor.u32 %v2425, %v2421
      %v2427 = vrot.slane %v2426, 4
      %v2429 = vshll.u32 %v1936, 16
      %v2431 = vrot.slane %v2429, 5
      %v2432 = vsel %vm1213, %v2427, %v2431
      %v2433 = vunpack.c.l.b16 %v2062
      %v2434 = vunpack.c.l.b16 %v2072
      %v2435 = vunpack.c.l.b16 %v2086
      %v2436 = vunpack.c.l.b16 %v2096
      %v2437 = vunpack.c.l.b16 %v2110
      %v2438 = vunpack.c.l.b16 %v2120
      %v2439 = vunpack.c.l.b16 %v2134
      %v2440 = vunpack.c.l.b16 %v2144
      %v2441 = vunpack.c.l.b16 %v2158
      %v2442 = vunpack.c.l.b16 %v2168
      %v2443 = vunpack.c.l.b16 %v2182
      %v2444 = vunpack.c.l.b16 %v2192
      %v2445 = vunpack.c.l.b16 %v2206
      %v2446 = vunpack.c.l.b16 %v2216
      %v2447 = vunpack.c.l.b16 %v2230
      %v2448 = vunpack.c.l.b16 %v2240
      %v2449 = vunpack.c.l.b16 %v2254
      %v2450 = vunpack.c.l.b16 %v2264
      %v2451 = vunpack.c.l.b16 %v2278
      %v2452 = vunpack.c.l.b16 %v2288
      %v2453 = vunpack.c.l.b16 %v2302
      %v2454 = vunpack.c.l.b16 %v2312
      %v2455 = vunpack.c.l.b16 %v2326
      %v2456 = vunpack.c.l.b16 %v2336
      %v2457 = vunpack.c.l.b16 %v2350
      %v2458 = vunpack.c.l.b16 %v2360
      %v2459 = vunpack.c.l.b16 %v2374
      %v2460 = vunpack.c.l.b16 %v2384
      %v2461 = vunpack.c.l.b16 %v2398
      %v2462 = vunpack.c.l.b16 %v2408
      %v2463 = vunpack.c.l.b16 %v2422
      %v2464 = vunpack.c.l.b16 %v2432
      %v2465 = vpack.c.b16 %v2434, %v2433
      %v2466 = vpack.c.b16 %v2436, %v2435
      %v2467 = vpack.c.b16 %v2438, %v2437
      %v2468 = vpack.c.b16 %v2440, %v2439
      %v2469 = vpack.c.b16 %v2442, %v2441
      %v2470 = vpack.c.b16 %v2444, %v2443
      %v2471 = vpack.c.b16 %v2446, %v2445
      %v2472 = vpack.c.b16 %v2448, %v2447
      %v2473 = vpack.c.b16 %v2450, %v2449
      %v2474 = vpack.c.b16 %v2452, %v2451
      %v2475 = vpack.c.b16 %v2454, %v2453
      %v2476 = vpack.c.b16 %v2456, %v2455
      %v2477 = vpack.c.b16 %v2458, %v2457
      %v2478 = vpack.c.b16 %v2460, %v2459
      %v2479 = vpack.c.b16 %v2462, %v2461
      %v2480 = vpack.c.b16 %v2464, %v2463
      %2497 = vst [vmem:[#allocation3 + $0x20] sm:$0xff] %v2465
      %2498 = vst [vmem:[#allocation3 + $0x68] sm:$0xff] %v2466
      %2499 = vst [vmem:[#allocation3 + $0xb0] sm:$0xff] %v2467
      %2500 = vst [vmem:[#allocation3 + $0xf8] sm:$0xff] %v2468
      %2501 = vst [vmem:[#allocation3 + $0x140] sm:$0xff] %v2469
      %2502 = vst [vmem:[#allocation3 + $0x188] sm:$0xff] %v2470
      %2503 = vst [vmem:[#allocation3 + $0x1d0] sm:$0xff] %v2471
      %2504 = vst [vmem:[#allocation3 + $0x218] sm:$0xff] %v2472
      %2505 = vst [vmem:[#allocation3 + $0x260] sm:$0xff] %v2473
      %2506 = vst [vmem:[#allocation3 + $0x2a8] sm:$0xff] %v2474
      %2507 = vst [vmem:[#allocation3 + $0x2f0] sm:$0xff] %v2475
      %2508 = vst [vmem:[#allocation3 + $0x338] sm:$0xff] %v2476
      %2509 = vst [vmem:[#allocation3 + $0x380] sm:$0xff] %v2477
      %2510 = vst [vmem:[#allocation3 + $0x3c8] sm:$0xff] %v2478
      %2511 = vst [vmem:[#allocation3 + $0x410] sm:$0xff] %v2479
      %2512 = vst [vmem:[#allocation3 + $0x458] sm:$0xff] %v2480
      %v2529 = vrot.slane %v1889, 5
      %v2530 = vrot.slane %v2529, 4
      %v2531 = vrot.slane %v1890, 5
      %v2532 = vsel %vm1696, %v2530, %v2531
      %v2533 = vrot.slane %v2531, 4
      %v2534 = vrot.slane %v1891, 5
      %v2535 = vsel %vm1696, %v2533, %v2534
      %v2536 = vrot.slane %v1892, 5
      %v2537 = vrot.slane %v2536, 4
      %v2538 = vrot.slane %v1893, 5
      %v2539 = vsel %vm1696, %v2537, %v2538
      %v2540 = vrot.slane %v2538, 4
      %v2541 = vrot.slane %v1894, 5
      %v2542 = vsel %vm1696, %v2540, %v2541
      %v2543 = vrot.slane %v1895, 5
      %v2544 = vrot.slane %v2543, 4
      %v2545 = vrot.slane %v1896, 5
      %v2546 = vsel %vm1696, %v2544, %v2545
      %v2547 = vrot.slane %v2545, 4
      %v2548 = vrot.slane %v1897, 5
      %v2549 = vsel %vm1696, %v2547, %v2548
      %v2550 = vrot.slane %v1898, 5
      %v2551 = vrot.slane %v2550, 4
      %v2552 = vrot.slane %v1899, 5
      %v2553 = vsel %vm1696, %v2551, %v2552
      %v2554 = vrot.slane %v2552, 4
      %v2555 = vrot.slane %v1900, 5
      %v2556 = vsel %vm1696, %v2554, %v2555
      %v2557 = vrot.slane %v1901, 5
      %v2558 = vrot.slane %v2557, 4
      %v2559 = vrot.slane %v1902, 5
      %v2560 = vsel %vm1696, %v2558, %v2559
      %v2561 = vrot.slane %v2559, 4
      %v2562 = vrot.slane %v1903, 5
      %v2563 = vsel %vm1696, %v2561, %v2562
      %v2564 = vrot.slane %v1904, 5
      %v2565 = vrot.slane %v2564, 4
      %v2566 = vrot.slane %v1905, 5
      %v2567 = vsel %vm1696, %v2565, %v2566
      %v2568 = vrot.slane %v2566, 4
      %v2569 = vrot.slane %v1906, 5
      %v2570 = vsel %vm1696, %v2568, %v2569
      %v2571 = vrot.slane %v1907, 5
      %v2572 = vrot.slane %v2571, 4
      %v2573 = vrot.slane %v1908, 5
      %v2574 = vsel %vm1696, %v2572, %v2573
      %v2575 = vrot.slane %v2573, 4
      %v2576 = vrot.slane %v1909, 5
      %v2577 = vsel %vm1696, %v2575, %v2576
      %v2578 = vrot.slane %v1910, 5
      %v2579 = vrot.slane %v2578, 4
      %v2580 = vrot.slane %v1911, 5
      %v2581 = vsel %vm1696, %v2579, %v2580
      %v2582 = vrot.slane %v2580, 4
      %v2583 = vrot.slane %v1912, 5
      %v2584 = vsel %vm1696, %v2582, %v2583
      %v2585 = vrot.slane %v1913, 5
      %v2586 = vrot.slane %v2585, 4
      %v2587 = vrot.slane %v1914, 5
      %v2588 = vsel %vm1696, %v2586, %v2587
      %v2589 = vrot.slane %v2587, 4
      %v2590 = vrot.slane %v1915, 5
      %v2591 = vsel %vm1696, %v2589, %v2590
      %v2592 = vrot.slane %v1916, 5
      %v2593 = vrot.slane %v2592, 4
      %v2594 = vrot.slane %v1917, 5
      %v2595 = vsel %vm1696, %v2593, %v2594
      %v2596 = vrot.slane %v2594, 4
      %v2597 = vrot.slane %v1918, 5
      %v2598 = vsel %vm1696, %v2596, %v2597
      %v2599 = vrot.slane %v1919, 5
      %v2600 = vrot.slane %v2599, 4
      %v2601 = vrot.slane %v1920, 5
      %v2602 = vsel %vm1696, %v2600, %v2601
      %v2603 = vrot.slane %v2601, 4
      %v2604 = vrot.slane %v1921, 5
      %v2605 = vsel %vm1696, %v2603, %v2604
      %v2606 = vrot.slane %v1922, 5
      %v2607 = vrot.slane %v2606, 4
      %v2608 = vrot.slane %v1923, 5
      %v2609 = vsel %vm1696, %v2607, %v2608
      %v2610 = vrot.slane %v2608, 4
      %v2611 = vrot.slane %v1924, 5
      %v2612 = vsel %vm1696, %v2610, %v2611
      %v2613 = vrot.slane %v1925, 5
      %v2614 = vrot.slane %v2613, 4
      %v2615 = vrot.slane %v1926, 5
      %v2616 = vsel %vm1696, %v2614, %v2615
      %v2617 = vrot.slane %v2615, 4
      %v2618 = vrot.slane %v1927, 5
      %v2619 = vsel %vm1696, %v2617, %v2618
      %v2620 = vrot.slane %v1928, 5
      %v2621 = vrot.slane %v2620, 4
      %v2622 = vrot.slane %v1929, 5
      %v2623 = vsel %vm1696, %v2621, %v2622
      %v2624 = vrot.slane %v2622, 4
      %v2625 = vrot.slane %v1930, 5
      %v2626 = vsel %vm1696, %v2624, %v2625
      %v2627 = vrot.slane %v1931, 5
      %v2628 = vrot.slane %v2627, 4
      %v2629 = vrot.slane %v1932, 5
      %v2630 = vsel %vm1696, %v2628, %v2629
      %v2631 = vrot.slane %v2629, 4
      %v2632 = vrot.slane %v1933, 5
      %v2633 = vsel %vm1696, %v2631, %v2632
      %v2634 = vrot.slane %v1934, 5
      %v2635 = vrot.slane %v2634, 4
      %v2636 = vrot.slane %v1935, 5
      %v2637 = vsel %vm1696, %v2635, %v2636
      %v2638 = vrot.slane %v2636, 4
      %v2639 = vrot.slane %v1936, 5
      %v2640 = vsel %vm1696, %v2638, %v2639
      %v2641 = vunpack.c.l.b16 %v2532
      %v2642 = vunpack.c.l.b16 %v2535
      %v2643 = vunpack.c.l.b16 %v2539
      %v2644 = vunpack.c.l.b16 %v2542
      %v2645 = vunpack.c.l.b16 %v2546
      %v2646 = vunpack.c.l.b16 %v2549
      %v2647 = vunpack.c.l.b16 %v2553
      %v2648 = vunpack.c.l.b16 %v2556
      %v2649 = vunpack.c.l.b16 %v2560
      %v2650 = vunpack.c.l.b16 %v2563
      %v2651 = vunpack.c.l.b16 %v2567
      %v2652 = vunpack.c.l.b16 %v2570
      %v2653 = vunpack.c.l.b16 %v2574
      %v2654 = vunpack.c.l.b16 %v2577
      %v2655 = vunpack.c.l.b16 %v2581
      %v2656 = vunpack.c.l.b16 %v2584
      %v2657 = vunpack.c.l.b16 %v2588
      %v2658 = vunpack.c.l.b16 %v2591
      %v2659 = vunpack.c.l.b16 %v2595
      %v2660 = vunpack.c.l.b16 %v2598
      %v2661 = vunpack.c.l.b16 %v2602
      %v2662 = vunpack.c.l.b16 %v2605
      %v2663 = vunpack.c.l.b16 %v2609
      %v2664 = vunpack.c.l.b16 %v2612
      %v2665 = vunpack.c.l.b16 %v2616
      %v2666 = vunpack.c.l.b16 %v2619
      %v2667 = vunpack.c.l.b16 %v2623
      %v2668 = vunpack.c.l.b16 %v2626
      %v2669 = vunpack.c.l.b16 %v2630
      %v2670 = vunpack.c.l.b16 %v2633
      %v2671 = vunpack.c.l.b16 %v2637
      %v2672 = vunpack.c.l.b16 %v2640
      %v2673 = vpack.c.b16 %v2642, %v2641
      %v2674 = vpack.c.b16 %v2644, %v2643
      %v2675 = vpack.c.b16 %v2646, %v2645
      %v2676 = vpack.c.b16 %v2648, %v2647
      %v2677 = vpack.c.b16 %v2650, %v2649
      %v2678 = vpack.c.b16 %v2652, %v2651
      %v2679 = vpack.c.b16 %v2654, %v2653
      %v2680 = vpack.c.b16 %v2656, %v2655
      %v2681 = vpack.c.b16 %v2658, %v2657
      %v2682 = vpack.c.b16 %v2660, %v2659
      %v2683 = vpack.c.b16 %v2662, %v2661
      %v2684 = vpack.c.b16 %v2664, %v2663
      %v2685 = vpack.c.b16 %v2666, %v2665
      %v2686 = vpack.c.b16 %v2668, %v2667
      %v2687 = vpack.c.b16 %v2670, %v2669
      %v2688 = vpack.c.b16 %v2672, %v2671
      %2705 = vst [vmem:[#allocation3 + $0x28] sm:$0xff] %v2673
      %2706 = vst [vmem:[#allocation3 + $0x70] sm:$0xff] %v2674
      %2707 = vst [vmem:[#allocation3 + $0xb8] sm:$0xff] %v2675
      %2708 = vst [vmem:[#allocation3 + $0x100] sm:$0xff] %v2676
      %2709 = vst [vmem:[#allocation3 + $0x148] sm:$0xff] %v2677
      %2710 = vst [vmem:[#allocation3 + $0x190] sm:$0xff] %v2678
      %2711 = vst [vmem:[#allocation3 + $0x1d8] sm:$0xff] %v2679
      %2712 = vst [vmem:[#allocation3 + $0x220] sm:$0xff] %v2680
      %2713 = vst [vmem:[#allocation3 + $0x268] sm:$0xff] %v2681
      %2714 = vst [vmem:[#allocation3 + $0x2b0] sm:$0xff] %v2682
      %2715 = vst [vmem:[#allocation3 + $0x2f8] sm:$0xff] %v2683
      %2716 = vst [vmem:[#allocation3 + $0x340] sm:$0xff] %v2684
      %2717 = vst [vmem:[#allocation3 + $0x388] sm:$0xff] %v2685
      %2718 = vst [vmem:[#allocation3 + $0x3d0] sm:$0xff] %v2686
      %2719 = vst [vmem:[#allocation3 + $0x418] sm:$0xff] %v2687
      %2720 = vst [vmem:[#allocation3 + $0x460] sm:$0xff] %v2688
      %s2721 = scalar_lea.vmem [#allocation2], 24
      %v2722 = vld [vmem:[%s2721] sm:$0xf]
      %v2723 = vld [vmem:[%s2721 + $0x4] sm:$0xf]
      %v2724 = vld [vmem:[%s2721 + $0x8] sm:$0xf]
      %v2725 = vld [vmem:[%s2721 + $0xc] sm:$0xf]
      %v2726 = vld [vmem:[%s2721 + $0x10] sm:$0xf]
      %v2727 = vld [vmem:[%s2721 + $0x14] sm:$0xf]
      %v2728 = vld [vmem:[%s2721 + $0x18] sm:$0xf]
      %v2729 = vld [vmem:[%s2721 + $0x1c] sm:$0xf]
      %v2730 = vld [vmem:[%s2721 + $0x20] sm:$0xf]
      %v2731 = vld [vmem:[%s2721 + $0x24] sm:$0xf]
      %v2732 = vld [vmem:[%s2721 + $0x28] sm:$0xf]
      %v2733 = vld [vmem:[%s2721 + $0x2c] sm:$0xf]
      %v2734 = vld [vmem:[%s2721 + $0x30] sm:$0xf]
      %v2735 = vld [vmem:[%s2721 + $0x34] sm:$0xf]
      %v2736 = vld [vmem:[%s2721 + $0x38] sm:$0xf]
      %v2737 = vld [vmem:[%s2721 + $0x3c] sm:$0xf]
      %v2738 = vld [vmem:[%s2721 + $0x40] sm:$0xf]
      %v2739 = vld [vmem:[%s2721 + $0x44] sm:$0xf]
      %v2740 = vld [vmem:[%s2721 + $0x48] sm:$0xf]
      %v2741 = vld [vmem:[%s2721 + $0x4c] sm:$0xf]
      %v2742 = vld [vmem:[%s2721 + $0x50] sm:$0xf]
      %v2743 = vld [vmem:[%s2721 + $0x54] sm:$0xf]
      %v2744 = vld [vmem:[%s2721 + $0x58] sm:$0xf]
      %v2745 = vld [vmem:[%s2721 + $0x5c] sm:$0xf]
      %v2746 = vld [vmem:[%s2721 + $0x60] sm:$0xf]
      %v2747 = vld [vmem:[%s2721 + $0x64] sm:$0xf]
      %v2748 = vld [vmem:[%s2721 + $0x68] sm:$0xf]
      %v2749 = vld [vmem:[%s2721 + $0x6c] sm:$0xf]
      %v2750 = vld [vmem:[%s2721 + $0x70] sm:$0xf]
      %v2751 = vld [vmem:[%s2721 + $0x74] sm:$0xf]
      %v2752 = vld [vmem:[%s2721 + $0x78] sm:$0xf]
      %v2753 = vld [vmem:[%s2721 + $0x7c] sm:$0xf]
      %v2754 = vld [vmem:[%s2721 + $0x80] sm:$0xf]
      %v2755 = vld [vmem:[%s2721 + $0x84] sm:$0xf]
      %v2756 = vld [vmem:[%s2721 + $0x88] sm:$0xf]
      %v2757 = vld [vmem:[%s2721 + $0x8c] sm:$0xf]
      %v2758 = vld [vmem:[%s2721 + $0x90] sm:$0xf]
      %v2759 = vld [vmem:[%s2721 + $0x94] sm:$0xf]
      %v2760 = vld [vmem:[%s2721 + $0x98] sm:$0xf]
      %v2761 = vld [vmem:[%s2721 + $0x9c] sm:$0xf]
      %v2762 = vld [vmem:[%s2721 + $0xa0] sm:$0xf]
      %v2763 = vld [vmem:[%s2721 + $0xa4] sm:$0xf]
      %v2764 = vld [vmem:[%s2721 + $0xa8] sm:$0xf]
      %v2765 = vld [vmem:[%s2721 + $0xac] sm:$0xf]
      %v2766 = vld [vmem:[%s2721 + $0xb0] sm:$0xf]
      %v2767 = vld [vmem:[%s2721 + $0xb4] sm:$0xf]
      %v2768 = vld [vmem:[%s2721 + $0xb8] sm:$0xf]
      %v2769 = vld [vmem:[%s2721 + $0xbc] sm:$0xf]
      %v2802 = vunpack.c.l.b16 %v2722
      %v2803 = vunpack.c.l.b16 %v2723
      %v2804 = vunpack.c.l.b16 %v2725
      %v2805 = vunpack.c.l.b16 %v2726
      %v2806 = vunpack.c.l.b16 %v2728
      %v2807 = vunpack.c.l.b16 %v2729
      %v2808 = vunpack.c.l.b16 %v2731
      %v2809 = vunpack.c.l.b16 %v2732
      %v2810 = vunpack.c.l.b16 %v2734
      %v2811 = vunpack.c.l.b16 %v2735
      %v2812 = vunpack.c.l.b16 %v2737
      %v2813 = vunpack.c.l.b16 %v2738
      %v2814 = vunpack.c.l.b16 %v2740
      %v2815 = vunpack.c.l.b16 %v2741
      %v2816 = vunpack.c.l.b16 %v2743
      %v2817 = vunpack.c.l.b16 %v2744
      %v2818 = vunpack.c.l.b16 %v2746
      %v2819 = vunpack.c.l.b16 %v2747
      %v2820 = vunpack.c.l.b16 %v2749
      %v2821 = vunpack.c.l.b16 %v2750
      %v2822 = vunpack.c.l.b16 %v2752
      %v2823 = vunpack.c.l.b16 %v2753
      %v2824 = vunpack.c.l.b16 %v2755
      %v2825 = vunpack.c.l.b16 %v2756
      %v2826 = vunpack.c.l.b16 %v2758
      %v2827 = vunpack.c.l.b16 %v2759
      %v2828 = vunpack.c.l.b16 %v2761
      %v2829 = vunpack.c.l.b16 %v2762
      %v2830 = vunpack.c.l.b16 %v2764
      %v2831 = vunpack.c.l.b16 %v2765
      %v2832 = vunpack.c.l.b16 %v2767
      %v2833 = vunpack.c.l.b16 %v2768
      %v2834 = vpack.c.b16 %v2803, %v2802
      %v2835 = vpack.c.b16 %v2805, %v2804
      %v2836 = vpack.c.b16 %v2807, %v2806
      %v2837 = vpack.c.b16 %v2809, %v2808
      %v2838 = vpack.c.b16 %v2811, %v2810
      %v2839 = vpack.c.b16 %v2813, %v2812
      %v2840 = vpack.c.b16 %v2815, %v2814
      %v2841 = vpack.c.b16 %v2817, %v2816
      %v2842 = vpack.c.b16 %v2819, %v2818
      %v2843 = vpack.c.b16 %v2821, %v2820
      %v2844 = vpack.c.b16 %v2823, %v2822
      %v2845 = vpack.c.b16 %v2825, %v2824
      %v2846 = vpack.c.b16 %v2827, %v2826
      %v2847 = vpack.c.b16 %v2829, %v2828
      %v2848 = vpack.c.b16 %v2831, %v2830
      %v2849 = vpack.c.b16 %v2833, %v2832
      %2866 = vst [vmem:[#allocation3 + $0x30] sm:$0xff] %v2834
      %2867 = vst [vmem:[#allocation3 + $0x78] sm:$0xff] %v2835
      %2868 = vst [vmem:[#allocation3 + $0xc0] sm:$0xff] %v2836
      %2869 = vst [vmem:[#allocation3 + $0x108] sm:$0xff] %v2837
      %2870 = vst [vmem:[#allocation3 + $0x150] sm:$0xff] %v2838
      %2871 = vst [vmem:[#allocation3 + $0x198] sm:$0xff] %v2839
      %2872 = vst [vmem:[#allocation3 + $0x1e0] sm:$0xff] %v2840
      %2873 = vst [vmem:[#allocation3 + $0x228] sm:$0xff] %v2841
      %2874 = vst [vmem:[#allocation3 + $0x270] sm:$0xff] %v2842
      %2875 = vst [vmem:[#allocation3 + $0x2b8] sm:$0xff] %v2843
      %2876 = vst [vmem:[#allocation3 + $0x300] sm:$0xff] %v2844
      %2877 = vst [vmem:[#allocation3 + $0x348] sm:$0xff] %v2845
      %2878 = vst [vmem:[#allocation3 + $0x390] sm:$0xff] %v2846
      %2879 = vst [vmem:[#allocation3 + $0x3d8] sm:$0xff] %v2847
      %2880 = vst [vmem:[#allocation3 + $0x420] sm:$0xff] %v2848
      %2881 = vst [vmem:[#allocation3 + $0x468] sm:$0xff] %v2849
      %v2883 = vshrl.u32 %v2722, 16
      %v2885 = vrot.slane %v2883, 4
      %v2886 = vshll.u32 %v2722, 16
      %v2888 = vrot.slane %v2886, 5
      %v2889 = vor.u32 %v2885, %v2888
      %v2890 = vrot.slane %v2889, 4
      %v2892 = vshll.u32 %v2723, 16
      %v2894 = vrot.slane %v2892, 5
      %v2895 = vsel %vm1213, %v2890, %v2894
      %v2896 = vshrl.u32 %v2723, 16
      %v2898 = vrot.slane %v2896, 4
      %v2899 = vor.u32 %v2898, %v2894
      %v2900 = vrot.slane %v2899, 4
      %v2902 = vshll.u32 %v2724, 16
      %v2904 = vrot.slane %v2902, 5
      %v2905 = vsel %vm1213, %v2900, %v2904
      %v2907 = vshrl.u32 %v2725, 16
      %v2909 = vrot.slane %v2907, 4
      %v2910 = vshll.u32 %v2725, 16
      %v2912 = vrot.slane %v2910, 5
      %v2913 = vor.u32 %v2909, %v2912
      %v2914 = vrot.slane %v2913, 4
      %v2916 = vshll.u32 %v2726, 16
      %v2918 = vrot.slane %v2916, 5
      %v2919 = vsel %vm1213, %v2914, %v2918
      %v2920 = vshrl.u32 %v2726, 16
      %v2922 = vrot.slane %v2920, 4
      %v2923 = vor.u32 %v2922, %v2918
      %v2924 = vrot.slane %v2923, 4
      %v2926 = vshll.u32 %v2727, 16
      %v2928 = vrot.slane %v2926, 5
      %v2929 = vsel %vm1213, %v2924, %v2928
      %v2931 = vshrl.u32 %v2728, 16
      %v2933 = vrot.slane %v2931, 4
      %v2934 = vshll.u32 %v2728, 16
      %v2936 = vrot.slane %v2934, 5
      %v2937 = vor.u32 %v2933, %v2936
      %v2938 = vrot.slane %v2937, 4
      %v2940 = vshll.u32 %v2729, 16
      %v2942 = vrot.slane %v2940, 5
      %v2943 = vsel %vm1213, %v2938, %v2942
      %v2944 = vshrl.u32 %v2729, 16
      %v2946 = vrot.slane %v2944, 4
      %v2947 = vor.u32 %v2946, %v2942
      %v2948 = vrot.slane %v2947, 4
      %v2950 = vshll.u32 %v2730, 16
      %v2952 = vrot.slane %v2950, 5
      %v2953 = vsel %vm1213, %v2948, %v2952
      %v2955 = vshrl.u32 %v2731, 16
      %v2957 = vrot.slane %v2955, 4
      %v2958 = vshll.u32 %v2731, 16
      %v2960 = vrot.slane %v2958, 5
      %v2961 = vor.u32 %v2957, %v2960
      %v2962 = vrot.slane %v2961, 4
      %v2964 = vshll.u32 %v2732, 16
      %v2966 = vrot.slane %v2964, 5
      %v2967 = vsel %vm1213, %v2962, %v2966
      %v2968 = vshrl.u32 %v2732, 16
      %v2970 = vrot.slane %v2968, 4
      %v2971 = vor.u32 %v2970, %v2966
      %v2972 = vrot.slane %v2971, 4
      %v2974 = vshll.u32 %v2733, 16
      %v2976 = vrot.slane %v2974, 5
      %v2977 = vsel %vm1213, %v2972, %v2976
      %v2979 = vshrl.u32 %v2734, 16
      %v2981 = vrot.slane %v2979, 4
      %v2982 = vshll.u32 %v2734, 16
      %v2984 = vrot.slane %v2982, 5
      %v2985 = vor.u32 %v2981, %v2984
      %v2986 = vrot.slane %v2985, 4
      %v2988 = vshll.u32 %v2735, 16
      %v2990 = vrot.slane %v2988, 5
      %v2991 = vsel %vm1213, %v2986, %v2990
      %v2992 = vshrl.u32 %v2735, 16
      %v2994 = vrot.slane %v2992, 4
      %v2995 = vor.u32 %v2994, %v2990
      %v2996 = vrot.slane %v2995, 4
      %v2998 = vshll.u32 %v2736, 16
      %v3000 = vrot.slane %v2998, 5
      %v3001 = vsel %vm1213, %v2996, %v3000
      %v3003 = vshrl.u32 %v2737, 16
      %v3005 = vrot.slane %v3003, 4
      %v3006 = vshll.u32 %v2737, 16
      %v3008 = vrot.slane %v3006, 5
      %v3009 = vor.u32 %v3005, %v3008
      %v3010 = vrot.slane %v3009, 4
      %v3012 = vshll.u32 %v2738, 16
      %v3014 = vrot.slane %v3012, 5
      %v3015 = vsel %vm1213, %v3010, %v3014
      %v3016 = vshrl.u32 %v2738, 16
      %v3018 = vrot.slane %v3016, 4
      %v3019 = vor.u32 %v3018, %v3014
      %v3020 = vrot.slane %v3019, 4
      %v3022 = vshll.u32 %v2739, 16
      %v3024 = vrot.slane %v3022, 5
      %v3025 = vsel %vm1213, %v3020, %v3024
      %v3027 = vshrl.u32 %v2740, 16
      %v3029 = vrot.slane %v3027, 4
      %v3030 = vshll.u32 %v2740, 16
      %v3032 = vrot.slane %v3030, 5
      %v3033 = vor.u32 %v3029, %v3032
      %v3034 = vrot.slane %v3033, 4
      %v3036 = vshll.u32 %v2741, 16
      %v3038 = vrot.slane %v3036, 5
      %v3039 = vsel %vm1213, %v3034, %v3038
      %v3040 = vshrl.u32 %v2741, 16
      %v3042 = vrot.slane %v3040, 4
      %v3043 = vor.u32 %v3042, %v3038
      %v3044 = vrot.slane %v3043, 4
      %v3046 = vshll.u32 %v2742, 16
      %v3048 = vrot.slane %v3046, 5
      %v3049 = vsel %vm1213, %v3044, %v3048
      %v3051 = vshrl.u32 %v2743, 16
      %v3053 = vrot.slane %v3051, 4
      %v3054 = vshll.u32 %v2743, 16
      %v3056 = vrot.slane %v3054, 5
      %v3057 = vor.u32 %v3053, %v3056
      %v3058 = vrot.slane %v3057, 4
      %v3060 = vshll.u32 %v2744, 16
      %v3062 = vrot.slane %v3060, 5
      %v3063 = vsel %vm1213, %v3058, %v3062
      %v3064 = vshrl.u32 %v2744, 16
      %v3066 = vrot.slane %v3064, 4
      %v3067 = vor.u32 %v3066, %v3062
      %v3068 = vrot.slane %v3067, 4
      %v3070 = vshll.u32 %v2745, 16
      %v3072 = vrot.slane %v3070, 5
      %v3073 = vsel %vm1213, %v3068, %v3072
      %v3075 = vshrl.u32 %v2746, 16
      %v3077 = vrot.slane %v3075, 4
      %v3078 = vshll.u32 %v2746, 16
      %v3080 = vrot.slane %v3078, 5
      %v3081 = vor.u32 %v3077, %v3080
      %v3082 = vrot.slane %v3081, 4
      %v3084 = vshll.u32 %v2747, 16
      %v3086 = vrot.slane %v3084, 5
      %v3087 = vsel %vm1213, %v3082, %v3086
      %v3088 = vshrl.u32 %v2747, 16
      %v3090 = vrot.slane %v3088, 4
      %v3091 = vor.u32 %v3090, %v3086
      %v3092 = vrot.slane %v3091, 4
      %v3094 = vshll.u32 %v2748, 16
      %v3096 = vrot.slane %v3094, 5
      %v3097 = vsel %vm1213, %v3092, %v3096
      %v3099 = vshrl.u32 %v2749, 16
      %v3101 = vrot.slane %v3099, 4
      %v3102 = vshll.u32 %v2749, 16
      %v3104 = vrot.slane %v3102, 5
      %v3105 = vor.u32 %v3101, %v3104
      %v3106 = vrot.slane %v3105, 4
      %v3108 = vshll.u32 %v2750, 16
      %v3110 = vrot.slane %v3108, 5
      %v3111 = vsel %vm1213, %v3106, %v3110
      %v3112 = vshrl.u32 %v2750, 16
      %v3114 = vrot.slane %v3112, 4
      %v3115 = vor.u32 %v3114, %v3110
      %v3116 = vrot.slane %v3115, 4
      %v3118 = vshll.u32 %v2751, 16
      %v3120 = vrot.slane %v3118, 5
      %v3121 = vsel %vm1213, %v3116, %v3120
      %v3123 = vshrl.u32 %v2752, 16
      %v3125 = vrot.slane %v3123, 4
      %v3126 = vshll.u32 %v2752, 16
      %v3128 = vrot.slane %v3126, 5
      %v3129 = vor.u32 %v3125, %v3128
      %v3130 = vrot.slane %v3129, 4
      %v3132 = vshll.u32 %v2753, 16
      %v3134 = vrot.slane %v3132, 5
      %v3135 = vsel %vm1213, %v3130, %v3134
      %v3136 = vshrl.u32 %v2753, 16
      %v3138 = vrot.slane %v3136, 4
      %v3139 = vor.u32 %v3138, %v3134
      %v3140 = vrot.slane %v3139, 4
      %v3142 = vshll.u32 %v2754, 16
      %v3144 = vrot.slane %v3142, 5
      %v3145 = vsel %vm1213, %v3140, %v3144
      %v3147 = vshrl.u32 %v2755, 16
      %v3149 = vrot.slane %v3147, 4
      %v3150 = vshll.u32 %v2755, 16
      %v3152 = vrot.slane %v3150, 5
      %v3153 = vor.u32 %v3149, %v3152
      %v3154 = vrot.slane %v3153, 4
      %v3156 = vshll.u32 %v2756, 16
      %v3158 = vrot.slane %v3156, 5
      %v3159 = vsel %vm1213, %v3154, %v3158
      %v3160 = vshrl.u32 %v2756, 16
      %v3162 = vrot.slane %v3160, 4
      %v3163 = vor.u32 %v3162, %v3158
      %v3164 = vrot.slane %v3163, 4
      %v3166 = vshll.u32 %v2757, 16
      %v3168 = vrot.slane %v3166, 5
      %v3169 = vsel %vm1213, %v3164, %v3168
      %v3171 = vshrl.u32 %v2758, 16
      %v3173 = vrot.slane %v3171, 4
      %v3174 = vshll.u32 %v2758, 16
      %v3176 = vrot.slane %v3174, 5
      %v3177 = vor.u32 %v3173, %v3176
      %v3178 = vrot.slane %v3177, 4
      %v3180 = vshll.u32 %v2759, 16
      %v3182 = vrot.slane %v3180, 5
      %v3183 = vsel %vm1213, %v3178, %v3182
      %v3184 = vshrl.u32 %v2759, 16
      %v3186 = vrot.slane %v3184, 4
      %v3187 = vor.u32 %v3186, %v3182
      %v3188 = vrot.slane %v3187, 4
      %v3190 = vshll.u32 %v2760, 16
      %v3192 = vrot.slane %v3190, 5
      %v3193 = vsel %vm1213, %v3188, %v3192
      %v3195 = vshrl.u32 %v2761, 16
      %v3197 = vrot.slane %v3195, 4
      %v3198 = vshll.u32 %v2761, 16
      %v3200 = vrot.slane %v3198, 5
      %v3201 = vor.u32 %v3197, %v3200
      %v3202 = vrot.slane %v3201, 4
      %v3204 = vshll.u32 %v2762, 16
      %v3206 = vrot.slane %v3204, 5
      %v3207 = vsel %vm1213, %v3202, %v3206
      %v3208 = vshrl.u32 %v2762, 16
      %v3210 = vrot.slane %v3208, 4
      %v3211 = vor.u32 %v3210, %v3206
      %v3212 = vrot.slane %v3211, 4
      %v3214 = vshll.u32 %v2763, 16
      %v3216 = vrot.slane %v3214, 5
      %v3217 = vsel %vm1213, %v3212, %v3216
      %v3219 = vshrl.u32 %v2764, 16
      %v3221 = vrot.slane %v3219, 4
      %v3222 = vshll.u32 %v2764, 16
      %v3224 = vrot.slane %v3222, 5
      %v3225 = vor.u32 %v3221, %v3224
      %v3226 = vrot.slane %v3225, 4
      %v3228 = vshll.u32 %v2765, 16
      %v3230 = vrot.slane %v3228, 5
      %v3231 = vsel %vm1213, %v3226, %v3230
      %v3232 = vshrl.u32 %v2765, 16
      %v3234 = vrot.slane %v3232, 4
      %v3235 = vor.u32 %v3234, %v3230
      %v3236 = vrot.slane %v3235, 4
      %v3238 = vshll.u32 %v2766, 16
      %v3240 = vrot.slane %v3238, 5
      %v3241 = vsel %vm1213, %v3236, %v3240
      %v3243 = vshrl.u32 %v2767, 16
      %v3245 = vrot.slane %v3243, 4
      %v3246 = vshll.u32 %v2767, 16
      %v3248 = vrot.slane %v3246, 5
      %v3249 = vor.u32 %v3245, %v3248
      %v3250 = vrot.slane %v3249, 4
      %v3252 = vshll.u32 %v2768, 16
      %v3254 = vrot.slane %v3252, 5
      %v3255 = vsel %vm1213, %v3250, %v3254
      %v3256 = vshrl.u32 %v2768, 16
      %v3258 = vrot.slane %v3256, 4
      %v3259 = vor.u32 %v3258, %v3254
      %v3260 = vrot.slane %v3259, 4
      %v3262 = vshll.u32 %v2769, 16
      %v3264 = vrot.slane %v3262, 5
      %v3265 = vsel %vm1213, %v3260, %v3264
      %v3266 = vunpack.c.l.b16 %v2895
      %v3267 = vunpack.c.l.b16 %v2905
      %v3268 = vunpack.c.l.b16 %v2919
      %v3269 = vunpack.c.l.b16 %v2929
      %v3270 = vunpack.c.l.b16 %v2943
      %v3271 = vunpack.c.l.b16 %v2953
      %v3272 = vunpack.c.l.b16 %v2967
      %v3273 = vunpack.c.l.b16 %v2977
      %v3274 = vunpack.c.l.b16 %v2991
      %v3275 = vunpack.c.l.b16 %v3001
      %v3276 = vunpack.c.l.b16 %v3015
      %v3277 = vunpack.c.l.b16 %v3025
      %v3278 = vunpack.c.l.b16 %v3039
      %v3279 = vunpack.c.l.b16 %v3049
      %v3280 = vunpack.c.l.b16 %v3063
      %v3281 = vunpack.c.l.b16 %v3073
      %v3282 = vunpack.c.l.b16 %v3087
      %v3283 = vunpack.c.l.b16 %v3097
      %v3284 = vunpack.c.l.b16 %v3111
      %v3285 = vunpack.c.l.b16 %v3121
      %v3286 = vunpack.c.l.b16 %v3135
      %v3287 = vunpack.c.l.b16 %v3145
      %v3288 = vunpack.c.l.b16 %v3159
      %v3289 = vunpack.c.l.b16 %v3169
      %v3290 = vunpack.c.l.b16 %v3183
      %v3291 = vunpack.c.l.b16 %v3193
      %v3292 = vunpack.c.l.b16 %v3207
      %v3293 = vunpack.c.l.b16 %v3217
      %v3294 = vunpack.c.l.b16 %v3231
      %v3295 = vunpack.c.l.b16 %v3241
      %v3296 = vunpack.c.l.b16 %v3255
      %v3297 = vunpack.c.l.b16 %v3265
      %v3298 = vpack.c.b16 %v3267, %v3266
      %v3299 = vpack.c.b16 %v3269, %v3268
      %v3300 = vpack.c.b16 %v3271, %v3270
      %v3301 = vpack.c.b16 %v3273, %v3272
      %v3302 = vpack.c.b16 %v3275, %v3274
      %v3303 = vpack.c.b16 %v3277, %v3276
      %v3304 = vpack.c.b16 %v3279, %v3278
      %v3305 = vpack.c.b16 %v3281, %v3280
      %v3306 = vpack.c.b16 %v3283, %v3282
      %v3307 = vpack.c.b16 %v3285, %v3284
      %v3308 = vpack.c.b16 %v3287, %v3286
      %v3309 = vpack.c.b16 %v3289, %v3288
      %v3310 = vpack.c.b16 %v3291, %v3290
      %v3311 = vpack.c.b16 %v3293, %v3292
      %v3312 = vpack.c.b16 %v3295, %v3294
      %v3313 = vpack.c.b16 %v3297, %v3296
      %3330 = vst [vmem:[#allocation3 + $0x38] sm:$0xff] %v3298
      %3331 = vst [vmem:[#allocation3 + $0x80] sm:$0xff] %v3299
      %3332 = vst [vmem:[#allocation3 + $0xc8] sm:$0xff] %v3300
      %3333 = vst [vmem:[#allocation3 + $0x110] sm:$0xff] %v3301
      %3334 = vst [vmem:[#allocation3 + $0x158] sm:$0xff] %v3302
      %3335 = vst [vmem:[#allocation3 + $0x1a0] sm:$0xff] %v3303
      %3336 = vst [vmem:[#allocation3 + $0x1e8] sm:$0xff] %v3304
      %3337 = vst [vmem:[#allocation3 + $0x230] sm:$0xff] %v3305
      %3338 = vst [vmem:[#allocation3 + $0x278] sm:$0xff] %v3306
      %3339 = vst [vmem:[#allocation3 + $0x2c0] sm:$0xff] %v3307
      %3340 = vst [vmem:[#allocation3 + $0x308] sm:$0xff] %v3308
      %3341 = vst [vmem:[#allocation3 + $0x350] sm:$0xff] %v3309
      %3342 = vst [vmem:[#allocation3 + $0x398] sm:$0xff] %v3310
      %3343 = vst [vmem:[#allocation3 + $0x3e0] sm:$0xff] %v3311
      %3344 = vst [vmem:[#allocation3 + $0x428] sm:$0xff] %v3312
      %3345 = vst [vmem:[#allocation3 + $0x470] sm:$0xff] %v3313
      %v3362 = vrot.slane %v2722, 5
      %v3363 = vrot.slane %v3362, 4
      %v3364 = vrot.slane %v2723, 5
      %v3365 = vsel %vm1696, %v3363, %v3364
      %v3366 = vrot.slane %v3364, 4
      %v3367 = vrot.slane %v2724, 5
      %v3368 = vsel %vm1696, %v3366, %v3367
      %v3369 = vrot.slane %v2725, 5
      %v3370 = vrot.slane %v3369, 4
      %v3371 = vrot.slane %v2726, 5
      %v3372 = vsel %vm1696, %v3370, %v3371
      %v3373 = vrot.slane %v3371, 4
      %v3374 = vrot.slane %v2727, 5
      %v3375 = vsel %vm1696, %v3373, %v3374
      %v3376 = vrot.slane %v2728, 5
      %v3377 = vrot.slane %v3376, 4
      %v3378 = vrot.slane %v2729, 5
      %v3379 = vsel %vm1696, %v3377, %v3378
      %v3380 = vrot.slane %v3378, 4
      %v3381 = vrot.slane %v2730, 5
      %v3382 = vsel %vm1696, %v3380, %v3381
      %v3383 = vrot.slane %v2731, 5
      %v3384 = vrot.slane %v3383, 4
      %v3385 = vrot.slane %v2732, 5
      %v3386 = vsel %vm1696, %v3384, %v3385
      %v3387 = vrot.slane %v3385, 4
      %v3388 = vrot.slane %v2733, 5
      %v3389 = vsel %vm1696, %v3387, %v3388
      %v3390 = vrot.slane %v2734, 5
      %v3391 = vrot.slane %v3390, 4
      %v3392 = vrot.slane %v2735, 5
      %v3393 = vsel %vm1696, %v3391, %v3392
      %v3394 = vrot.slane %v3392, 4
      %v3395 = vrot.slane %v2736, 5
      %v3396 = vsel %vm1696, %v3394, %v3395
      %v3397 = vrot.slane %v2737, 5
      %v3398 = vrot.slane %v3397, 4
      %v3399 = vrot.slane %v2738, 5
      %v3400 = vsel %vm1696, %v3398, %v3399
      %v3401 = vrot.slane %v3399, 4
      %v3402 = vrot.slane %v2739, 5
      %v3403 = vsel %vm1696, %v3401, %v3402
      %v3404 = vrot.slane %v2740, 5
      %v3405 = vrot.slane %v3404, 4
      %v3406 = vrot.slane %v2741, 5
      %v3407 = vsel %vm1696, %v3405, %v3406
      %v3408 = vrot.slane %v3406, 4
      %v3409 = vrot.slane %v2742, 5
      %v3410 = vsel %vm1696, %v3408, %v3409
      %v3411 = vrot.slane %v2743, 5
      %v3412 = vrot.slane %v3411, 4
      %v3413 = vrot.slane %v2744, 5
      %v3414 = vsel %vm1696, %v3412, %v3413
      %v3415 = vrot.slane %v3413, 4
      %v3416 = vrot.slane %v2745, 5
      %v3417 = vsel %vm1696, %v3415, %v3416
      %v3418 = vrot.slane %v2746, 5
      %v3419 = vrot.slane %v3418, 4
      %v3420 = vrot.slane %v2747, 5
      %v3421 = vsel %vm1696, %v3419, %v3420
      %v3422 = vrot.slane %v3420, 4
      %v3423 = vrot.slane %v2748, 5
      %v3424 = vsel %vm1696, %v3422, %v3423
      %v3425 = vrot.slane %v2749, 5
      %v3426 = vrot.slane %v3425, 4
      %v3427 = vrot.slane %v2750, 5
      %v3428 = vsel %vm1696, %v3426, %v3427
      %v3429 = vrot.slane %v3427, 4
      %v3430 = vrot.slane %v2751, 5
      %v3431 = vsel %vm1696, %v3429, %v3430
      %v3432 = vrot.slane %v2752, 5
      %v3433 = vrot.slane %v3432, 4
      %v3434 = vrot.slane %v2753, 5
      %v3435 = vsel %vm1696, %v3433, %v3434
      %v3436 = vrot.slane %v3434, 4
      %v3437 = vrot.slane %v2754, 5
      %v3438 = vsel %vm1696, %v3436, %v3437
      %v3439 = vrot.slane %v2755, 5
      %v3440 = vrot.slane %v3439, 4
      %v3441 = vrot.slane %v2756, 5
      %v3442 = vsel %vm1696, %v3440, %v3441
      %v3443 = vrot.slane %v3441, 4
      %v3444 = vrot.slane %v2757, 5
      %v3445 = vsel %vm1696, %v3443, %v3444
      %v3446 = vrot.slane %v2758, 5
      %v3447 = vrot.slane %v3446, 4
      %v3448 = vrot.slane %v2759, 5
      %v3449 = vsel %vm1696, %v3447, %v3448
      %v3450 = vrot.slane %v3448, 4
      %v3451 = vrot.slane %v2760, 5
      %v3452 = vsel %vm1696, %v3450, %v3451
      %v3453 = vrot.slane %v2761, 5
      %v3454 = vrot.slane %v3453, 4
      %v3455 = vrot.slane %v2762, 5
      %v3456 = vsel %vm1696, %v3454, %v3455
      %v3457 = vrot.slane %v3455, 4
      %v3458 = vrot.slane %v2763, 5
      %v3459 = vsel %vm1696, %v3457, %v3458
      %v3460 = vrot.slane %v2764, 5
      %v3461 = vrot.slane %v3460, 4
      %v3462 = vrot.slane %v2765, 5
      %v3463 = vsel %vm1696, %v3461, %v3462
      %v3464 = vrot.slane %v3462, 4
      %v3465 = vrot.slane %v2766, 5
      %v3466 = vsel %vm1696, %v3464, %v3465
      %v3467 = vrot.slane %v2767, 5
      %v3468 = vrot.slane %v3467, 4
      %v3469 = vrot.slane %v2768, 5
      %v3470 = vsel %vm1696, %v3468, %v3469
      %v3471 = vrot.slane %v3469, 4
      %v3472 = vrot.slane %v2769, 5
      %v3473 = vsel %vm1696, %v3471, %v3472
      %v3474 = vunpack.c.l.b16 %v3365
      %v3475 = vunpack.c.l.b16 %v3368
      %v3476 = vunpack.c.l.b16 %v3372
      %v3477 = vunpack.c.l.b16 %v3375
      %v3478 = vunpack.c.l.b16 %v3379
      %v3479 = vunpack.c.l.b16 %v3382
      %v3480 = vunpack.c.l.b16 %v3386
      %v3481 = vunpack.c.l.b16 %v3389
      %v3482 = vunpack.c.l.b16 %v3393
      %v3483 = vunpack.c.l.b16 %v3396
      %v3484 = vunpack.c.l.b16 %v3400
      %v3485 = vunpack.c.l.b16 %v3403
      %v3486 = vunpack.c.l.b16 %v3407
      %v3487 = vunpack.c.l.b16 %v3410
      %v3488 = vunpack.c.l.b16 %v3414
      %v3489 = vunpack.c.l.b16 %v3417
      %v3490 = vunpack.c.l.b16 %v3421
      %v3491 = vunpack.c.l.b16 %v3424
      %v3492 = vunpack.c.l.b16 %v3428
      %v3493 = vunpack.c.l.b16 %v3431
      %v3494 = vunpack.c.l.b16 %v3435
      %v3495 = vunpack.c.l.b16 %v3438
      %v3496 = vunpack.c.l.b16 %v3442
      %v3497 = vunpack.c.l.b16 %v3445
      %v3498 = vunpack.c.l.b16 %v3449
      %v3499 = vunpack.c.l.b16 %v3452
      %v3500 = vunpack.c.l.b16 %v3456
      %v3501 = vunpack.c.l.b16 %v3459
      %v3502 = vunpack.c.l.b16 %v3463
      %v3503 = vunpack.c.l.b16 %v3466
      %v3504 = vunpack.c.l.b16 %v3470
      %v3505 = vunpack.c.l.b16 %v3473
      %v3506 = vpack.c.b16 %v3475, %v3474
      %v3507 = vpack.c.b16 %v3477, %v3476
      %v3508 = vpack.c.b16 %v3479, %v3478
      %v3509 = vpack.c.b16 %v3481, %v3480
      %v3510 = vpack.c.b16 %v3483, %v3482
      %v3511 = vpack.c.b16 %v3485, %v3484
      %v3512 = vpack.c.b16 %v3487, %v3486
      %v3513 = vpack.c.b16 %v3489, %v3488
      %v3514 = vpack.c.b16 %v3491, %v3490
      %v3515 = vpack.c.b16 %v3493, %v3492
      %v3516 = vpack.c.b16 %v3495, %v3494
      %v3517 = vpack.c.b16 %v3497, %v3496
      %v3518 = vpack.c.b16 %v3499, %v3498
      %v3519 = vpack.c.b16 %v3501, %v3500
      %v3520 = vpack.c.b16 %v3503, %v3502
      %v3521 = vpack.c.b16 %v3505, %v3504
      %3538 = vst [vmem:[#allocation3 + $0x40] sm:$0xff] %v3506
      %3539 = vst [vmem:[#allocation3 + $0x88] sm:$0xff] %v3507
      %3540 = vst [vmem:[#allocation3 + $0xd0] sm:$0xff] %v3508
      %3541 = vst [vmem:[#allocation3 + $0x118] sm:$0xff] %v3509
      %3542 = vst [vmem:[#allocation3 + $0x160] sm:$0xff] %v3510
      %3543 = vst [vmem:[#allocation3 + $0x1a8] sm:$0xff] %v3511
      %3544 = vst [vmem:[#allocation3 + $0x1f0] sm:$0xff] %v3512
      %3545 = vst [vmem:[#allocation3 + $0x238] sm:$0xff] %v3513
      %3546 = vst [vmem:[#allocation3 + $0x280] sm:$0xff] %v3514
      %3547 = vst [vmem:[#allocation3 + $0x2c8] sm:$0xff] %v3515
      %3548 = vst [vmem:[#allocation3 + $0x310] sm:$0xff] %v3516
      %3549 = vst [vmem:[#allocation3 + $0x358] sm:$0xff] %v3517
      %3550 = vst [vmem:[#allocation3 + $0x3a0] sm:$0xff] %v3518
      %3551 = vst [vmem:[#allocation3 + $0x3e8] sm:$0xff] %v3519
      %3552 = vst [vmem:[#allocation3 + $0x430] sm:$0xff] %v3520
      %3553 = vst [vmem:[#allocation3 + $0x478] sm:$0xff] %v3521
      %v3554 = vld [vmem:[#allocation3] sm:$0xff]
      %v3555 = vld [vmem:[#allocation3 + $0x8] sm:$0xff]
      %v3556 = vld [vmem:[#allocation3 + $0x10] sm:$0xff]
      %v3557 = vld [vmem:[#allocation3 + $0x18] sm:$0xff]
      %v3558 = vld [vmem:[#allocation3 + $0x20] sm:$0xff]
      %v3559 = vld [vmem:[#allocation3 + $0x28] sm:$0xff]
      %v3560 = vld [vmem:[#allocation3 + $0x30] sm:$0xff]
      %v3561 = vld [vmem:[#allocation3 + $0x38] sm:$0xff]
      %v3562 = vld [vmem:[#allocation3 + $0x40] sm:$0xff]
      %v3563 = vld [vmem:[#allocation3 + $0x48] sm:$0xff]
      %v3564 = vld [vmem:[#allocation3 + $0x50] sm:$0xff]
      %v3565 = vld [vmem:[#allocation3 + $0x58] sm:$0xff]
      %v3566 = vld [vmem:[#allocation3 + $0x60] sm:$0xff]
      %v3567 = vld [vmem:[#allocation3 + $0x68] sm:$0xff]
      %v3568 = vld [vmem:[#allocation3 + $0x70] sm:$0xff]
      %v3569 = vld [vmem:[#allocation3 + $0x78] sm:$0xff]
      %v3570 = vld [vmem:[#allocation3 + $0x80] sm:$0xff]
      %v3571 = vld [vmem:[#allocation3 + $0x88] sm:$0xff]
      %v3572 = vld [vmem:[#allocation3 + $0x90] sm:$0xff]
      %v3573 = vld [vmem:[#allocation3 + $0x98] sm:$0xff]
      %v3574 = vld [vmem:[#allocation3 + $0xa0] sm:$0xff]
      %v3575 = vld [vmem:[#allocation3 + $0xa8] sm:$0xff]
      %v3576 = vld [vmem:[#allocation3 + $0xb0] sm:$0xff]
      %v3577 = vld [vmem:[#allocation3 + $0xb8] sm:$0xff]
      %v3578 = vld [vmem:[#allocation3 + $0xc0] sm:$0xff]
      %v3579 = vld [vmem:[#allocation3 + $0xc8] sm:$0xff]
      %v3580 = vld [vmem:[#allocation3 + $0xd0] sm:$0xff]
      %v3581 = vld [vmem:[#allocation3 + $0xd8] sm:$0xff]
      %v3582 = vld [vmem:[#allocation3 + $0xe0] sm:$0xff]
      %v3583 = vld [vmem:[#allocation3 + $0xe8] sm:$0xff]
      %v3584 = vld [vmem:[#allocation3 + $0xf0] sm:$0xff]
      %v3585 = vld [vmem:[#allocation3 + $0xf8] sm:$0xff]
      %v3586 = vld [vmem:[#allocation3 + $0x100] sm:$0xff]
      %v3587 = vld [vmem:[#allocation3 + $0x108] sm:$0xff]
      %v3588 = vld [vmem:[#allocation3 + $0x110] sm:$0xff]
      %v3589 = vld [vmem:[#allocation3 + $0x118] sm:$0xff]
      %v3590 = vld [vmem:[#allocation3 + $0x120] sm:$0xff]
      %v3591 = vld [vmem:[#allocation3 + $0x128] sm:$0xff]
      %v3592 = vld [vmem:[#allocation3 + $0x130] sm:$0xff]
      %v3593 = vld [vmem:[#allocation3 + $0x138] sm:$0xff]
      %v3594 = vld [vmem:[#allocation3 + $0x140] sm:$0xff]
      %v3595 = vld [vmem:[#allocation3 + $0x148] sm:$0xff]
      %v3596 = vld [vmem:[#allocation3 + $0x150] sm:$0xff]
      %v3597 = vld [vmem:[#allocation3 + $0x158] sm:$0xff]
      %v3598 = vld [vmem:[#allocation3 + $0x160] sm:$0xff]
      %v3599 = vld [vmem:[#allocation3 + $0x168] sm:$0xff]
      %v3600 = vld [vmem:[#allocation3 + $0x170] sm:$0xff]
      %v3601 = vld [vmem:[#allocation3 + $0x178] sm:$0xff]
      %v3602 = vld [vmem:[#allocation3 + $0x180] sm:$0xff]
      %v3603 = vld [vmem:[#allocation3 + $0x188] sm:$0xff]
      %v3604 = vld [vmem:[#allocation3 + $0x190] sm:$0xff]
      %v3605 = vld [vmem:[#allocation3 + $0x198] sm:$0xff]
      %v3606 = vld [vmem:[#allocation3 + $0x1a0] sm:$0xff]
      %v3607 = vld [vmem:[#allocation3 + $0x1a8] sm:$0xff]
      %v3608 = vld [vmem:[#allocation3 + $0x1b0] sm:$0xff]
      %v3609 = vld [vmem:[#allocation3 + $0x1b8] sm:$0xff]
      %v3610 = vld [vmem:[#allocation3 + $0x1c0] sm:$0xff]
      %v3611 = vld [vmem:[#allocation3 + $0x1c8] sm:$0xff]
      %v3612 = vld [vmem:[#allocation3 + $0x1d0] sm:$0xff]
      %v3613 = vld [vmem:[#allocation3 + $0x1d8] sm:$0xff]
      %v3614 = vld [vmem:[#allocation3 + $0x1e0] sm:$0xff]
      %v3615 = vld [vmem:[#allocation3 + $0x1e8] sm:$0xff]
      %v3616 = vld [vmem:[#allocation3 + $0x1f0] sm:$0xff]
      %v3617 = vld [vmem:[#allocation3 + $0x1f8] sm:$0xff]
      %v3618 = vld [vmem:[#allocation3 + $0x200] sm:$0xff]
      %v3619 = vld [vmem:[#allocation3 + $0x208] sm:$0xff]
      %v3620 = vld [vmem:[#allocation3 + $0x210] sm:$0xff]
      %v3621 = vld [vmem:[#allocation3 + $0x218] sm:$0xff]
      %v3622 = vld [vmem:[#allocation3 + $0x220] sm:$0xff]
      %v3623 = vld [vmem:[#allocation3 + $0x228] sm:$0xff]
      %v3624 = vld [vmem:[#allocation3 + $0x230] sm:$0xff]
      %v3625 = vld [vmem:[#allocation3 + $0x238] sm:$0xff]
      %v3626 = vld [vmem:[#allocation3 + $0x240] sm:$0xff]
      %v3627 = vld [vmem:[#allocation3 + $0x248] sm:$0xff]
      %v3628 = vld [vmem:[#allocation3 + $0x250] sm:$0xff]
      %v3629 = vld [vmem:[#allocation3 + $0x258] sm:$0xff]
      %v3630 = vld [vmem:[#allocation3 + $0x260] sm:$0xff]
      %v3631 = vld [vmem:[#allocation3 + $0x268] sm:$0xff]
      %v3632 = vld [vmem:[#allocation3 + $0x270] sm:$0xff]
      %v3633 = vld [vmem:[#allocation3 + $0x278] sm:$0xff]
      %v3634 = vld [vmem:[#allocation3 + $0x280] sm:$0xff]
      %v3635 = vld [vmem:[#allocation3 + $0x288] sm:$0xff]
      %v3636 = vld [vmem:[#allocation3 + $0x290] sm:$0xff]
      %v3637 = vld [vmem:[#allocation3 + $0x298] sm:$0xff]
      %v3638 = vld [vmem:[#allocation3 + $0x2a0] sm:$0xff]
      %v3639 = vld [vmem:[#allocation3 + $0x2a8] sm:$0xff]
      %v3640 = vld [vmem:[#allocation3 + $0x2b0] sm:$0xff]
      %v3641 = vld [vmem:[#allocation3 + $0x2b8] sm:$0xff]
      %v3642 = vld [vmem:[#allocation3 + $0x2c0] sm:$0xff]
      %v3643 = vld [vmem:[#allocation3 + $0x2c8] sm:$0xff]
      %v3644 = vld [vmem:[#allocation3 + $0x2d0] sm:$0xff]
      %v3645 = vld [vmem:[#allocation3 + $0x2d8] sm:$0xff]
      %v3646 = vld [vmem:[#allocation3 + $0x2e0] sm:$0xff]
      %v3647 = vld [vmem:[#allocation3 + $0x2e8] sm:$0xff]
      %v3648 = vld [vmem:[#allocation3 + $0x2f0] sm:$0xff]
      %v3649 = vld [vmem:[#allocation3 + $0x2f8] sm:$0xff]
      %v3650 = vld [vmem:[#allocation3 + $0x300] sm:$0xff]
      %v3651 = vld [vmem:[#allocation3 + $0x308] sm:$0xff]
      %v3652 = vld [vmem:[#allocation3 + $0x310] sm:$0xff]
      %v3653 = vld [vmem:[#allocation3 + $0x318] sm:$0xff]
      %v3654 = vld [vmem:[#allocation3 + $0x320] sm:$0xff]
      %v3655 = vld [vmem:[#allocation3 + $0x328] sm:$0xff]
      %v3656 = vld [vmem:[#allocation3 + $0x330] sm:$0xff]
      %v3657 = vld [vmem:[#allocation3 + $0x338] sm:$0xff]
      %v3658 = vld [vmem:[#allocation3 + $0x340] sm:$0xff]
      %v3659 = vld [vmem:[#allocation3 + $0x348] sm:$0xff]
      %v3660 = vld [vmem:[#allocation3 + $0x350] sm:$0xff]
      %v3661 = vld [vmem:[#allocation3 + $0x358] sm:$0xff]
      %v3662 = vld [vmem:[#allocation3 + $0x360] sm:$0xff]
      %v3663 = vld [vmem:[#allocation3 + $0x368] sm:$0xff]
      %v3664 = vld [vmem:[#allocation3 + $0x370] sm:$0xff]
      %v3665 = vld [vmem:[#allocation3 + $0x378] sm:$0xff]
      %v3666 = vld [vmem:[#allocation3 + $0x380] sm:$0xff]
      %v3667 = vld [vmem:[#allocation3 + $0x388] sm:$0xff]
      %v3668 = vld [vmem:[#allocation3 + $0x390] sm:$0xff]
      %v3669 = vld [vmem:[#allocation3 + $0x398] sm:$0xff]
      %v3670 = vld [vmem:[#allocation3 + $0x3a0] sm:$0xff]
      %v3671 = vld [vmem:[#allocation3 + $0x3a8] sm:$0xff]
      %v3672 = vld [vmem:[#allocation3 + $0x3b0] sm:$0xff]
      %v3673 = vld [vmem:[#allocation3 + $0x3b8] sm:$0xff]
      %v3674 = vld [vmem:[#allocation3 + $0x3c0] sm:$0xff]
      %v3675 = vld [vmem:[#allocation3 + $0x3c8] sm:$0xff]
      %v3676 = vld [vmem:[#allocation3 + $0x3d0] sm:$0xff]
      %v3677 = vld [vmem:[#allocation3 + $0x3d8] sm:$0xff]
      %v3678 = vld [vmem:[#allocation3 + $0x3e0] sm:$0xff]
      %v3679 = vld [vmem:[#allocation3 + $0x3e8] sm:$0xff]
      %v3680 = vld [vmem:[#allocation3 + $0x3f0] sm:$0xff]
      %v3681 = vld [vmem:[#allocation3 + $0x3f8] sm:$0xff]
      %v3682 = vld [vmem:[#allocation3 + $0x400] sm:$0xff]
      %v3683 = vld [vmem:[#allocation3 + $0x408] sm:$0xff]
      %v3684 = vld [vmem:[#allocation3 + $0x410] sm:$0xff]
      %v3685 = vld [vmem:[#allocation3 + $0x418] sm:$0xff]
      %v3686 = vld [vmem:[#allocation3 + $0x420] sm:$0xff]
      %v3687 = vld [vmem:[#allocation3 + $0x428] sm:$0xff]
      %v3688 = vld [vmem:[#allocation3 + $0x430] sm:$0xff]
      %v3689 = vld [vmem:[#allocation3 + $0x438] sm:$0xff]
      %v3690 = vld [vmem:[#allocation3 + $0x440] sm:$0xff]
      %v3691 = vld [vmem:[#allocation3 + $0x448] sm:$0xff]
      %v3692 = vld [vmem:[#allocation3 + $0x450] sm:$0xff]
      %v3693 = vld [vmem:[#allocation3 + $0x458] sm:$0xff]
      %v3694 = vld [vmem:[#allocation3 + $0x460] sm:$0xff]
      %v3695 = vld [vmem:[#allocation3 + $0x468] sm:$0xff]
      %v3696 = vld [vmem:[#allocation3 + $0x470] sm:$0xff]
      %v3697 = vld [vmem:[#allocation3 + $0x478] sm:$0xff]
      %v3698 = vld [vmem:[%s3] sm:$0xf]
      %v3699 = vld [vmem:[%s3 + $0x4] sm:$0xf]
      %v3700 = vld [vmem:[%s3 + $0x8] sm:$0xf]
      %v3701 = vld [vmem:[%s3 + $0xc] sm:$0xf]
      %v3702 = vld [vmem:[%s3 + $0x10] sm:$0xf]
      %v3703 = vld [vmem:[%s3 + $0x14] sm:$0xf]
      %v3704 = vld [vmem:[%s3 + $0x18] sm:$0xf]
      %v3705 = vld [vmem:[%s3 + $0x1c] sm:$0xf]
      %v3706 = vld [vmem:[%s3 + $0x20] sm:$0xf]
      %v3707 = vld [vmem:[%s3 + $0x24] sm:$0xf]
      %v3708 = vld [vmem:[%s3 + $0x28] sm:$0xf]
      %v3709 = vld [vmem:[%s3 + $0x2c] sm:$0xf]
      %v3710 = vld [vmem:[%s3 + $0x30] sm:$0xf]
      %v3711 = vld [vmem:[%s3 + $0x34] sm:$0xf]
      %v3712 = vld [vmem:[%s3 + $0x38] sm:$0xf]
      %v3713 = vld [vmem:[%s3 + $0x3c] sm:$0xf]
      %v3714 = vld [vmem:[%s3 + $0x40] sm:$0xf]
      %v3715 = vld [vmem:[%s3 + $0x44] sm:$0xf]
      %v3716 = vld [vmem:[%s3 + $0x48] sm:$0xf]
      %v3717 = vld [vmem:[%s3 + $0x4c] sm:$0xf]
      %v3718 = vld [vmem:[%s3 + $0x50] sm:$0xf]
      %v3719 = vld [vmem:[%s3 + $0x54] sm:$0xf]
      %v3720 = vld [vmem:[%s3 + $0x58] sm:$0xf]
      %v3721 = vld [vmem:[%s3 + $0x5c] sm:$0xf]
      %v3722 = vld [vmem:[%s3 + $0x60] sm:$0xf]
      %v3723 = vld [vmem:[%s3 + $0x64] sm:$0xf]
      %v3724 = vld [vmem:[%s3 + $0x68] sm:$0xf]
      %v3725 = vld [vmem:[%s3 + $0x6c] sm:$0xf]
      %v3726 = vld [vmem:[%s3 + $0x70] sm:$0xf]
      %v3727 = vld [vmem:[%s3 + $0x74] sm:$0xf]
      %v3728 = vld [vmem:[%s3 + $0x78] sm:$0xf]
      %v3729 = vld [vmem:[%s3 + $0x7c] sm:$0xf]
      %v3730 = vld [vmem:[%s3 + $0x80] sm:$0xf]
      %v3731 = vld [vmem:[%s3 + $0x84] sm:$0xf]
      %v3732 = vld [vmem:[%s3 + $0x88] sm:$0xf]
      %v3733 = vld [vmem:[%s3 + $0x8c] sm:$0xf]
      %v3734 = vld [vmem:[%s3 + $0x90] sm:$0xf]
      %v3735 = vld [vmem:[%s3 + $0x94] sm:$0xf]
      %v3736 = vld [vmem:[%s3 + $0x98] sm:$0xf]
      %v3737 = vld [vmem:[%s3 + $0x9c] sm:$0xf]
      %v3738 = vld [vmem:[%s3 + $0xa0] sm:$0xf]
      %v3739 = vld [vmem:[%s3 + $0xa4] sm:$0xf]
      %v3740 = vld [vmem:[%s3 + $0xa8] sm:$0xf]
      %v3741 = vld [vmem:[%s3 + $0xac] sm:$0xf]
      %v3742 = vld [vmem:[%s3 + $0xb0] sm:$0xf]
      %v3743 = vld [vmem:[%s3 + $0xb4] sm:$0xf]
      %v3744 = vld [vmem:[%s3 + $0xb8] sm:$0xf]
      %v3745 = vld [vmem:[%s3 + $0xbc] sm:$0xf]
      %v3746 = vld [vmem:[%s3 + $0xc0] sm:$0xf]
      %v3747 = vld [vmem:[%s3 + $0xc4] sm:$0xf]
      %v3748 = vld [vmem:[%s3 + $0xc8] sm:$0xf]
      %v3749 = vld [vmem:[%s3 + $0xcc] sm:$0xf]
      %v3750 = vld [vmem:[%s3 + $0xd0] sm:$0xf]
      %v3751 = vld [vmem:[%s3 + $0xd4] sm:$0xf]
      %v3752 = vld [vmem:[%s3 + $0xd8] sm:$0xf]
      %v3753 = vld [vmem:[%s3 + $0xdc] sm:$0xf]
      %v3754 = vld [vmem:[%s3 + $0xe0] sm:$0xf]
      %v3755 = vld [vmem:[%s3 + $0xe4] sm:$0xf]
      %v3756 = vld [vmem:[%s3 + $0xe8] sm:$0xf]
      %v3757 = vld [vmem:[%s3 + $0xec] sm:$0xf]
      %v3758 = vld [vmem:[%s3 + $0xf0] sm:$0xf]
      %v3759 = vld [vmem:[%s3 + $0xf4] sm:$0xf]
      %v3760 = vld [vmem:[%s3 + $0xf8] sm:$0xf]
      %v3761 = vld [vmem:[%s3 + $0xfc] sm:$0xf]
      %v3762 = vld [vmem:[%s3 + $0x100] sm:$0xf]
      %v3763 = vld [vmem:[%s3 + $0x104] sm:$0xf]
      %v3764 = vld [vmem:[%s3 + $0x108] sm:$0xf]
      %v3765 = vld [vmem:[%s3 + $0x10c] sm:$0xf]
      %v3766 = vld [vmem:[%s3 + $0x110] sm:$0xf]
      %v3767 = vld [vmem:[%s3 + $0x114] sm:$0xf]
      %v3768 = vld [vmem:[%s3 + $0x118] sm:$0xf]
      %v3769 = vld [vmem:[%s3 + $0x11c] sm:$0xf]
      %v3770 = vld [vmem:[%s3 + $0x120] sm:$0xf]
      %v3771 = vld [vmem:[%s3 + $0x124] sm:$0xf]
      %v3772 = vld [vmem:[%s3 + $0x128] sm:$0xf]
      %v3773 = vld [vmem:[%s3 + $0x12c] sm:$0xf]
      %v3774 = vld [vmem:[%s3 + $0x130] sm:$0xf]
      %v3775 = vld [vmem:[%s3 + $0x134] sm:$0xf]
      %v3776 = vld [vmem:[%s3 + $0x138] sm:$0xf]
      %v3777 = vld [vmem:[%s3 + $0x13c] sm:$0xf]
      %v3778 = vld [vmem:[%s3 + $0x140] sm:$0xf]
      %v3779 = vld [vmem:[%s3 + $0x144] sm:$0xf]
      %v3780 = vld [vmem:[%s3 + $0x148] sm:$0xf]
      %v3781 = vld [vmem:[%s3 + $0x14c] sm:$0xf]
      %v3782 = vld [vmem:[%s3 + $0x150] sm:$0xf]
      %v3783 = vld [vmem:[%s3 + $0x154] sm:$0xf]
      %v3784 = vld [vmem:[%s3 + $0x158] sm:$0xf]
      %v3785 = vld [vmem:[%s3 + $0x15c] sm:$0xf]
      %v3786 = vld [vmem:[%s3 + $0x160] sm:$0xf]
      %v3787 = vld [vmem:[%s3 + $0x164] sm:$0xf]
      %v3788 = vld [vmem:[%s3 + $0x168] sm:$0xf]
      %v3789 = vld [vmem:[%s3 + $0x16c] sm:$0xf]
      %v3790 = vld [vmem:[%s3 + $0x170] sm:$0xf]
      %v3791 = vld [vmem:[%s3 + $0x174] sm:$0xf]
      %v3792 = vld [vmem:[%s3 + $0x178] sm:$0xf]
      %v3793 = vld [vmem:[%s3 + $0x17c] sm:$0xf]
      %v3794 = vld [vmem:[%s3 + $0x180] sm:$0xf]
      %v3795 = vld [vmem:[%s3 + $0x184] sm:$0xf]
      %v3796 = vld [vmem:[%s3 + $0x188] sm:$0xf]
      %v3797 = vld [vmem:[%s3 + $0x18c] sm:$0xf]
      %v3798 = vld [vmem:[%s3 + $0x190] sm:$0xf]
      %v3799 = vld [vmem:[%s3 + $0x194] sm:$0xf]
      %v3800 = vld [vmem:[%s3 + $0x198] sm:$0xf]
      %v3801 = vld [vmem:[%s3 + $0x19c] sm:$0xf]
      %v3802 = vld [vmem:[%s3 + $0x1a0] sm:$0xf]
      %v3803 = vld [vmem:[%s3 + $0x1a4] sm:$0xf]
      %v3804 = vld [vmem:[%s3 + $0x1a8] sm:$0xf]
      %v3805 = vld [vmem:[%s3 + $0x1ac] sm:$0xf]
      %v3806 = vld [vmem:[%s3 + $0x1b0] sm:$0xf]
      %v3807 = vld [vmem:[%s3 + $0x1b4] sm:$0xf]
      %v3808 = vld [vmem:[%s3 + $0x1b8] sm:$0xf]
      %v3809 = vld [vmem:[%s3 + $0x1bc] sm:$0xf]
      %v3810 = vld [vmem:[%s3 + $0x1c0] sm:$0xf]
      %v3811 = vld [vmem:[%s3 + $0x1c4] sm:$0xf]
      %v3812 = vld [vmem:[%s3 + $0x1c8] sm:$0xf]
      %v3813 = vld [vmem:[%s3 + $0x1cc] sm:$0xf]
      %v3814 = vld [vmem:[%s3 + $0x1d0] sm:$0xf]
      %v3815 = vld [vmem:[%s3 + $0x1d4] sm:$0xf]
      %v3816 = vld [vmem:[%s3 + $0x1d8] sm:$0xf]
      %v3817 = vld [vmem:[%s3 + $0x1dc] sm:$0xf]
      %v3818 = vld [vmem:[%s3 + $0x1e0] sm:$0xf]
      %v3819 = vld [vmem:[%s3 + $0x1e4] sm:$0xf]
      %v3820 = vld [vmem:[%s3 + $0x1e8] sm:$0xf]
      %v3821 = vld [vmem:[%s3 + $0x1ec] sm:$0xf]
      %v3822 = vld [vmem:[%s3 + $0x1f0] sm:$0xf]
      %v3823 = vld [vmem:[%s3 + $0x1f4] sm:$0xf]
      %v3824 = vld [vmem:[%s3 + $0x1f8] sm:$0xf]
      %v3825 = vld [vmem:[%s3 + $0x1fc] sm:$0xf]
      %v3826 = vld [vmem:[%s3 + $0x200] sm:$0xf]
      %v3827 = vld [vmem:[%s3 + $0x204] sm:$0xf]
      %v3828 = vld [vmem:[%s3 + $0x208] sm:$0xf]
      %v3829 = vld [vmem:[%s3 + $0x20c] sm:$0xf]
      %v3830 = vld [vmem:[%s3 + $0x210] sm:$0xf]
      %v3831 = vld [vmem:[%s3 + $0x214] sm:$0xf]
      %v3832 = vld [vmem:[%s3 + $0x218] sm:$0xf]
      %v3833 = vld [vmem:[%s3 + $0x21c] sm:$0xf]
      %v3834 = vld [vmem:[%s3 + $0x220] sm:$0xf]
      %v3835 = vld [vmem:[%s3 + $0x224] sm:$0xf]
      %v3836 = vld [vmem:[%s3 + $0x228] sm:$0xf]
      %v3837 = vld [vmem:[%s3 + $0x22c] sm:$0xf]
      %v3838 = vld [vmem:[%s3 + $0x230] sm:$0xf]
      %v3839 = vld [vmem:[%s3 + $0x234] sm:$0xf]
      %v3840 = vld [vmem:[%s3 + $0x238] sm:$0xf]
      %v3841 = vld [vmem:[%s3 + $0x23c] sm:$0xf]
      %v3986 = vunpack.c.l.b16 %v3698
      %v3987 = vunpack.c.l.b16 %v3699
      %v3988 = vunpack.c.l.b16 %v3700
      %v3989 = vunpack.c.l.b16 %v3701
      %v3990 = vunpack.c.l.b16 %v3702
      %v3991 = vunpack.c.l.b16 %v3703
      %v3992 = vunpack.c.l.b16 %v3704
      %v3993 = vunpack.c.l.b16 %v3705
      %v3994 = vunpack.c.l.b16 %v3706
      %v3995 = vunpack.c.l.b16 %v3707
      %v3996 = vunpack.c.l.b16 %v3708
      %v3997 = vunpack.c.l.b16 %v3709
      %v3998 = vunpack.c.l.b16 %v3710
      %v3999 = vunpack.c.l.b16 %v3711
      %v4000 = vunpack.c.l.b16 %v3712
      %v4001 = vunpack.c.l.b16 %v3713
      %v4002 = vunpack.c.l.b16 %v3714
      %v4003 = vunpack.c.l.b16 %v3715
      %v4004 = vunpack.c.l.b16 %v3716
      %v4005 = vunpack.c.l.b16 %v3717
      %v4006 = vunpack.c.l.b16 %v3718
      %v4007 = vunpack.c.l.b16 %v3719
      %v4008 = vunpack.c.l.b16 %v3720
      %v4009 = vunpack.c.l.b16 %v3721
      %v4010 = vunpack.c.l.b16 %v3722
      %v4011 = vunpack.c.l.b16 %v3723
      %v4012 = vunpack.c.l.b16 %v3724
      %v4013 = vunpack.c.l.b16 %v3725
      %v4014 = vunpack.c.l.b16 %v3726
      %v4015 = vunpack.c.l.b16 %v3727
      %v4016 = vunpack.c.l.b16 %v3728
      %v4017 = vunpack.c.l.b16 %v3729
      %v4018 = vunpack.c.l.b16 %v3730
      %v4019 = vunpack.c.l.b16 %v3731
      %v4020 = vunpack.c.l.b16 %v3732
      %v4021 = vunpack.c.l.b16 %v3733
      %v4022 = vunpack.c.l.b16 %v3734
      %v4023 = vunpack.c.l.b16 %v3735
      %v4024 = vunpack.c.l.b16 %v3736
      %v4025 = vunpack.c.l.b16 %v3737
      %v4026 = vunpack.c.l.b16 %v3738
      %v4027 = vunpack.c.l.b16 %v3739
      %v4028 = vunpack.c.l.b16 %v3740
      %v4029 = vunpack.c.l.b16 %v3741
      %v4030 = vunpack.c.l.b16 %v3742
      %v4031 = vunpack.c.l.b16 %v3743
      %v4032 = vunpack.c.l.b16 %v3744
      %v4033 = vunpack.c.l.b16 %v3745
      %v4034 = vunpack.c.l.b16 %v3746
      %v4035 = vunpack.c.l.b16 %v3747
      %v4036 = vunpack.c.l.b16 %v3748
      %v4037 = vunpack.c.l.b16 %v3749
      %v4038 = vunpack.c.l.b16 %v3750
      %v4039 = vunpack.c.l.b16 %v3751
      %v4040 = vunpack.c.l.b16 %v3752
      %v4041 = vunpack.c.l.b16 %v3753
      %v4042 = vunpack.c.l.b16 %v3754
      %v4043 = vunpack.c.l.b16 %v3755
      %v4044 = vunpack.c.l.b16 %v3756
      %v4045 = vunpack.c.l.b16 %v3757
      %v4046 = vunpack.c.l.b16 %v3758
      %v4047 = vunpack.c.l.b16 %v3759
      %v4048 = vunpack.c.l.b16 %v3760
      %v4049 = vunpack.c.l.b16 %v3761
      %v4050 = vunpack.c.l.b16 %v3762
      %v4051 = vunpack.c.l.b16 %v3763
      %v4052 = vunpack.c.l.b16 %v3764
      %v4053 = vunpack.c.l.b16 %v3765
      %v4054 = vunpack.c.l.b16 %v3766
      %v4055 = vunpack.c.l.b16 %v3767
      %v4056 = vunpack.c.l.b16 %v3768
      %v4057 = vunpack.c.l.b16 %v3769
      %v4058 = vunpack.c.l.b16 %v3770
      %v4059 = vunpack.c.l.b16 %v3771
      %v4060 = vunpack.c.l.b16 %v3772
      %v4061 = vunpack.c.l.b16 %v3773
      %v4062 = vunpack.c.l.b16 %v3774
      %v4063 = vunpack.c.l.b16 %v3775
      %v4064 = vunpack.c.l.b16 %v3776
      %v4065 = vunpack.c.l.b16 %v3777
      %v4066 = vunpack.c.l.b16 %v3778
      %v4067 = vunpack.c.l.b16 %v3779
      %v4068 = vunpack.c.l.b16 %v3780
      %v4069 = vunpack.c.l.b16 %v3781
      %v4070 = vunpack.c.l.b16 %v3782
      %v4071 = vunpack.c.l.b16 %v3783
      %v4072 = vunpack.c.l.b16 %v3784
      %v4073 = vunpack.c.l.b16 %v3785
      %v4074 = vunpack.c.l.b16 %v3786
      %v4075 = vunpack.c.l.b16 %v3787
      %v4076 = vunpack.c.l.b16 %v3788
      %v4077 = vunpack.c.l.b16 %v3789
      %v4078 = vunpack.c.l.b16 %v3790
      %v4079 = vunpack.c.l.b16 %v3791
      %v4080 = vunpack.c.l.b16 %v3792
      %v4081 = vunpack.c.l.b16 %v3793
      %v4082 = vunpack.c.l.b16 %v3794
      %v4083 = vunpack.c.l.b16 %v3795
      %v4084 = vunpack.c.l.b16 %v3796
      %v4085 = vunpack.c.l.b16 %v3797
      %v4086 = vunpack.c.l.b16 %v3798
      %v4087 = vunpack.c.l.b16 %v3799
      %v4088 = vunpack.c.l.b16 %v3800
      %v4089 = vunpack.c.l.b16 %v3801
      %v4090 = vunpack.c.l.b16 %v3802
      %v4091 = vunpack.c.l.b16 %v3803
      %v4092 = vunpack.c.l.b16 %v3804
      %v4093 = vunpack.c.l.b16 %v3805
      %v4094 = vunpack.c.l.b16 %v3806
      %v4095 = vunpack.c.l.b16 %v3807
      %v4096 = vunpack.c.l.b16 %v3808
      %v4097 = vunpack.c.l.b16 %v3809
      %v4098 = vunpack.c.l.b16 %v3810
      %v4099 = vunpack.c.l.b16 %v3811
      %v4100 = vunpack.c.l.b16 %v3812
      %v4101 = vunpack.c.l.b16 %v3813
      %v4102 = vunpack.c.l.b16 %v3814
      %v4103 = vunpack.c.l.b16 %v3815
      %v4104 = vunpack.c.l.b16 %v3816
      %v4105 = vunpack.c.l.b16 %v3817
      %v4106 = vunpack.c.l.b16 %v3818
      %v4107 = vunpack.c.l.b16 %v3819
      %v4108 = vunpack.c.l.b16 %v3820
      %v4109 = vunpack.c.l.b16 %v3821
      %v4110 = vunpack.c.l.b16 %v3822
      %v4111 = vunpack.c.l.b16 %v3823
      %v4112 = vunpack.c.l.b16 %v3824
      %v4113 = vunpack.c.l.b16 %v3825
      %v4114 = vunpack.c.l.b16 %v3826
      %v4115 = vunpack.c.l.b16 %v3827
      %v4116 = vunpack.c.l.b16 %v3828
      %v4117 = vunpack.c.l.b16 %v3829
      %v4118 = vunpack.c.l.b16 %v3830
      %v4119 = vunpack.c.l.b16 %v3831
      %v4120 = vunpack.c.l.b16 %v3832
      %v4121 = vunpack.c.l.b16 %v3833
      %v4122 = vunpack.c.l.b16 %v3834
      %v4123 = vunpack.c.l.b16 %v3835
      %v4124 = vunpack.c.l.b16 %v3836
      %v4125 = vunpack.c.l.b16 %v3837
      %v4126 = vunpack.c.l.b16 %v3838
      %v4127 = vunpack.c.l.b16 %v3839
      %v4128 = vunpack.c.l.b16 %v3840
      %v4129 = vunpack.c.l.b16 %v3841
      %v4130 = vpack.c.b16 %v3987, %v3986
      %v4131 = vpack.c.b16 %v3989, %v3988
      %v4132 = vpack.c.b16 %v3991, %v3990
      %v4133 = vpack.c.b16 %v3993, %v3992
      %v4134 = vpack.c.b16 %v3995, %v3994
      %v4135 = vpack.c.b16 %v3997, %v3996
      %v4136 = vpack.c.b16 %v3999, %v3998
      %v4137 = vpack.c.b16 %v4001, %v4000
      %v4138 = vpack.c.b16 %v4003, %v4002
      %v4139 = vpack.c.b16 %v4005, %v4004
      %v4140 = vpack.c.b16 %v4007, %v4006
      %v4141 = vpack.c.b16 %v4009, %v4008
      %v4142 = vpack.c.b16 %v4011, %v4010
      %v4143 = vpack.c.b16 %v4013, %v4012
      %v4144 = vpack.c.b16 %v4015, %v4014
      %v4145 = vpack.c.b16 %v4017, %v4016
      %v4146 = vpack.c.b16 %v4019, %v4018
      %v4147 = vpack.c.b16 %v4021, %v4020
      %v4148 = vpack.c.b16 %v4023, %v4022
      %v4149 = vpack.c.b16 %v4025, %v4024
      %v4150 = vpack.c.b16 %v4027, %v4026
      %v4151 = vpack.c.b16 %v4029, %v4028
      %v4152 = vpack.c.b16 %v4031, %v4030
      %v4153 = vpack.c.b16 %v4033, %v4032
      %v4154 = vpack.c.b16 %v4035, %v4034
      %v4155 = vpack.c.b16 %v4037, %v4036
      %v4156 = vpack.c.b16 %v4039, %v4038
      %v4157 = vpack.c.b16 %v4041, %v4040
      %v4158 = vpack.c.b16 %v4043, %v4042
      %v4159 = vpack.c.b16 %v4045, %v4044
      %v4160 = vpack.c.b16 %v4047, %v4046
      %v4161 = vpack.c.b16 %v4049, %v4048
      %v4162 = vpack.c.b16 %v4051, %v4050
      %v4163 = vpack.c.b16 %v4053, %v4052
      %v4164 = vpack.c.b16 %v4055, %v4054
      %v4165 = vpack.c.b16 %v4057, %v4056
      %v4166 = vpack.c.b16 %v4059, %v4058
      %v4167 = vpack.c.b16 %v4061, %v4060
      %v4168 = vpack.c.b16 %v4063, %v4062
      %v4169 = vpack.c.b16 %v4065, %v4064
      %v4170 = vpack.c.b16 %v4067, %v4066
      %v4171 = vpack.c.b16 %v4069, %v4068
      %v4172 = vpack.c.b16 %v4071, %v4070
      %v4173 = vpack.c.b16 %v4073, %v4072
      %v4174 = vpack.c.b16 %v4075, %v4074
      %v4175 = vpack.c.b16 %v4077, %v4076
      %v4176 = vpack.c.b16 %v4079, %v4078
      %v4177 = vpack.c.b16 %v4081, %v4080
      %v4178 = vpack.c.b16 %v4083, %v4082
      %v4179 = vpack.c.b16 %v4085, %v4084
      %v4180 = vpack.c.b16 %v4087, %v4086
      %v4181 = vpack.c.b16 %v4089, %v4088
      %v4182 = vpack.c.b16 %v4091, %v4090
      %v4183 = vpack.c.b16 %v4093, %v4092
      %v4184 = vpack.c.b16 %v4095, %v4094
      %v4185 = vpack.c.b16 %v4097, %v4096
      %v4186 = vpack.c.b16 %v4099, %v4098
      %v4187 = vpack.c.b16 %v4101, %v4100
      %v4188 = vpack.c.b16 %v4103, %v4102
      %v4189 = vpack.c.b16 %v4105, %v4104
      %v4190 = vpack.c.b16 %v4107, %v4106
      %v4191 = vpack.c.b16 %v4109, %v4108
      %v4192 = vpack.c.b16 %v4111, %v4110
      %v4193 = vpack.c.b16 %v4113, %v4112
      %v4194 = vpack.c.b16 %v4115, %v4114
      %v4195 = vpack.c.b16 %v4117, %v4116
      %v4196 = vpack.c.b16 %v4119, %v4118
      %v4197 = vpack.c.b16 %v4121, %v4120
      %v4198 = vpack.c.b16 %v4123, %v4122
      %v4199 = vpack.c.b16 %v4125, %v4124
      %v4200 = vpack.c.b16 %v4127, %v4126
      %v4201 = vpack.c.b16 %v4129, %v4128
      %4274 = vmatprep.subr.bf16.mxu0 0
      %4275 = vmatpush1.bf16.msra.mxu0 %v4130
      %4276 = vmatprep.subr.bf16.mxu0 0
      %4277 = vmatpush1.bf16.msra.mxu0 %v4131
      %4278 = vmatprep.subr.bf16.mxu0 0
      %4279 = vmatpush1.bf16.msra.mxu0 %v4132
      %4280 = vmatprep.subr.bf16.mxu0 0
      %4281 = vmatpush1.bf16.msra.mxu0 %v4133
      %4282 = vmatprep.subr.bf16.mxu0 0
      %4283 = vmatpush1.bf16.msra.mxu0 %v4134
      %4284 = vmatprep.subr.bf16.mxu0 0
      %4285 = vmatpush1.bf16.msra.mxu0 %v4135
      %4286 = vmatprep.subr.bf16.mxu0 0
      %4287 = vmatpush1.bf16.msra.mxu0 %v4136
      %4288 = vmatprep.subr.bf16.mxu0 0
      %4289 = vmatpush1.bf16.msra.mxu0 %v4137
      %4290 = vmatprep.subr.bf16.mxu0 0
      %4291 = vmatpush1.bf16.msra.mxu0 %v4138
      %4292 = vmatprep.subr.bf16.mxu0 0
      %4293 = vmatpush1.bf16.msra.mxu0 %v4139
      %4294 = vmatprep.subr.bf16.mxu0 0
      %4295 = vmatpush1.bf16.msra.mxu0 %v4140
      %4296 = vmatprep.subr.bf16.mxu0 0
      %4297 = vmatpush1.bf16.msra.mxu0 %v4141
      %4298 = vmatprep.subr.bf16.mxu0 0
      %4299 = vmatpush1.bf16.msra.mxu0 %v4142
      %4300 = vmatprep.subr.bf16.mxu0 0
      %4301 = vmatpush1.bf16.msra.mxu0 %v4143
      %4302 = vmatprep.subr.bf16.mxu0 0
      %4303 = vmatpush1.bf16.msra.mxu0 %v4144
      %4304 = vmatprep.subr.bf16.mxu0 0
      %4305 = vmatpush1.bf16.msra.mxu0 %v4145
      %4306 = vmatprep.mubr.bf16.mxu0 %v3555
      %4307 = vmatmul.mubr.bf16.gmra.mrb[0].mxu0 %v3554
      %v4308 = vpop.f32.mrb[0].mxu0
      %v4309 = vadd.f32 0.0, %v4308
      %v4310 = vpop.f32.mrb[0].mxu0
      %v4311 = vpop.f32.mrb[0].mxu0
      %v4312 = vadd.f32 0.0, %v4311
      %v4313 = vpop.f32.mrb[0].mxu0
      %4314 = vmatprep.mubr.bf16.mxu0 %v3564
      %4315 = vmatmul.mubr.bf16.gmra.mrb[0].mxu0 %v3563
      %v4316 = vpop.f32.mrb[0].mxu0
      %v4317 = vadd.f32 0.0, %v4316
      %v4318 = vpop.f32.mrb[0].mxu0
      %v4319 = vpop.f32.mrb[0].mxu0
      %v4320 = vadd.f32 0.0, %v4319
      %v4321 = vpop.f32.mrb[0].mxu0
      %4322 = vmatprep.mubr.bf16.mxu0 %v3573
      %4323 = vmatmul.mubr.bf16.gmra.mrb[0].mxu0 %v3572
      %v4324 = vpop.f32.mrb[0].mxu0
      %v4325 = vadd.f32 0.0, %v4324
      %v4326 = vpop.f32.mrb[0].mxu0
      %v4327 = vpop.f32.mrb[0].mxu0
      %v4328 = vadd.f32 0.0, %v4327
      %v4329 = vpop.f32.mrb[0].mxu0
      %4330 = vmatprep.mubr.bf16.mxu0 %v3582
      %4331 = vmatmul.mubr.bf16.gmra.mrb[0].mxu0 %v3581
      %v4332 = vpop.f32.mrb[0].mxu0
      %v4333 = vadd.f32 0.0, %v4332
      %v4334 = vpop.f32.mrb[0].mxu0
      %v4335 = vpop.f32.mrb[0].mxu0
      %v4336 = vadd.f32 0.0, %v4335
      %v4337 = vpop.f32.mrb[0].mxu0
      %4338 = vmatprep.mubr.bf16.mxu0 %v3591
      %4339 = vmatmul.mubr.bf16.gmra.mrb[0].mxu0 %v3590
      %v4340 = vpop.f32.mrb[0].mxu0
      %v4341 = vadd.f32 0.0, %v4340
      %v4342 = vpop.f32.mrb[0].mxu0
      %v4343 = vpop.f32.mrb[0].mxu0
      %v4344 = vadd.f32 0.0, %v4343
      %v4345 = vpop.f32.mrb[0].mxu0
      %4346 = vmatprep.mubr.bf16.mxu0 %v3600
      %4347 = vmatmul.mubr.bf16.gmra.mrb[0].mxu0 %v3599
      %v4348 = vpop.f32.mrb[0].mxu0
      %v4349 = vadd.f32 0.0, %v4348
      %v4350 = vpop.f32.mrb[0].mxu0
      %v4351 = vpop.f32.mrb[0].mxu0
      %v4352 = vadd.f32 0.0, %v4351
      %v4353 = vpop.f32.mrb[0].mxu0
      %4354 = vmatprep.mubr.bf16.mxu0 %v3609
      %4355 = vmatmul.mubr.bf16.gmra.mrb[0].mxu0 %v3608
      %v4356 = vpop.f32.mrb[0].mxu0
      %v4357 = vadd.f32 0.0, %v4356
      %v4358 = vpop.f32.mrb[0].mxu0
      %v4359 = vpop.f32.mrb[0].mxu0
      %v4360 = vadd.f32 0.0, %v4359
      %v4361 = vpop.f32.mrb[0].mxu0
      %4362 = vmatprep.mubr.bf16.mxu0 %v3618
      %4363 = vmatmul.mubr.bf16.gmra.mrb[0].mxu0 %v3617
      %v4364 = vpop.f32.mrb[0].mxu0
      %v4365 = vadd.f32 0.0, %v4364
      %v4366 = vpop.f32.mrb[0].mxu0
      %v4367 = vpop.f32.mrb[0].mxu0
      %v4368 = vadd.f32 0.0, %v4367
      %v4369 = vpop.f32.mrb[0].mxu0
      %4370 = vmatprep.mubr.bf16.mxu0 %v3627
      %4371 = vmatmul.mubr.bf16.gmra.mrb[0].mxu0 %v3626
      %v4372 = vpop.f32.mrb[0].mxu0
      %v4373 = vadd.f32 0.0, %v4372
      %v4374 = vpop.f32.mrb[0].mxu0
      %v4375 = vpop.f32.mrb[0].mxu0
      %v4376 = vadd.f32 0.0, %v4375
      %v4377 = vpop.f32.mrb[0].mxu0
      %4378 = vmatprep.mubr.bf16.mxu0 %v3636
      %4379 = vmatmul.mubr.bf16.gmra.mrb[0].mxu0 %v3635
      %v4380 = vpop.f32.mrb[0].mxu0
      %v4381 = vadd.f32 0.0, %v4380
      %v4382 = vpop.f32.mrb[0].mxu0
      %v4383 = vpop.f32.mrb[0].mxu0
      %v4384 = vadd.f32 0.0, %v4383
      %v4385 = vpop.f32.mrb[0].mxu0
      %4386 = vmatprep.mubr.bf16.mxu0 %v3645
      %4387 = vmatmul.mubr.bf16.gmra.mrb[0].mxu0 %v3644
      %v4388 = vpop.f32.mrb[0].mxu0
      %v4389 = vadd.f32 0.0, %v4388
      %v4390 = vpop.f32.mrb[0].mxu0
      %v4391 = vpop.f32.mrb[0].mxu0
      %v4392 = vadd.f32 0.0, %v4391
      %v4393 = vpop.f32.mrb[0].mxu0
      %4394 = vmatprep.mubr.bf16.mxu0 %v3654
      %4395 = vmatmul.mubr.bf16.gmra.mrb[0].mxu0 %v3653
      %v4396 = vpop.f32.mrb[0].mxu0
      %v4397 = vadd.f32 0.0, %v4396
      %v4398 = vpop.f32.mrb[0].mxu0
      %v4399 = vpop.f32.mrb[0].mxu0
      %v4400 = vadd.f32 0.0, %v4399
      %v4401 = vpop.f32.mrb[0].mxu0
      %4402 = vmatprep.mubr.bf16.mxu0 %v3663
      %4403 = vmatmul.mubr.bf16.gmra.mrb[0].mxu0 %v3662
      %v4404 = vpop.f32.mrb[0].mxu0
      %v4405 = vadd.f32 0.0, %v4404
      %v4406 = vpop.f32.mrb[0].mxu0
      %v4407 = vpop.f32.mrb[0].mxu0
      %v4408 = vadd.f32 0.0, %v4407
      %v4409 = vpop.f32.mrb[0].mxu0
      %4410 = vmatprep.mubr.bf16.mxu0 %v3672
      %4411 = vmatmul.mubr.bf16.gmra.mrb[0].mxu0 %v3671
      %v4412 = vpop.f32.mrb[0].mxu0
      %v4413 = vadd.f32 0.0, %v4412
      %v4414 = vpop.f32.mrb[0].mxu0
      %v4415 = vpop.f32.mrb[0].mxu0
      %v4416 = vadd.f32 0.0, %v4415
      %v4417 = vpop.f32.mrb[0].mxu0
      %4418 = vmatprep.mubr.bf16.mxu0 %v3681
      %4419 = vmatmul.mubr.bf16.gmra.mrb[0].mxu0 %v3680
      %v4420 = vpop.f32.mrb[0].mxu0
      %v4421 = vadd.f32 0.0, %v4420
      %v4422 = vpop.f32.mrb[0].mxu0
      %v4423 = vpop.f32.mrb[0].mxu0
      %v4424 = vadd.f32 0.0, %v4423
      %v4425 = vpop.f32.mrb[0].mxu0
      %4426 = vmatprep.mubr.bf16.mxu0 %v3690
      %4427 = vmatmul.mubr.bf16.gmra.mrb[0].mxu0 %v3689
      %v4428 = vpop.f32.mrb[0].mxu0
      %v4429 = vadd.f32 0.0, %v4428
      %v4430 = vpop.f32.mrb[0].mxu0
      %v4431 = vpop.f32.mrb[0].mxu0
      %v4432 = vadd.f32 0.0, %v4431
      %v4433 = vpop.f32.mrb[0].mxu0
      %4434 = vdwg.mxu0
      %4435 = vmatprep.subr.bf16.mxu0 0
      %4436 = vmatpush1.bf16.msra.mxu0 %v4146
      %4437 = vmatprep.subr.bf16.mxu0 0
      %4438 = vmatpush1.bf16.msra.mxu0 %v4147
      %4439 = vmatprep.subr.bf16.mxu0 0
      %4440 = vmatpush1.bf16.msra.mxu0 %v4148
      %4441 = vmatprep.subr.bf16.mxu0 0
      %4442 = vmatpush1.bf16.msra.mxu0 %v4149
      %4443 = vmatprep.subr.bf16.mxu0 0
      %4444 = vmatpush1.bf16.msra.mxu0 %v4150
      %4445 = vmatprep.subr.bf16.mxu0 0
      %4446 = vmatpush1.bf16.msra.mxu0 %v4151
      %4447 = vmatprep.subr.bf16.mxu0 0
      %4448 = vmatpush1.bf16.msra.mxu0 %v4152
      %4449 = vmatprep.subr.bf16.mxu0 0
      %4450 = vmatpush1.bf16.msra.mxu0 %v4153
      %4451 = vmatprep.subr.bf16.mxu0 0
      %4452 = vmatpush1.bf16.msra.mxu0 %v4154
      %4453 = vmatprep.subr.bf16.mxu0 0
      %4454 = vmatpush1.bf16.msra.mxu0 %v4155
      %4455 = vmatprep.subr.bf16.mxu0 0
      %4456 = vmatpush1.bf16.msra.mxu0 %v4156
      %4457 = vmatprep.subr.bf16.mxu0 0
      %4458 = vmatpush1.bf16.msra.mxu0 %v4157
      %4459 = vmatprep.subr.bf16.mxu0 0
      %4460 = vmatpush1.bf16.msra.mxu0 %v4158
      %4461 = vmatprep.subr.bf16.mxu0 0
      %4462 = vmatpush1.bf16.msra.mxu0 %v4159
      %4463 = vmatprep.subr.bf16.mxu0 0
      %4464 = vmatpush1.bf16.msra.mxu0 %v4160
      %4465 = vmatprep.subr.bf16.mxu0 0
      %4466 = vmatpush1.bf16.msra.mxu0 %v4161
      %4467 = vmatprep.mubr.bf16.mxu0 %v3557
      %4468 = vmatmul.mubr.bf16.gmra.mrb[0].mxu0 %v3556
      %v4469 = vpop.f32.mrb[0].mxu0
      %v4470 = vadd.f32 %v4309, %v4469
      %v4471 = vpop.f32.mrb[0].mxu0
      %v4472 = vpop.f32.mrb[0].mxu0
      %v4473 = vadd.f32 %v4312, %v4472
      %v4474 = vpop.f32.mrb[0].mxu0
      %4475 = vmatprep.mubr.bf16.mxu0 %v3566
      %4476 = vmatmul.mubr.bf16.gmra.mrb[0].mxu0 %v3565
      %v4477 = vpop.f32.mrb[0].mxu0
      %v4478 = vadd.f32 %v4317, %v4477
      %v4479 = vpop.f32.mrb[0].mxu0
      %v4480 = vpop.f32.mrb[0].mxu0
      %v4481 = vadd.f32 %v4320, %v4480
      %v4482 = vpop.f32.mrb[0].mxu0
      %4483 = vmatprep.mubr.bf16.mxu0 %v3575
      %4484 = vmatmul.mubr.bf16.gmra.mrb[0].mxu0 %v3574
      %v4485 = vpop.f32.mrb[0].mxu0
      %v4486 = vadd.f32 %v4325, %v4485
      %v4487 = vpop.f32.mrb[0].mxu0
      %v4488 = vpop.f32.mrb[0].mxu0
      %v4489 = vadd.f32 %v4328, %v4488
      %v4490 = vpop.f32.mrb[0].mxu0
      %4491 = vmatprep.mubr.bf16.mxu0 %v3584
      %4492 = vmatmul.mubr.bf16.gmra.mrb[0].mxu0 %v3583
      %v4493 = vpop.f32.mrb[0].mxu0
      %v4494 = vadd.f32 %v4333, %v4493
      %v4495 = vpop.f32.mrb[0].mxu0
      %v4496 = vpop.f32.mrb[0].mxu0
      %v4497 = vadd.f32 %v4336, %v4496
      %v4498 = vpop.f32.mrb[0].mxu0
      %4499 = vmatprep.mubr.bf16.mxu0 %v3593
      %4500 = vmatmul.mubr.bf16.gmra.mrb[0].mxu0 %v3592
      %v4501 = vpop.f32.mrb[0].mxu0
      %v4502 = vadd.f32 %v4341, %v4501
      %v4503 = vpop.f32.mrb[0].mxu0
      %v4504 = vpop.f32.mrb[0].mxu0
      %v4505 = vadd.f32 %v4344, %v4504
      %v4506 = vpop.f32.mrb[0].mxu0
      %4507 = vmatprep.mubr.bf16.mxu0 %v3602
      %4508 = vmatmul.mubr.bf16.gmra.mrb[0].mxu0 %v3601
      %v4509 = vpop.f32.mrb[0].mxu0
      %v4510 = vadd.f32 %v4349, %v4509
      %v4511 = vpop.f32.mrb[0].mxu0
      %v4512 = vpop.f32.mrb[0].mxu0
      %v4513 = vadd.f32 %v4352, %v4512
      %v4514 = vpop.f32.mrb[0].mxu0
      %4515 = vmatprep.mubr.bf16.mxu0 %v3611
      %4516 = vmatmul.mubr.bf16.gmra.mrb[0].mxu0 %v3610
      %v4517 = vpop.f32.mrb[0].mxu0
      %v4518 = vadd.f32 %v4357, %v4517
      %v4519 = vpop.f32.mrb[0].mxu0
      %v4520 = vpop.f32.mrb[0].mxu0
      %v4521 = vadd.f32 %v4360, %v4520
      %v4522 = vpop.f32.mrb[0].mxu0
      %4523 = vmatprep.mubr.bf16.mxu0 %v3620
      %4524 = vmatmul.mubr.bf16.gmra.mrb[0].mxu0 %v3619
      %v4525 = vpop.f32.mrb[0].mxu0
      %v4526 = vadd.f32 %v4365, %v4525
      %v4527 = vpop.f32.mrb[0].mxu0
      %v4528 = vpop.f32.mrb[0].mxu0
      %v4529 = vadd.f32 %v4368, %v4528
      %v4530 = vpop.f32.mrb[0].mxu0
      %4531 = vmatprep.mubr.bf16.mxu0 %v3629
      %4532 = vmatmul.mubr.bf16.gmra.mrb[0].mxu0 %v3628
      %v4533 = vpop.f32.mrb[0].mxu0
      %v4534 = vadd.f32 %v4373, %v4533
      %v4535 = vpop.f32.mrb[0].mxu0
      %v4536 = vpop.f32.mrb[0].mxu0
      %v4537 = vadd.f32 %v4376, %v4536
      %v4538 = vpop.f32.mrb[0].mxu0
      %4539 = vmatprep.mubr.bf16.mxu0 %v3638
      %4540 = vmatmul.mubr.bf16.gmra.mrb[0].mxu0 %v3637
      %v4541 = vpop.f32.mrb[0].mxu0
      %v4542 = vadd.f32 %v4381, %v4541
      %v4543 = vpop.f32.mrb[0].mxu0
      %v4544 = vpop.f32.mrb[0].mxu0
      %v4545 = vadd.f32 %v4384, %v4544
      %v4546 = vpop.f32.mrb[0].mxu0
      %4547 = vmatprep.mubr.bf16.mxu0 %v3647
      %4548 = vmatmul.mubr.bf16.gmra.mrb[0].mxu0 %v3646
      %v4549 = vpop.f32.mrb[0].mxu0
      %v4550 = vadd.f32 %v4389, %v4549
      %v4551 = vpop.f32.mrb[0].mxu0
      %v4552 = vpop.f32.mrb[0].mxu0
      %v4553 = vadd.f32 %v4392, %v4552
      %v4554 = vpop.f32.mrb[0].mxu0
      %4555 = vmatprep.mubr.bf16.mxu0 %v3656
      %4556 = vmatmul.mubr.bf16.gmra.mrb[0].mxu0 %v3655
      %v4557 = vpop.f32.mrb[0].mxu0
      %v4558 = vadd.f32 %v4397, %v4557
      %v4559 = vpop.f32.mrb[0].mxu0
      %v4560 = vpop.f32.mrb[0].mxu0
      %v4561 = vadd.f32 %v4400, %v4560
      %v4562 = vpop.f32.mrb[0].mxu0
      %4563 = vmatprep.mubr.bf16.mxu0 %v3665
      %4564 = vmatmul.mubr.bf16.gmra.mrb[0].mxu0 %v3664
      %v4565 = vpop.f32.mrb[0].mxu0
      %v4566 = vadd.f32 %v4405, %v4565
      %v4567 = vpop.f32.mrb[0].mxu0
      %v4568 = vpop.f32.mrb[0].mxu0
      %v4569 = vadd.f32 %v4408, %v4568
      %v4570 = vpop.f32.mrb[0].mxu0
      %4571 = vmatprep.mubr.bf16.mxu0 %v3674
      %4572 = vmatmul.mubr.bf16.gmra.mrb[0].mxu0 %v3673
      %v4573 = vpop.f32.mrb[0].mxu0
      %v4574 = vadd.f32 %v4413, %v4573
      %v4575 = vpop.f32.mrb[0].mxu0
      %v4576 = vpop.f32.mrb[0].mxu0
      %v4577 = vadd.f32 %v4416, %v4576
      %v4578 = vpop.f32.mrb[0].mxu0
      %4579 = vmatprep.mubr.bf16.mxu0 %v3683
      %4580 = vmatmul.mubr.bf16.gmra.mrb[0].mxu0 %v3682
      %v4581 = vpop.f32.mrb[0].mxu0
      %v4582 = vadd.f32 %v4421, %v4581
      %v4583 = vpop.f32.mrb[0].mxu0
      %v4584 = vpop.f32.mrb[0].mxu0
      %v4585 = vadd.f32 %v4424, %v4584
      %v4586 = vpop.f32.mrb[0].mxu0
      %4587 = vmatprep.mubr.bf16.mxu0 %v3692
      %4588 = vmatmul.mubr.bf16.gmra.mrb[0].mxu0 %v3691
      %v4589 = vpop.f32.mrb[0].mxu0
      %v4590 = vadd.f32 %v4429, %v4589
      %v4591 = vpop.f32.mrb[0].mxu0
      %v4592 = vpop.f32.mrb[0].mxu0
      %v4593 = vadd.f32 %v4432, %v4592
      %v4594 = vpop.f32.mrb[0].mxu0
      %4595 = vdwg.mxu0
      %4596 = vmatprep.subr.bf16.mxu0 0
      %4597 = vmatpush1.bf16.msra.mxu0 %v4162
      %4598 = vmatprep.subr.bf16.mxu0 0
      %4599 = vmatpush1.bf16.msra.mxu0 %v4163
      %4600 = vmatprep.subr.bf16.mxu0 0
      %4601 = vmatpush1.bf16.msra.mxu0 %v4164
      %4602 = vmatprep.subr.bf16.mxu0 0
      %4603 = vmatpush1.bf16.msra.mxu0 %v4165
      %4604 = vmatprep.subr.bf16.mxu0 0
      %4605 = vmatpush1.bf16.msra.mxu0 %v4166
      %4606 = vmatprep.subr.bf16.mxu0 0
      %4607 = vmatpush1.bf16.msra.mxu0 %v4167
      %4608 = vmatprep.subr.bf16.mxu0 0
      %4609 = vmatpush1.bf16.msra.mxu0 %v4168
      %4610 = vmatprep.subr.bf16.mxu0 0
      %4611 = vmatpush1.bf16.msra.mxu0 %v4169
      %4612 = vmatprep.subr.bf16.mxu0 0
      %4613 = vmatpush1.bf16.msra.mxu0 %v4170
      %4614 = vmatprep.subr.bf16.mxu0 0
      %4615 = vmatpush1.bf16.msra.mxu0 %v4171
      %4616 = vmatprep.subr.bf16.mxu0 0
      %4617 = vmatpush1.bf16.msra.mxu0 %v4172
      %4618 = vmatprep.subr.bf16.mxu0 0
      %4619 = vmatpush1.bf16.msra.mxu0 %v4173
      %4620 = vmatprep.subr.bf16.mxu0 0
      %4621 = vmatpush1.bf16.msra.mxu0 %v4174
      %4622 = vmatprep.subr.bf16.mxu0 0
      %4623 = vmatpush1.bf16.msra.mxu0 %v4175
      %4624 = vmatprep.subr.bf16.mxu0 0
      %4625 = vmatpush1.bf16.msra.mxu0 %v4176
      %4626 = vmatprep.subr.bf16.mxu0 0
      %4627 = vmatpush1.bf16.msra.mxu0 %v4177
      %4628 = vmatprep.mubr.bf16.mxu0 %v3559
      %4629 = vmatmul.mubr.bf16.gmra.mrb[0].mxu0 %v3558
      %v4630 = vpop.f32.mrb[0].mxu0
      %v4631 = vadd.f32 %v4470, %v4630
      %v4632 = vpop.f32.mrb[0].mxu0
      %v4633 = vpop.f32.mrb[0].mxu0
      %v4634 = vadd.f32 %v4473, %v4633
      %v4635 = vpop.f32.mrb[0].mxu0
      %4636 = vmatprep.mubr.bf16.mxu0 %v3568
      %4637 = vmatmul.mubr.bf16.gmra.mrb[0].mxu0 %v3567
      %v4638 = vpop.f32.mrb[0].mxu0
      %v4639 = vadd.f32 %v4478, %v4638
      %v4640 = vpop.f32.mrb[0].mxu0
      %v4641 = vpop.f32.mrb[0].mxu0
      %v4642 = vadd.f32 %v4481, %v4641
      %v4643 = vpop.f32.mrb[0].mxu0
      %4644 = vmatprep.mubr.bf16.mxu0 %v3577
      %4645 = vmatmul.mubr.bf16.gmra.mrb[0].mxu0 %v3576
      %v4646 = vpop.f32.mrb[0].mxu0
      %v4647 = vadd.f32 %v4486, %v4646
      %v4648 = vpop.f32.mrb[0].mxu0
      %v4649 = vpop.f32.mrb[0].mxu0
      %v4650 = vadd.f32 %v4489, %v4649
      %v4651 = vpop.f32.mrb[0].mxu0
      %4652 = vmatprep.mubr.bf16.mxu0 %v3586
      %4653 = vmatmul.mubr.bf16.gmra.mrb[0].mxu0 %v3585
      %v4654 = vpop.f32.mrb[0].mxu0
      %v4655 = vadd.f32 %v4494, %v4654
      %v4656 = vpop.f32.mrb[0].mxu0
      %v4657 = vpop.f32.mrb[0].mxu0
      %v4658 = vadd.f32 %v4497, %v4657
      %v4659 = vpop.f32.mrb[0].mxu0
      %4660 = vmatprep.mubr.bf16.mxu0 %v3595
      %4661 = vmatmul.mubr.bf16.gmra.mrb[0].mxu0 %v3594
      %v4662 = vpop.f32.mrb[0].mxu0
      %v4663 = vadd.f32 %v4502, %v4662
      %v4664 = vpop.f32.mrb[0].mxu0
      %v4665 = vpop.f32.mrb[0].mxu0
      %v4666 = vadd.f32 %v4505, %v4665
      %v4667 = vpop.f32.mrb[0].mxu0
      %4668 = vmatprep.mubr.bf16.mxu0 %v3604
      %4669 = vmatmul.mubr.bf16.gmra.mrb[0].mxu0 %v3603
      %v4670 = vpop.f32.mrb[0].mxu0
      %v4671 = vadd.f32 %v4510, %v4670
      %v4672 = vpop.f32.mrb[0].mxu0
      %v4673 = vpop.f32.mrb[0].mxu0
      %v4674 = vadd.f32 %v4513, %v4673
      %v4675 = vpop.f32.mrb[0].mxu0
      %4676 = vmatprep.mubr.bf16.mxu0 %v3613
      %4677 = vmatmul.mubr.bf16.gmra.mrb[0].mxu0 %v3612
      %v4678 = vpop.f32.mrb[0].mxu0
      %v4679 = vadd.f32 %v4518, %v4678
      %v4680 = vpop.f32.mrb[0].mxu0
      %v4681 = vpop.f32.mrb[0].mxu0
      %v4682 = vadd.f32 %v4521, %v4681
      %v4683 = vpop.f32.mrb[0].mxu0
      %4684 = vmatprep.mubr.bf16.mxu0 %v3622
      %4685 = vmatmul.mubr.bf16.gmra.mrb[0].mxu0 %v3621
      %v4686 = vpop.f32.mrb[0].mxu0
      %v4687 = vadd.f32 %v4526, %v4686
      %v4688 = vpop.f32.mrb[0].mxu0
      %v4689 = vpop.f32.mrb[0].mxu0
      %v4690 = vadd.f32 %v4529, %v4689
      %v4691 = vpop.f32.mrb[0].mxu0
      %4692 = vmatprep.mubr.bf16.mxu0 %v3631
      %4693 = vmatmul.mubr.bf16.gmra.mrb[0].mxu0 %v3630
      %v4694 = vpop.f32.mrb[0].mxu0
      %v4695 = vadd.f32 %v4534, %v4694
      %v4696 = vpop.f32.mrb[0].mxu0
      %v4697 = vpop.f32.mrb[0].mxu0
      %v4698 = vadd.f32 %v4537, %v4697
      %v4699 = vpop.f32.mrb[0].mxu0
      %4700 = vmatprep.mubr.bf16.mxu0 %v3640
      %4701 = vmatmul.mubr.bf16.gmra.mrb[0].mxu0 %v3639
      %v4702 = vpop.f32.mrb[0].mxu0
      %v4703 = vadd.f32 %v4542, %v4702
      %v4704 = vpop.f32.mrb[0].mxu0
      %v4705 = vpop.f32.mrb[0].mxu0
      %v4706 = vadd.f32 %v4545, %v4705
      %v4707 = vpop.f32.mrb[0].mxu0
      %4708 = vmatprep.mubr.bf16.mxu0 %v3649
      %4709 = vmatmul.mubr.bf16.gmra.mrb[0].mxu0 %v3648
      %v4710 = vpop.f32.mrb[0].mxu0
      %v4711 = vadd.f32 %v4550, %v4710
      %v4712 = vpop.f32.mrb[0].mxu0
      %v4713 = vpop.f32.mrb[0].mxu0
      %v4714 = vadd.f32 %v4553, %v4713
      %v4715 = vpop.f32.mrb[0].mxu0
      %4716 = vmatprep.mubr.bf16.mxu0 %v3658
      %4717 = vmatmul.mubr.bf16.gmra.mrb[0].mxu0 %v3657
      %v4718 = vpop.f32.mrb[0].mxu0
      %v4719 = vadd.f32 %v4558, %v4718
      %v4720 = vpop.f32.mrb[0].mxu0
      %v4721 = vpop.f32.mrb[0].mxu0
      %v4722 = vadd.f32 %v4561, %v4721
      %v4723 = vpop.f32.mrb[0].mxu0
      %4724 = vmatprep.mubr.bf16.mxu0 %v3667
      %4725 = vmatmul.mubr.bf16.gmra.mrb[0].mxu0 %v3666
      %v4726 = vpop.f32.mrb[0].mxu0
      %v4727 = vadd.f32 %v4566, %v4726
      %v4728 = vpop.f32.mrb[0].mxu0
      %v4729 = vpop.f32.mrb[0].mxu0
      %v4730 = vadd.f32 %v4569, %v4729
      %v4731 = vpop.f32.mrb[0].mxu0
      %4732 = vmatprep.mubr.bf16.mxu0 %v3676
      %4733 = vmatmul.mubr.bf16.gmra.mrb[0].mxu0 %v3675
      %v4734 = vpop.f32.mrb[0].mxu0
      %v4735 = vadd.f32 %v4574, %v4734
      %v4736 = vpop.f32.mrb[0].mxu0
      %v4737 = vpop.f32.mrb[0].mxu0
      %v4738 = vadd.f32 %v4577, %v4737
      %v4739 = vpop.f32.mrb[0].mxu0
      %4740 = vmatprep.mubr.bf16.mxu0 %v3685
      %4741 = vmatmul.mubr.bf16.gmra.mrb[0].mxu0 %v3684
      %v4742 = vpop.f32.mrb[0].mxu0
      %v4743 = vadd.f32 %v4582, %v4742
      %v4744 = vpop.f32.mrb[0].mxu0
      %v4745 = vpop.f32.mrb[0].mxu0
      %v4746 = vadd.f32 %v4585, %v4745
      %v4747 = vpop.f32.mrb[0].mxu0
      %4748 = vmatprep.mubr.bf16.mxu0 %v3694
      %4749 = vmatmul.mubr.bf16.gmra.mrb[0].mxu0 %v3693
      %v4750 = vpop.f32.mrb[0].mxu0
      %v4751 = vadd.f32 %v4590, %v4750
      %v4752 = vpop.f32.mrb[0].mxu0
      %v4753 = vpop.f32.mrb[0].mxu0
      %v4754 = vadd.f32 %v4593, %v4753
      %v4755 = vpop.f32.mrb[0].mxu0
      %4756 = vdwg.mxu0
      %4757 = vmatprep.subr.bf16.mxu0 0
      %4758 = vmatpush1.bf16.msra.mxu0 %v4178
      %4759 = vmatprep.subr.bf16.mxu0 0
      %4760 = vmatpush1.bf16.msra.mxu0 %v4179
      %4761 = vmatprep.subr.bf16.mxu0 0
      %4762 = vmatpush1.bf16.msra.mxu0 %v4180
      %4763 = vmatprep.subr.bf16.mxu0 0
      %4764 = vmatpush1.bf16.msra.mxu0 %v4181
      %4765 = vmatprep.subr.bf16.mxu0 0
      %4766 = vmatpush1.bf16.msra.mxu0 %v4182
      %4767 = vmatprep.subr.bf16.mxu0 0
      %4768 = vmatpush1.bf16.msra.mxu0 %v4183
      %4769 = vmatprep.subr.bf16.mxu0 0
      %4770 = vmatpush1.bf16.msra.mxu0 %v4184
      %4771 = vmatprep.subr.bf16.mxu0 0
      %4772 = vmatpush1.bf16.msra.mxu0 %v4185
      %4773 = vmatprep.subr.bf16.mxu0 0
      %4774 = vmatpush1.bf16.msra.mxu0 %v4186
      %4775 = vmatprep.subr.bf16.mxu0 0
      %4776 = vmatpush1.bf16.msra.mxu0 %v4187
      %4777 = vmatprep.subr.bf16.mxu0 0
      %4778 = vmatpush1.bf16.msra.mxu0 %v4188
      %4779 = vmatprep.subr.bf16.mxu0 0
      %4780 = vmatpush1.bf16.msra.mxu0 %v4189
      %4781 = vmatprep.subr.bf16.mxu0 0
      %4782 = vmatpush1.bf16.msra.mxu0 %v4190
      %4783 = vmatprep.subr.bf16.mxu0 0
      %4784 = vmatpush1.bf16.msra.mxu0 %v4191
      %4785 = vmatprep.subr.bf16.mxu0 0
      %4786 = vmatpush1.bf16.msra.mxu0 %v4192
      %4787 = vmatprep.subr.bf16.mxu0 0
      %4788 = vmatpush1.bf16.msra.mxu0 %v4193
      %4789 = vmatprep.mubr.bf16.mxu0 %v3561
      %4790 = vmatmul.mubr.bf16.gmra.mrb[0].mxu0 %v3560
      %v4791 = vpop.f32.mrb[0].mxu0
      %v4792 = vadd.f32 %v4631, %v4791
      %v4793 = vpop.f32.mrb[0].mxu0
      %v4794 = vpop.f32.mrb[0].mxu0
      %v4795 = vadd.f32 %v4634, %v4794
      %v4796 = vpop.f32.mrb[0].mxu0
      %4797 = vmatprep.mubr.bf16.mxu0 %v3570
      %4798 = vmatmul.mubr.bf16.gmra.mrb[0].mxu0 %v3569
      %v4799 = vpop.f32.mrb[0].mxu0
      %v4800 = vadd.f32 %v4639, %v4799
      %v4801 = vpop.f32.mrb[0].mxu0
      %v4802 = vpop.f32.mrb[0].mxu0
      %v4803 = vadd.f32 %v4642, %v4802
      %v4804 = vpop.f32.mrb[0].mxu0
      %4805 = vmatprep.mubr.bf16.mxu0 %v3579
      %4806 = vmatmul.mubr.bf16.gmra.mrb[0].mxu0 %v3578
      %v4807 = vpop.f32.mrb[0].mxu0
      %v4808 = vadd.f32 %v4647, %v4807
      %v4809 = vpop.f32.mrb[0].mxu0
      %v4810 = vpop.f32.mrb[0].mxu0
      %v4811 = vadd.f32 %v4650, %v4810
      %v4812 = vpop.f32.mrb[0].mxu0
      %4813 = vmatprep.mubr.bf16.mxu0 %v3588
      %4814 = vmatmul.mubr.bf16.gmra.mrb[0].mxu0 %v3587
      %v4815 = vpop.f32.mrb[0].mxu0
      %v4816 = vadd.f32 %v4655, %v4815
      %v4817 = vpop.f32.mrb[0].mxu0
      %v4818 = vpop.f32.mrb[0].mxu0
      %v4819 = vadd.f32 %v4658, %v4818
      %v4820 = vpop.f32.mrb[0].mxu0
      %4821 = vmatprep.mubr.bf16.mxu0 %v3597
      %4822 = vmatmul.mubr.bf16.gmra.mrb[0].mxu0 %v3596
      %v4823 = vpop.f32.mrb[0].mxu0
      %v4824 = vadd.f32 %v4663, %v4823
      %v4825 = vpop.f32.mrb[0].mxu0
      %v4826 = vpop.f32.mrb[0].mxu0
      %v4827 = vadd.f32 %v4666, %v4826
      %v4828 = vpop.f32.mrb[0].mxu0
      %4829 = vmatprep.mubr.bf16.mxu0 %v3606
      %4830 = vmatmul.mubr.bf16.gmra.mrb[0].mxu0 %v3605
      %v4831 = vpop.f32.mrb[0].mxu0
      %v4832 = vadd.f32 %v4671, %v4831
      %v4833 = vpop.f32.mrb[0].mxu0
      %v4834 = vpop.f32.mrb[0].mxu0
      %v4835 = vadd.f32 %v4674, %v4834
      %v4836 = vpop.f32.mrb[0].mxu0
      %4837 = vmatprep.mubr.bf16.mxu0 %v3615
      %4838 = vmatmul.mubr.bf16.gmra.mrb[0].mxu0 %v3614
      %v4839 = vpop.f32.mrb[0].mxu0
      %v4840 = vadd.f32 %v4679, %v4839
      %v4841 = vpop.f32.mrb[0].mxu0
      %v4842 = vpop.f32.mrb[0].mxu0
      %v4843 = vadd.f32 %v4682, %v4842
      %v4844 = vpop.f32.mrb[0].mxu0
      %4845 = vmatprep.mubr.bf16.mxu0 %v3624
      %4846 = vmatmul.mubr.bf16.gmra.mrb[0].mxu0 %v3623
      %v4847 = vpop.f32.mrb[0].mxu0
      %v4848 = vadd.f32 %v4687, %v4847
      %v4849 = vpop.f32.mrb[0].mxu0
      %v4850 = vpop.f32.mrb[0].mxu0
      %v4851 = vadd.f32 %v4690, %v4850
      %v4852 = vpop.f32.mrb[0].mxu0
      %4853 = vmatprep.mubr.bf16.mxu0 %v3633
      %4854 = vmatmul.mubr.bf16.gmra.mrb[0].mxu0 %v3632
      %v4855 = vpop.f32.mrb[0].mxu0
      %v4856 = vadd.f32 %v4695, %v4855
      %v4857 = vpop.f32.mrb[0].mxu0
      %v4858 = vpop.f32.mrb[0].mxu0
      %v4859 = vadd.f32 %v4698, %v4858
      %v4860 = vpop.f32.mrb[0].mxu0
      %4861 = vmatprep.mubr.bf16.mxu0 %v3642
      %4862 = vmatmul.mubr.bf16.gmra.mrb[0].mxu0 %v3641
      %v4863 = vpop.f32.mrb[0].mxu0
      %v4864 = vadd.f32 %v4703, %v4863
      %v4865 = vpop.f32.mrb[0].mxu0
      %v4866 = vpop.f32.mrb[0].mxu0
      %v4867 = vadd.f32 %v4706, %v4866
      %v4868 = vpop.f32.mrb[0].mxu0
      %4869 = vmatprep.mubr.bf16.mxu0 %v3651
      %4870 = vmatmul.mubr.bf16.gmra.mrb[0].mxu0 %v3650
      %v4871 = vpop.f32.mrb[0].mxu0
      %v4872 = vadd.f32 %v4711, %v4871
      %v4873 = vpop.f32.mrb[0].mxu0
      %v4874 = vpop.f32.mrb[0].mxu0
      %v4875 = vadd.f32 %v4714, %v4874
      %v4876 = vpop.f32.mrb[0].mxu0
      %4877 = vmatprep.mubr.bf16.mxu0 %v3660
      %4878 = vmatmul.mubr.bf16.gmra.mrb[0].mxu0 %v3659
      %v4879 = vpop.f32.mrb[0].mxu0
      %v4880 = vadd.f32 %v4719, %v4879
      %v4881 = vpop.f32.mrb[0].mxu0
      %v4882 = vpop.f32.mrb[0].mxu0
      %v4883 = vadd.f32 %v4722, %v4882
      %v4884 = vpop.f32.mrb[0].mxu0
      %4885 = vmatprep.mubr.bf16.mxu0 %v3669
      %4886 = vmatmul.mubr.bf16.gmra.mrb[0].mxu0 %v3668
      %v4887 = vpop.f32.mrb[0].mxu0
      %v4888 = vadd.f32 %v4727, %v4887
      %v4889 = vpop.f32.mrb[0].mxu0
      %v4890 = vpop.f32.mrb[0].mxu0
      %v4891 = vadd.f32 %v4730, %v4890
      %v4892 = vpop.f32.mrb[0].mxu0
      %4893 = vmatprep.mubr.bf16.mxu0 %v3678
      %4894 = vmatmul.mubr.bf16.gmra.mrb[0].mxu0 %v3677
      %v4895 = vpop.f32.mrb[0].mxu0
      %v4896 = vadd.f32 %v4735, %v4895
      %v4897 = vpop.f32.mrb[0].mxu0
      %v4898 = vpop.f32.mrb[0].mxu0
      %v4899 = vadd.f32 %v4738, %v4898
      %v4900 = vpop.f32.mrb[0].mxu0
      %4901 = vmatprep.mubr.bf16.mxu0 %v3687
      %4902 = vmatmul.mubr.bf16.gmra.mrb[0].mxu0 %v3686
      %v4903 = vpop.f32.mrb[0].mxu0
      %v4904 = vadd.f32 %v4743, %v4903
      %v4905 = vpop.f32.mrb[0].mxu0
      %v4906 = vpop.f32.mrb[0].mxu0
      %v4907 = vadd.f32 %v4746, %v4906
      %v4908 = vpop.f32.mrb[0].mxu0
      %4909 = vmatprep.mubr.bf16.mxu0 %v3696
      %4910 = vmatmul.mubr.bf16.gmra.mrb[0].mxu0 %v3695
      %v4911 = vpop.f32.mrb[0].mxu0
      %v4912 = vadd.f32 %v4751, %v4911
      %v4913 = vpop.f32.mrb[0].mxu0
      %v4914 = vpop.f32.mrb[0].mxu0
      %v4915 = vadd.f32 %v4754, %v4914
      %v4916 = vpop.f32.mrb[0].mxu0
      %4917 = vdwg.mxu0
      %4918 = vmatprep.subr.bf16.mxu0 0
      %4919 = vmatpush1.bf16.msra.mxu0 %v4194
      %4920 = vmatprep.subr.bf16.mxu0 0
      %4921 = vmatpush1.bf16.msra.mxu0 %v4195
      %4922 = vmatprep.subr.bf16.mxu0 0
      %4923 = vmatpush1.bf16.msra.mxu0 %v4196
      %4924 = vmatprep.subr.bf16.mxu0 0
      %4925 = vmatpush1.bf16.msra.mxu0 %v4197
      %4926 = vmatprep.subr.bf16.mxu0 0
      %4927 = vmatpush1.bf16.msra.mxu0 %v4198
      %4928 = vmatprep.subr.bf16.mxu0 0
      %4929 = vmatpush1.bf16.msra.mxu0 %v4199
      %4930 = vmatprep.subr.bf16.mxu0 0
      %4931 = vmatpush1.bf16.msra.mxu0 %v4200
      %4932 = vmatprep.subr.bf16.mxu0 0
      %4933 = vmatpush1.bf16.msra.mxu0 %v4201
      %4934 = vmatprep.subr.bf16.mxu0 0
      %4935 = vmatpush1.bf16.msra.mxu0 0
      %4936 = vmatprep.subr.bf16.mxu0 0
      %4937 = vmatpush1.bf16.msra.mxu0 0
      %4938 = vmatprep.subr.bf16.mxu0 0
      %4939 = vmatpush1.bf16.msra.mxu0 0
      %4940 = vmatprep.subr.bf16.mxu0 0
      %4941 = vmatpush1.bf16.msra.mxu0 0
      %4942 = vmatprep.subr.bf16.mxu0 0
      %4943 = vmatpush1.bf16.msra.mxu0 0
      %4944 = vmatprep.subr.bf16.mxu0 0
      %4945 = vmatpush1.bf16.msra.mxu0 0
      %4946 = vmatprep.subr.bf16.mxu0 0
      %4947 = vmatpush1.bf16.msra.mxu0 0
      %4948 = vmatprep.subr.bf16.mxu0 0
      %4949 = vmatpush1.bf16.msra.mxu0 0
      %4950 = vmatprep.mubr.bf16.mxu0 0
      %4951 = vmatmul.mubr.bf16.gmra.mrb[0].mxu0 %v3562
      %v4952 = vpop.f32.mrb[0].mxu0
      %v4953 = vadd.f32 %v4792, %v4952
      %v4954 = vpop.f32.mrb[0].mxu0
      %v4955 = vpop.f32.mrb[0].mxu0
      %v4956 = vadd.f32 %v4795, %v4955
      %v4957 = vpop.f32.mrb[0].mxu0
      %4958 = vmatprep.mubr.bf16.mxu0 0
      %4959 = vmatmul.mubr.bf16.gmra.mrb[0].mxu0 %v3571
      %v4960 = vpop.f32.mrb[0].mxu0
      %v4961 = vadd.f32 %v4800, %v4960
      %v4962 = vpop.f32.mrb[0].mxu0
      %v4963 = vpop.f32.mrb[0].mxu0
      %v4964 = vadd.f32 %v4803, %v4963
      %v4965 = vpop.f32.mrb[0].mxu0
      %4966 = vmatprep.mubr.bf16.mxu0 0
      %4967 = vmatmul.mubr.bf16.gmra.mrb[0].mxu0 %v3580
      %v4968 = vpop.f32.mrb[0].mxu0
      %v4969 = vadd.f32 %v4808, %v4968
      %v4970 = vpop.f32.mrb[0].mxu0
      %v4971 = vpop.f32.mrb[0].mxu0
      %v4972 = vadd.f32 %v4811, %v4971
      %v4973 = vpop.f32.mrb[0].mxu0
      %4974 = vmatprep.mubr.bf16.mxu0 0
      %4975 = vmatmul.mubr.bf16.gmra.mrb[0].mxu0 %v3589
      %v4976 = vpop.f32.mrb[0].mxu0
      %v4977 = vadd.f32 %v4816, %v4976
      %v4978 = vpop.f32.mrb[0].mxu0
      %v4979 = vpop.f32.mrb[0].mxu0
      %v4980 = vadd.f32 %v4819, %v4979
      %v4981 = vpop.f32.mrb[0].mxu0
      %4982 = vmatprep.mubr.bf16.mxu0 0
      %4983 = vmatmul.mubr.bf16.gmra.mrb[0].mxu0 %v3598
      %v4984 = vpop.f32.mrb[0].mxu0
      %v4985 = vadd.f32 %v4824, %v4984
      %v4986 = vpop.f32.mrb[0].mxu0
      %v4987 = vpop.f32.mrb[0].mxu0
      %v4988 = vadd.f32 %v4827, %v4987
      %v4989 = vpop.f32.mrb[0].mxu0
      %4990 = vmatprep.mubr.bf16.mxu0 0
      %4991 = vmatmul.mubr.bf16.gmra.mrb[0].mxu0 %v3607
      %v4992 = vpop.f32.mrb[0].mxu0
      %v4993 = vadd.f32 %v4832, %v4992
      %v4994 = vpop.f32.mrb[0].mxu0
      %v4995 = vpop.f32.mrb[0].mxu0
      %v4996 = vadd.f32 %v4835, %v4995
      %v4997 = vpop.f32.mrb[0].mxu0
      %4998 = vmatprep.mubr.bf16.mxu0 0
      %4999 = vmatmul.mubr.bf16.gmra.mrb[0].mxu0 %v3616
      %v5000 = vpop.f32.mrb[0].mxu0
      %v5001 = vadd.f32 %v4840, %v5000
      %v5002 = vpop.f32.mrb[0].mxu0
      %v5003 = vpop.f32.mrb[0].mxu0
      %v5004 = vadd.f32 %v4843, %v5003
      %v5005 = vpop.f32.mrb[0].mxu0
      %5006 = vmatprep.mubr.bf16.mxu0 0
      %5007 = vmatmul.mubr.bf16.gmra.mrb[0].mxu0 %v3625
      %v5008 = vpop.f32.mrb[0].mxu0
      %v5009 = vadd.f32 %v4848, %v5008
      %v5010 = vpop.f32.mrb[0].mxu0
      %v5011 = vpop.f32.mrb[0].mxu0
      %v5012 = vadd.f32 %v4851, %v5011
      %v5013 = vpop.f32.mrb[0].mxu0
      %5014 = vmatprep.mubr.bf16.mxu0 0
      %5015 = vmatmul.mubr.bf16.gmra.mrb[0].mxu0 %v3634
      %v5016 = vpop.f32.mrb[0].mxu0
      %v5017 = vadd.f32 %v4856, %v5016
      %v5018 = vpop.f32.mrb[0].mxu0
      %v5019 = vpop.f32.mrb[0].mxu0
      %v5020 = vadd.f32 %v4859, %v5019
      %v5021 = vpop.f32.mrb[0].mxu0
      %5022 = vmatprep.mubr.bf16.mxu0 0
      %5023 = vmatmul.mubr.bf16.gmra.mrb[0].mxu0 %v3643
      %v5024 = vpop.f32.mrb[0].mxu0
      %v5025 = vadd.f32 %v4864, %v5024
      %v5026 = vpop.f32.mrb[0].mxu0
      %v5027 = vpop.f32.mrb[0].mxu0
      %v5028 = vadd.f32 %v4867, %v5027
      %v5029 = vpop.f32.mrb[0].mxu0
      %5030 = vmatprep.mubr.bf16.mxu0 0
      %5031 = vmatmul.mubr.bf16.gmra.mrb[0].mxu0 %v3652
      %v5032 = vpop.f32.mrb[0].mxu0
      %v5033 = vadd.f32 %v4872, %v5032
      %v5034 = vpop.f32.mrb[0].mxu0
      %v5035 = vpop.f32.mrb[0].mxu0
      %v5036 = vadd.f32 %v4875, %v5035
      %v5037 = vpop.f32.mrb[0].mxu0
      %5038 = vmatprep.mubr.bf16.mxu0 0
      %5039 = vmatmul.mubr.bf16.gmra.mrb[0].mxu0 %v3661
      %v5040 = vpop.f32.mrb[0].mxu0
      %v5041 = vadd.f32 %v4880, %v5040
      %v5042 = vpop.f32.mrb[0].mxu0
      %v5043 = vpop.f32.mrb[0].mxu0
      %v5044 = vadd.f32 %v4883, %v5043
      %v5045 = vpop.f32.mrb[0].mxu0
      %5046 = vmatprep.mubr.bf16.mxu0 0
      %5047 = vmatmul.mubr.bf16.gmra.mrb[0].mxu0 %v3670
      %v5048 = vpop.f32.mrb[0].mxu0
      %v5049 = vadd.f32 %v4888, %v5048
      %v5050 = vpop.f32.mrb[0].mxu0
      %v5051 = vpop.f32.mrb[0].mxu0
      %v5052 = vadd.f32 %v4891, %v5051
      %v5053 = vpop.f32.mrb[0].mxu0
      %5054 = vmatprep.mubr.bf16.mxu0 0
      %5055 = vmatmul.mubr.bf16.gmra.mrb[0].mxu0 %v3679
      %v5056 = vpop.f32.mrb[0].mxu0
      %v5057 = vadd.f32 %v4896, %v5056
      %v5058 = vpop.f32.mrb[0].mxu0
      %v5059 = vpop.f32.mrb[0].mxu0
      %v5060 = vadd.f32 %v4899, %v5059
      %v5061 = vpop.f32.mrb[0].mxu0
      %5062 = vmatprep.mubr.bf16.mxu0 0
      %5063 = vmatmul.mubr.bf16.gmra.mrb[0].mxu0 %v3688
      %v5064 = vpop.f32.mrb[0].mxu0
      %v5065 = vadd.f32 %v4904, %v5064
      %v5066 = vpop.f32.mrb[0].mxu0
      %v5067 = vpop.f32.mrb[0].mxu0
      %v5068 = vadd.f32 %v4907, %v5067
      %v5069 = vpop.f32.mrb[0].mxu0
      %5070 = vmatprep.mubr.bf16.mxu0 0
      %5071 = vmatmul.mubr.bf16.gmra.mrb[0].mxu0 %v3697
      %v5072 = vpop.f32.mrb[0].mxu0
      %v5073 = vadd.f32 %v4912, %v5072
      %v5074 = vpop.f32.mrb[0].mxu0
      %v5075 = vpop.f32.mrb[0].mxu0
      %v5076 = vadd.f32 %v4915, %v5075
      %v5077 = vpop.f32.mrb[0].mxu0
      %5078 = vdwg.mxu0
      %v5079 = vpack.c.bf16 %v4956, %v4953
      %v5080 = vpack.c.bf16 %v4964, %v4961
      %v5081 = vpack.c.bf16 %v4972, %v4969
      %v5082 = vpack.c.bf16 %v4980, %v4977
      %v5083 = vpack.c.bf16 %v4988, %v4985
      %v5084 = vpack.c.bf16 %v4996, %v4993
      %v5085 = vpack.c.bf16 %v5004, %v5001
      %v5086 = vpack.c.bf16 %v5012, %v5009
      %v5087 = vpack.c.bf16 %v5020, %v5017
      %v5088 = vpack.c.bf16 %v5028, %v5025
      %v5089 = vpack.c.bf16 %v5036, %v5033
      %v5090 = vpack.c.bf16 %v5044, %v5041
      %v5091 = vpack.c.bf16 %v5052, %v5049
      %v5092 = vpack.c.bf16 %v5060, %v5057
      %v5093 = vpack.c.bf16 %v5068, %v5065
      %v5094 = vpack.c.bf16 %v5076, %v5073
      %v5111 = vunpack.c.l.b16 %v5079
      %v5112 = vunpack.c.h.b16 %v5079
      %v5113 = vunpack.c.l.b16 %v5080
      %v5114 = vunpack.c.h.b16 %v5080
      %v5115 = vunpack.c.l.b16 %v5081
      %v5116 = vunpack.c.h.b16 %v5081
      %v5117 = vunpack.c.l.b16 %v5082
      %v5118 = vunpack.c.h.b16 %v5082
      %v5119 = vunpack.c.l.b16 %v5083
      %v5120 = vunpack.c.h.b16 %v5083
      %v5121 = vunpack.c.l.b16 %v5084
      %v5122 = vunpack.c.h.b16 %v5084
      %v5123 = vunpack.c.l.b16 %v5085
      %v5124 = vunpack.c.h.b16 %v5085
      %v5125 = vunpack.c.l.b16 %v5086
      %v5126 = vunpack.c.h.b16 %v5086
      %v5127 = vunpack.c.l.b16 %v5087
      %v5128 = vunpack.c.h.b16 %v5087
      %v5129 = vunpack.c.l.b16 %v5088
      %v5130 = vunpack.c.h.b16 %v5088
      %v5131 = vunpack.c.l.b16 %v5089
      %v5132 = vunpack.c.h.b16 %v5089
      %v5133 = vunpack.c.l.b16 %v5090
      %v5134 = vunpack.c.h.b16 %v5090
      %v5135 = vunpack.c.l.b16 %v5091
      %v5136 = vunpack.c.h.b16 %v5091
      %v5137 = vunpack.c.l.b16 %v5092
      %v5138 = vunpack.c.h.b16 %v5092
      %v5139 = vunpack.c.l.b16 %v5093
      %v5140 = vunpack.c.h.b16 %v5093
      %v5141 = vunpack.c.l.b16 %v5094
      %v5142 = vunpack.c.h.b16 %v5094
      %v5143 = vpack.c.b16 %v5111, %v5111
      %v5144 = vpack.c.b16 %v5112, %v5112
      %v5145 = vpack.c.b16 %v5113, %v5113
      %v5146 = vpack.c.b16 %v5114, %v5114
      %v5147 = vpack.c.b16 %v5115, %v5115
      %v5148 = vpack.c.b16 %v5116, %v5116
      %v5149 = vpack.c.b16 %v5117, %v5117
      %v5150 = vpack.c.b16 %v5118, %v5118
      %v5151 = vpack.c.b16 %v5119, %v5119
      %v5152 = vpack.c.b16 %v5120, %v5120
      %v5153 = vpack.c.b16 %v5121, %v5121
      %v5154 = vpack.c.b16 %v5122, %v5122
      %v5155 = vpack.c.b16 %v5123, %v5123
      %v5156 = vpack.c.b16 %v5124, %v5124
      %v5157 = vpack.c.b16 %v5125, %v5125
      %v5158 = vpack.c.b16 %v5126, %v5126
      %v5159 = vpack.c.b16 %v5127, %v5127
      %v5160 = vpack.c.b16 %v5128, %v5128
      %v5161 = vpack.c.b16 %v5129, %v5129
      %v5162 = vpack.c.b16 %v5130, %v5130
      %v5163 = vpack.c.b16 %v5131, %v5131
      %v5164 = vpack.c.b16 %v5132, %v5132
      %v5165 = vpack.c.b16 %v5133, %v5133
      %v5166 = vpack.c.b16 %v5134, %v5134
      %v5167 = vpack.c.b16 %v5135, %v5135
      %v5168 = vpack.c.b16 %v5136, %v5136
      %v5169 = vpack.c.b16 %v5137, %v5137
      %v5170 = vpack.c.b16 %v5138, %v5138
      %v5171 = vpack.c.b16 %v5139, %v5139
      %v5172 = vpack.c.b16 %v5140, %v5140
      %v5173 = vpack.c.b16 %v5141, %v5141
      %v5174 = vpack.c.b16 %v5142, %v5142
      %5207 = vst [vmem:[%s231] sm:$0xf] %v5143
      %5208 = vst [vmem:[%s231 + $0x4] sm:$0xf] %v5144
      %5209 = vst [vmem:[%s231 + $0x8] sm:$0xf] %v5145
      %5210 = vst [vmem:[%s231 + $0xc] sm:$0xf] %v5146
      %5211 = vst [vmem:[%s231 + $0x10] sm:$0xf] %v5147
      %5212 = vst [vmem:[%s231 + $0x14] sm:$0xf] %v5148
      %5213 = vst [vmem:[%s231 + $0x18] sm:$0xf] %v5149
      %5214 = vst [vmem:[%s231 + $0x1c] sm:$0xf] %v5150
      %5215 = vst [vmem:[%s231 + $0x20] sm:$0xf] %v5151
      %5216 = vst [vmem:[%s231 + $0x24] sm:$0xf] %v5152
      %5217 = vst [vmem:[%s231 + $0x28] sm:$0xf] %v5153
      %5218 = vst [vmem:[%s231 + $0x2c] sm:$0xf] %v5154
      %5219 = vst [vmem:[%s231 + $0x30] sm:$0xf] %v5155
      %5220 = vst [vmem:[%s231 + $0x34] sm:$0xf] %v5156
      %5221 = vst [vmem:[%s231 + $0x38] sm:$0xf] %v5157
      %5222 = vst [vmem:[%s231 + $0x3c] sm:$0xf] %v5158
      %5223 = vst [vmem:[%s231 + $0x40] sm:$0xf] %v5159
      %5224 = vst [vmem:[%s231 + $0x44] sm:$0xf] %v5160
      %5225 = vst [vmem:[%s231 + $0x48] sm:$0xf] %v5161
      %5226 = vst [vmem:[%s231 + $0x4c] sm:$0xf] %v5162
      %5227 = vst [vmem:[%s231 + $0x50] sm:$0xf] %v5163
      %5228 = vst [vmem:[%s231 + $0x54] sm:$0xf] %v5164
      %5229 = vst [vmem:[%s231 + $0x58] sm:$0xf] %v5165
      %5230 = vst [vmem:[%s231 + $0x5c] sm:$0xf] %v5166
      %5231 = vst [vmem:[%s231 + $0x60] sm:$0xf] %v5167
      %5232 = vst [vmem:[%s231 + $0x64] sm:$0xf] %v5168
      %5233 = vst [vmem:[%s231 + $0x68] sm:$0xf] %v5169
      %5234 = vst [vmem:[%s231 + $0x6c] sm:$0xf] %v5170
      %5235 = vst [vmem:[%s231 + $0x70] sm:$0xf] %v5171
      %5236 = vst [vmem:[%s231 + $0x74] sm:$0xf] %v5172
      %5237 = vst [vmem:[%s231 + $0x78] sm:$0xf] %v5173
      %5238 = vst [vmem:[%s231 + $0x7c] sm:$0xf] %v5174
      %v5239 = vadd.f32 %v4953, %v4956
      %v5240 = vadd.f32 %v5239, %v4961
      %v5241 = vadd.f32 %v5240, %v4964
      %v5242 = vadd.f32 %v5241, %v4969
      %v5243 = vadd.f32 %v5242, %v4972
      %v5244 = vadd.f32 %v5243, %v4977
      %v5245 = vadd.f32 %v5244, %v4980
      %v5246 = vadd.f32 %v5245, %v4985
      %v5247 = vadd.f32 %v5246, %v4988
      %v5248 = vadd.f32 %v5247, %v4993
      %v5249 = vadd.f32 %v5248, %v4996
      %v5250 = vadd.f32 %v5249, %v5001
      %v5251 = vadd.f32 %v5250, %v5004
      %v5252 = vadd.f32 %v5251, %v5009
      %v5253 = vadd.f32 %v5252, %v5012
      %v5254 = vadd.f32 %v5253, %v5017
      %v5255 = vadd.f32 %v5254, %v5020
      %v5256 = vadd.f32 %v5255, %v5025
      %v5257 = vadd.f32 %v5256, %v5028
      %v5258 = vadd.f32 %v5257, %v5033
      %v5259 = vadd.f32 %v5258, %v5036
      %v5260 = vadd.f32 %v5259, %v5041
      %v5261 = vadd.f32 %v5260, %v5044
      %v5262 = vadd.f32 %v5261, %v5049
      %v5263 = vadd.f32 %v5262, %v5052
      %v5264 = vadd.f32 %v5263, %v5057
      %v5265 = vadd.f32 %v5264, %v5060
      %v5266 = vadd.f32 %v5265, %v5065
      %v5267 = vadd.f32 %v5266, %v5068
      %v5268 = vadd.f32 %v5267, %v5073
      %v5269 = vadd.f32 %v5268, %v5076
      %v5270 = vrot.slane %v5269, 4
      %v5271 = vadd.f32 %v5269, %v5270
      %v5272 = vrot.slane %v5271, 2
      %v5273 = vadd.f32 %v5271, %v5272
      %v5274 = vrot.slane %v5273, 1
      %v5275 = vadd.f32 %v5273, %v5274
      %v5276 = vmul.f32 %v4953, %v4953
      %v5277 = vmul.f32 %v4956, %v4956
      %v5278 = vmul.f32 %v4961, %v4961
      %v5279 = vmul.f32 %v4964, %v4964
      %v5280 = vmul.f32 %v4969, %v4969
      %v5281 = vmul.f32 %v4972, %v4972
      %v5282 = vmul.f32 %v4977, %v4977
      %v5283 = vmul.f32 %v4980, %v4980
      %v5284 = vmul.f32 %v4985, %v4985
      %v5285 = vmul.f32 %v4988, %v4988
      %v5286 = vmul.f32 %v4993, %v4993
      %v5287 = vmul.f32 %v4996, %v4996
      %v5288 = vmul.f32 %v5001, %v5001
      %v5289 = vmul.f32 %v5004, %v5004
      %v5290 = vmul.f32 %v5009, %v5009
      %v5291 = vmul.f32 %v5012, %v5012
      %v5292 = vmul.f32 %v5017, %v5017
      %v5293 = vmul.f32 %v5020, %v5020
      %v5294 = vmul.f32 %v5025, %v5025
      %v5295 = vmul.f32 %v5028, %v5028
      %v5296 = vmul.f32 %v5033, %v5033
      %v5297 = vmul.f32 %v5036, %v5036
      %v5298 = vmul.f32 %v5041, %v5041
      %v5299 = vmul.f32 %v5044, %v5044
      %v5300 = vmul.f32 %v5049, %v5049
      %v5301 = vmul.f32 %v5052, %v5052
      %v5302 = vmul.f32 %v5057, %v5057
      %v5303 = vmul.f32 %v5060, %v5060
      %v5304 = vmul.f32 %v5065, %v5065
      %v5305 = vmul.f32 %v5068, %v5068
      %v5306 = vmul.f32 %v5073, %v5073
      %v5307 = vmul.f32 %v5076, %v5076
      %v5308 = vadd.f32 %v5276, %v5277
      %v5309 = vadd.f32 %v5308, %v5278
      %v5310 = vadd.f32 %v5309, %v5279
      %v5311 = vadd.f32 %v5310, %v5280
      %v5312 = vadd.f32 %v5311, %v5281
      %v5313 = vadd.f32 %v5312, %v5282
      %v5314 = vadd.f32 %v5313, %v5283
      %v5315 = vadd.f32 %v5314, %v5284
      %v5316 = vadd.f32 %v5315, %v5285
      %v5317 = vadd.f32 %v5316, %v5286
      %v5318 = vadd.f32 %v5317, %v5287
      %v5319 = vadd.f32 %v5318, %v5288
      %v5320 = vadd.f32 %v5319, %v5289
      %v5321 = vadd.f32 %v5320, %v5290
      %v5322 = vadd.f32 %v5321, %v5291
      %v5323 = vadd.f32 %v5322, %v5292
      %v5324 = vadd.f32 %v5323, %v5293
      %v5325 = vadd.f32 %v5324, %v5294
      %v5326 = vadd.f32 %v5325, %v5295
      %v5327 = vadd.f32 %v5326, %v5296
      %v5328 = vadd.f32 %v5327, %v5297
      %v5329 = vadd.f32 %v5328, %v5298
      %v5330 = vadd.f32 %v5329, %v5299
      %v5331 = vadd.f32 %v5330, %v5300
      %v5332 = vadd.f32 %v5331, %v5301
      %v5333 = vadd.f32 %v5332, %v5302
      %v5334 = vadd.f32 %v5333, %v5303
      %v5335 = vadd.f32 %v5334, %v5304
      %v5336 = vadd.f32 %v5335, %v5305
      %v5337 = vadd.f32 %v5336, %v5306
      %v5338 = vadd.f32 %v5337, %v5307
      %v5339 = vrot.slane %v5338, 4
      %v5340 = vadd.f32 %v5338, %v5339
      %v5341 = vrot.slane %v5340, 2
      %v5342 = vadd.f32 %v5340, %v5341
      %v5343 = vrot.slane %v5342, 1
      %v5344 = vadd.f32 %v5342, %v5343
      %vm5345 = vcmask 1040384
      %v5346 = vsel %vm5345, %v5275, %v5344
      %5347 = vst [vmem:[%s235] sm:$0x3] %v5346
      %p5348 = scmp.lt.s32.totalorder %s17, 1
      %s5349 = scalar_select %p5348, %s17, 1
      %s5350 = smul.addr %s5349, 32
      %s5351 = smul.addr %s5350, 4
      %s5352 = scalar_lea.vmem %s4, %s5351
      %p5353 = scmp.lt.s32.totalorder %s17, 1
      %s5354 = scalar_select %p5353, %s17, 1
      %s5355 = smul.addr %s5354, 2
      %s5356 = scalar_lea.vmem %s5, %s5355
      // Predicated region
      $region37: #{bottleneck_forward.5} parent=35 // pred_check
        %p5357 = pneg %p124
      $region38: #{bottleneck_forward.5} parent=35 // pred_check_branch
        %5359 = sbr.rel (%p5357) target = $region40
      $region39: #{bottleneck_forward.5} parent=35 // pred_region
        _
      $region40: #{bottleneck_forward.5} parent=35 // pred_fallthru
        _
      // Predicated region
      $region41: #{bottleneck_forward.5} parent=35 // pred_check
        %p5360 = pneg %p150
      $region42: #{bottleneck_forward.5} parent=35 // pred_check_branch
        %5362 = sbr.rel (%p5360) target = $region44
      $region43: #{bottleneck_forward.5} parent=35 // pred_region
        _
      $region44: #{bottleneck_forward.5} parent=35 // pred_fallthru
        _
    $region36: #{bottleneck_forward.5} parent=5 // pred_fallthru
      _
    %p5363 = scmp.le.s32.totalorder 2, %s12
    // Predicated region
    $region45: #{bottleneck_forward.5} parent=5 // pred_check
      %p5364 = pneg %p5363
    $region46: #{bottleneck_forward.5} parent=5 // pred_check_branch
      %5366 = sbr.rel (%p5364) target = $region48
    $region47: #{bottleneck_forward.5} parent=5 // pred_region
      %s5367 = ssub.s32 %s12, 2
      // Predicated region
      $region49: #{bottleneck_forward.5} parent=47 // pred_check
        %p5368 = pneg %p130
      $region50: #{bottleneck_forward.5} parent=47 // pred_check_branch
        %5370 = sbr.rel (%p5368) target = $region52
      $region51: #{bottleneck_forward.5} parent=47 // pred_region
        %p5371 = scmp.lt.s32.totalorder %s18, 1
        %s5372 = scalar_select %p5371, %s18, 1
        %s5373 = smul.addr %s5372, 32
        %s5374 = smul.addr %s5373, 4
        %s5375 = scalar_lea.vmem %s4, %s5374
      $region52: #{bottleneck_forward.5} parent=47 // pred_fallthru
        _
      // Predicated region
      $region53: #{bottleneck_forward.5} parent=47 // pred_check
        %p5376 = pneg %p156
      $region54: #{bottleneck_forward.5} parent=47 // pred_check_branch
        %5378 = sbr.rel (%p5376) target = $region56
      $region55: #{bottleneck_forward.5} parent=47 // pred_region
        %p5379 = scmp.lt.s32.totalorder %s18, 1
        %s5380 = scalar_select %p5379, %s18, 1
        %s5381 = smul.addr %s5380, 2
        %s5382 = scalar_lea.vmem %s5, %s5381
      $region56: #{bottleneck_forward.5} parent=47 // pred_fallthru
        _
    $region48: #{bottleneck_forward.5} parent=5 // pred_fallthru
      _
  $region6: #{bottleneck_forward.5} parent=0 // loop_footer
    %s16 = sadd.s32 1, %s12
  $region7: #{bottleneck_forward.5} parent=0 // loop_footer_branch
    %11 = sbr.rel target = $region3
  $region8: #{bottleneck_forward.5} parent=0 // loop_exit
    _

</llo_original>
